<compile_context>
chip_gen: v6e
topology: v6e:2x2x1
jax: 0.10.0
libtpu: 0.0.40
codegen_flags: <defaults>
</compile_context>

<pallas_src>
import math
import jax
import jax.numpy as jnp
from jax.experimental import pallas as pl
from jax.experimental.pallas import tpu as pltpu

# ---------------------------------------------------------------------------
# Config (small stand-in sizes consistent with the module: per-component
# 2-layer EqualLinear MLP mapping dim_s_code -> dim_style*remaining, then
# W+ latent-avg merge).
# ---------------------------------------------------------------------------
BS            = 2
NUM_SEG_CLS   = 12          # number of components / LocalMLPs
DIM_S_CODE    = 256         # style-vector dim coming out of the encoder
DIM_STYLE     = 128         # StyleGAN W dim (small stand-in for 512)
NUM_W_TOTAL   = 18
REMAINING_IDX = 13          # opts.remaining_layer_idx (!= 17 branch)
HIDDEN        = DIM_STYLE   # latent_squeeze_ratio = 1
OUT_DIM       = DIM_STYLE * REMAINING_IDX                    # per-comp MLP width
TAIL_DIM      = DIM_STYLE * (NUM_W_TOTAL - REMAINING_IDX)    # broadcast tail
FULL_OUT      = DIM_STYLE * NUM_W_TOTAL                      # kernel output width

GROUP = 6                   # components per grid step -> grid = (2,)

LEAKY_SLOPE = 0.01                          # nn.LeakyReLU() default slope
SCALE1 = 1.0 / math.sqrt(DIM_S_CODE)        # EqualLinear scale, lr_mul = 1
SCALE2 = 1.0 / math.sqrt(HIDDEN)


# ---------------------------------------------------------------------------
# One-time parameter transform: fold EqualLinear scales into the weights, fold
# latent_avg[:remaining] into the second bias, cast big weights to bf16, and
# pre-flatten the latent_avg tail.
# ---------------------------------------------------------------------------
def prepare_params(w1, b1, w2, b2, latent_avg):
    w1_p = (w1 * SCALE1).astype(jnp.bfloat16)              # [n_comp, din, hidden]
    w2_p = (w2 * SCALE2).astype(jnp.bfloat16)              # [n_comp, hidden, out]
    b1_p = b1.astype(jnp.float32)                          # [n_comp, 1, hidden]
    avg_head = latent_avg[:REMAINING_IDX].reshape(1, 1, OUT_DIM)
    b2_p = (b2 + avg_head).astype(jnp.float32)             # [n_comp, 1, out]
    tail_p = latent_avg[REMAINING_IDX:].reshape(1, TAIL_DIM).astype(jnp.float32)
    return w1_p, b1_p, w2_p, b2_p, tail_p


# ---------------------------------------------------------------------------
# Pallas kernel: one grid step = GROUP seg components (statically unrolled).
#   x_ref    : [GROUP, bs, din]        f32 (component-major)
#   w1_ref   : [GROUP, din, hidden]    bf16 (scale pre-folded)
#   b1_ref   : [GROUP, 1, hidden]      f32
#   w2_ref   : [GROUP, hidden, out]    bf16 (scale pre-folded)
#   b2_ref   : [GROUP, 1, out]         f32  (latent_avg head pre-folded)
#   tail_ref : [1, tail]               f32  (latent_avg tail, flattened)
#   o_ref    : [GROUP, bs, 18*D]       f32
# ---------------------------------------------------------------------------
def _make_local_mlp_kernel(bs, group):
    def kernel(x_ref, w1_ref, b1_ref, w2_ref, b2_ref, tail_ref, o_ref):
        # hoist the tail broadcast out of the unrolled loop
        tail = jnp.broadcast_to(tail_ref[...], (bs, TAIL_DIM))
        for c in range(group):                               # static unroll
            x = x_ref[c].astype(jnp.bfloat16)                # (bs, din)
            h = jnp.dot(x, w1_ref[c],
                        preferred_element_type=jnp.float32) + b1_ref[c]
            h = jnp.where(h >= 0.0, h, LEAKY_SLOPE * h)      # LeakyReLU(0.01)
            out = jnp.dot(h.astype(jnp.bfloat16), w2_ref[c],
                          preferred_element_type=jnp.float32) + b2_ref[c]
            # lane-dim concat at a 128-aligned boundary (no cross-lane shuffles)
            o_ref[c] = jnp.concatenate([out, tail], axis=-1)  # (bs, 18*D)
    return kernel


def cal_style_codes_pallas(style_vectors, w1_p, b1_p, w2_p, b2_p, tail_p):
    """style_vectors: [bs, n_comp, dim_s_code]
       returns style_codes: [bs, n_comp, 18, dim_style]"""
    bs, n_comp, din = style_vectors.shape
    assert n_comp % GROUP == 0

    # component-major layout for the kernel: [n_comp, bs, din]
    x3 = jnp.transpose(style_vectors, (1, 0, 2)).astype(jnp.float32)
    n_steps = n_comp // GROUP

    out3 = pl.pallas_call(
        _make_local_mlp_kernel(bs, GROUP),
        out_shape=jax.ShapeDtypeStruct((n_comp, bs, FULL_OUT), jnp.float32),
        grid_spec=pltpu.PrefetchScalarGridSpec(
            num_scalar_prefetch=0,
            grid=(n_steps,),
            in_specs=[
                pl.BlockSpec((GROUP, bs, din),         lambda i: (i, 0, 0)),
                pl.BlockSpec((GROUP, din, HIDDEN),     lambda i: (i, 0, 0)),
                pl.BlockSpec((GROUP, 1, HIDDEN),       lambda i: (i, 0, 0)),
                pl.BlockSpec((GROUP, HIDDEN, OUT_DIM), lambda i: (i, 0, 0)),
                pl.BlockSpec((GROUP, 1, OUT_DIM),      lambda i: (i, 0, 0)),
                pl.BlockSpec((1, TAIL_DIM),            lambda i: (0, 0)),
            ],
            out_specs=pl.BlockSpec((GROUP, bs, FULL_OUT), lambda i: (i, 0, 0)),
        ),
        compiler_params=pltpu.CompilerParams(
            dimension_semantics=("parallel",)),
    )(x3, w1_p, b1_p, w2_p, b2_p, tail_p)

    # Glue (fused under jit): [n_comp, bs, 18*D] -> [bs, n_comp, 18, D]
    codes = out3.reshape(n_comp, bs, NUM_W_TOTAL, DIM_STYLE)
    return jnp.transpose(codes, (1, 0, 2, 3))


# ---------------------------------------------------------------------------
# Pure-JAX reference matched to the kernel's bf16 streaming path.
# ---------------------------------------------------------------------------
def cal_style_codes_ref(style_vectors, w1_p, b1_p, w2_p, b2_p, tail_p):
    bs, n_comp, _ = style_vectors.shape
    x = style_vectors.astype(jnp.bfloat16).astype(jnp.float32)
    w1f = w1_p.astype(jnp.float32)
    w2f = w2_p.astype(jnp.float32)
    h = jnp.einsum('bci,cih->bch', x, w1f) + b1_p[:, 0][None]
    h = jnp.where(h >= 0.0, h, LEAKY_SLOPE * h)
    h = h.astype(jnp.bfloat16).astype(jnp.float32)
    o = jnp.einsum('bch,cho->bco', h, w2f) + b2_p[:, 0][None]
    codes = o.reshape(bs, n_comp, REMAINING_IDX, DIM_STYLE)
    rem = jnp.broadcast_to(
        tail_p.reshape(1, 1, NUM_W_TOTAL - REMAINING_IDX, DIM_STYLE),
        (bs, n_comp, NUM_W_TOTAL - REMAINING_IDX, DIM_STYLE))
    return jnp.concatenate([codes, rem], axis=2)


if __name__ == "__main__":
    key = jax.random.PRNGKey(0)
    ks = jax.random.split(key, 6)

    # Deterministic synthetic params (EqualLinear: weight ~ N(0,1)),
    # stored pre-transposed as [num_comp, in, out].
    w1 = jax.random.normal(ks[0], (NUM_SEG_CLS, DIM_S_CODE, HIDDEN), jnp.float32)
    b1 = 0.01 * jax.random.normal(ks[1], (NUM_SEG_CLS, 1, HIDDEN), jnp.float32)
    w2 = jax.random.normal(ks[2], (NUM_SEG_CLS, HIDDEN, OUT_DIM), jnp.float32)
    b2 = 0.01 * jax.random.normal(ks[3], (NUM_SEG_CLS, 1, OUT_DIM), jnp.float32)
    latent_avg = jax.random.normal(ks[4], (NUM_W_TOTAL, DIM_STYLE), jnp.float32) * 0.1

    # Synthetic per-component style vectors (encoder output), [bs, n_comp, dim]
    style_vectors = jax.random.normal(ks[5], (BS, NUM_SEG_CLS, DIM_S_CODE),
                                      jnp.float32)

    # One-time parameter transform (scales + latent_avg head folded, bf16 cast)
    w1_p, b1_p, w2_p, b2_p, tail_p = prepare_params(w1, b1, w2, b2, latent_avg)

    fn = jax.jit(cal_style_codes_pallas)
    out = fn(style_vectors, w1_p, b1_p, w2_p, b2_p, tail_p)
    out = jax.block_until_ready(out)

    ref = cal_style_codes_ref(style_vectors, w1_p, b1_p, w2_p, b2_p, tail_p)
    assert out.shape == (BS, NUM_SEG_CLS, NUM_W_TOTAL, DIM_STYLE), out.shape
    max_err = float(jnp.max(jnp.abs(out - ref)))
    assert max_err < 2e-3, max_err

    print("KERNEL_OK")
</pallas_src>

<mosaic_0001>
module attributes {stable_mosaic.version = 11 : i64} {
  func.func @kernel(%arg0: i32, %arg1: memref<6x2x256xf32, #tpu.memory_space<vmem>>, %arg2: memref<6x256x128xbf16, #tpu.memory_space<vmem>>, %arg3: memref<6x1x128xf32, #tpu.memory_space<vmem>>, %arg4: memref<6x128x1664xbf16, #tpu.memory_space<vmem>>, %arg5: memref<6x1x1664xf32, #tpu.memory_space<vmem>>, %arg6: memref<1x640xf32, #tpu.memory_space<vmem>>, %arg7: memref<6x2x2304xf32, #tpu.memory_space<vmem>>) attributes {dimension_semantics = [#tpu.dimension_semantics<parallel>], iteration_bounds = array<i64: 2>, scalar_prefetch = 0 : i64, scratch_operands = 0 : i64, tpu.core_type = #tpu.core_type<tc>, window_params = [{transform_indices = @transform_0, window_bounds = array<i64: 6, 2, 256>}, {transform_indices = @transform_1, window_bounds = array<i64: 6, 256, 128>}, {transform_indices = @transform_2, window_bounds = array<i64: 6, 1, 128>}, {transform_indices = @transform_3, window_bounds = array<i64: 6, 128, 1664>}, {transform_indices = @transform_4, window_bounds = array<i64: 6, 1, 1664>}, {pipeline_mode = #tpu.pipeline_mode<synchronous>, transform_indices = @transform_5, window_bounds = array<i64: 1, 640>}, {transform_indices = @transform_6, window_bounds = array<i64: 6, 2, 2304>}]} {
    %c0 = arith.constant 0 : index
    %c0_0 = arith.constant 0 : index
    %0 = vector.load %arg6[%c0, %c0_0] : memref<1x640xf32, #tpu.memory_space<vmem>>, vector<1x640xf32>
    %1 = vector.shape_cast %0 : vector<1x640xf32> to vector<1x640xf32>
    %2 = vector.broadcast %1 : vector<1x640xf32> to vector<2x640xf32>
    %c0_1 = arith.constant 0 : index
    %c0_2 = arith.constant 0 : index
    %c0_3 = arith.constant 0 : index
    %3 = vector.load %arg1[%c0_1, %c0_2, %c0_3] : memref<6x2x256xf32, #tpu.memory_space<vmem>>, vector<1x2x256xf32>
    %4 = vector.shape_cast %3 : vector<1x2x256xf32> to vector<2x256xf32>
    %5 = arith.truncf %4 : vector<2x256xf32> to vector<2x256xbf16>
    %c0_4 = arith.constant 0 : index
    %c0_5 = arith.constant 0 : index
    %c0_6 = arith.constant 0 : index
    %6 = vector.load %arg2[%c0_4, %c0_5, %c0_6] : memref<6x256x128xbf16, #tpu.memory_space<vmem>>, vector<1x256x128xbf16>
    %7 = vector.shape_cast %6 : vector<1x256x128xbf16> to vector<256x128xbf16>
    %cst = arith.constant dense<0.000000e+00> : vector<2x128xf32>
    %8 = tpu.matmul %5, %7, %cst {dimension_numbers = #tpu.dot_dimension_numbers<[1], [0], [0], [1], [0, 0, 1, 1], [], []>} : vector<2x256xbf16>, vector<256x128xbf16>, vector<2x128xf32> -> vector<2x128xf32>
    %c0_7 = arith.constant 0 : index
    %c0_8 = arith.constant 0 : index
    %c0_9 = arith.constant 0 : index
    %9 = vector.load %arg3[%c0_7, %c0_8, %c0_9] : memref<6x1x128xf32, #tpu.memory_space<vmem>>, vector<1x1x128xf32>
    %10 = vector.shape_cast %9 : vector<1x1x128xf32> to vector<1x128xf32>
    %11 = vector.broadcast %10 : vector<1x128xf32> to vector<2x128xf32>
    %12 = arith.addf %8, %11 : vector<2x128xf32>
    %cst_10 = arith.constant 0.000000e+00 : f32
    %13 = vector.broadcast %cst_10 : f32 to vector<2x128xf32>
    %14 = arith.cmpf oge, %12, %13 : vector<2x128xf32>
    %cst_11 = arith.constant 0.00999999977 : f32
    %15 = vector.broadcast %cst_11 : f32 to vector<2x128xf32>
    %16 = arith.mulf %15, %12 : vector<2x128xf32>
    %17 = arith.select %14, %12, %16 : vector<2x128xi1>, vector<2x128xf32>
    %18 = arith.truncf %17 : vector<2x128xf32> to vector<2x128xbf16>
    %c0_12 = arith.constant 0 : index
    %c0_13 = arith.constant 0 : index
    %c0_14 = arith.constant 0 : index
    %19 = vector.load %arg4[%c0_12, %c0_13, %c0_14] : memref<6x128x1664xbf16, #tpu.memory_space<vmem>>, vector<1x128x1664xbf16>
    %20 = vector.shape_cast %19 : vector<1x128x1664xbf16> to vector<128x1664xbf16>
    %cst_15 = arith.constant dense<0.000000e+00> : vector<2x1664xf32>
    %21 = tpu.matmul %18, %20, %cst_15 {dimension_numbers = #tpu.dot_dimension_numbers<[1], [0], [0], [1], [0, 0, 1, 1], [], []>} : vector<2x128xbf16>, vector<128x1664xbf16>, vector<2x1664xf32> -> vector<2x1664xf32>
    %c0_16 = arith.constant 0 : index
    %c0_17 = arith.constant 0 : index
    %c0_18 = arith.constant 0 : index
    %22 = vector.load %arg5[%c0_16, %c0_17, %c0_18] : memref<6x1x1664xf32, #tpu.memory_space<vmem>>, vector<1x1x1664xf32>
    %23 = vector.shape_cast %22 : vector<1x1x1664xf32> to vector<1x1664xf32>
    %24 = vector.broadcast %23 : vector<1x1664xf32> to vector<2x1664xf32>
    %25 = arith.addf %21, %24 : vector<2x1664xf32>
    %26 = tpu.concatenate %25, %2 in 1 : vector<2x1664xf32>, vector<2x640xf32> -> vector<2x2304xf32>
    %c0_19 = arith.constant 0 : index
    %c0_20 = arith.constant 0 : index
    %c0_21 = arith.constant 0 : index
    %27 = vector.load %arg7[%c0_19, %c0_20, %c0_21] : memref<6x2x2304xf32, #tpu.memory_space<vmem>>, vector<1x2x2304xf32>
    %28 = vector.shape_cast %27 : vector<1x2x2304xf32> to vector<2x2304xf32>
    %29 = vector.shape_cast %26 : vector<2x2304xf32> to vector<1x2x2304xf32>
    tpu.vector_store %arg7[%c0_19, %c0_20, %c0_21], %29 {strides = array<i32>} : memref<6x2x2304xf32, #tpu.memory_space<vmem>>, vector<1x2x2304xf32>,
    %c1 = arith.constant 1 : index
    %c0_22 = arith.constant 0 : index
    %c0_23 = arith.constant 0 : index
    %30 = vector.load %arg1[%c1, %c0_22, %c0_23] : memref<6x2x256xf32, #tpu.memory_space<vmem>>, vector<1x2x256xf32>
    %31 = vector.shape_cast %30 : vector<1x2x256xf32> to vector<2x256xf32>
    %32 = arith.truncf %31 : vector<2x256xf32> to vector<2x256xbf16>
    %c1_24 = arith.constant 1 : index
    %c0_25 = arith.constant 0 : index
    %c0_26 = arith.constant 0 : index
    %33 = vector.load %arg2[%c1_24, %c0_25, %c0_26] : memref<6x256x128xbf16, #tpu.memory_space<vmem>>, vector<1x256x128xbf16>
    %34 = vector.shape_cast %33 : vector<1x256x128xbf16> to vector<256x128xbf16>
    %cst_27 = arith.constant dense<0.000000e+00> : vector<2x128xf32>
    %35 = tpu.matmul %32, %34, %cst_27 {dimension_numbers = #tpu.dot_dimension_numbers<[1], [0], [0], [1], [0, 0, 1, 1], [], []>} : vector<2x256xbf16>, vector<256x128xbf16>, vector<2x128xf32> -> vector<2x128xf32>
    %c1_28 = arith.constant 1 : index
    %c0_29 = arith.constant 0 : index
    %c0_30 = arith.constant 0 : index
    %36 = vector.load %arg3[%c1_28, %c0_29, %c0_30] : memref<6x1x128xf32, #tpu.memory_space<vmem>>, vector<1x1x128xf32>
    %37 = vector.shape_cast %36 : vector<1x1x128xf32> to vector<1x128xf32>
    %38 = vector.broadcast %37 : vector<1x128xf32> to vector<2x128xf32>
    %39 = arith.addf %35, %38 : vector<2x128xf32>
    %cst_31 = arith.constant 0.000000e+00 : f32
    %40 = vector.broadcast %cst_31 : f32 to vector<2x128xf32>
    %41 = arith.cmpf oge, %39, %40 : vector<2x128xf32>
    %cst_32 = arith.constant 0.00999999977 : f32
    %42 = vector.broadcast %cst_32 : f32 to vector<2x128xf32>
    %43 = arith.mulf %42, %39 : vector<2x128xf32>
    %44 = arith.select %41, %39, %43 : vector<2x128xi1>, vector<2x128xf32>
    %45 = arith.truncf %44 : vector<2x128xf32> to vector<2x128xbf16>
    %c1_33 = arith.constant 1 : index
    %c0_34 = arith.constant 0 : index
    %c0_35 = arith.constant 0 : index
    %46 = vector.load %arg4[%c1_33, %c0_34, %c0_35] : memref<6x128x1664xbf16, #tpu.memory_space<vmem>>, vector<1x128x1664xbf16>
    %47 = vector.shape_cast %46 : vector<1x128x1664xbf16> to vector<128x1664xbf16>
    %cst_36 = arith.constant dense<0.000000e+00> : vector<2x1664xf32>
    %48 = tpu.matmul %45, %47, %cst_36 {dimension_numbers = #tpu.dot_dimension_numbers<[1], [0], [0], [1], [0, 0, 1, 1], [], []>} : vector<2x128xbf16>, vector<128x1664xbf16>, vector<2x1664xf32> -> vector<2x1664xf32>
    %c1_37 = arith.constant 1 : index
    %c0_38 = arith.constant 0 : index
    %c0_39 = arith.constant 0 : index
    %49 = vector.load %arg5[%c1_37, %c0_38, %c0_39] : memref<6x1x1664xf32, #tpu.memory_space<vmem>>, vector<1x1x1664xf32>
    %50 = vector.shape_cast %49 : vector<1x1x1664xf32> to vector<1x1664xf32>
    %51 = vector.broadcast %50 : vector<1x1664xf32> to vector<2x1664xf32>
    %52 = arith.addf %48, %51 : vector<2x1664xf32>
    %53 = tpu.concatenate %52, %2 in 1 : vector<2x1664xf32>, vector<2x640xf32> -> vector<2x2304xf32>
    %c1_40 = arith.constant 1 : index
    %c0_41 = arith.constant 0 : index
    %c0_42 = arith.constant 0 : index
    %54 = vector.load %arg7[%c1_40, %c0_41, %c0_42] : memref<6x2x2304xf32, #tpu.memory_space<vmem>>, vector<1x2x2304xf32>
    %55 = vector.shape_cast %54 : vector<1x2x2304xf32> to vector<2x2304xf32>
    %56 = vector.shape_cast %53 : vector<2x2304xf32> to vector<1x2x2304xf32>
    tpu.vector_store %arg7[%c1_40, %c0_41, %c0_42], %56 {strides = array<i32>} : memref<6x2x2304xf32, #tpu.memory_space<vmem>>, vector<1x2x2304xf32>,
    %c2 = arith.constant 2 : index
    %c0_43 = arith.constant 0 : index
    %c0_44 = arith.constant 0 : index
    %57 = vector.load %arg1[%c2, %c0_43, %c0_44] : memref<6x2x256xf32, #tpu.memory_space<vmem>>, vector<1x2x256xf32>
    %58 = vector.shape_cast %57 : vector<1x2x256xf32> to vector<2x256xf32>
    %59 = arith.truncf %58 : vector<2x256xf32> to vector<2x256xbf16>
    %c2_45 = arith.constant 2 : index
    %c0_46 = arith.constant 0 : index
    %c0_47 = arith.constant 0 : index
    %60 = vector.load %arg2[%c2_45, %c0_46, %c0_47] : memref<6x256x128xbf16, #tpu.memory_space<vmem>>, vector<1x256x128xbf16>
    %61 = vector.shape_cast %60 : vector<1x256x128xbf16> to vector<256x128xbf16>
    %cst_48 = arith.constant dense<0.000000e+00> : vector<2x128xf32>
    %62 = tpu.matmul %59, %61, %cst_48 {dimension_numbers = #tpu.dot_dimension_numbers<[1], [0], [0], [1], [0, 0, 1, 1], [], []>} : vector<2x256xbf16>, vector<256x128xbf16>, vector<2x128xf32> -> vector<2x128xf32>
    %c2_49 = arith.constant 2 : index
    %c0_50 = arith.constant 0 : index
    %c0_51 = arith.constant 0 : index
    %63 = vector.load %arg3[%c2_49, %c0_50, %c0_51] : memref<6x1x128xf32, #tpu.memory_space<vmem>>, vector<1x1x128xf32>
    %64 = vector.shape_cast %63 : vector<1x1x128xf32> to vector<1x128xf32>
    %65 = vector.broadcast %64 : vector<1x128xf32> to vector<2x128xf32>
    %66 = arith.addf %62, %65 : vector<2x128xf32>
    %cst_52 = arith.constant 0.000000e+00 : f32
    %67 = vector.broadcast %cst_52 : f32 to vector<2x128xf32>
    %68 = arith.cmpf oge, %66, %67 : vector<2x128xf32>
    %cst_53 = arith.constant 0.00999999977 : f32
    %69 = vector.broadcast %cst_53 : f32 to vector<2x128xf32>
    %70 = arith.mulf %69, %66 : vector<2x128xf32>
    %71 = arith.select %68, %66, %70 : vector<2x128xi1>, vector<2x128xf32>
    %72 = arith.truncf %71 : vector<2x128xf32> to vector<2x128xbf16>
    %c2_54 = arith.constant 2 : index
    %c0_55 = arith.constant 0 : index
    %c0_56 = arith.constant 0 : index
    %73 = vector.load %arg4[%c2_54, %c0_55, %c0_56] : memref<6x128x1664xbf16, #tpu.memory_space<vmem>>, vector<1x128x1664xbf16>
    %74 = vector.shape_cast %73 : vector<1x128x1664xbf16> to vector<128x1664xbf16>
    %cst_57 = arith.constant dense<0.000000e+00> : vector<2x1664xf32>
    %75 = tpu.matmul %72, %74, %cst_57 {dimension_numbers = #tpu.dot_dimension_numbers<[1], [0], [0], [1], [0, 0, 1, 1], [], []>} : vector<2x128xbf16>, vector<128x1664xbf16>, vector<2x1664xf32> -> vector<2x1664xf32>
    %c2_58 = arith.constant 2 : index
    %c0_59 = arith.constant 0 : index
    %c0_60 = arith.constant 0 : index
    %76 = vector.load %arg5[%c2_58, %c0_59, %c0_60] : memref<6x1x1664xf32, #tpu.memory_space<vmem>>, vector<1x1x1664xf32>
    %77 = vector.shape_cast %76 : vector<1x1x1664xf32> to vector<1x1664xf32>
    %78 = vector.broadcast %77 : vector<1x1664xf32> to vector<2x1664xf32>
    %79 = arith.addf %75, %78 : vector<2x1664xf32>
    %80 = tpu.concatenate %79, %2 in 1 : vector<2x1664xf32>, vector<2x640xf32> -> vector<2x2304xf32>
    %c2_61 = arith.constant 2 : index
    %c0_62 = arith.constant 0 : index
    %c0_63 = arith.constant 0 : index
    %81 = vector.load %arg7[%c2_61, %c0_62, %c0_63] : memref<6x2x2304xf32, #tpu.memory_space<vmem>>, vector<1x2x2304xf32>
    %82 = vector.shape_cast %81 : vector<1x2x2304xf32> to vector<2x2304xf32>
    %83 = vector.shape_cast %80 : vector<2x2304xf32> to vector<1x2x2304xf32>
    tpu.vector_store %arg7[%c2_61, %c0_62, %c0_63], %83 {strides = array<i32>} : memref<6x2x2304xf32, #tpu.memory_space<vmem>>, vector<1x2x2304xf32>,
    %c3 = arith.constant 3 : index
    %c0_64 = arith.constant 0 : index
    %c0_65 = arith.constant 0 : index
    %84 = vector.load %arg1[%c3, %c0_64, %c0_65] : memref<6x2x256xf32, #tpu.memory_space<vmem>>, vector<1x2x256xf32>
    %85 = vector.shape_cast %84 : vector<1x2x256xf32> to vector<2x256xf32>
    %86 = arith.truncf %85 : vector<2x256xf32> to vector<2x256xbf16>
    %c3_66 = arith.constant 3 : index
    %c0_67 = arith.constant 0 : index
    %c0_68 = arith.constant 0 : index
    %87 = vector.load %arg2[%c3_66, %c0_67, %c0_68] : memref<6x256x128xbf16, #tpu.memory_space<vmem>>, vector<1x256x128xbf16>
    %88 = vector.shape_cast %87 : vector<1x256x128xbf16> to vector<256x128xbf16>
    %cst_69 = arith.constant dense<0.000000e+00> : vector<2x128xf32>
    %89 = tpu.matmul %86, %88, %cst_69 {dimension_numbers = #tpu.dot_dimension_numbers<[1], [0], [0], [1], [0, 0, 1, 1], [], []>} : vector<2x256xbf16>, vector<256x128xbf16>, vector<2x128xf32> -> vector<2x128xf32>
    %c3_70 = arith.constant 3 : index
    %c0_71 = arith.constant 0 : index
    %c0_72 = arith.constant 0 : index
    %90 = vector.load %arg3[%c3_70, %c0_71, %c0_72] : memref<6x1x128xf32, #tpu.memory_space<vmem>>, vector<1x1x128xf32>
    %91 = vector.shape_cast %90 : vector<1x1x128xf32> to vector<1x128xf32>
    %92 = vector.broadcast %91 : vector<1x128xf32> to vector<2x128xf32>
    %93 = arith.addf %89, %92 : vector<2x128xf32>
    %cst_73 = arith.constant 0.000000e+00 : f32
    %94 = vector.broadcast %cst_73 : f32 to vector<2x128xf32>
    %95 = arith.cmpf oge, %93, %94 : vector<2x128xf32>
    %cst_74 = arith.constant 0.00999999977 : f32
    %96 = vector.broadcast %cst_74 : f32 to vector<2x128xf32>
    %97 = arith.mulf %96, %93 : vector<2x128xf32>
    %98 = arith.select %95, %93, %97 : vector<2x128xi1>, vector<2x128xf32>
    %99 = arith.truncf %98 : vector<2x128xf32> to vector<2x128xbf16>
    %c3_75 = arith.constant 3 : index
    %c0_76 = arith.constant 0 : index
    %c0_77 = arith.constant 0 : index
    %100 = vector.load %arg4[%c3_75, %c0_76, %c0_77] : memref<6x128x1664xbf16, #tpu.memory_space<vmem>>, vector<1x128x1664xbf16>
    %101 = vector.shape_cast %100 : vector<1x128x1664xbf16> to vector<128x1664xbf16>
    %cst_78 = arith.constant dense<0.000000e+00> : vector<2x1664xf32>
    %102 = tpu.matmul %99, %101, %cst_78 {dimension_numbers = #tpu.dot_dimension_numbers<[1], [0], [0], [1], [0, 0, 1, 1], [], []>} : vector<2x128xbf16>, vector<128x1664xbf16>, vector<2x1664xf32> -> vector<2x1664xf32>
    %c3_79 = arith.constant 3 : index
    %c0_80 = arith.constant 0 : index
    %c0_81 = arith.constant 0 : index
    %103 = vector.load %arg5[%c3_79, %c0_80, %c0_81] : memref<6x1x1664xf32, #tpu.memory_space<vmem>>, vector<1x1x1664xf32>
    %104 = vector.shape_cast %103 : vector<1x1x1664xf32> to vector<1x1664xf32>
    %105 = vector.broadcast %104 : vector<1x1664xf32> to vector<2x1664xf32>
    %106 = arith.addf %102, %105 : vector<2x1664xf32>
    %107 = tpu.concatenate %106, %2 in 1 : vector<2x1664xf32>, vector<2x640xf32> -> vector<2x2304xf32>
    %c3_82 = arith.constant 3 : index
    %c0_83 = arith.constant 0 : index
    %c0_84 = arith.constant 0 : index
    %108 = vector.load %arg7[%c3_82, %c0_83, %c0_84] : memref<6x2x2304xf32, #tpu.memory_space<vmem>>, vector<1x2x2304xf32>
    %109 = vector.shape_cast %108 : vector<1x2x2304xf32> to vector<2x2304xf32>
    %110 = vector.shape_cast %107 : vector<2x2304xf32> to vector<1x2x2304xf32>
    tpu.vector_store %arg7[%c3_82, %c0_83, %c0_84], %110 {strides = array<i32>} : memref<6x2x2304xf32, #tpu.memory_space<vmem>>, vector<1x2x2304xf32>,
    %c4 = arith.constant 4 : index
    %c0_85 = arith.constant 0 : index
    %c0_86 = arith.constant 0 : index
    %111 = vector.load %arg1[%c4, %c0_85, %c0_86] : memref<6x2x256xf32, #tpu.memory_space<vmem>>, vector<1x2x256xf32>
    %112 = vector.shape_cast %111 : vector<1x2x256xf32> to vector<2x256xf32>
    %113 = arith.truncf %112 : vector<2x256xf32> to vector<2x256xbf16>
    %c4_87 = arith.constant 4 : index
    %c0_88 = arith.constant 0 : index
    %c0_89 = arith.constant 0 : index
    %114 = vector.load %arg2[%c4_87, %c0_88, %c0_89] : memref<6x256x128xbf16, #tpu.memory_space<vmem>>, vector<1x256x128xbf16>
    %115 = vector.shape_cast %114 : vector<1x256x128xbf16> to vector<256x128xbf16>
    %cst_90 = arith.constant dense<0.000000e+00> : vector<2x128xf32>
    %116 = tpu.matmul %113, %115, %cst_90 {dimension_numbers = #tpu.dot_dimension_numbers<[1], [0], [0], [1], [0, 0, 1, 1], [], []>} : vector<2x256xbf16>, vector<256x128xbf16>, vector<2x128xf32> -> vector<2x128xf32>
    %c4_91 = arith.constant 4 : index
    %c0_92 = arith.constant 0 : index
    %c0_93 = arith.constant 0 : index
    %117 = vector.load %arg3[%c4_91, %c0_92, %c0_93] : memref<6x1x128xf32, #tpu.memory_space<vmem>>, vector<1x1x128xf32>
    %118 = vector.shape_cast %117 : vector<1x1x128xf32> to vector<1x128xf32>
    %119 = vector.broadcast %118 : vector<1x128xf32> to vector<2x128xf32>
    %120 = arith.addf %116, %119 : vector<2x128xf32>
    %cst_94 = arith.constant 0.000000e+00 : f32
    %121 = vector.broadcast %cst_94 : f32 to vector<2x128xf32>
    %122 = arith.cmpf oge, %120, %121 : vector<2x128xf32>
    %cst_95 = arith.constant 0.00999999977 : f32
    %123 = vector.broadcast %cst_95 : f32 to vector<2x128xf32>
    %124 = arith.mulf %123, %120 : vector<2x128xf32>
    %125 = arith.select %122, %120, %124 : vector<2x128xi1>, vector<2x128xf32>
    %126 = arith.truncf %125 : vector<2x128xf32> to vector<2x128xbf16>
    %c4_96 = arith.constant 4 : index
    %c0_97 = arith.constant 0 : index
    %c0_98 = arith.constant 0 : index
    %127 = vector.load %arg4[%c4_96, %c0_97, %c0_98] : memref<6x128x1664xbf16, #tpu.memory_space<vmem>>, vector<1x128x1664xbf16>
    %128 = vector.shape_cast %127 : vector<1x128x1664xbf16> to vector<128x1664xbf16>
    %cst_99 = arith.constant dense<0.000000e+00> : vector<2x1664xf32>
    %129 = tpu.matmul %126, %128, %cst_99 {dimension_numbers = #tpu.dot_dimension_numbers<[1], [0], [0], [1], [0, 0, 1, 1], [], []>} : vector<2x128xbf16>, vector<128x1664xbf16>, vector<2x1664xf32> -> vector<2x1664xf32>
    %c4_100 = arith.constant 4 : index
    %c0_101 = arith.constant 0 : index
    %c0_102 = arith.constant 0 : index
    %130 = vector.load %arg5[%c4_100, %c0_101, %c0_102] : memref<6x1x1664xf32, #tpu.memory_space<vmem>>, vector<1x1x1664xf32>
    %131 = vector.shape_cast %130 : vector<1x1x1664xf32> to vector<1x1664xf32>
    %132 = vector.broadcast %131 : vector<1x1664xf32> to vector<2x1664xf32>
    %133 = arith.addf %129, %132 : vector<2x1664xf32>
    %134 = tpu.concatenate %133, %2 in 1 : vector<2x1664xf32>, vector<2x640xf32> -> vector<2x2304xf32>
    %c4_103 = arith.constant 4 : index
    %c0_104 = arith.constant 0 : index
    %c0_105 = arith.constant 0 : index
    %135 = vector.load %arg7[%c4_103, %c0_104, %c0_105] : memref<6x2x2304xf32, #tpu.memory_space<vmem>>, vector<1x2x2304xf32>
    %136 = vector.shape_cast %135 : vector<1x2x2304xf32> to vector<2x2304xf32>
    %137 = vector.shape_cast %134 : vector<2x2304xf32> to vector<1x2x2304xf32>
    tpu.vector_store %arg7[%c4_103, %c0_104, %c0_105], %137 {strides = array<i32>} : memref<6x2x2304xf32, #tpu.memory_space<vmem>>, vector<1x2x2304xf32>,
    %c5 = arith.constant 5 : index
    %c0_106 = arith.constant 0 : index
    %c0_107 = arith.constant 0 : index
    %138 = vector.load %arg1[%c5, %c0_106, %c0_107] : memref<6x2x256xf32, #tpu.memory_space<vmem>>, vector<1x2x256xf32>
    %139 = vector.shape_cast %138 : vector<1x2x256xf32> to vector<2x256xf32>
    %140 = arith.truncf %139 : vector<2x256xf32> to vector<2x256xbf16>
    %c5_108 = arith.constant 5 : index
    %c0_109 = arith.constant 0 : index
    %c0_110 = arith.constant 0 : index
    %141 = vector.load %arg2[%c5_108, %c0_109, %c0_110] : memref<6x256x128xbf16, #tpu.memory_space<vmem>>, vector<1x256x128xbf16>
    %142 = vector.shape_cast %141 : vector<1x256x128xbf16> to vector<256x128xbf16>
    %cst_111 = arith.constant dense<0.000000e+00> : vector<2x128xf32>
    %143 = tpu.matmul %140, %142, %cst_111 {dimension_numbers = #tpu.dot_dimension_numbers<[1], [0], [0], [1], [0, 0, 1, 1], [], []>} : vector<2x256xbf16>, vector<256x128xbf16>, vector<2x128xf32> -> vector<2x128xf32>
    %c5_112 = arith.constant 5 : index
    %c0_113 = arith.constant 0 : index
    %c0_114 = arith.constant 0 : index
    %144 = vector.load %arg3[%c5_112, %c0_113, %c0_114] : memref<6x1x128xf32, #tpu.memory_space<vmem>>, vector<1x1x128xf32>
    %145 = vector.shape_cast %144 : vector<1x1x128xf32> to vector<1x128xf32>
    %146 = vector.broadcast %145 : vector<1x128xf32> to vector<2x128xf32>
    %147 = arith.addf %143, %146 : vector<2x128xf32>
    %cst_115 = arith.constant 0.000000e+00 : f32
    %148 = vector.broadcast %cst_115 : f32 to vector<2x128xf32>
    %149 = arith.cmpf oge, %147, %148 : vector<2x128xf32>
    %cst_116 = arith.constant 0.00999999977 : f32
    %150 = vector.broadcast %cst_116 : f32 to vector<2x128xf32>
    %151 = arith.mulf %150, %147 : vector<2x128xf32>
    %152 = arith.select %149, %147, %151 : vector<2x128xi1>, vector<2x128xf32>
    %153 = arith.truncf %152 : vector<2x128xf32> to vector<2x128xbf16>
    %c5_117 = arith.constant 5 : index
    %c0_118 = arith.constant 0 : index
    %c0_119 = arith.constant 0 : index
    %154 = vector.load %arg4[%c5_117, %c0_118, %c0_119] : memref<6x128x1664xbf16, #tpu.memory_space<vmem>>, vector<1x128x1664xbf16>
    %155 = vector.shape_cast %154 : vector<1x128x1664xbf16> to vector<128x1664xbf16>
    %cst_120 = arith.constant dense<0.000000e+00> : vector<2x1664xf32>
    %156 = tpu.matmul %153, %155, %cst_120 {dimension_numbers = #tpu.dot_dimension_numbers<[1], [0], [0], [1], [0, 0, 1, 1], [], []>} : vector<2x128xbf16>, vector<128x1664xbf16>, vector<2x1664xf32> -> vector<2x1664xf32>
    %c5_121 = arith.constant 5 : index
    %c0_122 = arith.constant 0 : index
    %c0_123 = arith.constant 0 : index
    %157 = vector.load %arg5[%c5_121, %c0_122, %c0_123] : memref<6x1x1664xf32, #tpu.memory_space<vmem>>, vector<1x1x1664xf32>
    %158 = vector.shape_cast %157 : vector<1x1x1664xf32> to vector<1x1664xf32>
    %159 = vector.broadcast %158 : vector<1x1664xf32> to vector<2x1664xf32>
    %160 = arith.addf %156, %159 : vector<2x1664xf32>
    %161 = tpu.concatenate %160, %2 in 1 : vector<2x1664xf32>, vector<2x640xf32> -> vector<2x2304xf32>
    %c5_124 = arith.constant 5 : index
    %c0_125 = arith.constant 0 : index
    %c0_126 = arith.constant 0 : index
    %162 = vector.load %arg7[%c5_124, %c0_125, %c0_126] : memref<6x2x2304xf32, #tpu.memory_space<vmem>>, vector<1x2x2304xf32>
    %163 = vector.shape_cast %162 : vector<1x2x2304xf32> to vector<2x2304xf32>
    %164 = vector.shape_cast %161 : vector<2x2304xf32> to vector<1x2x2304xf32>
    tpu.vector_store %arg7[%c5_124, %c0_125, %c0_126], %164 {strides = array<i32>} : memref<6x2x2304xf32, #tpu.memory_space<vmem>>, vector<1x2x2304xf32>,
    return
  }
  func.func @transform_0(%arg0: i32) -> (i32, i32, i32) {
    %c0_i32 = arith.constant 0 : i32
    %c0_i32_0 = arith.constant 0 : i32
    %c0_i32_1 = arith.constant 0 : i32
    return %arg0, %c0_i32, %c0_i32_0 : i32, i32, i32
  }
  func.func @transform_1(%arg0: i32) -> (i32, i32, i32) {
    %c0_i32 = arith.constant 0 : i32
    %c0_i32_0 = arith.constant 0 : i32
    %c0_i32_1 = arith.constant 0 : i32
    return %arg0, %c0_i32, %c0_i32_0 : i32, i32, i32
  }
  func.func @transform_2(%arg0: i32) -> (i32, i32, i32) {
    %c0_i32 = arith.constant 0 : i32
    %c0_i32_0 = arith.constant 0 : i32
    %c0_i32_1 = arith.constant 0 : i32
    return %arg0, %c0_i32, %c0_i32_0 : i32, i32, i32
  }
  func.func @transform_3(%arg0: i32) -> (i32, i32, i32) {
    %c0_i32 = arith.constant 0 : i32
    %c0_i32_0 = arith.constant 0 : i32
    %c0_i32_1 = arith.constant 0 : i32
    return %arg0, %c0_i32, %c0_i32_0 : i32, i32, i32
  }
  func.func @transform_4(%arg0: i32) -> (i32, i32, i32) {
    %c0_i32 = arith.constant 0 : i32
    %c0_i32_0 = arith.constant 0 : i32
    %c0_i32_1 = arith.constant 0 : i32
    return %arg0, %c0_i32, %c0_i32_0 : i32, i32, i32
  }
  func.func @transform_5(%arg0: i32) -> (i32, i32) {
    %c0_i32 = arith.constant 0 : i32
    %c0_i32_0 = arith.constant 0 : i32
    %c0_i32_1 = arith.constant 0 : i32
    return %c0_i32, %c0_i32_0 : i32, i32
  }
  func.func @transform_6(%arg0: i32) -> (i32, i32, i32) {
    %c0_i32 = arith.constant 0 : i32
    %c0_i32_0 = arith.constant 0 : i32
    %c0_i32_1 = arith.constant 0 : i32
    return %arg0, %c0_i32, %c0_i32_0 : i32, i32, i32
  }
}

</mosaic_0001>

<llo_original>
// kernel: cal_style_codes_pallas.1
$region0: #{cal_style_codes_pallas.1}
  #allocation0 [shape = 'u32[]', space=smem, size = 0x4, offset = 0x4, fixed_abs, tag = 'smem constant byte address 0x4 - core index']
  #allocation1 [shape = 'u32[144,128]{1,0:T(1,128)}', space=vmem, size = 0x12000, scoped, tag = 'internal scratch']
  %s0 = inlined_call_operand.hbm [shape: f32[12,2,256], index: 0, kind: input, shape index: {}]
  %s1 = inlined_call_operand.hbm [shape: bf16[12,256,128], index: 1, kind: input, shape index: {}]
  %s2 = inlined_call_operand.hbm [shape: f32[12,1,128], index: 2, kind: input, shape index: {}]
  %s3 = inlined_call_operand.hbm [shape: bf16[12,128,1664], index: 3, kind: input, shape index: {}]
  %s4 = inlined_call_operand.hbm [shape: f32[12,1,1664], index: 4, kind: input, shape index: {}]
  %s5 = inlined_call_operand.hbm [shape: f32[1,640], index: 5, kind: input, shape index: {}]
  %s6 = inlined_call_operand.vmem [shape: f32[12,2,2304], index: 6, kind: output, shape index: {}]
  %s7 = sld [smem:[#allocation0]]
  $region81: #{cal_style_codes_pallas.1} parent=0
    _
  %s9 = ssub.s32 1, %s7
  %s10 = scalar_select 0, %s9, %s7
  $region1: #{cal_style_codes_pallas.1} parent=0
    #allocation2 [shape = 'u8[24576]{0}', space=vmem, size = 0x6000, scoped, tag = 'input window, operand 0']
    #allocation3 [shape = 's32[2]{0}', space=sflag, size = 0x8, scoped, tag = 'scoped memory for cal_style_codes_pallas.1']
    #allocation4 [shape = 'u8[786432]{0}', space=vmem, size = 0xc0000, scoped, tag = 'input window, operand 1']
    #allocation5 [shape = 's32[2]{0}', space=sflag, size = 0x8, scoped, tag = 'scoped memory for cal_style_codes_pallas.1']
    #allocation6 [shape = 'u8[6144]{0}', space=vmem, size = 0x1800, scoped, tag = 'input window, operand 2']
    #allocation7 [shape = 'u8[5111808]{0}', space=vmem, size = 0x4e0000, scoped, tag = 'input window, operand 3']
    #allocation8 [shape = 's32[2]{0}', space=sflag, size = 0x8, scoped, tag = 'scoped memory for cal_style_codes_pallas.1']
    #allocation9 [shape = 'u8[79872]{0}', space=vmem, size = 0x13800, scoped, tag = 'input window, operand 4']
    #allocation10 [shape = 'u8[2560]{0}', space=vmem, size = 0xc00, scoped, tag = 'input window, operand 5, single buffered']
    #allocation11 [shape = 's32[1]{0}', space=sflag, size = 0x4, scoped, tag = 'scoped memory for cal_style_codes_pallas.1']
    %11 = vsyncpa [#allocation3], 0
    %s12 = scalar_lea.sflag [#allocation3], 1
    %13 = vsyncpa %s12, 0
    %14 = vsyncpa [#allocation5], 0
    %s15 = scalar_lea.sflag [#allocation5], 1
    %16 = vsyncpa %s15, 0
    %17 = vsyncpa [#allocation8], 0
    %s18 = scalar_lea.sflag [#allocation8], 1
    %19 = vsyncpa %s18, 0
    %20 = vsyncpa [#allocation11], 0
    loop: start=0, step=1, limit=4
    $region2: #{cal_style_codes_pallas.1} parent=1 // loop_pre_header
      _
    $region3: #{cal_style_codes_pallas.1} parent=1 // loop_header
      %s22 = sphi 0, %s26
      %p23 = scmp.ge.s32.totalorder %s22, 4
      %s32 = sphi 0, %s34
      %s35 = sphi 0, %s32
      %s36 = sphi 0, %s35
      %s52 = sphi 0, %s36
      %s58 = sphi 0, %s60
      %s61 = sphi 0, %s58
      %s62 = sphi 0, %s61
      %s78 = sphi 0, %s62
      %s84 = sphi 0, %s86
      %s87 = sphi 0, %s84
      %s88 = sphi 0, %s87
      %s104 = sphi 0, %s88
      %s110 = sphi 0, %s112
      %s113 = sphi 0, %s110
      %s114 = sphi 0, %s113
      %s130 = sphi 0, %s114
      %s136 = sphi 0, %s138
      %s139 = sphi 0, %s136
      %s140 = sphi 0, %s139
      %s156 = sphi 0, %s140
      %s160 = sphi 0, %s160
      %s162 = sphi 0, %s160
      %s163 = sphi 0, %s162
      %s177 = sphi 0, %s163
      %s183 = sphi 0, %s185
      %s186 = sphi 0, %s183
      %s187 = sphi 0, %s186
      %s203 = sphi 0, %s187
    $region4: #{cal_style_codes_pallas.1} parent=1 // loop_header_branch
      %25 = sbr.rel (%p23) target = $region8
    $region5: #{cal_style_codes_pallas.1} parent=1 // loop_body
      %s27 = ssub.s32 %s22, 1
      %s28 = ssub.s32 %s22, 2
      %s29 = sadd.s32 %s22, 1
      %s30 = ssub.s32 %s22, %s29
      %p31 = scmp.eq.s32.totalorder %s30, 0
      %s33 = sadd.s32 %s32, 1
      %s34 = scalar_select %p31, %s32, %s33
      %p37 = pneg %p31
      %p38 = scmp.eq.s32.totalorder %s22, 1
      %p39 = por %p37, %p38
      %p40 = scmp.ne.s32.totalorder %s32, %s35
      %p41 = scmp.eq.s32.totalorder %s22, 0
      %p42 = por %p40, %p41
      %p43 = scmp.ne.s32.totalorder %s32, %s35
      %p44 = scmp.eq.s32.totalorder %s27, 1
      %p45 = por %p43, %p44
      %p46 = scmp.ne.s32.totalorder %s35, %s36
      %p47 = scmp.eq.s32.totalorder %s27, 0
      %p48 = por %p46, %p47
      %p49 = scmp.ne.s32.totalorder %s35, %s36
      %p50 = scmp.eq.s32.totalorder %s28, 1
      %p51 = por %p49, %p50
      %p53 = scmp.ne.s32.totalorder %s36, %s52
      %p54 = scmp.eq.s32.totalorder %s28, 0
      %p55 = por %p53, %p54
      %s56 = ssub.s32 %s22, %s29
      %p57 = scmp.eq.s32.totalorder %s56, 0
      %s59 = sadd.s32 %s58, 1
      %s60 = scalar_select %p57, %s58, %s59
      %p63 = pneg %p57
      %p64 = scmp.eq.s32.totalorder %s22, 1
      %p65 = por %p63, %p64
      %p66 = scmp.ne.s32.totalorder %s58, %s61
      %p67 = scmp.eq.s32.totalorder %s22, 0
      %p68 = por %p66, %p67
      %p69 = scmp.ne.s32.totalorder %s58, %s61
      %p70 = scmp.eq.s32.totalorder %s27, 1
      %p71 = por %p69, %p70
      %p72 = scmp.ne.s32.totalorder %s61, %s62
      %p73 = scmp.eq.s32.totalorder %s27, 0
      %p74 = por %p72, %p73
      %p75 = scmp.ne.s32.totalorder %s61, %s62
      %p76 = scmp.eq.s32.totalorder %s28, 1
      %p77 = por %p75, %p76
      %p79 = scmp.ne.s32.totalorder %s62, %s78
      %p80 = scmp.eq.s32.totalorder %s28, 0
      %p81 = por %p79, %p80
      %s82 = ssub.s32 %s22, %s29
      %p83 = scmp.eq.s32.totalorder %s82, 0
      %s85 = sadd.s32 %s84, 1
      %s86 = scalar_select %p83, %s84, %s85
      %p89 = pneg %p83
      %p90 = scmp.eq.s32.totalorder %s22, 1
      %p91 = por %p89, %p90
      %p92 = scmp.ne.s32.totalorder %s84, %s87
      %p93 = scmp.eq.s32.totalorder %s22, 0
      %p94 = por %p92, %p93
      %p95 = scmp.ne.s32.totalorder %s84, %s87
      %p96 = scmp.eq.s32.totalorder %s27, 1
      %p97 = por %p95, %p96
      %p98 = scmp.ne.s32.totalorder %s87, %s88
      %p99 = scmp.eq.s32.totalorder %s27, 0
      %p100 = por %p98, %p99
      %p101 = scmp.ne.s32.totalorder %s87, %s88
      %p102 = scmp.eq.s32.totalorder %s28, 1
      %p103 = por %p101, %p102
      %p105 = scmp.ne.s32.totalorder %s88, %s104
      %p106 = scmp.eq.s32.totalorder %s28, 0
      %p107 = por %p105, %p106
      %s108 = ssub.s32 %s22, %s29
      %p109 = scmp.eq.s32.totalorder %s108, 0
      %s111 = sadd.s32 %s110, 1
      %s112 = scalar_select %p109, %s110, %s111
      %p115 = pneg %p109
      %p116 = scmp.eq.s32.totalorder %s22, 1
      %p117 = por %p115, %p116
      %p118 = scmp.ne.s32.totalorder %s110, %s113
      %p119 = scmp.eq.s32.totalorder %s22, 0
      %p120 = por %p118, %p119
      %p121 = scmp.ne.s32.totalorder %s110, %s113
      %p122 = scmp.eq.s32.totalorder %s27, 1
      %p123 = por %p121, %p122
      %p124 = scmp.ne.s32.totalorder %s113, %s114
      %p125 = scmp.eq.s32.totalorder %s27, 0
      %p126 = por %p124, %p125
      %p127 = scmp.ne.s32.totalorder %s113, %s114
      %p128 = scmp.eq.s32.totalorder %s28, 1
      %p129 = por %p127, %p128
      %p131 = scmp.ne.s32.totalorder %s114, %s130
      %p132 = scmp.eq.s32.totalorder %s28, 0
      %p133 = por %p131, %p132
      %s134 = ssub.s32 %s22, %s29
      %p135 = scmp.eq.s32.totalorder %s134, 0
      %s137 = sadd.s32 %s136, 1
      %s138 = scalar_select %p135, %s136, %s137
      %p141 = pneg %p135
      %p142 = scmp.eq.s32.totalorder %s22, 1
      %p143 = por %p141, %p142
      %p144 = scmp.ne.s32.totalorder %s136, %s139
      %p145 = scmp.eq.s32.totalorder %s22, 0
      %p146 = por %p144, %p145
      %p147 = scmp.ne.s32.totalorder %s136, %s139
      %p148 = scmp.eq.s32.totalorder %s27, 1
      %p149 = por %p147, %p148
      %p150 = scmp.ne.s32.totalorder %s139, %s140
      %p151 = scmp.eq.s32.totalorder %s27, 0
      %p152 = por %p150, %p151
      %p153 = scmp.ne.s32.totalorder %s139, %s140
      %p154 = scmp.eq.s32.totalorder %s28, 1
      %p155 = por %p153, %p154
      %p157 = scmp.ne.s32.totalorder %s140, %s156
      %p158 = scmp.eq.s32.totalorder %s28, 0
      %p159 = por %p157, %p158
      %s161 = sadd.s32 %s160, 1
      %p164 = scmp.eq.s32.totalorder %s22, 1
      %p165 = scmp.ne.s32.totalorder %s160, %s162
      %p166 = scmp.eq.s32.totalorder %s22, 0
      %p167 = por %p165, %p166
      %p168 = scmp.ne.s32.totalorder %s160, %s162
      %p169 = scmp.eq.s32.totalorder %s27, 1
      %p170 = por %p168, %p169
      %p171 = scmp.ne.s32.totalorder %s162, %s163
      %p172 = scmp.eq.s32.totalorder %s27, 0
      %p173 = por %p171, %p172
      %p174 = scmp.ne.s32.totalorder %s162, %s163
      %p175 = scmp.eq.s32.totalorder %s28, 1
      %p176 = por %p174, %p175
      %p178 = scmp.ne.s32.totalorder %s163, %s177
      %p179 = scmp.eq.s32.totalorder %s28, 0
      %p180 = por %p178, %p179
      %s181 = ssub.s32 %s22, %s29
      %p182 = scmp.eq.s32.totalorder %s181, 0
      %s184 = sadd.s32 %s183, 1
      %s185 = scalar_select %p182, %s183, %s184
      %p188 = pneg %p182
      %p189 = scmp.eq.s32.totalorder %s22, 1
      %p190 = por %p188, %p189
      %p191 = scmp.ne.s32.totalorder %s183, %s186
      %p192 = scmp.eq.s32.totalorder %s22, 0
      %p193 = por %p191, %p192
      %p194 = scmp.ne.s32.totalorder %s183, %s186
      %p195 = scmp.eq.s32.totalorder %s27, 1
      %p196 = por %p194, %p195
      %p197 = scmp.ne.s32.totalorder %s186, %s187
      %p198 = scmp.eq.s32.totalorder %s27, 0
      %p199 = por %p197, %p198
      %p200 = scmp.ne.s32.totalorder %s186, %s187
      %p201 = scmp.eq.s32.totalorder %s28, 1
      %p202 = por %p200, %p201
      %p204 = scmp.ne.s32.totalorder %s187, %s203
      %p205 = scmp.eq.s32.totalorder %s28, 0
      %p206 = por %p204, %p205
      %p207 = scmp.le.s32.totalorder 1, %s22
      %p208 = scmp.lt.s32.totalorder %s22, 3
      %p209 = pnand %p207, %p208
      %p210 = pneg %p209
      // Predicated region
      $region9: #{cal_style_codes_pallas.1} parent=5 // pred_check
        _
      $region10: #{cal_style_codes_pallas.1} parent=5 // pred_check_branch
        %212 = sbr.rel (%p209) target = $region12
      $region11: #{cal_style_codes_pallas.1} parent=5 // pred_region
        %s213 = ssub.s32 %s22, 1
        // Predicated region
        $region13: #{cal_style_codes_pallas.1} parent=11 // pred_check
          %p214 = pneg %p173
        $region14: #{cal_style_codes_pallas.1} parent=11 // pred_check_branch
          %216 = sbr.rel (%p214) target = $region16
        $region15: #{cal_style_codes_pallas.1} parent=11 // pred_region
          %s218 = ssub.s32 80, 80
          %219 = vsyncadd [#allocation11], %s218
          %s221 = sshll.u32 [#allocation10], 4
          %s222 = int_to_ptr.vmem [resolvable:$true] %s221
          %224 = dma.hbm_to_vmem [thread:$0]  %s5, 80, %s222, [#allocation11]
        $region16: #{cal_style_codes_pallas.1} parent=11 // pred_fallthru
          _
      $region12: #{cal_style_codes_pallas.1} parent=5 // pred_fallthru
        _
      %p225 = scmp.lt.s32.totalorder %s22, 2
      // Predicated region
      $region17: #{cal_style_codes_pallas.1} parent=5 // pred_check
        %p226 = pneg %p225
      $region18: #{cal_style_codes_pallas.1} parent=5 // pred_check_branch
        %228 = sbr.rel (%p226) target = $region20
      $region19: #{cal_style_codes_pallas.1} parent=5 // pred_region
        // Predicated region
        $region21: #{cal_style_codes_pallas.1} parent=19 // pred_check
          %p229 = pneg %p42
        $region22: #{cal_style_codes_pallas.1} parent=19 // pred_check_branch
          %231 = sbr.rel (%p229) target = $region24
        $region23: #{cal_style_codes_pallas.1} parent=19 // pred_region
          %s232 = sand.u32 %s32, 1
          %s233 = scalar_lea.sflag [#allocation3], %s232
          %s234 = sand.u32 %s32, 1
          %s235 = smul.addr %s234, 24
          %s236 = scalar_lea.vmem [#allocation2], %s235
          %s237 = smul.u32 6, %s22
          %s239 = ssub.s32 384, 384
          %240 = vsyncadd %s233, %s239
          %s241 = smul.addr %s237, 2
          %s242 = smul.addr %s241, 32
          %s243 = scalar_lea.hbm %s0, %s242
          %s244 = sshll.u32 %s236, 4
          %s245 = int_to_ptr.vmem [resolvable:$true] %s244
          %250 = dma.hbm_to_vmem [thread:$0]  %s243, 384, %s245, %s233, 64, 64, 4
        $region24: #{cal_style_codes_pallas.1} parent=19 // pred_fallthru
          _
        // Predicated region
        $region25: #{cal_style_codes_pallas.1} parent=19 // pred_check
          %p251 = pneg %p68
        $region26: #{cal_style_codes_pallas.1} parent=19 // pred_check_branch
          %253 = sbr.rel (%p251) target = $region28
        $region27: #{cal_style_codes_pallas.1} parent=19 // pred_region
          %s254 = sand.u32 %s22, 1
          %s255 = scalar_lea.sflag [#allocation5], %s254
          %s256 = sand.u32 %s58, 1
          %s257 = smul.addr %s256, 768
          %s258 = scalar_lea.vmem [#allocation4], %s257
          %s259 = smul.u32 6, %s22
          %s261 = ssub.s32 12288, 12288
          %262 = vsyncadd %s255, %s261
          %s263 = smul.addr %s259, 32
          %s264 = smul.addr %s263, 64
          %s265 = scalar_lea.hbm %s1, %s264
          %s266 = sshll.u32 %s258, 4
          %s267 = int_to_ptr.vmem [resolvable:$true] %s266
          %272 = dma.hbm_to_vmem [thread:$0]  %s265, 12288, %s267, %s255, 64, 64, 4
        $region28: #{cal_style_codes_pallas.1} parent=19 // pred_fallthru
          _
        // Predicated region
        $region29: #{cal_style_codes_pallas.1} parent=19 // pred_check
          %p273 = pneg %p94
        $region30: #{cal_style_codes_pallas.1} parent=19 // pred_check_branch
          %275 = sbr.rel (%p273) target = $region32
        $region31: #{cal_style_codes_pallas.1} parent=19 // pred_region
          %s276 = sand.u32 %s22, 1
          %s277 = scalar_lea.sflag [#allocation5], %s276
          %s278 = sand.u32 %s84, 1
          %s279 = smul.addr %s278, 6
          %s280 = scalar_lea.vmem [#allocation6], %s279
          %s281 = smul.u32 6, %s22
          %s283 = ssub.s32 96, 96
          %284 = vsyncadd %s277, %s283
          %s285 = smul.addr %s281, 16
          %s286 = scalar_lea.hbm %s2, %s285
          %s287 = sshll.u32 %s280, 4
          %s288 = int_to_ptr.vmem [resolvable:$true] %s287
          %293 = dma.hbm_to_vmem [thread:$0]  %s286, 96, %s288, %s277, 16, 16, 1
        $region32: #{cal_style_codes_pallas.1} parent=19 // pred_fallthru
          _
        // Predicated region
        $region33: #{cal_style_codes_pallas.1} parent=19 // pred_check
          %p294 = pneg %p120
        $region34: #{cal_style_codes_pallas.1} parent=19 // pred_check_branch
          %296 = sbr.rel (%p294) target = $region36
        $region35: #{cal_style_codes_pallas.1} parent=19 // pred_region
          %s297 = sand.u32 %s22, 1
          %s298 = scalar_lea.sflag [#allocation8], %s297
          %s299 = sand.u32 %s110, 1
          %s300 = smul.addr %s299, 4992
          %s301 = scalar_lea.vmem [#allocation7], %s300
          %s302 = smul.u32 6, %s22
          %s304 = ssub.s32 79872, 79872
          %305 = vsyncadd %s298, %s304
          %s306 = smul.addr %s302, 208
          %s307 = smul.addr %s306, 64
          %s308 = scalar_lea.hbm %s3, %s307
          %s309 = sshll.u32 %s301, 4
          %s310 = int_to_ptr.vmem [resolvable:$true] %s309
          %315 = dma.hbm_to_vmem [thread:$0]  %s308, 79872, %s310, %s298, 832, 832, 52
        $region36: #{cal_style_codes_pallas.1} parent=19 // pred_fallthru
          _
        // Predicated region
        $region37: #{cal_style_codes_pallas.1} parent=19 // pred_check
          %p316 = pneg %p146
        $region38: #{cal_style_codes_pallas.1} parent=19 // pred_check_branch
          %318 = sbr.rel (%p316) target = $region40
        $region39: #{cal_style_codes_pallas.1} parent=19 // pred_region
          %s319 = sand.u32 %s22, 1
          %s320 = scalar_lea.sflag [#allocation8], %s319
          %s321 = sand.u32 %s136, 1
          %s322 = smul.addr %s321, 78
          %s323 = scalar_lea.vmem [#allocation9], %s322
          %s324 = smul.u32 6, %s22
          %s326 = ssub.s32 1248, 1248
          %327 = vsyncadd %s320, %s326
          %s328 = smul.addr %s324, 13
          %s329 = smul.addr %s328, 16
          %s330 = scalar_lea.hbm %s4, %s329
          %s331 = sshll.u32 %s323, 4
          %s332 = int_to_ptr.vmem [resolvable:$true] %s331
          %337 = dma.hbm_to_vmem [thread:$0]  %s330, 1248, %s332, %s320, 208, 208, 13
        $region40: #{cal_style_codes_pallas.1} parent=19 // pred_fallthru
          _
      $region20: #{cal_style_codes_pallas.1} parent=5 // pred_fallthru
        _
      %p338 = scmp.le.s32.totalorder 1, %s22
      %p339 = scmp.lt.s32.totalorder %s22, 3
      %p340 = pnand %p338, %p339
      %p341 = pneg %p340
      // Predicated region
      $region41: #{cal_style_codes_pallas.1} parent=5 // pred_check
        _
      $region42: #{cal_style_codes_pallas.1} parent=5 // pred_check_branch
        %343 = sbr.rel (%p340) target = $region44
      $region43: #{cal_style_codes_pallas.1} parent=5 // pred_region
        %s344 = ssub.s32 %s22, 1
        %s345 = sand.u32 %s35, 1
        %s346 = scalar_lea.sflag [#allocation3], %s345
        %s347 = sand.u32 %s35, 1
        %s348 = smul.addr %s347, 24
        %s349 = scalar_lea.vmem [#allocation2], %s348
        // Predicated region
        $region45: #{cal_style_codes_pallas.1} parent=43 // pred_check
          %p350 = pneg %p48
        $region46: #{cal_style_codes_pallas.1} parent=43 // pred_check_branch
          %352 = sbr.rel (%p350) target = $region48
        $region47: #{cal_style_codes_pallas.1} parent=43 // pred_region
          %353 = dma.done %s346, 384
        $region48: #{cal_style_codes_pallas.1} parent=43 // pred_fallthru
          _
        %s354 = sand.u32 %s27, 1
        %s355 = scalar_lea.sflag [#allocation5], %s354
        %s356 = sand.u32 %s61, 1
        %s357 = smul.addr %s356, 768
        %s358 = scalar_lea.vmem [#allocation4], %s357
        // Predicated region
        $region49: #{cal_style_codes_pallas.1} parent=43 // pred_check
          %p359 = pneg %p74
        $region50: #{cal_style_codes_pallas.1} parent=43 // pred_check_branch
          %361 = sbr.rel (%p359) target = $region52
        $region51: #{cal_style_codes_pallas.1} parent=43 // pred_region
          %362 = dma.done %s355, 12288
        $region52: #{cal_style_codes_pallas.1} parent=43 // pred_fallthru
          _
        %s363 = sand.u32 %s27, 1
        %s364 = scalar_lea.sflag [#allocation5], %s363
        %s365 = sand.u32 %s87, 1
        %s366 = smul.addr %s365, 6
        %s367 = scalar_lea.vmem [#allocation6], %s366
        // Predicated region
        $region53: #{cal_style_codes_pallas.1} parent=43 // pred_check
          %p368 = pneg %p100
        $region54: #{cal_style_codes_pallas.1} parent=43 // pred_check_branch
          %370 = sbr.rel (%p368) target = $region56
        $region55: #{cal_style_codes_pallas.1} parent=43 // pred_region
          %371 = dma.done %s364, 96
        $region56: #{cal_style_codes_pallas.1} parent=43 // pred_fallthru
          _
        %s372 = sand.u32 %s27, 1
        %s373 = scalar_lea.sflag [#allocation8], %s372
        %s374 = sand.u32 %s113, 1
        %s375 = smul.addr %s374, 4992
        %s376 = scalar_lea.vmem [#allocation7], %s375
        // Predicated region
        $region57: #{cal_style_codes_pallas.1} parent=43 // pred_check
          %p377 = pneg %p126
        $region58: #{cal_style_codes_pallas.1} parent=43 // pred_check_branch
          %379 = sbr.rel (%p377) target = $region60
        $region59: #{cal_style_codes_pallas.1} parent=43 // pred_region
          %380 = dma.done %s373, 79872
        $region60: #{cal_style_codes_pallas.1} parent=43 // pred_fallthru
          _
        %s381 = sand.u32 %s27, 1
        %s382 = scalar_lea.sflag [#allocation8], %s381
        %s383 = sand.u32 %s139, 1
        %s384 = smul.addr %s383, 78
        %s385 = scalar_lea.vmem [#allocation9], %s384
        // Predicated region
        $region61: #{cal_style_codes_pallas.1} parent=43 // pred_check
          %p386 = pneg %p152
        $region62: #{cal_style_codes_pallas.1} parent=43 // pred_check_branch
          %388 = sbr.rel (%p386) target = $region64
        $region63: #{cal_style_codes_pallas.1} parent=43 // pred_region
          %389 = dma.done %s382, 1248
        $region64: #{cal_style_codes_pallas.1} parent=43 // pred_fallthru
          _
        // Predicated region
        $region65: #{cal_style_codes_pallas.1} parent=43 // pred_check
          %p390 = pneg %p173
        $region66: #{cal_style_codes_pallas.1} parent=43 // pred_check_branch
          %392 = sbr.rel (%p390) target = $region68
        $region67: #{cal_style_codes_pallas.1} parent=43 // pred_region
          %393 = dma.done [#allocation11], 80
        $region68: #{cal_style_codes_pallas.1} parent=43 // pred_fallthru
          _
        %s394 = sand.u32 %s35, 1
        %s395 = scalar_lea.sflag [#allocation3], %s394
        %s396 = sand.u32 %s35, 1
        %s397 = smul.addr %s396, 24
        %s398 = scalar_lea.vmem [#allocation2], %s397
        %p399 = pneg %p48
        %p400 = pneg %p45
        %s401 = sand.u32 %s27, 1
        %s402 = scalar_lea.sflag [#allocation5], %s401
        %s403 = sand.u32 %s61, 1
        %s404 = smul.addr %s403, 768
        %s405 = scalar_lea.vmem [#allocation4], %s404
        %p406 = pneg %p74
        %p407 = pneg %p71
        %s408 = sand.u32 %s27, 1
        %s409 = scalar_lea.sflag [#allocation5], %s408
        %s410 = sand.u32 %s87, 1
        %s411 = smul.addr %s410, 6
        %s412 = scalar_lea.vmem [#allocation6], %s411
        %p413 = pneg %p100
        %p414 = pneg %p97
        %s415 = sand.u32 %s27, 1
        %s416 = scalar_lea.sflag [#allocation8], %s415
        %s417 = sand.u32 %s113, 1
        %s418 = smul.addr %s417, 4992
        %s419 = scalar_lea.vmem [#allocation7], %s418
        %p420 = pneg %p126
        %p421 = pneg %p123
        %s422 = sand.u32 %s27, 1
        %s423 = scalar_lea.sflag [#allocation8], %s422
        %s424 = sand.u32 %s139, 1
        %s425 = smul.addr %s424, 78
        %s426 = scalar_lea.vmem [#allocation9], %s425
        %p427 = pneg %p152
        %p428 = pneg %p149
        %p429 = pneg %p173
        %p430 = pneg %p170
        %p431 = pneg %p199
        %p432 = pneg %p196
        %s433 = smul.u32 6, %s27
        %p434 = scmp.lt.s32.totalorder %s433, 11
        %s435 = scalar_select %p434, %s433, 11
        %s436 = smul.addr %s435, 18
        %s437 = smul.addr %s436, 2
        %s438 = scalar_lea.vmem %s6, %s437
        %s439 = smul.u32 6, %s27
        %s440 = smul.u32 6, %s27
        %s441 = smul.u32 6, %s27
        %s442 = smul.u32 6, %s27
        %s443 = smul.u32 6, %s27
        %s444 = smul.u32 6, %s27
        %p445 = scmp.lt.s32.totalorder %s444, 11
        %s446 = scalar_select %p445, %s444, 11
        %s447 = smul.addr %s446, 18
        %s448 = smul.addr %s447, 2
        %s449 = scalar_lea.vmem %s6, %s448
        %s450 = smul.u32 6, %s27
        %v452 = vld [vmem:[#allocation10] sm:$0x1f]
        %v454 = vlaneseq
        %v455 = vshrl.u32 %v454, 7
        %v456 = vsub.s32 0, %v455
        %v457 = vrot.slane %v452, %v456
        %v458 = vlaneseq
        %v459 = vshrl.u32 %v458, 7
        %v460 = vsub.s32 1, %v459
        %v461 = vrot.slane %v452, %v460
        %v462 = vlaneseq
        %v463 = vshrl.u32 %v462, 7
        %v464 = vsub.s32 2, %v463
        %v465 = vrot.slane %v452, %v464
        %v466 = vlaneseq
        %v467 = vshrl.u32 %v466, 7
        %v468 = vsub.s32 3, %v467
        %v469 = vrot.slane %v452, %v468
        %v470 = vlaneseq
        %v471 = vshrl.u32 %v470, 7
        %v472 = vsub.s32 4, %v471
        %v473 = vrot.slane %v452, %v472
        %v474 = vld [vmem:[%s349] sm:$0xf]
        %v477 = vunpack.c.l.s4 1983009808
        %v478 = vunpack.c.0.s8 %v477
        %v479 = vlaneseq
        %v480 = vshrl.u32 %v479, 7
        %v481 = vsub.s32 %v478, %v480
        %v482 = vrot.slane %v474, %v481
        %v483 = vcombine.high %v482, %v482
        %v486 = vpack.c.bf16 %v482, %v482
        %v487 = vpack.c.bf16 %v483, %v483
        %v488 = vld [vmem:[%s358] sm:$0xf]
        %v489 = vld [vmem:[%s358 + $0x4] sm:$0xf]
        %v490 = vld [vmem:[%s358 + $0x8] sm:$0xf]
        %v491 = vld [vmem:[%s358 + $0xc] sm:$0xf]
        %v492 = vld [vmem:[%s358 + $0x10] sm:$0xf]
        %v493 = vld [vmem:[%s358 + $0x14] sm:$0xf]
        %v494 = vld [vmem:[%s358 + $0x18] sm:$0xf]
        %v495 = vld [vmem:[%s358 + $0x1c] sm:$0xf]
        %v496 = vld [vmem:[%s358 + $0x20] sm:$0xf]
        %v497 = vld [vmem:[%s358 + $0x24] sm:$0xf]
        %v498 = vld [vmem:[%s358 + $0x28] sm:$0xf]
        %v499 = vld [vmem:[%s358 + $0x2c] sm:$0xf]
        %v500 = vld [vmem:[%s358 + $0x30] sm:$0xf]
        %v501 = vld [vmem:[%s358 + $0x34] sm:$0xf]
        %v502 = vld [vmem:[%s358 + $0x38] sm:$0xf]
        %v503 = vld [vmem:[%s358 + $0x3c] sm:$0xf]
        %v504 = vld [vmem:[%s358 + $0x40] sm:$0xf]
        %v505 = vld [vmem:[%s358 + $0x44] sm:$0xf]
        %v506 = vld [vmem:[%s358 + $0x48] sm:$0xf]
        %v507 = vld [vmem:[%s358 + $0x4c] sm:$0xf]
        %v508 = vld [vmem:[%s358 + $0x50] sm:$0xf]
        %v509 = vld [vmem:[%s358 + $0x54] sm:$0xf]
        %v510 = vld [vmem:[%s358 + $0x58] sm:$0xf]
        %v511 = vld [vmem:[%s358 + $0x5c] sm:$0xf]
        %v512 = vld [vmem:[%s358 + $0x60] sm:$0xf]
        %v513 = vld [vmem:[%s358 + $0x64] sm:$0xf]
        %v514 = vld [vmem:[%s358 + $0x68] sm:$0xf]
        %v515 = vld [vmem:[%s358 + $0x6c] sm:$0xf]
        %v516 = vld [vmem:[%s358 + $0x70] sm:$0xf]
        %v517 = vld [vmem:[%s358 + $0x74] sm:$0xf]
        %v518 = vld [vmem:[%s358 + $0x78] sm:$0xf]
        %v519 = vld [vmem:[%s358 + $0x7c] sm:$0xf]
        %v520 = vld [vmem:[%s367] sm:$0x1]
        %v522 = vlaneseq
        %v523 = vshrl.u32 %v522, 7
        %v524 = vsub.s32 0, %v523
        %v525 = vrot.slane %v520, %v524
        %v559 = vunpack.c.l.b16 %v488
        %v560 = vunpack.c.l.b16 %v489
        %v561 = vunpack.c.l.b16 %v490
        %v562 = vunpack.c.l.b16 %v491
        %v563 = vunpack.c.l.b16 %v492
        %v564 = vunpack.c.l.b16 %v493
        %v565 = vunpack.c.l.b16 %v494
        %v566 = vunpack.c.l.b16 %v495
        %v567 = vunpack.c.l.b16 %v496
        %v568 = vunpack.c.l.b16 %v497
        %v569 = vunpack.c.l.b16 %v498
        %v570 = vunpack.c.l.b16 %v499
        %v571 = vunpack.c.l.b16 %v500
        %v572 = vunpack.c.l.b16 %v501
        %v573 = vunpack.c.l.b16 %v502
        %v574 = vunpack.c.l.b16 %v503
        %v575 = vunpack.c.l.b16 %v504
        %v576 = vunpack.c.l.b16 %v505
        %v577 = vunpack.c.l.b16 %v506
        %v578 = vunpack.c.l.b16 %v507
        %v579 = vunpack.c.l.b16 %v508
        %v580 = vunpack.c.l.b16 %v509
        %v581 = vunpack.c.l.b16 %v510
        %v582 = vunpack.c.l.b16 %v511
        %v583 = vunpack.c.l.b16 %v512
        %v584 = vunpack.c.l.b16 %v513
        %v585 = vunpack.c.l.b16 %v514
        %v586 = vunpack.c.l.b16 %v515
        %v587 = vunpack.c.l.b16 %v516
        %v588 = vunpack.c.l.b16 %v517
        %v589 = vunpack.c.l.b16 %v518
        %v590 = vunpack.c.l.b16 %v519
        %v591 = vpack.c.b16 %v560, %v559
        %v592 = vpack.c.b16 %v562, %v561
        %v593 = vpack.c.b16 %v564, %v563
        %v594 = vpack.c.b16 %v566, %v565
        %v595 = vpack.c.b16 %v568, %v567
        %v596 = vpack.c.b16 %v570, %v569
        %v597 = vpack.c.b16 %v572, %v571
        %v598 = vpack.c.b16 %v574, %v573
        %v599 = vpack.c.b16 %v576, %v575
        %v600 = vpack.c.b16 %v578, %v577
        %v601 = vpack.c.b16 %v580, %v579
        %v602 = vpack.c.b16 %v582, %v581
        %v603 = vpack.c.b16 %v584, %v583
        %v604 = vpack.c.b16 %v586, %v585
        %v605 = vpack.c.b16 %v588, %v587
        %v606 = vpack.c.b16 %v590, %v589
        %623 = vmatprep.subr.bf16.mxu0 0
        %624 = vmatpush1.bf16.msra.mxu0 %v598
        %625 = vmatprep.subr.bf16.mxu0 0
        %626 = vmatpush1.bf16.msra.mxu0 %v597
        %627 = vmatprep.subr.bf16.mxu0 0
        %628 = vmatpush1.bf16.msra.mxu0 %v596
        %629 = vmatprep.subr.bf16.mxu0 0
        %630 = vmatpush1.bf16.msra.mxu0 %v595
        %631 = vmatprep.subr.bf16.mxu0 0
        %632 = vmatpush1.bf16.msra.mxu0 %v594
        %633 = vmatprep.subr.bf16.mxu0 0
        %634 = vmatpush1.bf16.msra.mxu0 %v593
        %635 = vmatprep.subr.bf16.mxu0 0
        %636 = vmatpush1.bf16.msra.mxu0 %v592
        %637 = vmatprep.subr.bf16.mxu0 0
        %638 = vmatpush1.bf16.msra.mxu0 %v591
        %639 = vmatprep.subr.bf16.mxu0 0
        %640 = vmatpush2.bf16.msra.mxu0 %v606
        %641 = vmatprep.subr.bf16.mxu0 0
        %642 = vmatpush2.bf16.msra.mxu0 %v605
        %643 = vmatprep.subr.bf16.mxu0 0
        %644 = vmatpush2.bf16.msra.mxu0 %v604
        %645 = vmatprep.subr.bf16.mxu0 0
        %646 = vmatpush2.bf16.msra.mxu0 %v603
        %647 = vmatprep.subr.bf16.mxu0 0
        %648 = vmatpush2.bf16.msra.mxu0 %v602
        %649 = vmatprep.subr.bf16.mxu0 0
        %650 = vmatpush2.bf16.msra.mxu0 %v601
        %651 = vmatprep.subr.bf16.mxu0 0
        %652 = vmatpush2.bf16.msra.mxu0 %v600
        %653 = vmatprep.subr.bf16.mxu0 0
        %654 = vmatpush2.bf16.msra.mxu0 %v599
        %655 = vmatprep.mubr.bf16.mxu0 %v487
        %656 = vmatmul.mubr.bf16.gmra.mxu0 %v486
        %v657 = vpop.f32.mrf.mxu0
        %v658 = vadd.f32 %v525, %v657
        %v659 = vpop.f32.mrf.mxu0
        %v660 = vpop.f32.mrf.mxu0
        %v661 = vpop.f32.mrf.mxu0
        %662 = vdwg.mxu0
        %vm663 = vcmp.ge.f32.partialorder %v658, 0.0
        %v664 = vmul.f32 %v658, 0.01
        %v665 = vsel %vm663, %v658, %v664
        %v666 = vpack.c.bf16 %v665, %v665
        %v667 = vld [vmem:[%s376] sm:$0xff]
        %v668 = vld [vmem:[%s376 + $0x8] sm:$0xff]
        %v669 = vld [vmem:[%s376 + $0x10] sm:$0xff]
        %v670 = vld [vmem:[%s376 + $0x18] sm:$0xff]
        %v671 = vld [vmem:[%s376 + $0x20] sm:$0xff]
        %v672 = vld [vmem:[%s376 + $0x28] sm:$0xff]
        %v673 = vld [vmem:[%s376 + $0x30] sm:$0xf]
        %v674 = vld [vmem:[%s376 + $0x34] sm:$0xff]
        %v675 = vld [vmem:[%s376 + $0x3c] sm:$0xff]
        %v676 = vld [vmem:[%s376 + $0x44] sm:$0xff]
        %v677 = vld [vmem:[%s376 + $0x4c] sm:$0xff]
        %v678 = vld [vmem:[%s376 + $0x54] sm:$0xff]
        %v679 = vld [vmem:[%s376 + $0x5c] sm:$0xff]
        %v680 = vld [vmem:[%s376 + $0x64] sm:$0xf]
        %v681 = vld [vmem:[%s376 + $0x68] sm:$0xff]
        %v682 = vld [vmem:[%s376 + $0x70] sm:$0xff]
        %v683 = vld [vmem:[%s376 + $0x78] sm:$0xff]
        %v684 = vld [vmem:[%s376 + $0x80] sm:$0xff]
        %v685 = vld [vmem:[%s376 + $0x88] sm:$0xff]
        %v686 = vld [vmem:[%s376 + $0x90] sm:$0xff]
        %v687 = vld [vmem:[%s376 + $0x98] sm:$0xf]
        %v688 = vld [vmem:[%s376 + $0x9c] sm:$0xff]
        %v689 = vld [vmem:[%s376 + $0xa4] sm:$0xff]
        %v690 = vld [vmem:[%s376 + $0xac] sm:$0xff]
        %v691 = vld [vmem:[%s376 + $0xb4] sm:$0xff]
        %v692 = vld [vmem:[%s376 + $0xbc] sm:$0xff]
        %v693 = vld [vmem:[%s376 + $0xc4] sm:$0xff]
        %v694 = vld [vmem:[%s376 + $0xcc] sm:$0xf]
        %v695 = vld [vmem:[%s376 + $0xd0] sm:$0xff]
        %v696 = vld [vmem:[%s376 + $0xd8] sm:$0xff]
        %v697 = vld [vmem:[%s376 + $0xe0] sm:$0xff]
        %v698 = vld [vmem:[%s376 + $0xe8] sm:$0xff]
        %v699 = vld [vmem:[%s376 + $0xf0] sm:$0xff]
        %v700 = vld [vmem:[%s376 + $0xf8] sm:$0xff]
        %v701 = vld [vmem:[%s376 + $0x100] sm:$0xf]
        %v702 = vld [vmem:[%s376 + $0x104] sm:$0xff]
        %v703 = vld [vmem:[%s376 + $0x10c] sm:$0xff]
        %v704 = vld [vmem:[%s376 + $0x114] sm:$0xff]
        %v705 = vld [vmem:[%s376 + $0x11c] sm:$0xff]
        %v706 = vld [vmem:[%s376 + $0x124] sm:$0xff]
        %v707 = vld [vmem:[%s376 + $0x12c] sm:$0xff]
        %v708 = vld [vmem:[%s376 + $0x134] sm:$0xf]
        %v709 = vld [vmem:[%s376 + $0x138] sm:$0xff]
        %v710 = vld [vmem:[%s376 + $0x140] sm:$0xff]
        %v711 = vld [vmem:[%s376 + $0x148] sm:$0xff]
        %v712 = vld [vmem:[%s376 + $0x150] sm:$0xff]
        %v713 = vld [vmem:[%s376 + $0x158] sm:$0xff]
        %v714 = vld [vmem:[%s376 + $0x160] sm:$0xff]
        %v715 = vld [vmem:[%s376 + $0x168] sm:$0xf]
        %v716 = vld [vmem:[%s376 + $0x16c] sm:$0xff]
        %v717 = vld [vmem:[%s376 + $0x174] sm:$0xff]
        %v718 = vld [vmem:[%s376 + $0x17c] sm:$0xff]
        %v719 = vld [vmem:[%s376 + $0x184] sm:$0xff]
        %v720 = vld [vmem:[%s376 + $0x18c] sm:$0xff]
        %v721 = vld [vmem:[%s376 + $0x194] sm:$0xff]
        %v722 = vld [vmem:[%s376 + $0x19c] sm:$0xf]
        %v723 = vld [vmem:[%s376 + $0x1a0] sm:$0xff]
        %v724 = vld [vmem:[%s376 + $0x1a8] sm:$0xff]
        %v725 = vld [vmem:[%s376 + $0x1b0] sm:$0xff]
        %v726 = vld [vmem:[%s376 + $0x1b8] sm:$0xff]
        %v727 = vld [vmem:[%s376 + $0x1c0] sm:$0xff]
        %v728 = vld [vmem:[%s376 + $0x1c8] sm:$0xff]
        %v729 = vld [vmem:[%s376 + $0x1d0] sm:$0xf]
        %v730 = vld [vmem:[%s376 + $0x1d4] sm:$0xff]
        %v731 = vld [vmem:[%s376 + $0x1dc] sm:$0xff]
        %v732 = vld [vmem:[%s376 + $0x1e4] sm:$0xff]
        %v733 = vld [vmem:[%s376 + $0x1ec] sm:$0xff]
        %v734 = vld [vmem:[%s376 + $0x1f4] sm:$0xff]
        %v735 = vld [vmem:[%s376 + $0x1fc] sm:$0xff]
        %v736 = vld [vmem:[%s376 + $0x204] sm:$0xf]
        %v737 = vld [vmem:[%s376 + $0x208] sm:$0xff]
        %v738 = vld [vmem:[%s376 + $0x210] sm:$0xff]
        %v739 = vld [vmem:[%s376 + $0x218] sm:$0xff]
        %v740 = vld [vmem:[%s376 + $0x220] sm:$0xff]
        %v741 = vld [vmem:[%s376 + $0x228] sm:$0xff]
        %v742 = vld [vmem:[%s376 + $0x230] sm:$0xff]
        %v743 = vld [vmem:[%s376 + $0x238] sm:$0xf]
        %v744 = vld [vmem:[%s376 + $0x23c] sm:$0xff]
        %v745 = vld [vmem:[%s376 + $0x244] sm:$0xff]
        %v746 = vld [vmem:[%s376 + $0x24c] sm:$0xff]
        %v747 = vld [vmem:[%s376 + $0x254] sm:$0xff]
        %v748 = vld [vmem:[%s376 + $0x25c] sm:$0xff]
        %v749 = vld [vmem:[%s376 + $0x264] sm:$0xff]
        %v750 = vld [vmem:[%s376 + $0x26c] sm:$0xf]
        %v751 = vld [vmem:[%s376 + $0x270] sm:$0xff]
        %v752 = vld [vmem:[%s376 + $0x278] sm:$0xff]
        %v753 = vld [vmem:[%s376 + $0x280] sm:$0xff]
        %v754 = vld [vmem:[%s376 + $0x288] sm:$0xff]
        %v755 = vld [vmem:[%s376 + $0x290] sm:$0xff]
        %v756 = vld [vmem:[%s376 + $0x298] sm:$0xff]
        %v757 = vld [vmem:[%s376 + $0x2a0] sm:$0xf]
        %v758 = vld [vmem:[%s376 + $0x2a4] sm:$0xff]
        %v759 = vld [vmem:[%s376 + $0x2ac] sm:$0xff]
        %v760 = vld [vmem:[%s376 + $0x2b4] sm:$0xff]
        %v761 = vld [vmem:[%s376 + $0x2bc] sm:$0xff]
        %v762 = vld [vmem:[%s376 + $0x2c4] sm:$0xff]
        %v763 = vld [vmem:[%s376 + $0x2cc] sm:$0xff]
        %v764 = vld [vmem:[%s376 + $0x2d4] sm:$0xf]
        %v765 = vld [vmem:[%s376 + $0x2d8] sm:$0xff]
        %v766 = vld [vmem:[%s376 + $0x2e0] sm:$0xff]
        %v767 = vld [vmem:[%s376 + $0x2e8] sm:$0xff]
        %v768 = vld [vmem:[%s376 + $0x2f0] sm:$0xff]
        %v769 = vld [vmem:[%s376 + $0x2f8] sm:$0xff]
        %v770 = vld [vmem:[%s376 + $0x300] sm:$0xff]
        %v771 = vld [vmem:[%s376 + $0x308] sm:$0xf]
        %v772 = vld [vmem:[%s376 + $0x30c] sm:$0xff]
        %v773 = vld [vmem:[%s376 + $0x314] sm:$0xff]
        %v774 = vld [vmem:[%s376 + $0x31c] sm:$0xff]
        %v775 = vld [vmem:[%s376 + $0x324] sm:$0xff]
        %v776 = vld [vmem:[%s376 + $0x32c] sm:$0xff]
        %v777 = vld [vmem:[%s376 + $0x334] sm:$0xff]
        %v778 = vld [vmem:[%s376 + $0x33c] sm:$0xf]
        %v779 = vld [vmem:[%s385] sm:$0xff]
        %v780 = vld [vmem:[%s385 + $0x8] sm:$0x1f]
        %v783 = vlaneseq
        %v784 = vshrl.u32 %v783, 7
        %v785 = vsub.s32 0, %v784
        %v786 = vrot.slane %v779, %v785
        %v787 = vlaneseq
        %v788 = vshrl.u32 %v787, 7
        %v789 = vsub.s32 1, %v788
        %v790 = vrot.slane %v779, %v789
        %v791 = vlaneseq
        %v792 = vshrl.u32 %v791, 7
        %v793 = vsub.s32 2, %v792
        %v794 = vrot.slane %v779, %v793
        %v795 = vlaneseq
        %v796 = vshrl.u32 %v795, 7
        %v797 = vsub.s32 3, %v796
        %v798 = vrot.slane %v779, %v797
        %v799 = vlaneseq
        %v800 = vshrl.u32 %v799, 7
        %v801 = vsub.s32 4, %v800
        %v802 = vrot.slane %v779, %v801
        %v803 = vlaneseq
        %v804 = vshrl.u32 %v803, 7
        %v805 = vsub.s32 5, %v804
        %v806 = vrot.slane %v779, %v805
        %v807 = vlaneseq
        %v808 = vshrl.u32 %v807, 7
        %v809 = vsub.s32 6, %v808
        %v810 = vrot.slane %v779, %v809
        %v811 = vlaneseq
        %v812 = vshrl.u32 %v811, 7
        %v813 = vsub.s32 7, %v812
        %v814 = vrot.slane %v779, %v813
        %v815 = vlaneseq
        %v816 = vshrl.u32 %v815, 7
        %v817 = vsub.s32 0, %v816
        %v818 = vrot.slane %v780, %v817
        %v819 = vlaneseq
        %v820 = vshrl.u32 %v819, 7
        %v821 = vsub.s32 1, %v820
        %v822 = vrot.slane %v780, %v821
        %v823 = vlaneseq
        %v824 = vshrl.u32 %v823, 7
        %v825 = vsub.s32 2, %v824
        %v826 = vrot.slane %v780, %v825
        %v827 = vlaneseq
        %v828 = vshrl.u32 %v827, 7
        %v829 = vsub.s32 3, %v828
        %v830 = vrot.slane %v780, %v829
        %v831 = vlaneseq
        %v832 = vshrl.u32 %v831, 7
        %v833 = vsub.s32 4, %v832
        %v834 = vrot.slane %v780, %v833
        %v960 = vunpack.c.l.b16 %v667
        %v961 = vunpack.c.h.b16 %v667
        %v962 = vunpack.c.l.b16 %v668
        %v963 = vunpack.c.h.b16 %v668
        %v964 = vunpack.c.l.b16 %v669
        %v965 = vunpack.c.h.b16 %v669
        %v966 = vunpack.c.l.b16 %v670
        %v967 = vunpack.c.h.b16 %v670
        %v968 = vunpack.c.l.b16 %v671
        %v969 = vunpack.c.h.b16 %v671
        %v970 = vunpack.c.l.b16 %v672
        %v971 = vunpack.c.h.b16 %v672
        %v972 = vunpack.c.l.b16 %v673
        %v973 = vunpack.c.l.b16 %v674
        %v974 = vunpack.c.h.b16 %v674
        %v975 = vunpack.c.l.b16 %v675
        %v976 = vunpack.c.h.b16 %v675
        %v977 = vunpack.c.l.b16 %v676
        %v978 = vunpack.c.h.b16 %v676
        %v979 = vunpack.c.l.b16 %v677
        %v980 = vunpack.c.h.b16 %v677
        %v981 = vunpack.c.l.b16 %v678
        %v982 = vunpack.c.h.b16 %v678
        %v983 = vunpack.c.l.b16 %v679
        %v984 = vunpack.c.h.b16 %v679
        %v985 = vunpack.c.l.b16 %v680
        %v986 = vunpack.c.l.b16 %v681
        %v987 = vunpack.c.h.b16 %v681
        %v988 = vunpack.c.l.b16 %v682
        %v989 = vunpack.c.h.b16 %v682
        %v990 = vunpack.c.l.b16 %v683
        %v991 = vunpack.c.h.b16 %v683
        %v992 = vunpack.c.l.b16 %v684
        %v993 = vunpack.c.h.b16 %v684
        %v994 = vunpack.c.l.b16 %v685
        %v995 = vunpack.c.h.b16 %v685
        %v996 = vunpack.c.l.b16 %v686
        %v997 = vunpack.c.h.b16 %v686
        %v998 = vunpack.c.l.b16 %v687
        %v999 = vunpack.c.l.b16 %v688
        %v1000 = vunpack.c.h.b16 %v688
        %v1001 = vunpack.c.l.b16 %v689
        %v1002 = vunpack.c.h.b16 %v689
        %v1003 = vunpack.c.l.b16 %v690
        %v1004 = vunpack.c.h.b16 %v690
        %v1005 = vunpack.c.l.b16 %v691
        %v1006 = vunpack.c.h.b16 %v691
        %v1007 = vunpack.c.l.b16 %v692
        %v1008 = vunpack.c.h.b16 %v692
        %v1009 = vunpack.c.l.b16 %v693
        %v1010 = vunpack.c.h.b16 %v693
        %v1011 = vunpack.c.l.b16 %v694
        %v1012 = vunpack.c.l.b16 %v695
        %v1013 = vunpack.c.h.b16 %v695
        %v1014 = vunpack.c.l.b16 %v696
        %v1015 = vunpack.c.h.b16 %v696
        %v1016 = vunpack.c.l.b16 %v697
        %v1017 = vunpack.c.h.b16 %v697
        %v1018 = vunpack.c.l.b16 %v698
        %v1019 = vunpack.c.h.b16 %v698
        %v1020 = vunpack.c.l.b16 %v699
        %v1021 = vunpack.c.h.b16 %v699
        %v1022 = vunpack.c.l.b16 %v700
        %v1023 = vunpack.c.h.b16 %v700
        %v1024 = vunpack.c.l.b16 %v701
        %v1025 = vunpack.c.l.b16 %v702
        %v1026 = vunpack.c.h.b16 %v702
        %v1027 = vunpack.c.l.b16 %v703
        %v1028 = vunpack.c.h.b16 %v703
        %v1029 = vunpack.c.l.b16 %v704
        %v1030 = vunpack.c.h.b16 %v704
        %v1031 = vunpack.c.l.b16 %v705
        %v1032 = vunpack.c.h.b16 %v705
        %v1033 = vunpack.c.l.b16 %v706
        %v1034 = vunpack.c.h.b16 %v706
        %v1035 = vunpack.c.l.b16 %v707
        %v1036 = vunpack.c.h.b16 %v707
        %v1037 = vunpack.c.l.b16 %v708
        %v1038 = vunpack.c.l.b16 %v709
        %v1039 = vunpack.c.h.b16 %v709
        %v1040 = vunpack.c.l.b16 %v710
        %v1041 = vunpack.c.h.b16 %v710
        %v1042 = vunpack.c.l.b16 %v711
        %v1043 = vunpack.c.h.b16 %v711
        %v1044 = vunpack.c.l.b16 %v712
        %v1045 = vunpack.c.h.b16 %v712
        %v1046 = vunpack.c.l.b16 %v713
        %v1047 = vunpack.c.h.b16 %v713
        %v1048 = vunpack.c.l.b16 %v714
        %v1049 = vunpack.c.h.b16 %v714
        %v1050 = vunpack.c.l.b16 %v715
        %v1051 = vunpack.c.l.b16 %v716
        %v1052 = vunpack.c.h.b16 %v716
        %v1053 = vunpack.c.l.b16 %v717
        %v1054 = vunpack.c.h.b16 %v717
        %v1055 = vunpack.c.l.b16 %v718
        %v1056 = vunpack.c.h.b16 %v718
        %v1057 = vunpack.c.l.b16 %v719
        %v1058 = vunpack.c.h.b16 %v719
        %v1059 = vunpack.c.l.b16 %v720
        %v1060 = vunpack.c.h.b16 %v720
        %v1061 = vunpack.c.l.b16 %v721
        %v1062 = vunpack.c.h.b16 %v721
        %v1063 = vunpack.c.l.b16 %v722
        %v1064 = vunpack.c.l.b16 %v723
        %v1065 = vunpack.c.h.b16 %v723
        %v1066 = vunpack.c.l.b16 %v724
        %v1067 = vunpack.c.h.b16 %v724
        %v1068 = vunpack.c.l.b16 %v725
        %v1069 = vunpack.c.h.b16 %v725
        %v1070 = vunpack.c.l.b16 %v726
        %v1071 = vunpack.c.h.b16 %v726
        %v1072 = vunpack.c.l.b16 %v727
        %v1073 = vunpack.c.h.b16 %v727
        %v1074 = vunpack.c.l.b16 %v728
        %v1075 = vunpack.c.h.b16 %v728
        %v1076 = vunpack.c.l.b16 %v729
        %v1077 = vunpack.c.l.b16 %v730
        %v1078 = vunpack.c.h.b16 %v730
        %v1079 = vunpack.c.l.b16 %v731
        %v1080 = vunpack.c.h.b16 %v731
        %v1081 = vunpack.c.l.b16 %v732
        %v1082 = vunpack.c.h.b16 %v732
        %v1083 = vunpack.c.l.b16 %v733
        %v1084 = vunpack.c.h.b16 %v733
        %v1085 = vunpack.c.l.b16 %v734
        %v1086 = vunpack.c.h.b16 %v734
        %v1087 = vunpack.c.l.b16 %v735
        %v1088 = vunpack.c.h.b16 %v735
        %v1089 = vunpack.c.l.b16 %v736
        %v1090 = vunpack.c.l.b16 %v737
        %v1091 = vunpack.c.h.b16 %v737
        %v1092 = vunpack.c.l.b16 %v738
        %v1093 = vunpack.c.h.b16 %v738
        %v1094 = vunpack.c.l.b16 %v739
        %v1095 = vunpack.c.h.b16 %v739
        %v1096 = vunpack.c.l.b16 %v740
        %v1097 = vunpack.c.h.b16 %v740
        %v1098 = vunpack.c.l.b16 %v741
        %v1099 = vunpack.c.h.b16 %v741
        %v1100 = vunpack.c.l.b16 %v742
        %v1101 = vunpack.c.h.b16 %v742
        %v1102 = vunpack.c.l.b16 %v743
        %v1103 = vunpack.c.l.b16 %v744
        %v1104 = vunpack.c.h.b16 %v744
        %v1105 = vunpack.c.l.b16 %v745
        %v1106 = vunpack.c.h.b16 %v745
        %v1107 = vunpack.c.l.b16 %v746
        %v1108 = vunpack.c.h.b16 %v746
        %v1109 = vunpack.c.l.b16 %v747
        %v1110 = vunpack.c.h.b16 %v747
        %v1111 = vunpack.c.l.b16 %v748
        %v1112 = vunpack.c.h.b16 %v748
        %v1113 = vunpack.c.l.b16 %v749
        %v1114 = vunpack.c.h.b16 %v749
        %v1115 = vunpack.c.l.b16 %v750
        %v1116 = vunpack.c.l.b16 %v751
        %v1117 = vunpack.c.h.b16 %v751
        %v1118 = vunpack.c.l.b16 %v752
        %v1119 = vunpack.c.h.b16 %v752
        %v1120 = vunpack.c.l.b16 %v753
        %v1121 = vunpack.c.h.b16 %v753
        %v1122 = vunpack.c.l.b16 %v754
        %v1123 = vunpack.c.h.b16 %v754
        %v1124 = vunpack.c.l.b16 %v755
        %v1125 = vunpack.c.h.b16 %v755
        %v1126 = vunpack.c.l.b16 %v756
        %v1127 = vunpack.c.h.b16 %v756
        %v1128 = vunpack.c.l.b16 %v757
        %v1129 = vunpack.c.l.b16 %v758
        %v1130 = vunpack.c.h.b16 %v758
        %v1131 = vunpack.c.l.b16 %v759
        %v1132 = vunpack.c.h.b16 %v759
        %v1133 = vunpack.c.l.b16 %v760
        %v1134 = vunpack.c.h.b16 %v760
        %v1135 = vunpack.c.l.b16 %v761
        %v1136 = vunpack.c.h.b16 %v761
        %v1137 = vunpack.c.l.b16 %v762
        %v1138 = vunpack.c.h.b16 %v762
        %v1139 = vunpack.c.l.b16 %v763
        %v1140 = vunpack.c.h.b16 %v763
        %v1141 = vunpack.c.l.b16 %v764
        %v1142 = vunpack.c.l.b16 %v765
        %v1143 = vunpack.c.h.b16 %v765
        %v1144 = vunpack.c.l.b16 %v766
        %v1145 = vunpack.c.h.b16 %v766
        %v1146 = vunpack.c.l.b16 %v767
        %v1147 = vunpack.c.h.b16 %v767
        %v1148 = vunpack.c.l.b16 %v768
        %v1149 = vunpack.c.h.b16 %v768
        %v1150 = vunpack.c.l.b16 %v769
        %v1151 = vunpack.c.h.b16 %v769
        %v1152 = vunpack.c.l.b16 %v770
        %v1153 = vunpack.c.h.b16 %v770
        %v1154 = vunpack.c.l.b16 %v771
        %v1155 = vunpack.c.l.b16 %v772
        %v1156 = vunpack.c.h.b16 %v772
        %v1157 = vunpack.c.l.b16 %v773
        %v1158 = vunpack.c.h.b16 %v773
        %v1159 = vunpack.c.l.b16 %v774
        %v1160 = vunpack.c.h.b16 %v774
        %v1161 = vunpack.c.l.b16 %v775
        %v1162 = vunpack.c.h.b16 %v775
        %v1163 = vunpack.c.l.b16 %v776
        %v1164 = vunpack.c.h.b16 %v776
        %v1165 = vunpack.c.l.b16 %v777
        %v1166 = vunpack.c.h.b16 %v777
        %v1167 = vunpack.c.l.b16 %v778
        %v1168 = vpack.c.b16 %v973, %v960
        %v1169 = vpack.c.b16 %v974, %v961
        %v1170 = vpack.c.b16 %v975, %v962
        %v1171 = vpack.c.b16 %v976, %v963
        %v1172 = vpack.c.b16 %v977, %v964
        %v1173 = vpack.c.b16 %v978, %v965
        %v1174 = vpack.c.b16 %v979, %v966
        %v1175 = vpack.c.b16 %v980, %v967
        %v1176 = vpack.c.b16 %v981, %v968
        %v1177 = vpack.c.b16 %v982, %v969
        %v1178 = vpack.c.b16 %v983, %v970
        %v1179 = vpack.c.b16 %v984, %v971
        %v1180 = vpack.c.b16 %v985, %v972
        %v1181 = vpack.c.b16 %v999, %v986
        %v1182 = vpack.c.b16 %v1000, %v987
        %v1183 = vpack.c.b16 %v1001, %v988
        %v1184 = vpack.c.b16 %v1002, %v989
        %v1185 = vpack.c.b16 %v1003, %v990
        %v1186 = vpack.c.b16 %v1004, %v991
        %v1187 = vpack.c.b16 %v1005, %v992
        %v1188 = vpack.c.b16 %v1006, %v993
        %v1189 = vpack.c.b16 %v1007, %v994
        %v1190 = vpack.c.b16 %v1008, %v995
        %v1191 = vpack.c.b16 %v1009, %v996
        %v1192 = vpack.c.b16 %v1010, %v997
        %v1193 = vpack.c.b16 %v1011, %v998
        %v1194 = vpack.c.b16 %v1025, %v1012
        %v1195 = vpack.c.b16 %v1026, %v1013
        %v1196 = vpack.c.b16 %v1027, %v1014
        %v1197 = vpack.c.b16 %v1028, %v1015
        %v1198 = vpack.c.b16 %v1029, %v1016
        %v1199 = vpack.c.b16 %v1030, %v1017
        %v1200 = vpack.c.b16 %v1031, %v1018
        %v1201 = vpack.c.b16 %v1032, %v1019
        %v1202 = vpack.c.b16 %v1033, %v1020
        %v1203 = vpack.c.b16 %v1034, %v1021
        %v1204 = vpack.c.b16 %v1035, %v1022
        %v1205 = vpack.c.b16 %v1036, %v1023
        %v1206 = vpack.c.b16 %v1037, %v1024
        %v1207 = vpack.c.b16 %v1051, %v1038
        %v1208 = vpack.c.b16 %v1052, %v1039
        %v1209 = vpack.c.b16 %v1053, %v1040
        %v1210 = vpack.c.b16 %v1054, %v1041
        %v1211 = vpack.c.b16 %v1055, %v1042
        %v1212 = vpack.c.b16 %v1056, %v1043
        %v1213 = vpack.c.b16 %v1057, %v1044
        %v1214 = vpack.c.b16 %v1058, %v1045
        %v1215 = vpack.c.b16 %v1059, %v1046
        %v1216 = vpack.c.b16 %v1060, %v1047
        %v1217 = vpack.c.b16 %v1061, %v1048
        %v1218 = vpack.c.b16 %v1062, %v1049
        %v1219 = vpack.c.b16 %v1063, %v1050
        %v1220 = vpack.c.b16 %v1077, %v1064
        %v1221 = vpack.c.b16 %v1078, %v1065
        %v1222 = vpack.c.b16 %v1079, %v1066
        %v1223 = vpack.c.b16 %v1080, %v1067
        %v1224 = vpack.c.b16 %v1081, %v1068
        %v1225 = vpack.c.b16 %v1082, %v1069
        %v1226 = vpack.c.b16 %v1083, %v1070
        %v1227 = vpack.c.b16 %v1084, %v1071
        %v1228 = vpack.c.b16 %v1085, %v1072
        %v1229 = vpack.c.b16 %v1086, %v1073
        %v1230 = vpack.c.b16 %v1087, %v1074
        %v1231 = vpack.c.b16 %v1088, %v1075
        %v1232 = vpack.c.b16 %v1089, %v1076
        %v1233 = vpack.c.b16 %v1103, %v1090
        %v1234 = vpack.c.b16 %v1104, %v1091
        %v1235 = vpack.c.b16 %v1105, %v1092
        %v1236 = vpack.c.b16 %v1106, %v1093
        %v1237 = vpack.c.b16 %v1107, %v1094
        %v1238 = vpack.c.b16 %v1108, %v1095
        %v1239 = vpack.c.b16 %v1109, %v1096
        %v1240 = vpack.c.b16 %v1110, %v1097
        %v1241 = vpack.c.b16 %v1111, %v1098
        %v1242 = vpack.c.b16 %v1112, %v1099
        %v1243 = vpack.c.b16 %v1113, %v1100
        %v1244 = vpack.c.b16 %v1114, %v1101
        %v1245 = vpack.c.b16 %v1115, %v1102
        %v1246 = vpack.c.b16 %v1129, %v1116
        %v1247 = vpack.c.b16 %v1130, %v1117
        %v1248 = vpack.c.b16 %v1131, %v1118
        %v1249 = vpack.c.b16 %v1132, %v1119
        %v1250 = vpack.c.b16 %v1133, %v1120
        %v1251 = vpack.c.b16 %v1134, %v1121
        %v1252 = vpack.c.b16 %v1135, %v1122
        %v1253 = vpack.c.b16 %v1136, %v1123
        %v1254 = vpack.c.b16 %v1137, %v1124
        %v1255 = vpack.c.b16 %v1138, %v1125
        %v1256 = vpack.c.b16 %v1139, %v1126
        %v1257 = vpack.c.b16 %v1140, %v1127
        %v1258 = vpack.c.b16 %v1141, %v1128
        %v1259 = vpack.c.b16 %v1155, %v1142
        %v1260 = vpack.c.b16 %v1156, %v1143
        %v1261 = vpack.c.b16 %v1157, %v1144
        %v1262 = vpack.c.b16 %v1158, %v1145
        %v1263 = vpack.c.b16 %v1159, %v1146
        %v1264 = vpack.c.b16 %v1160, %v1147
        %v1265 = vpack.c.b16 %v1161, %v1148
        %v1266 = vpack.c.b16 %v1162, %v1149
        %v1267 = vpack.c.b16 %v1163, %v1150
        %v1268 = vpack.c.b16 %v1164, %v1151
        %v1269 = vpack.c.b16 %v1165, %v1152
        %v1270 = vpack.c.b16 %v1166, %v1153
        %v1271 = vpack.c.b16 %v1167, %v1154
        %1376 = vmatprep.subr.bf16.mxu0 %v1260
        %1377 = vmatpush1.bf16.msra.mxu0 %v1259
        %1378 = vmatprep.subr.bf16.mxu0 %v1247
        %1379 = vmatpush1.bf16.msra.mxu0 %v1246
        %1380 = vmatprep.subr.bf16.mxu0 %v1234
        %1381 = vmatpush1.bf16.msra.mxu0 %v1233
        %1382 = vmatprep.subr.bf16.mxu0 %v1221
        %1383 = vmatpush1.bf16.msra.mxu0 %v1220
        %1384 = vmatprep.subr.bf16.mxu0 %v1208
        %1385 = vmatpush1.bf16.msra.mxu0 %v1207
        %1386 = vmatprep.subr.bf16.mxu0 %v1195
        %1387 = vmatpush1.bf16.msra.mxu0 %v1194
        %1388 = vmatprep.subr.bf16.mxu0 %v1182
        %1389 = vmatpush1.bf16.msra.mxu0 %v1181
        %1390 = vmatprep.subr.bf16.mxu0 %v1169
        %1391 = vmatpush1.bf16.msra.mxu0 %v1168
        %1392 = vmatprep.subr.bf16.mxu0 0
        %1393 = vmatpush2.bf16.msra.mxu0 0
        %1394 = vmatprep.subr.bf16.mxu0 0
        %1395 = vmatpush2.bf16.msra.mxu0 0
        %1396 = vmatprep.subr.bf16.mxu0 0
        %1397 = vmatpush2.bf16.msra.mxu0 0
        %1398 = vmatprep.subr.bf16.mxu0 0
        %1399 = vmatpush2.bf16.msra.mxu0 0
        %1400 = vmatprep.subr.bf16.mxu0 0
        %1401 = vmatpush2.bf16.msra.mxu0 0
        %1402 = vmatprep.subr.bf16.mxu0 0
        %1403 = vmatpush2.bf16.msra.mxu0 0
        %1404 = vmatprep.subr.bf16.mxu0 0
        %1405 = vmatpush2.bf16.msra.mxu0 0
        %1406 = vmatprep.subr.bf16.mxu0 0
        %1407 = vmatpush2.bf16.msra.mxu0 0
        %1408 = vmatprep.mubr.bf16.mxu0 0
        %1409 = vmatmul.mubr.bf16.gmra.mxu0 %v666
        %v1410 = vpop.f32.mrf.mxu0
        %v1411 = vadd.f32 %v786, %v1410
        %v1412 = vpop.f32.mrf.mxu0
        %v1413 = vadd.f32 %v790, %v1412
        %v1414 = vpop.f32.mrf.mxu0
        %v1415 = vpop.f32.mrf.mxu0
        %1416 = vdwg.mxu0
        %1417 = vmatprep.subr.bf16.mxu0 %v1262
        %1418 = vmatpush1.bf16.msra.mxu0 %v1261
        %1419 = vmatprep.subr.bf16.mxu0 %v1249
        %1420 = vmatpush1.bf16.msra.mxu0 %v1248
        %1421 = vmatprep.subr.bf16.mxu0 %v1236
        %1422 = vmatpush1.bf16.msra.mxu0 %v1235
        %1423 = vmatprep.subr.bf16.mxu0 %v1223
        %1424 = vmatpush1.bf16.msra.mxu0 %v1222
        %1425 = vmatprep.subr.bf16.mxu0 %v1210
        %1426 = vmatpush1.bf16.msra.mxu0 %v1209
        %1427 = vmatprep.subr.bf16.mxu0 %v1197
        %1428 = vmatpush1.bf16.msra.mxu0 %v1196
        %1429 = vmatprep.subr.bf16.mxu0 %v1184
        %1430 = vmatpush1.bf16.msra.mxu0 %v1183
        %1431 = vmatprep.subr.bf16.mxu0 %v1171
        %1432 = vmatpush1.bf16.msra.mxu0 %v1170
        %1433 = vmatprep.subr.bf16.mxu0 0
        %1434 = vmatpush2.bf16.msra.mxu0 0
        %1435 = vmatprep.subr.bf16.mxu0 0
        %1436 = vmatpush2.bf16.msra.mxu0 0
        %1437 = vmatprep.subr.bf16.mxu0 0
        %1438 = vmatpush2.bf16.msra.mxu0 0
        %1439 = vmatprep.subr.bf16.mxu0 0
        %1440 = vmatpush2.bf16.msra.mxu0 0
        %1441 = vmatprep.subr.bf16.mxu0 0
        %1442 = vmatpush2.bf16.msra.mxu0 0
        %1443 = vmatprep.subr.bf16.mxu0 0
        %1444 = vmatpush2.bf16.msra.mxu0 0
        %1445 = vmatprep.subr.bf16.mxu0 0
        %1446 = vmatpush2.bf16.msra.mxu0 0
        %1447 = vmatprep.subr.bf16.mxu0 0
        %1448 = vmatpush2.bf16.msra.mxu0 0
        %1449 = vmatprep.mubr.bf16.mxu0 0
        %1450 = vmatmul.mubr.bf16.gmra.mxu0 %v666
        %v1451 = vpop.f32.mrf.mxu0
        %v1452 = vadd.f32 %v794, %v1451
        %v1453 = vpop.f32.mrf.mxu0
        %v1454 = vadd.f32 %v798, %v1453
        %v1455 = vpop.f32.mrf.mxu0
        %v1456 = vpop.f32.mrf.mxu0
        %1457 = vdwg.mxu0
        %1458 = vmatprep.subr.bf16.mxu0 %v1264
        %1459 = vmatpush1.bf16.msra.mxu0 %v1263
        %1460 = vmatprep.subr.bf16.mxu0 %v1251
        %1461 = vmatpush1.bf16.msra.mxu0 %v1250
        %1462 = vmatprep.subr.bf16.mxu0 %v1238
        %1463 = vmatpush1.bf16.msra.mxu0 %v1237
        %1464 = vmatprep.subr.bf16.mxu0 %v1225
        %1465 = vmatpush1.bf16.msra.mxu0 %v1224
        %1466 = vmatprep.subr.bf16.mxu0 %v1212
        %1467 = vmatpush1.bf16.msra.mxu0 %v1211
        %1468 = vmatprep.subr.bf16.mxu0 %v1199
        %1469 = vmatpush1.bf16.msra.mxu0 %v1198
        %1470 = vmatprep.subr.bf16.mxu0 %v1186
        %1471 = vmatpush1.bf16.msra.mxu0 %v1185
        %1472 = vmatprep.subr.bf16.mxu0 %v1173
        %1473 = vmatpush1.bf16.msra.mxu0 %v1172
        %1474 = vmatprep.subr.bf16.mxu0 0
        %1475 = vmatpush2.bf16.msra.mxu0 0
        %1476 = vmatprep.subr.bf16.mxu0 0
        %1477 = vmatpush2.bf16.msra.mxu0 0
        %1478 = vmatprep.subr.bf16.mxu0 0
        %1479 = vmatpush2.bf16.msra.mxu0 0
        %1480 = vmatprep.subr.bf16.mxu0 0
        %1481 = vmatpush2.bf16.msra.mxu0 0
        %1482 = vmatprep.subr.bf16.mxu0 0
        %1483 = vmatpush2.bf16.msra.mxu0 0
        %1484 = vmatprep.subr.bf16.mxu0 0
        %1485 = vmatpush2.bf16.msra.mxu0 0
        %1486 = vmatprep.subr.bf16.mxu0 0
        %1487 = vmatpush2.bf16.msra.mxu0 0
        %1488 = vmatprep.subr.bf16.mxu0 0
        %1489 = vmatpush2.bf16.msra.mxu0 0
        %1490 = vmatprep.mubr.bf16.mxu0 0
        %1491 = vmatmul.mubr.bf16.gmra.mxu0 %v666
        %v1492 = vpop.f32.mrf.mxu0
        %v1493 = vadd.f32 %v802, %v1492
        %v1494 = vpop.f32.mrf.mxu0
        %v1495 = vadd.f32 %v806, %v1494
        %v1496 = vpop.f32.mrf.mxu0
        %v1497 = vpop.f32.mrf.mxu0
        %1498 = vdwg.mxu0
        %1499 = vmatprep.subr.bf16.mxu0 %v1266
        %1500 = vmatpush1.bf16.msra.mxu0 %v1265
        %1501 = vmatprep.subr.bf16.mxu0 %v1253
        %1502 = vmatpush1.bf16.msra.mxu0 %v1252
        %1503 = vmatprep.subr.bf16.mxu0 %v1240
        %1504 = vmatpush1.bf16.msra.mxu0 %v1239
        %1505 = vmatprep.subr.bf16.mxu0 %v1227
        %1506 = vmatpush1.bf16.msra.mxu0 %v1226
        %1507 = vmatprep.subr.bf16.mxu0 %v1214
        %1508 = vmatpush1.bf16.msra.mxu0 %v1213
        %1509 = vmatprep.subr.bf16.mxu0 %v1201
        %1510 = vmatpush1.bf16.msra.mxu0 %v1200
        %1511 = vmatprep.subr.bf16.mxu0 %v1188
        %1512 = vmatpush1.bf16.msra.mxu0 %v1187
        %1513 = vmatprep.subr.bf16.mxu0 %v1175
        %1514 = vmatpush1.bf16.msra.mxu0 %v1174
        %1515 = vmatprep.subr.bf16.mxu0 0
        %1516 = vmatpush2.bf16.msra.mxu0 0
        %1517 = vmatprep.subr.bf16.mxu0 0
        %1518 = vmatpush2.bf16.msra.mxu0 0
        %1519 = vmatprep.subr.bf16.mxu0 0
        %1520 = vmatpush2.bf16.msra.mxu0 0
        %1521 = vmatprep.subr.bf16.mxu0 0
        %1522 = vmatpush2.bf16.msra.mxu0 0
        %1523 = vmatprep.subr.bf16.mxu0 0
        %1524 = vmatpush2.bf16.msra.mxu0 0
        %1525 = vmatprep.subr.bf16.mxu0 0
        %1526 = vmatpush2.bf16.msra.mxu0 0
        %1527 = vmatprep.subr.bf16.mxu0 0
        %1528 = vmatpush2.bf16.msra.mxu0 0
        %1529 = vmatprep.subr.bf16.mxu0 0
        %1530 = vmatpush2.bf16.msra.mxu0 0
        %1531 = vmatprep.mubr.bf16.mxu0 0
        %1532 = vmatmul.mubr.bf16.gmra.mxu0 %v666
        %v1533 = vpop.f32.mrf.mxu0
        %v1534 = vadd.f32 %v810, %v1533
        %v1535 = vpop.f32.mrf.mxu0
        %v1536 = vadd.f32 %v814, %v1535
        %v1537 = vpop.f32.mrf.mxu0
        %v1538 = vpop.f32.mrf.mxu0
        %1539 = vdwg.mxu0
        %1540 = vmatprep.subr.bf16.mxu0 %v1268
        %1541 = vmatpush1.bf16.msra.mxu0 %v1267
        %1542 = vmatprep.subr.bf16.mxu0 %v1255
        %1543 = vmatpush1.bf16.msra.mxu0 %v1254
        %1544 = vmatprep.subr.bf16.mxu0 %v1242
        %1545 = vmatpush1.bf16.msra.mxu0 %v1241
        %1546 = vmatprep.subr.bf16.mxu0 %v1229
        %1547 = vmatpush1.bf16.msra.mxu0 %v1228
        %1548 = vmatprep.subr.bf16.mxu0 %v1216
        %1549 = vmatpush1.bf16.msra.mxu0 %v1215
        %1550 = vmatprep.subr.bf16.mxu0 %v1203
        %1551 = vmatpush1.bf16.msra.mxu0 %v1202
        %1552 = vmatprep.subr.bf16.mxu0 %v1190
        %1553 = vmatpush1.bf16.msra.mxu0 %v1189
        %1554 = vmatprep.subr.bf16.mxu0 %v1177
        %1555 = vmatpush1.bf16.msra.mxu0 %v1176
        %1556 = vmatprep.subr.bf16.mxu0 0
        %1557 = vmatpush2.bf16.msra.mxu0 0
        %1558 = vmatprep.subr.bf16.mxu0 0
        %1559 = vmatpush2.bf16.msra.mxu0 0
        %1560 = vmatprep.subr.bf16.mxu0 0
        %1561 = vmatpush2.bf16.msra.mxu0 0
        %1562 = vmatprep.subr.bf16.mxu0 0
        %1563 = vmatpush2.bf16.msra.mxu0 0
        %1564 = vmatprep.subr.bf16.mxu0 0
        %1565 = vmatpush2.bf16.msra.mxu0 0
        %1566 = vmatprep.subr.bf16.mxu0 0
        %1567 = vmatpush2.bf16.msra.mxu0 0
        %1568 = vmatprep.subr.bf16.mxu0 0
        %1569 = vmatpush2.bf16.msra.mxu0 0
        %1570 = vmatprep.subr.bf16.mxu0 0
        %1571 = vmatpush2.bf16.msra.mxu0 0
        %1572 = vmatprep.mubr.bf16.mxu0 0
        %1573 = vmatmul.mubr.bf16.gmra.mxu0 %v666
        %v1574 = vpop.f32.mrf.mxu0
        %v1575 = vadd.f32 %v818, %v1574
        %v1576 = vpop.f32.mrf.mxu0
        %v1577 = vadd.f32 %v822, %v1576
        %v1578 = vpop.f32.mrf.mxu0
        %v1579 = vpop.f32.mrf.mxu0
        %1580 = vdwg.mxu0
        %1581 = vmatprep.subr.bf16.mxu0 %v1270
        %1582 = vmatpush1.bf16.msra.mxu0 %v1269
        %1583 = vmatprep.subr.bf16.mxu0 %v1257
        %1584 = vmatpush1.bf16.msra.mxu0 %v1256
        %1585 = vmatprep.subr.bf16.mxu0 %v1244
        %1586 = vmatpush1.bf16.msra.mxu0 %v1243
        %1587 = vmatprep.subr.bf16.mxu0 %v1231
        %1588 = vmatpush1.bf16.msra.mxu0 %v1230
        %1589 = vmatprep.subr.bf16.mxu0 %v1218
        %1590 = vmatpush1.bf16.msra.mxu0 %v1217
        %1591 = vmatprep.subr.bf16.mxu0 %v1205
        %1592 = vmatpush1.bf16.msra.mxu0 %v1204
        %1593 = vmatprep.subr.bf16.mxu0 %v1192
        %1594 = vmatpush1.bf16.msra.mxu0 %v1191
        %1595 = vmatprep.subr.bf16.mxu0 %v1179
        %1596 = vmatpush1.bf16.msra.mxu0 %v1178
        %1597 = vmatprep.subr.bf16.mxu0 0
        %1598 = vmatpush2.bf16.msra.mxu0 0
        %1599 = vmatprep.subr.bf16.mxu0 0
        %1600 = vmatpush2.bf16.msra.mxu0 0
        %1601 = vmatprep.subr.bf16.mxu0 0
        %1602 = vmatpush2.bf16.msra.mxu0 0
        %1603 = vmatprep.subr.bf16.mxu0 0
        %1604 = vmatpush2.bf16.msra.mxu0 0
        %1605 = vmatprep.subr.bf16.mxu0 0
        %1606 = vmatpush2.bf16.msra.mxu0 0
        %1607 = vmatprep.subr.bf16.mxu0 0
        %1608 = vmatpush2.bf16.msra.mxu0 0
        %1609 = vmatprep.subr.bf16.mxu0 0
        %1610 = vmatpush2.bf16.msra.mxu0 0
        %1611 = vmatprep.subr.bf16.mxu0 0
        %1612 = vmatpush2.bf16.msra.mxu0 0
        %1613 = vmatprep.mubr.bf16.mxu0 0
        %1614 = vmatmul.mubr.bf16.gmra.mxu0 %v666
        %v1615 = vpop.f32.mrf.mxu0
        %v1616 = vadd.f32 %v826, %v1615
        %v1617 = vpop.f32.mrf.mxu0
        %v1618 = vadd.f32 %v830, %v1617
        %v1619 = vpop.f32.mrf.mxu0
        %v1620 = vpop.f32.mrf.mxu0
        %1621 = vdwg.mxu0
        %1622 = vmatprep.subr.bf16.mxu0 0
        %1623 = vmatpush1.bf16.msra.mxu0 %v1271
        %1624 = vmatprep.subr.bf16.mxu0 0
        %1625 = vmatpush1.bf16.msra.mxu0 %v1258
        %1626 = vmatprep.subr.bf16.mxu0 0
        %1627 = vmatpush1.bf16.msra.mxu0 %v1245
        %1628 = vmatprep.subr.bf16.mxu0 0
        %1629 = vmatpush1.bf16.msra.mxu0 %v1232
        %1630 = vmatprep.subr.bf16.mxu0 0
        %1631 = vmatpush1.bf16.msra.mxu0 %v1219
        %1632 = vmatprep.subr.bf16.mxu0 0
        %1633 = vmatpush1.bf16.msra.mxu0 %v1206
        %1634 = vmatprep.subr.bf16.mxu0 0
        %1635 = vmatpush1.bf16.msra.mxu0 %v1193
        %1636 = vmatprep.subr.bf16.mxu0 0
        %1637 = vmatpush1.bf16.msra.mxu0 %v1180
        %1638 = vmatprep.subr.bf16.mxu0 0
        %1639 = vmatpush2.bf16.msra.mxu0 0
        %1640 = vmatprep.subr.bf16.mxu0 0
        %1641 = vmatpush2.bf16.msra.mxu0 0
        %1642 = vmatprep.subr.bf16.mxu0 0
        %1643 = vmatpush2.bf16.msra.mxu0 0
        %1644 = vmatprep.subr.bf16.mxu0 0
        %1645 = vmatpush2.bf16.msra.mxu0 0
        %1646 = vmatprep.subr.bf16.mxu0 0
        %1647 = vmatpush2.bf16.msra.mxu0 0
        %1648 = vmatprep.subr.bf16.mxu0 0
        %1649 = vmatpush2.bf16.msra.mxu0 0
        %1650 = vmatprep.subr.bf16.mxu0 0
        %1651 = vmatpush2.bf16.msra.mxu0 0
        %1652 = vmatprep.subr.bf16.mxu0 0
        %1653 = vmatpush2.bf16.msra.mxu0 0
        %1654 = vmatprep.mubr.bf16.mxu0 0
        %1655 = vmatmul.mubr.bf16.gmra.mxu0 %v666
        %v1656 = vpop.f32.mrf.mxu0
        %v1657 = vadd.f32 %v834, %v1656
        %v1658 = vpop.f32.mrf.mxu0
        %v1659 = vpop.f32.mrf.mxu0
        %v1660 = vpop.f32.mrf.mxu0
        %1661 = vdwg.mxu0
        %v1675 = vcombine.low %v1411, %v1413
        %v1676 = vcombine.low %v1452, %v1454
        %v1678 = vunpack.c.l.s4 1983009808
        %v1679 = vunpack.c.0.s8 %v1678
        %v1680 = vlaneseq
        %v1681 = vshrl.u32 %v1680, 7
        %v1682 = vsub.s32 %v1679, %v1681
        %v1683 = vrot.slane %v1675, %v1682
        %v1685 = vunpack.c.l.s4 1983009808
        %v1686 = vunpack.c.0.s8 %v1685
        %v1687 = vlaneseq
        %v1688 = vshrl.u32 %v1687, 7
        %v1689 = vsub.s32 %v1686, %v1688
        %v1690 = vrot.slane %v1676, %v1689
        %v1691 = vcombine.low %v1683, %v1690
        %v1692 = vcombine.low %v1493, %v1495
        %v1693 = vcombine.low %v1534, %v1536
        %v1695 = vunpack.c.l.s4 1983009808
        %v1696 = vunpack.c.0.s8 %v1695
        %v1697 = vlaneseq
        %v1698 = vshrl.u32 %v1697, 7
        %v1699 = vsub.s32 %v1696, %v1698
        %v1700 = vrot.slane %v1692, %v1699
        %v1702 = vunpack.c.l.s4 1983009808
        %v1703 = vunpack.c.0.s8 %v1702
        %v1704 = vlaneseq
        %v1705 = vshrl.u32 %v1704, 7
        %v1706 = vsub.s32 %v1703, %v1705
        %v1707 = vrot.slane %v1693, %v1706
        %v1708 = vcombine.low %v1700, %v1707
        %v1709 = vcombine.low %v1575, %v1577
        %v1710 = vcombine.low %v1616, %v1618
        %v1712 = vunpack.c.l.s4 1983009808
        %v1713 = vunpack.c.0.s8 %v1712
        %v1714 = vlaneseq
        %v1715 = vshrl.u32 %v1714, 7
        %v1716 = vsub.s32 %v1713, %v1715
        %v1717 = vrot.slane %v1709, %v1716
        %v1719 = vunpack.c.l.s4 1983009808
        %v1720 = vunpack.c.0.s8 %v1719
        %v1721 = vlaneseq
        %v1722 = vshrl.u32 %v1721, 7
        %v1723 = vsub.s32 %v1720, %v1722
        %v1724 = vrot.slane %v1710, %v1723
        %v1725 = vcombine.low %v1717, %v1724
        %v1726 = vcombine.low %v1657, %v457
        %v1727 = vcombine.low %v461, %v465
        %v1729 = vunpack.c.l.s4 1983009808
        %v1730 = vunpack.c.0.s8 %v1729
        %v1731 = vlaneseq
        %v1732 = vshrl.u32 %v1731, 7
        %v1733 = vsub.s32 %v1730, %v1732
        %v1734 = vrot.slane %v1726, %v1733
        %v1736 = vunpack.c.l.s4 1983009808
        %v1737 = vunpack.c.0.s8 %v1736
        %v1738 = vlaneseq
        %v1739 = vshrl.u32 %v1738, 7
        %v1740 = vsub.s32 %v1737, %v1739
        %v1741 = vrot.slane %v1727, %v1740
        %v1742 = vcombine.low %v1734, %v1741
        %v1743 = vcombine.low %v469, %v473
        %v1745 = vunpack.c.l.s4 1983009808
        %v1746 = vunpack.c.0.s8 %v1745
        %v1747 = vlaneseq
        %v1748 = vshrl.u32 %v1747, 7
        %v1749 = vsub.s32 %v1746, %v1748
        %v1750 = vrot.slane %v1743, %v1749
        %1756 = vst [vmem:[%s449] sm:$0xff] %v1691
        %1757 = vst [vmem:[%s449 + $0x8] sm:$0xff] %v1708
        %1758 = vst [vmem:[%s449 + $0x10] sm:$0xff] %v1725
        %1759 = vst [vmem:[%s449 + $0x18] sm:$0xff] %v1742
        %1760 = vst [vmem:[%s449 + $0x20] sm:$0xf] %v1750
        %s1761 = scalar_lea.vmem %s349, 4 [#allocation2]
        %v1762 = vld [vmem:[%s1761] sm:$0xf]
        %v1765 = vunpack.c.l.s4 1983009808
        %v1766 = vunpack.c.0.s8 %v1765
        %v1767 = vlaneseq
        %v1768 = vshrl.u32 %v1767, 7
        %v1769 = vsub.s32 %v1766, %v1768
        %v1770 = vrot.slane %v1762, %v1769
        %v1771 = vcombine.high %v1770, %v1770
        %v1774 = vpack.c.bf16 %v1770, %v1770
        %v1775 = vpack.c.bf16 %v1771, %v1771
        %s1776 = scalar_lea.vmem %s358, 128 [#allocation4]
        %v1777 = vld [vmem:[%s1776] sm:$0xf]
        %v1778 = vld [vmem:[%s1776 + $0x4] sm:$0xf]
        %v1779 = vld [vmem:[%s1776 + $0x8] sm:$0xf]
        %v1780 = vld [vmem:[%s1776 + $0xc] sm:$0xf]
        %v1781 = vld [vmem:[%s1776 + $0x10] sm:$0xf]
        %v1782 = vld [vmem:[%s1776 + $0x14] sm:$0xf]
        %v1783 = vld [vmem:[%s1776 + $0x18] sm:$0xf]
        %v1784 = vld [vmem:[%s1776 + $0x1c] sm:$0xf]
        %v1785 = vld [vmem:[%s1776 + $0x20] sm:$0xf]
        %v1786 = vld [vmem:[%s1776 + $0x24] sm:$0xf]
        %v1787 = vld [vmem:[%s1776 + $0x28] sm:$0xf]
        %v1788 = vld [vmem:[%s1776 + $0x2c] sm:$0xf]
        %v1789 = vld [vmem:[%s1776 + $0x30] sm:$0xf]
        %v1790 = vld [vmem:[%s1776 + $0x34] sm:$0xf]
        %v1791 = vld [vmem:[%s1776 + $0x38] sm:$0xf]
        %v1792 = vld [vmem:[%s1776 + $0x3c] sm:$0xf]
        %v1793 = vld [vmem:[%s1776 + $0x40] sm:$0xf]
        %v1794 = vld [vmem:[%s1776 + $0x44] sm:$0xf]
        %v1795 = vld [vmem:[%s1776 + $0x48] sm:$0xf]
        %v1796 = vld [vmem:[%s1776 + $0x4c] sm:$0xf]
        %v1797 = vld [vmem:[%s1776 + $0x50] sm:$0xf]
        %v1798 = vld [vmem:[%s1776 + $0x54] sm:$0xf]
        %v1799 = vld [vmem:[%s1776 + $0x58] sm:$0xf]
        %v1800 = vld [vmem:[%s1776 + $0x5c] sm:$0xf]
        %v1801 = vld [vmem:[%s1776 + $0x60] sm:$0xf]
        %v1802 = vld [vmem:[%s1776 + $0x64] sm:$0xf]
        %v1803 = vld [vmem:[%s1776 + $0x68] sm:$0xf]
        %v1804 = vld [vmem:[%s1776 + $0x6c] sm:$0xf]
        %v1805 = vld [vmem:[%s1776 + $0x70] sm:$0xf]
        %v1806 = vld [vmem:[%s1776 + $0x74] sm:$0xf]
        %v1807 = vld [vmem:[%s1776 + $0x78] sm:$0xf]
        %v1808 = vld [vmem:[%s1776 + $0x7c] sm:$0xf]
        %s1809 = scalar_lea.vmem %s367, 1 [#allocation6]
        %v1810 = vld [vmem:[%s1809] sm:$0x1]
        %v1812 = vlaneseq
        %v1813 = vshrl.u32 %v1812, 7
        %v1814 = vsub.s32 0, %v1813
        %v1815 = vrot.slane %v1810, %v1814
        %v1849 = vunpack.c.l.b16 %v1777
        %v1850 = vunpack.c.l.b16 %v1778
        %v1851 = vunpack.c.l.b16 %v1779
        %v1852 = vunpack.c.l.b16 %v1780
        %v1853 = vunpack.c.l.b16 %v1781
        %v1854 = vunpack.c.l.b16 %v1782
        %v1855 = vunpack.c.l.b16 %v1783
        %v1856 = vunpack.c.l.b16 %v1784
        %v1857 = vunpack.c.l.b16 %v1785
        %v1858 = vunpack.c.l.b16 %v1786
        %v1859 = vunpack.c.l.b16 %v1787
        %v1860 = vunpack.c.l.b16 %v1788
        %v1861 = vunpack.c.l.b16 %v1789
        %v1862 = vunpack.c.l.b16 %v1790
        %v1863 = vunpack.c.l.b16 %v1791
        %v1864 = vunpack.c.l.b16 %v1792
        %v1865 = vunpack.c.l.b16 %v1793
        %v1866 = vunpack.c.l.b16 %v1794
        %v1867 = vunpack.c.l.b16 %v1795
        %v1868 = vunpack.c.l.b16 %v1796
        %v1869 = vunpack.c.l.b16 %v1797
        %v1870 = vunpack.c.l.b16 %v1798
        %v1871 = vunpack.c.l.b16 %v1799
        %v1872 = vunpack.c.l.b16 %v1800
        %v1873 = vunpack.c.l.b16 %v1801
        %v1874 = vunpack.c.l.b16 %v1802
        %v1875 = vunpack.c.l.b16 %v1803
        %v1876 = vunpack.c.l.b16 %v1804
        %v1877 = vunpack.c.l.b16 %v1805
        %v1878 = vunpack.c.l.b16 %v1806
        %v1879 = vunpack.c.l.b16 %v1807
        %v1880 = vunpack.c.l.b16 %v1808
        %v1881 = vpack.c.b16 %v1850, %v1849
        %v1882 = vpack.c.b16 %v1852, %v1851
        %v1883 = vpack.c.b16 %v1854, %v1853
        %v1884 = vpack.c.b16 %v1856, %v1855
        %v1885 = vpack.c.b16 %v1858, %v1857
        %v1886 = vpack.c.b16 %v1860, %v1859
        %v1887 = vpack.c.b16 %v1862, %v1861
        %v1888 = vpack.c.b16 %v1864, %v1863
        %v1889 = vpack.c.b16 %v1866, %v1865
        %v1890 = vpack.c.b16 %v1868, %v1867
        %v1891 = vpack.c.b16 %v1870, %v1869
        %v1892 = vpack.c.b16 %v1872, %v1871
        %v1893 = vpack.c.b16 %v1874, %v1873
        %v1894 = vpack.c.b16 %v1876, %v1875
        %v1895 = vpack.c.b16 %v1878, %v1877
        %v1896 = vpack.c.b16 %v1880, %v1879
        %1913 = vmatprep.subr.bf16.mxu0 0
        %1914 = vmatpush1.bf16.msra.mxu0 %v1888
        %1915 = vmatprep.subr.bf16.mxu0 0
        %1916 = vmatpush1.bf16.msra.mxu0 %v1887
        %1917 = vmatprep.subr.bf16.mxu0 0
        %1918 = vmatpush1.bf16.msra.mxu0 %v1886
        %1919 = vmatprep.subr.bf16.mxu0 0
        %1920 = vmatpush1.bf16.msra.mxu0 %v1885
        %1921 = vmatprep.subr.bf16.mxu0 0
        %1922 = vmatpush1.bf16.msra.mxu0 %v1884
        %1923 = vmatprep.subr.bf16.mxu0 0
        %1924 = vmatpush1.bf16.msra.mxu0 %v1883
        %1925 = vmatprep.subr.bf16.mxu0 0
        %1926 = vmatpush1.bf16.msra.mxu0 %v1882
        %1927 = vmatprep.subr.bf16.mxu0 0
        %1928 = vmatpush1.bf16.msra.mxu0 %v1881
        %1929 = vmatprep.subr.bf16.mxu0 0
        %1930 = vmatpush2.bf16.msra.mxu0 %v1896
        %1931 = vmatprep.subr.bf16.mxu0 0
        %1932 = vmatpush2.bf16.msra.mxu0 %v1895
        %1933 = vmatprep.subr.bf16.mxu0 0
        %1934 = vmatpush2.bf16.msra.mxu0 %v1894
        %1935 = vmatprep.subr.bf16.mxu0 0
        %1936 = vmatpush2.bf16.msra.mxu0 %v1893
        %1937 = vmatprep.subr.bf16.mxu0 0
        %1938 = vmatpush2.bf16.msra.mxu0 %v1892
        %1939 = vmatprep.subr.bf16.mxu0 0
        %1940 = vmatpush2.bf16.msra.mxu0 %v1891
        %1941 = vmatprep.subr.bf16.mxu0 0
        %1942 = vmatpush2.bf16.msra.mxu0 %v1890
        %1943 = vmatprep.subr.bf16.mxu0 0
        %1944 = vmatpush2.bf16.msra.mxu0 %v1889
        %1945 = vmatprep.mubr.bf16.mxu0 %v1775
        %1946 = vmatmul.mubr.bf16.gmra.mxu0 %v1774
        %v1947 = vpop.f32.mrf.mxu0
        %v1948 = vadd.f32 %v1815, %v1947
        %v1949 = vpop.f32.mrf.mxu0
        %v1950 = vpop.f32.mrf.mxu0
        %v1951 = vpop.f32.mrf.mxu0
        %1952 = vdwg.mxu0
        %vm1953 = vcmp.ge.f32.partialorder %v1948, 0.0
        %v1954 = vmul.f32 %v1948, 0.01
        %v1955 = vsel %vm1953, %v1948, %v1954
        %v1956 = vpack.c.bf16 %v1955, %v1955
        %s1957 = scalar_lea.vmem %s376, 832 [#allocation7]
        %v1958 = vld [vmem:[%s1957] sm:$0xff]
        %v1959 = vld [vmem:[%s1957 + $0x8] sm:$0xff]
        %v1960 = vld [vmem:[%s1957 + $0x10] sm:$0xff]
        %v1961 = vld [vmem:[%s1957 + $0x18] sm:$0xff]
        %v1962 = vld [vmem:[%s1957 + $0x20] sm:$0xff]
        %v1963 = vld [vmem:[%s1957 + $0x28] sm:$0xff]
        %v1964 = vld [vmem:[%s1957 + $0x30] sm:$0xf]
        %v1965 = vld [vmem:[%s1957 + $0x34] sm:$0xff]
        %v1966 = vld [vmem:[%s1957 + $0x3c] sm:$0xff]
        %v1967 = vld [vmem:[%s1957 + $0x44] sm:$0xff]
        %v1968 = vld [vmem:[%s1957 + $0x4c] sm:$0xff]
        %v1969 = vld [vmem:[%s1957 + $0x54] sm:$0xff]
        %v1970 = vld [vmem:[%s1957 + $0x5c] sm:$0xff]
        %v1971 = vld [vmem:[%s1957 + $0x64] sm:$0xf]
        %v1972 = vld [vmem:[%s1957 + $0x68] sm:$0xff]
        %v1973 = vld [vmem:[%s1957 + $0x70] sm:$0xff]
        %v1974 = vld [vmem:[%s1957 + $0x78] sm:$0xff]
        %v1975 = vld [vmem:[%s1957 + $0x80] sm:$0xff]
        %v1976 = vld [vmem:[%s1957 + $0x88] sm:$0xff]
        %v1977 = vld [vmem:[%s1957 + $0x90] sm:$0xff]
        %v1978 = vld [vmem:[%s1957 + $0x98] sm:$0xf]
        %v1979 = vld [vmem:[%s1957 + $0x9c] sm:$0xff]
        %v1980 = vld [vmem:[%s1957 + $0xa4] sm:$0xff]
        %v1981 = vld [vmem:[%s1957 + $0xac] sm:$0xff]
        %v1982 = vld [vmem:[%s1957 + $0xb4] sm:$0xff]
        %v1983 = vld [vmem:[%s1957 + $0xbc] sm:$0xff]
        %v1984 = vld [vmem:[%s1957 + $0xc4] sm:$0xff]
        %v1985 = vld [vmem:[%s1957 + $0xcc] sm:$0xf]
        %v1986 = vld [vmem:[%s1957 + $0xd0] sm:$0xff]
        %v1987 = vld [vmem:[%s1957 + $0xd8] sm:$0xff]
        %v1988 = vld [vmem:[%s1957 + $0xe0] sm:$0xff]
        %v1989 = vld [vmem:[%s1957 + $0xe8] sm:$0xff]
        %v1990 = vld [vmem:[%s1957 + $0xf0] sm:$0xff]
        %v1991 = vld [vmem:[%s1957 + $0xf8] sm:$0xff]
        %v1992 = vld [vmem:[%s1957 + $0x100] sm:$0xf]
        %v1993 = vld [vmem:[%s1957 + $0x104] sm:$0xff]
        %v1994 = vld [vmem:[%s1957 + $0x10c] sm:$0xff]
        %v1995 = vld [vmem:[%s1957 + $0x114] sm:$0xff]
        %v1996 = vld [vmem:[%s1957 + $0x11c] sm:$0xff]
        %v1997 = vld [vmem:[%s1957 + $0x124] sm:$0xff]
        %v1998 = vld [vmem:[%s1957 + $0x12c] sm:$0xff]
        %v1999 = vld [vmem:[%s1957 + $0x134] sm:$0xf]
        %v2000 = vld [vmem:[%s1957 + $0x138] sm:$0xff]
        %v2001 = vld [vmem:[%s1957 + $0x140] sm:$0xff]
        %v2002 = vld [vmem:[%s1957 + $0x148] sm:$0xff]
        %v2003 = vld [vmem:[%s1957 + $0x150] sm:$0xff]
        %v2004 = vld [vmem:[%s1957 + $0x158] sm:$0xff]
        %v2005 = vld [vmem:[%s1957 + $0x160] sm:$0xff]
        %v2006 = vld [vmem:[%s1957 + $0x168] sm:$0xf]
        %v2007 = vld [vmem:[%s1957 + $0x16c] sm:$0xff]
        %v2008 = vld [vmem:[%s1957 + $0x174] sm:$0xff]
        %v2009 = vld [vmem:[%s1957 + $0x17c] sm:$0xff]
        %v2010 = vld [vmem:[%s1957 + $0x184] sm:$0xff]
        %v2011 = vld [vmem:[%s1957 + $0x18c] sm:$0xff]
        %v2012 = vld [vmem:[%s1957 + $0x194] sm:$0xff]
        %v2013 = vld [vmem:[%s1957 + $0x19c] sm:$0xf]
        %v2014 = vld [vmem:[%s1957 + $0x1a0] sm:$0xff]
        %v2015 = vld [vmem:[%s1957 + $0x1a8] sm:$0xff]
        %v2016 = vld [vmem:[%s1957 + $0x1b0] sm:$0xff]
        %v2017 = vld [vmem:[%s1957 + $0x1b8] sm:$0xff]
        %v2018 = vld [vmem:[%s1957 + $0x1c0] sm:$0xff]
        %v2019 = vld [vmem:[%s1957 + $0x1c8] sm:$0xff]
        %v2020 = vld [vmem:[%s1957 + $0x1d0] sm:$0xf]
        %v2021 = vld [vmem:[%s1957 + $0x1d4] sm:$0xff]
        %v2022 = vld [vmem:[%s1957 + $0x1dc] sm:$0xff]
        %v2023 = vld [vmem:[%s1957 + $0x1e4] sm:$0xff]
        %v2024 = vld [vmem:[%s1957 + $0x1ec] sm:$0xff]
        %v2025 = vld [vmem:[%s1957 + $0x1f4] sm:$0xff]
        %v2026 = vld [vmem:[%s1957 + $0x1fc] sm:$0xff]
        %v2027 = vld [vmem:[%s1957 + $0x204] sm:$0xf]
        %v2028 = vld [vmem:[%s1957 + $0x208] sm:$0xff]
        %v2029 = vld [vmem:[%s1957 + $0x210] sm:$0xff]
        %v2030 = vld [vmem:[%s1957 + $0x218] sm:$0xff]
        %v2031 = vld [vmem:[%s1957 + $0x220] sm:$0xff]
        %v2032 = vld [vmem:[%s1957 + $0x228] sm:$0xff]
        %v2033 = vld [vmem:[%s1957 + $0x230] sm:$0xff]
        %v2034 = vld [vmem:[%s1957 + $0x238] sm:$0xf]
        %v2035 = vld [vmem:[%s1957 + $0x23c] sm:$0xff]
        %v2036 = vld [vmem:[%s1957 + $0x244] sm:$0xff]
        %v2037 = vld [vmem:[%s1957 + $0x24c] sm:$0xff]
        %v2038 = vld [vmem:[%s1957 + $0x254] sm:$0xff]
        %v2039 = vld [vmem:[%s1957 + $0x25c] sm:$0xff]
        %v2040 = vld [vmem:[%s1957 + $0x264] sm:$0xff]
        %v2041 = vld [vmem:[%s1957 + $0x26c] sm:$0xf]
        %v2042 = vld [vmem:[%s1957 + $0x270] sm:$0xff]
        %v2043 = vld [vmem:[%s1957 + $0x278] sm:$0xff]
        %v2044 = vld [vmem:[%s1957 + $0x280] sm:$0xff]
        %v2045 = vld [vmem:[%s1957 + $0x288] sm:$0xff]
        %v2046 = vld [vmem:[%s1957 + $0x290] sm:$0xff]
        %v2047 = vld [vmem:[%s1957 + $0x298] sm:$0xff]
        %v2048 = vld [vmem:[%s1957 + $0x2a0] sm:$0xf]
        %v2049 = vld [vmem:[%s1957 + $0x2a4] sm:$0xff]
        %v2050 = vld [vmem:[%s1957 + $0x2ac] sm:$0xff]
        %v2051 = vld [vmem:[%s1957 + $0x2b4] sm:$0xff]
        %v2052 = vld [vmem:[%s1957 + $0x2bc] sm:$0xff]
        %v2053 = vld [vmem:[%s1957 + $0x2c4] sm:$0xff]
        %v2054 = vld [vmem:[%s1957 + $0x2cc] sm:$0xff]
        %v2055 = vld [vmem:[%s1957 + $0x2d4] sm:$0xf]
        %v2056 = vld [vmem:[%s1957 + $0x2d8] sm:$0xff]
        %v2057 = vld [vmem:[%s1957 + $0x2e0] sm:$0xff]
        %v2058 = vld [vmem:[%s1957 + $0x2e8] sm:$0xff]
        %v2059 = vld [vmem:[%s1957 + $0x2f0] sm:$0xff]
        %v2060 = vld [vmem:[%s1957 + $0x2f8] sm:$0xff]
        %v2061 = vld [vmem:[%s1957 + $0x300] sm:$0xff]
        %v2062 = vld [vmem:[%s1957 + $0x308] sm:$0xf]
        %v2063 = vld [vmem:[%s1957 + $0x30c] sm:$0xff]
        %v2064 = vld [vmem:[%s1957 + $0x314] sm:$0xff]
        %v2065 = vld [vmem:[%s1957 + $0x31c] sm:$0xff]
        %v2066 = vld [vmem:[%s1957 + $0x324] sm:$0xff]
        %v2067 = vld [vmem:[%s1957 + $0x32c] sm:$0xff]
        %v2068 = vld [vmem:[%s1957 + $0x334] sm:$0xff]
        %v2069 = vld [vmem:[%s1957 + $0x33c] sm:$0xf]
        %s2070 = scalar_lea.vmem %s385, 13 [#allocation9]
        %v2071 = vld [vmem:[%s2070] sm:$0xff]
        %v2072 = vld [vmem:[%s2070 + $0x8] sm:$0x1f]
        %v2075 = vlaneseq
        %v2076 = vshrl.u32 %v2075, 7
        %v2077 = vsub.s32 0, %v2076
        %v2078 = vrot.slane %v2071, %v2077
        %v2079 = vlaneseq
        %v2080 = vshrl.u32 %v2079, 7
        %v2081 = vsub.s32 1, %v2080
        %v2082 = vrot.slane %v2071, %v2081
        %v2083 = vlaneseq
        %v2084 = vshrl.u32 %v2083, 7
        %v2085 = vsub.s32 2, %v2084
        %v2086 = vrot.slane %v2071, %v2085
        %v2087 = vlaneseq
        %v2088 = vshrl.u32 %v2087, 7
        %v2089 = vsub.s32 3, %v2088
        %v2090 = vrot.slane %v2071, %v2089
        %v2091 = vlaneseq
        %v2092 = vshrl.u32 %v2091, 7
        %v2093 = vsub.s32 4, %v2092
        %v2094 = vrot.slane %v2071, %v2093
        %v2095 = vlaneseq
        %v2096 = vshrl.u32 %v2095, 7
        %v2097 = vsub.s32 5, %v2096
        %v2098 = vrot.slane %v2071, %v2097
        %v2099 = vlaneseq
        %v2100 = vshrl.u32 %v2099, 7
        %v2101 = vsub.s32 6, %v2100
        %v2102 = vrot.slane %v2071, %v2101
        %v2103 = vlaneseq
        %v2104 = vshrl.u32 %v2103, 7
        %v2105 = vsub.s32 7, %v2104
        %v2106 = vrot.slane %v2071, %v2105
        %v2107 = vlaneseq
        %v2108 = vshrl.u32 %v2107, 7
        %v2109 = vsub.s32 0, %v2108
        %v2110 = vrot.slane %v2072, %v2109
        %v2111 = vlaneseq
        %v2112 = vshrl.u32 %v2111, 7
        %v2113 = vsub.s32 1, %v2112
        %v2114 = vrot.slane %v2072, %v2113
        %v2115 = vlaneseq
        %v2116 = vshrl.u32 %v2115, 7
        %v2117 = vsub.s32 2, %v2116
        %v2118 = vrot.slane %v2072, %v2117
        %v2119 = vlaneseq
        %v2120 = vshrl.u32 %v2119, 7
        %v2121 = vsub.s32 3, %v2120
        %v2122 = vrot.slane %v2072, %v2121
        %v2123 = vlaneseq
        %v2124 = vshrl.u32 %v2123, 7
        %v2125 = vsub.s32 4, %v2124
        %v2126 = vrot.slane %v2072, %v2125
        %v2252 = vunpack.c.l.b16 %v1958
        %v2253 = vunpack.c.h.b16 %v1958
        %v2254 = vunpack.c.l.b16 %v1959
        %v2255 = vunpack.c.h.b16 %v1959
        %v2256 = vunpack.c.l.b16 %v1960
        %v2257 = vunpack.c.h.b16 %v1960
        %v2258 = vunpack.c.l.b16 %v1961
        %v2259 = vunpack.c.h.b16 %v1961
        %v2260 = vunpack.c.l.b16 %v1962
        %v2261 = vunpack.c.h.b16 %v1962
        %v2262 = vunpack.c.l.b16 %v1963
        %v2263 = vunpack.c.h.b16 %v1963
        %v2264 = vunpack.c.l.b16 %v1964
        %v2265 = vunpack.c.l.b16 %v1965
        %v2266 = vunpack.c.h.b16 %v1965
        %v2267 = vunpack.c.l.b16 %v1966
        %v2268 = vunpack.c.h.b16 %v1966
        %v2269 = vunpack.c.l.b16 %v1967
        %v2270 = vunpack.c.h.b16 %v1967
        %v2271 = vunpack.c.l.b16 %v1968
        %v2272 = vunpack.c.h.b16 %v1968
        %v2273 = vunpack.c.l.b16 %v1969
        %v2274 = vunpack.c.h.b16 %v1969
        %v2275 = vunpack.c.l.b16 %v1970
        %v2276 = vunpack.c.h.b16 %v1970
        %v2277 = vunpack.c.l.b16 %v1971
        %v2278 = vunpack.c.l.b16 %v1972
        %v2279 = vunpack.c.h.b16 %v1972
        %v2280 = vunpack.c.l.b16 %v1973
        %v2281 = vunpack.c.h.b16 %v1973
        %v2282 = vunpack.c.l.b16 %v1974
        %v2283 = vunpack.c.h.b16 %v1974
        %v2284 = vunpack.c.l.b16 %v1975
        %v2285 = vunpack.c.h.b16 %v1975
        %v2286 = vunpack.c.l.b16 %v1976
        %v2287 = vunpack.c.h.b16 %v1976
        %v2288 = vunpack.c.l.b16 %v1977
        %v2289 = vunpack.c.h.b16 %v1977
        %v2290 = vunpack.c.l.b16 %v1978
        %v2291 = vunpack.c.l.b16 %v1979
        %v2292 = vunpack.c.h.b16 %v1979
        %v2293 = vunpack.c.l.b16 %v1980
        %v2294 = vunpack.c.h.b16 %v1980
        %v2295 = vunpack.c.l.b16 %v1981
        %v2296 = vunpack.c.h.b16 %v1981
        %v2297 = vunpack.c.l.b16 %v1982
        %v2298 = vunpack.c.h.b16 %v1982
        %v2299 = vunpack.c.l.b16 %v1983
        %v2300 = vunpack.c.h.b16 %v1983
        %v2301 = vunpack.c.l.b16 %v1984
        %v2302 = vunpack.c.h.b16 %v1984
        %v2303 = vunpack.c.l.b16 %v1985
        %v2304 = vunpack.c.l.b16 %v1986
        %v2305 = vunpack.c.h.b16 %v1986
        %v2306 = vunpack.c.l.b16 %v1987
        %v2307 = vunpack.c.h.b16 %v1987
        %v2308 = vunpack.c.l.b16 %v1988
        %v2309 = vunpack.c.h.b16 %v1988
        %v2310 = vunpack.c.l.b16 %v1989
        %v2311 = vunpack.c.h.b16 %v1989
        %v2312 = vunpack.c.l.b16 %v1990
        %v2313 = vunpack.c.h.b16 %v1990
        %v2314 = vunpack.c.l.b16 %v1991
        %v2315 = vunpack.c.h.b16 %v1991
        %v2316 = vunpack.c.l.b16 %v1992
        %v2317 = vunpack.c.l.b16 %v1993
        %v2318 = vunpack.c.h.b16 %v1993
        %v2319 = vunpack.c.l.b16 %v1994
        %v2320 = vunpack.c.h.b16 %v1994
        %v2321 = vunpack.c.l.b16 %v1995
        %v2322 = vunpack.c.h.b16 %v1995
        %v2323 = vunpack.c.l.b16 %v1996
        %v2324 = vunpack.c.h.b16 %v1996
        %v2325 = vunpack.c.l.b16 %v1997
        %v2326 = vunpack.c.h.b16 %v1997
        %v2327 = vunpack.c.l.b16 %v1998
        %v2328 = vunpack.c.h.b16 %v1998
        %v2329 = vunpack.c.l.b16 %v1999
        %v2330 = vunpack.c.l.b16 %v2000
        %v2331 = vunpack.c.h.b16 %v2000
        %v2332 = vunpack.c.l.b16 %v2001
        %v2333 = vunpack.c.h.b16 %v2001
        %v2334 = vunpack.c.l.b16 %v2002
        %v2335 = vunpack.c.h.b16 %v2002
        %v2336 = vunpack.c.l.b16 %v2003
        %v2337 = vunpack.c.h.b16 %v2003
        %v2338 = vunpack.c.l.b16 %v2004
        %v2339 = vunpack.c.h.b16 %v2004
        %v2340 = vunpack.c.l.b16 %v2005
        %v2341 = vunpack.c.h.b16 %v2005
        %v2342 = vunpack.c.l.b16 %v2006
        %v2343 = vunpack.c.l.b16 %v2007
        %v2344 = vunpack.c.h.b16 %v2007
        %v2345 = vunpack.c.l.b16 %v2008
        %v2346 = vunpack.c.h.b16 %v2008
        %v2347 = vunpack.c.l.b16 %v2009
        %v2348 = vunpack.c.h.b16 %v2009
        %v2349 = vunpack.c.l.b16 %v2010
        %v2350 = vunpack.c.h.b16 %v2010
        %v2351 = vunpack.c.l.b16 %v2011
        %v2352 = vunpack.c.h.b16 %v2011
        %v2353 = vunpack.c.l.b16 %v2012
        %v2354 = vunpack.c.h.b16 %v2012
        %v2355 = vunpack.c.l.b16 %v2013
        %v2356 = vunpack.c.l.b16 %v2014
        %v2357 = vunpack.c.h.b16 %v2014
        %v2358 = vunpack.c.l.b16 %v2015
        %v2359 = vunpack.c.h.b16 %v2015
        %v2360 = vunpack.c.l.b16 %v2016
        %v2361 = vunpack.c.h.b16 %v2016
        %v2362 = vunpack.c.l.b16 %v2017
        %v2363 = vunpack.c.h.b16 %v2017
        %v2364 = vunpack.c.l.b16 %v2018
        %v2365 = vunpack.c.h.b16 %v2018
        %v2366 = vunpack.c.l.b16 %v2019
        %v2367 = vunpack.c.h.b16 %v2019
        %v2368 = vunpack.c.l.b16 %v2020
        %v2369 = vunpack.c.l.b16 %v2021
        %v2370 = vunpack.c.h.b16 %v2021
        %v2371 = vunpack.c.l.b16 %v2022
        %v2372 = vunpack.c.h.b16 %v2022
        %v2373 = vunpack.c.l.b16 %v2023
        %v2374 = vunpack.c.h.b16 %v2023
        %v2375 = vunpack.c.l.b16 %v2024
        %v2376 = vunpack.c.h.b16 %v2024
        %v2377 = vunpack.c.l.b16 %v2025
        %v2378 = vunpack.c.h.b16 %v2025
        %v2379 = vunpack.c.l.b16 %v2026
        %v2380 = vunpack.c.h.b16 %v2026
        %v2381 = vunpack.c.l.b16 %v2027
        %v2382 = vunpack.c.l.b16 %v2028
        %v2383 = vunpack.c.h.b16 %v2028
        %v2384 = vunpack.c.l.b16 %v2029
        %v2385 = vunpack.c.h.b16 %v2029
        %v2386 = vunpack.c.l.b16 %v2030
        %v2387 = vunpack.c.h.b16 %v2030
        %v2388 = vunpack.c.l.b16 %v2031
        %v2389 = vunpack.c.h.b16 %v2031
        %v2390 = vunpack.c.l.b16 %v2032
        %v2391 = vunpack.c.h.b16 %v2032
        %v2392 = vunpack.c.l.b16 %v2033
        %v2393 = vunpack.c.h.b16 %v2033
        %v2394 = vunpack.c.l.b16 %v2034
        %v2395 = vunpack.c.l.b16 %v2035
        %v2396 = vunpack.c.h.b16 %v2035
        %v2397 = vunpack.c.l.b16 %v2036
        %v2398 = vunpack.c.h.b16 %v2036
        %v2399 = vunpack.c.l.b16 %v2037
        %v2400 = vunpack.c.h.b16 %v2037
        %v2401 = vunpack.c.l.b16 %v2038
        %v2402 = vunpack.c.h.b16 %v2038
        %v2403 = vunpack.c.l.b16 %v2039
        %v2404 = vunpack.c.h.b16 %v2039
        %v2405 = vunpack.c.l.b16 %v2040
        %v2406 = vunpack.c.h.b16 %v2040
        %v2407 = vunpack.c.l.b16 %v2041
        %v2408 = vunpack.c.l.b16 %v2042
        %v2409 = vunpack.c.h.b16 %v2042
        %v2410 = vunpack.c.l.b16 %v2043
        %v2411 = vunpack.c.h.b16 %v2043
        %v2412 = vunpack.c.l.b16 %v2044
        %v2413 = vunpack.c.h.b16 %v2044
        %v2414 = vunpack.c.l.b16 %v2045
        %v2415 = vunpack.c.h.b16 %v2045
        %v2416 = vunpack.c.l.b16 %v2046
        %v2417 = vunpack.c.h.b16 %v2046
        %v2418 = vunpack.c.l.b16 %v2047
        %v2419 = vunpack.c.h.b16 %v2047
        %v2420 = vunpack.c.l.b16 %v2048
        %v2421 = vunpack.c.l.b16 %v2049
        %v2422 = vunpack.c.h.b16 %v2049
        %v2423 = vunpack.c.l.b16 %v2050
        %v2424 = vunpack.c.h.b16 %v2050
        %v2425 = vunpack.c.l.b16 %v2051
        %v2426 = vunpack.c.h.b16 %v2051
        %v2427 = vunpack.c.l.b16 %v2052
        %v2428 = vunpack.c.h.b16 %v2052
        %v2429 = vunpack.c.l.b16 %v2053
        %v2430 = vunpack.c.h.b16 %v2053
        %v2431 = vunpack.c.l.b16 %v2054
        %v2432 = vunpack.c.h.b16 %v2054
        %v2433 = vunpack.c.l.b16 %v2055
        %v2434 = vunpack.c.l.b16 %v2056
        %v2435 = vunpack.c.h.b16 %v2056
        %v2436 = vunpack.c.l.b16 %v2057
        %v2437 = vunpack.c.h.b16 %v2057
        %v2438 = vunpack.c.l.b16 %v2058
        %v2439 = vunpack.c.h.b16 %v2058
        %v2440 = vunpack.c.l.b16 %v2059
        %v2441 = vunpack.c.h.b16 %v2059
        %v2442 = vunpack.c.l.b16 %v2060
        %v2443 = vunpack.c.h.b16 %v2060
        %v2444 = vunpack.c.l.b16 %v2061
        %v2445 = vunpack.c.h.b16 %v2061
        %v2446 = vunpack.c.l.b16 %v2062
        %v2447 = vunpack.c.l.b16 %v2063
        %v2448 = vunpack.c.h.b16 %v2063
        %v2449 = vunpack.c.l.b16 %v2064
        %v2450 = vunpack.c.h.b16 %v2064
        %v2451 = vunpack.c.l.b16 %v2065
        %v2452 = vunpack.c.h.b16 %v2065
        %v2453 = vunpack.c.l.b16 %v2066
        %v2454 = vunpack.c.h.b16 %v2066
        %v2455 = vunpack.c.l.b16 %v2067
        %v2456 = vunpack.c.h.b16 %v2067
        %v2457 = vunpack.c.l.b16 %v2068
        %v2458 = vunpack.c.h.b16 %v2068
        %v2459 = vunpack.c.l.b16 %v2069
        %v2460 = vpack.c.b16 %v2265, %v2252
        %v2461 = vpack.c.b16 %v2266, %v2253
        %v2462 = vpack.c.b16 %v2267, %v2254
        %v2463 = vpack.c.b16 %v2268, %v2255
        %v2464 = vpack.c.b16 %v2269, %v2256
        %v2465 = vpack.c.b16 %v2270, %v2257
        %v2466 = vpack.c.b16 %v2271, %v2258
        %v2467 = vpack.c.b16 %v2272, %v2259
        %v2468 = vpack.c.b16 %v2273, %v2260
        %v2469 = vpack.c.b16 %v2274, %v2261
        %v2470 = vpack.c.b16 %v2275, %v2262
        %v2471 = vpack.c.b16 %v2276, %v2263
        %v2472 = vpack.c.b16 %v2277, %v2264
        %v2473 = vpack.c.b16 %v2291, %v2278
        %v2474 = vpack.c.b16 %v2292, %v2279
        %v2475 = vpack.c.b16 %v2293, %v2280
        %v2476 = vpack.c.b16 %v2294, %v2281
        %v2477 = vpack.c.b16 %v2295, %v2282
        %v2478 = vpack.c.b16 %v2296, %v2283
        %v2479 = vpack.c.b16 %v2297, %v2284
        %v2480 = vpack.c.b16 %v2298, %v2285
        %v2481 = vpack.c.b16 %v2299, %v2286
        %v2482 = vpack.c.b16 %v2300, %v2287
        %v2483 = vpack.c.b16 %v2301, %v2288
        %v2484 = vpack.c.b16 %v2302, %v2289
        %v2485 = vpack.c.b16 %v2303, %v2290
        %v2486 = vpack.c.b16 %v2317, %v2304
        %v2487 = vpack.c.b16 %v2318, %v2305
        %v2488 = vpack.c.b16 %v2319, %v2306
        %v2489 = vpack.c.b16 %v2320, %v2307
        %v2490 = vpack.c.b16 %v2321, %v2308
        %v2491 = vpack.c.b16 %v2322, %v2309
        %v2492 = vpack.c.b16 %v2323, %v2310
        %v2493 = vpack.c.b16 %v2324, %v2311
        %v2494 = vpack.c.b16 %v2325, %v2312
        %v2495 = vpack.c.b16 %v2326, %v2313
        %v2496 = vpack.c.b16 %v2327, %v2314
        %v2497 = vpack.c.b16 %v2328, %v2315
        %v2498 = vpack.c.b16 %v2329, %v2316
        %v2499 = vpack.c.b16 %v2343, %v2330
        %v2500 = vpack.c.b16 %v2344, %v2331
        %v2501 = vpack.c.b16 %v2345, %v2332
        %v2502 = vpack.c.b16 %v2346, %v2333
        %v2503 = vpack.c.b16 %v2347, %v2334
        %v2504 = vpack.c.b16 %v2348, %v2335
        %v2505 = vpack.c.b16 %v2349, %v2336
        %v2506 = vpack.c.b16 %v2350, %v2337
        %v2507 = vpack.c.b16 %v2351, %v2338
        %v2508 = vpack.c.b16 %v2352, %v2339
        %v2509 = vpack.c.b16 %v2353, %v2340
        %v2510 = vpack.c.b16 %v2354, %v2341
        %v2511 = vpack.c.b16 %v2355, %v2342
        %v2512 = vpack.c.b16 %v2369, %v2356
        %v2513 = vpack.c.b16 %v2370, %v2357
        %v2514 = vpack.c.b16 %v2371, %v2358
        %v2515 = vpack.c.b16 %v2372, %v2359
        %v2516 = vpack.c.b16 %v2373, %v2360
        %v2517 = vpack.c.b16 %v2374, %v2361
        %v2518 = vpack.c.b16 %v2375, %v2362
        %v2519 = vpack.c.b16 %v2376, %v2363
        %v2520 = vpack.c.b16 %v2377, %v2364
        %v2521 = vpack.c.b16 %v2378, %v2365
        %v2522 = vpack.c.b16 %v2379, %v2366
        %v2523 = vpack.c.b16 %v2380, %v2367
        %v2524 = vpack.c.b16 %v2381, %v2368
        %v2525 = vpack.c.b16 %v2395, %v2382
        %v2526 = vpack.c.b16 %v2396, %v2383
        %v2527 = vpack.c.b16 %v2397, %v2384
        %v2528 = vpack.c.b16 %v2398, %v2385
        %v2529 = vpack.c.b16 %v2399, %v2386
        %v2530 = vpack.c.b16 %v2400, %v2387
        %v2531 = vpack.c.b16 %v2401, %v2388
        %v2532 = vpack.c.b16 %v2402, %v2389
        %v2533 = vpack.c.b16 %v2403, %v2390
        %v2534 = vpack.c.b16 %v2404, %v2391
        %v2535 = vpack.c.b16 %v2405, %v2392
        %v2536 = vpack.c.b16 %v2406, %v2393
        %v2537 = vpack.c.b16 %v2407, %v2394
        %v2538 = vpack.c.b16 %v2421, %v2408
        %v2539 = vpack.c.b16 %v2422, %v2409
        %v2540 = vpack.c.b16 %v2423, %v2410
        %v2541 = vpack.c.b16 %v2424, %v2411
        %v2542 = vpack.c.b16 %v2425, %v2412
        %v2543 = vpack.c.b16 %v2426, %v2413
        %v2544 = vpack.c.b16 %v2427, %v2414
        %v2545 = vpack.c.b16 %v2428, %v2415
        %v2546 = vpack.c.b16 %v2429, %v2416
        %v2547 = vpack.c.b16 %v2430, %v2417
        %v2548 = vpack.c.b16 %v2431, %v2418
        %v2549 = vpack.c.b16 %v2432, %v2419
        %v2550 = vpack.c.b16 %v2433, %v2420
        %v2551 = vpack.c.b16 %v2447, %v2434
        %v2552 = vpack.c.b16 %v2448, %v2435
        %v2553 = vpack.c.b16 %v2449, %v2436
        %v2554 = vpack.c.b16 %v2450, %v2437
        %v2555 = vpack.c.b16 %v2451, %v2438
        %v2556 = vpack.c.b16 %v2452, %v2439
        %v2557 = vpack.c.b16 %v2453, %v2440
        %v2558 = vpack.c.b16 %v2454, %v2441
        %v2559 = vpack.c.b16 %v2455, %v2442
        %v2560 = vpack.c.b16 %v2456, %v2443
        %v2561 = vpack.c.b16 %v2457, %v2444
        %v2562 = vpack.c.b16 %v2458, %v2445
        %v2563 = vpack.c.b16 %v2459, %v2446
        %2668 = vmatprep.subr.bf16.mxu0 %v2552
        %2669 = vmatpush1.bf16.msra.mxu0 %v2551
        %2670 = vmatprep.subr.bf16.mxu0 %v2539
        %2671 = vmatpush1.bf16.msra.mxu0 %v2538
        %2672 = vmatprep.subr.bf16.mxu0 %v2526
        %2673 = vmatpush1.bf16.msra.mxu0 %v2525
        %2674 = vmatprep.subr.bf16.mxu0 %v2513
        %2675 = vmatpush1.bf16.msra.mxu0 %v2512
        %2676 = vmatprep.subr.bf16.mxu0 %v2500
        %2677 = vmatpush1.bf16.msra.mxu0 %v2499
        %2678 = vmatprep.subr.bf16.mxu0 %v2487
        %2679 = vmatpush1.bf16.msra.mxu0 %v2486
        %2680 = vmatprep.subr.bf16.mxu0 %v2474
        %2681 = vmatpush1.bf16.msra.mxu0 %v2473
        %2682 = vmatprep.subr.bf16.mxu0 %v2461
        %2683 = vmatpush1.bf16.msra.mxu0 %v2460
        %2684 = vmatprep.subr.bf16.mxu0 0
        %2685 = vmatpush2.bf16.msra.mxu0 0
        %2686 = vmatprep.subr.bf16.mxu0 0
        %2687 = vmatpush2.bf16.msra.mxu0 0
        %2688 = vmatprep.subr.bf16.mxu0 0
        %2689 = vmatpush2.bf16.msra.mxu0 0
        %2690 = vmatprep.subr.bf16.mxu0 0
        %2691 = vmatpush2.bf16.msra.mxu0 0
        %2692 = vmatprep.subr.bf16.mxu0 0
        %2693 = vmatpush2.bf16.msra.mxu0 0
        %2694 = vmatprep.subr.bf16.mxu0 0
        %2695 = vmatpush2.bf16.msra.mxu0 0
        %2696 = vmatprep.subr.bf16.mxu0 0
        %2697 = vmatpush2.bf16.msra.mxu0 0
        %2698 = vmatprep.subr.bf16.mxu0 0
        %2699 = vmatpush2.bf16.msra.mxu0 0
        %2700 = vmatprep.mubr.bf16.mxu0 0
        %2701 = vmatmul.mubr.bf16.gmra.mxu0 %v1956
        %v2702 = vpop.f32.mrf.mxu0
        %v2703 = vadd.f32 %v2078, %v2702
        %v2704 = vpop.f32.mrf.mxu0
        %v2705 = vadd.f32 %v2082, %v2704
        %v2706 = vpop.f32.mrf.mxu0
        %v2707 = vpop.f32.mrf.mxu0
        %2708 = vdwg.mxu0
        %2709 = vmatprep.subr.bf16.mxu0 %v2554
        %2710 = vmatpush1.bf16.msra.mxu0 %v2553
        %2711 = vmatprep.subr.bf16.mxu0 %v2541
        %2712 = vmatpush1.bf16.msra.mxu0 %v2540
        %2713 = vmatprep.subr.bf16.mxu0 %v2528
        %2714 = vmatpush1.bf16.msra.mxu0 %v2527
        %2715 = vmatprep.subr.bf16.mxu0 %v2515
        %2716 = vmatpush1.bf16.msra.mxu0 %v2514
        %2717 = vmatprep.subr.bf16.mxu0 %v2502
        %2718 = vmatpush1.bf16.msra.mxu0 %v2501
        %2719 = vmatprep.subr.bf16.mxu0 %v2489
        %2720 = vmatpush1.bf16.msra.mxu0 %v2488
        %2721 = vmatprep.subr.bf16.mxu0 %v2476
        %2722 = vmatpush1.bf16.msra.mxu0 %v2475
        %2723 = vmatprep.subr.bf16.mxu0 %v2463
        %2724 = vmatpush1.bf16.msra.mxu0 %v2462
        %2725 = vmatprep.subr.bf16.mxu0 0
        %2726 = vmatpush2.bf16.msra.mxu0 0
        %2727 = vmatprep.subr.bf16.mxu0 0
        %2728 = vmatpush2.bf16.msra.mxu0 0
        %2729 = vmatprep.subr.bf16.mxu0 0
        %2730 = vmatpush2.bf16.msra.mxu0 0
        %2731 = vmatprep.subr.bf16.mxu0 0
        %2732 = vmatpush2.bf16.msra.mxu0 0
        %2733 = vmatprep.subr.bf16.mxu0 0
        %2734 = vmatpush2.bf16.msra.mxu0 0
        %2735 = vmatprep.subr.bf16.mxu0 0
        %2736 = vmatpush2.bf16.msra.mxu0 0
        %2737 = vmatprep.subr.bf16.mxu0 0
        %2738 = vmatpush2.bf16.msra.mxu0 0
        %2739 = vmatprep.subr.bf16.mxu0 0
        %2740 = vmatpush2.bf16.msra.mxu0 0
        %2741 = vmatprep.mubr.bf16.mxu0 0
        %2742 = vmatmul.mubr.bf16.gmra.mxu0 %v1956
        %v2743 = vpop.f32.mrf.mxu0
        %v2744 = vadd.f32 %v2086, %v2743
        %v2745 = vpop.f32.mrf.mxu0
        %v2746 = vadd.f32 %v2090, %v2745
        %v2747 = vpop.f32.mrf.mxu0
        %v2748 = vpop.f32.mrf.mxu0
        %2749 = vdwg.mxu0
        %2750 = vmatprep.subr.bf16.mxu0 %v2556
        %2751 = vmatpush1.bf16.msra.mxu0 %v2555
        %2752 = vmatprep.subr.bf16.mxu0 %v2543
        %2753 = vmatpush1.bf16.msra.mxu0 %v2542
        %2754 = vmatprep.subr.bf16.mxu0 %v2530
        %2755 = vmatpush1.bf16.msra.mxu0 %v2529
        %2756 = vmatprep.subr.bf16.mxu0 %v2517
        %2757 = vmatpush1.bf16.msra.mxu0 %v2516
        %2758 = vmatprep.subr.bf16.mxu0 %v2504
        %2759 = vmatpush1.bf16.msra.mxu0 %v2503
        %2760 = vmatprep.subr.bf16.mxu0 %v2491
        %2761 = vmatpush1.bf16.msra.mxu0 %v2490
        %2762 = vmatprep.subr.bf16.mxu0 %v2478
        %2763 = vmatpush1.bf16.msra.mxu0 %v2477
        %2764 = vmatprep.subr.bf16.mxu0 %v2465
        %2765 = vmatpush1.bf16.msra.mxu0 %v2464
        %2766 = vmatprep.subr.bf16.mxu0 0
        %2767 = vmatpush2.bf16.msra.mxu0 0
        %2768 = vmatprep.subr.bf16.mxu0 0
        %2769 = vmatpush2.bf16.msra.mxu0 0
        %2770 = vmatprep.subr.bf16.mxu0 0
        %2771 = vmatpush2.bf16.msra.mxu0 0
        %2772 = vmatprep.subr.bf16.mxu0 0
        %2773 = vmatpush2.bf16.msra.mxu0 0
        %2774 = vmatprep.subr.bf16.mxu0 0
        %2775 = vmatpush2.bf16.msra.mxu0 0
        %2776 = vmatprep.subr.bf16.mxu0 0
        %2777 = vmatpush2.bf16.msra.mxu0 0
        %2778 = vmatprep.subr.bf16.mxu0 0
        %2779 = vmatpush2.bf16.msra.mxu0 0
        %2780 = vmatprep.subr.bf16.mxu0 0
        %2781 = vmatpush2.bf16.msra.mxu0 0
        %2782 = vmatprep.mubr.bf16.mxu0 0
        %2783 = vmatmul.mubr.bf16.gmra.mxu0 %v1956
        %v2784 = vpop.f32.mrf.mxu0
        %v2785 = vadd.f32 %v2094, %v2784
        %v2786 = vpop.f32.mrf.mxu0
        %v2787 = vadd.f32 %v2098, %v2786
        %v2788 = vpop.f32.mrf.mxu0
        %v2789 = vpop.f32.mrf.mxu0
        %2790 = vdwg.mxu0
        %2791 = vmatprep.subr.bf16.mxu0 %v2558
        %2792 = vmatpush1.bf16.msra.mxu0 %v2557
        %2793 = vmatprep.subr.bf16.mxu0 %v2545
        %2794 = vmatpush1.bf16.msra.mxu0 %v2544
        %2795 = vmatprep.subr.bf16.mxu0 %v2532
        %2796 = vmatpush1.bf16.msra.mxu0 %v2531
        %2797 = vmatprep.subr.bf16.mxu0 %v2519
        %2798 = vmatpush1.bf16.msra.mxu0 %v2518
        %2799 = vmatprep.subr.bf16.mxu0 %v2506
        %2800 = vmatpush1.bf16.msra.mxu0 %v2505
        %2801 = vmatprep.subr.bf16.mxu0 %v2493
        %2802 = vmatpush1.bf16.msra.mxu0 %v2492
        %2803 = vmatprep.subr.bf16.mxu0 %v2480
        %2804 = vmatpush1.bf16.msra.mxu0 %v2479
        %2805 = vmatprep.subr.bf16.mxu0 %v2467
        %2806 = vmatpush1.bf16.msra.mxu0 %v2466
        %2807 = vmatprep.subr.bf16.mxu0 0
        %2808 = vmatpush2.bf16.msra.mxu0 0
        %2809 = vmatprep.subr.bf16.mxu0 0
        %2810 = vmatpush2.bf16.msra.mxu0 0
        %2811 = vmatprep.subr.bf16.mxu0 0
        %2812 = vmatpush2.bf16.msra.mxu0 0
        %2813 = vmatprep.subr.bf16.mxu0 0
        %2814 = vmatpush2.bf16.msra.mxu0 0
        %2815 = vmatprep.subr.bf16.mxu0 0
        %2816 = vmatpush2.bf16.msra.mxu0 0
        %2817 = vmatprep.subr.bf16.mxu0 0
        %2818 = vmatpush2.bf16.msra.mxu0 0
        %2819 = vmatprep.subr.bf16.mxu0 0
        %2820 = vmatpush2.bf16.msra.mxu0 0
        %2821 = vmatprep.subr.bf16.mxu0 0
        %2822 = vmatpush2.bf16.msra.mxu0 0
        %2823 = vmatprep.mubr.bf16.mxu0 0
        %2824 = vmatmul.mubr.bf16.gmra.mxu0 %v1956
        %v2825 = vpop.f32.mrf.mxu0
        %v2826 = vadd.f32 %v2102, %v2825
        %v2827 = vpop.f32.mrf.mxu0
        %v2828 = vadd.f32 %v2106, %v2827
        %v2829 = vpop.f32.mrf.mxu0
        %v2830 = vpop.f32.mrf.mxu0
        %2831 = vdwg.mxu0
        %2832 = vmatprep.subr.bf16.mxu0 %v2560
        %2833 = vmatpush1.bf16.msra.mxu0 %v2559
        %2834 = vmatprep.subr.bf16.mxu0 %v2547
        %2835 = vmatpush1.bf16.msra.mxu0 %v2546
        %2836 = vmatprep.subr.bf16.mxu0 %v2534
        %2837 = vmatpush1.bf16.msra.mxu0 %v2533
        %2838 = vmatprep.subr.bf16.mxu0 %v2521
        %2839 = vmatpush1.bf16.msra.mxu0 %v2520
        %2840 = vmatprep.subr.bf16.mxu0 %v2508
        %2841 = vmatpush1.bf16.msra.mxu0 %v2507
        %2842 = vmatprep.subr.bf16.mxu0 %v2495
        %2843 = vmatpush1.bf16.msra.mxu0 %v2494
        %2844 = vmatprep.subr.bf16.mxu0 %v2482
        %2845 = vmatpush1.bf16.msra.mxu0 %v2481
        %2846 = vmatprep.subr.bf16.mxu0 %v2469
        %2847 = vmatpush1.bf16.msra.mxu0 %v2468
        %2848 = vmatprep.subr.bf16.mxu0 0
        %2849 = vmatpush2.bf16.msra.mxu0 0
        %2850 = vmatprep.subr.bf16.mxu0 0
        %2851 = vmatpush2.bf16.msra.mxu0 0
        %2852 = vmatprep.subr.bf16.mxu0 0
        %2853 = vmatpush2.bf16.msra.mxu0 0
        %2854 = vmatprep.subr.bf16.mxu0 0
        %2855 = vmatpush2.bf16.msra.mxu0 0
        %2856 = vmatprep.subr.bf16.mxu0 0
        %2857 = vmatpush2.bf16.msra.mxu0 0
        %2858 = vmatprep.subr.bf16.mxu0 0
        %2859 = vmatpush2.bf16.msra.mxu0 0
        %2860 = vmatprep.subr.bf16.mxu0 0
        %2861 = vmatpush2.bf16.msra.mxu0 0
        %2862 = vmatprep.subr.bf16.mxu0 0
        %2863 = vmatpush2.bf16.msra.mxu0 0
        %2864 = vmatprep.mubr.bf16.mxu0 0
        %2865 = vmatmul.mubr.bf16.gmra.mxu0 %v1956
        %v2866 = vpop.f32.mrf.mxu0
        %v2867 = vadd.f32 %v2110, %v2866
        %v2868 = vpop.f32.mrf.mxu0
        %v2869 = vadd.f32 %v2114, %v2868
        %v2870 = vpop.f32.mrf.mxu0
        %v2871 = vpop.f32.mrf.mxu0
        %2872 = vdwg.mxu0
        %2873 = vmatprep.subr.bf16.mxu0 %v2562
        %2874 = vmatpush1.bf16.msra.mxu0 %v2561
        %2875 = vmatprep.subr.bf16.mxu0 %v2549
        %2876 = vmatpush1.bf16.msra.mxu0 %v2548
        %2877 = vmatprep.subr.bf16.mxu0 %v2536
        %2878 = vmatpush1.bf16.msra.mxu0 %v2535
        %2879 = vmatprep.subr.bf16.mxu0 %v2523
        %2880 = vmatpush1.bf16.msra.mxu0 %v2522
        %2881 = vmatprep.subr.bf16.mxu0 %v2510
        %2882 = vmatpush1.bf16.msra.mxu0 %v2509
        %2883 = vmatprep.subr.bf16.mxu0 %v2497
        %2884 = vmatpush1.bf16.msra.mxu0 %v2496
        %2885 = vmatprep.subr.bf16.mxu0 %v2484
        %2886 = vmatpush1.bf16.msra.mxu0 %v2483
        %2887 = vmatprep.subr.bf16.mxu0 %v2471
        %2888 = vmatpush1.bf16.msra.mxu0 %v2470
        %2889 = vmatprep.subr.bf16.mxu0 0
        %2890 = vmatpush2.bf16.msra.mxu0 0
        %2891 = vmatprep.subr.bf16.mxu0 0
        %2892 = vmatpush2.bf16.msra.mxu0 0
        %2893 = vmatprep.subr.bf16.mxu0 0
        %2894 = vmatpush2.bf16.msra.mxu0 0
        %2895 = vmatprep.subr.bf16.mxu0 0
        %2896 = vmatpush2.bf16.msra.mxu0 0
        %2897 = vmatprep.subr.bf16.mxu0 0
        %2898 = vmatpush2.bf16.msra.mxu0 0
        %2899 = vmatprep.subr.bf16.mxu0 0
        %2900 = vmatpush2.bf16.msra.mxu0 0
        %2901 = vmatprep.subr.bf16.mxu0 0
        %2902 = vmatpush2.bf16.msra.mxu0 0
        %2903 = vmatprep.subr.bf16.mxu0 0
        %2904 = vmatpush2.bf16.msra.mxu0 0
        %2905 = vmatprep.mubr.bf16.mxu0 0
        %2906 = vmatmul.mubr.bf16.gmra.mxu0 %v1956
        %v2907 = vpop.f32.mrf.mxu0
        %v2908 = vadd.f32 %v2118, %v2907
        %v2909 = vpop.f32.mrf.mxu0
        %v2910 = vadd.f32 %v2122, %v2909
        %v2911 = vpop.f32.mrf.mxu0
        %v2912 = vpop.f32.mrf.mxu0
        %2913 = vdwg.mxu0
        %2914 = vmatprep.subr.bf16.mxu0 0
        %2915 = vmatpush1.bf16.msra.mxu0 %v2563
        %2916 = vmatprep.subr.bf16.mxu0 0
        %2917 = vmatpush1.bf16.msra.mxu0 %v2550
        %2918 = vmatprep.subr.bf16.mxu0 0
        %2919 = vmatpush1.bf16.msra.mxu0 %v2537
        %2920 = vmatprep.subr.bf16.mxu0 0
        %2921 = vmatpush1.bf16.msra.mxu0 %v2524
        %2922 = vmatprep.subr.bf16.mxu0 0
        %2923 = vmatpush1.bf16.msra.mxu0 %v2511
        %2924 = vmatprep.subr.bf16.mxu0 0
        %2925 = vmatpush1.bf16.msra.mxu0 %v2498
        %2926 = vmatprep.subr.bf16.mxu0 0
        %2927 = vmatpush1.bf16.msra.mxu0 %v2485
        %2928 = vmatprep.subr.bf16.mxu0 0
        %2929 = vmatpush1.bf16.msra.mxu0 %v2472
        %2930 = vmatprep.subr.bf16.mxu0 0
        %2931 = vmatpush2.bf16.msra.mxu0 0
        %2932 = vmatprep.subr.bf16.mxu0 0
        %2933 = vmatpush2.bf16.msra.mxu0 0
        %2934 = vmatprep.subr.bf16.mxu0 0
        %2935 = vmatpush2.bf16.msra.mxu0 0
        %2936 = vmatprep.subr.bf16.mxu0 0
        %2937 = vmatpush2.bf16.msra.mxu0 0
        %2938 = vmatprep.subr.bf16.mxu0 0
        %2939 = vmatpush2.bf16.msra.mxu0 0
        %2940 = vmatprep.subr.bf16.mxu0 0
        %2941 = vmatpush2.bf16.msra.mxu0 0
        %2942 = vmatprep.subr.bf16.mxu0 0
        %2943 = vmatpush2.bf16.msra.mxu0 0
        %2944 = vmatprep.subr.bf16.mxu0 0
        %2945 = vmatpush2.bf16.msra.mxu0 0
        %2946 = vmatprep.mubr.bf16.mxu0 0
        %2947 = vmatmul.mubr.bf16.gmra.mxu0 %v1956
        %v2948 = vpop.f32.mrf.mxu0
        %v2949 = vadd.f32 %v2126, %v2948
        %v2950 = vpop.f32.mrf.mxu0
        %v2951 = vpop.f32.mrf.mxu0
        %v2952 = vpop.f32.mrf.mxu0
        %2953 = vdwg.mxu0
        %v2967 = vcombine.low %v2703, %v2705
        %v2968 = vcombine.low %v2744, %v2746
        %v2970 = vunpack.c.l.s4 1983009808
        %v2971 = vunpack.c.0.s8 %v2970
        %v2972 = vlaneseq
        %v2973 = vshrl.u32 %v2972, 7
        %v2974 = vsub.s32 %v2971, %v2973
        %v2975 = vrot.slane %v2967, %v2974
        %v2977 = vunpack.c.l.s4 1983009808
        %v2978 = vunpack.c.0.s8 %v2977
        %v2979 = vlaneseq
        %v2980 = vshrl.u32 %v2979, 7
        %v2981 = vsub.s32 %v2978, %v2980
        %v2982 = vrot.slane %v2968, %v2981
        %v2983 = vcombine.low %v2975, %v2982
        %v2984 = vcombine.low %v2785, %v2787
        %v2985 = vcombine.low %v2826, %v2828
        %v2987 = vunpack.c.l.s4 1983009808
        %v2988 = vunpack.c.0.s8 %v2987
        %v2989 = vlaneseq
        %v2990 = vshrl.u32 %v2989, 7
        %v2991 = vsub.s32 %v2988, %v2990
        %v2992 = vrot.slane %v2984, %v2991
        %v2994 = vunpack.c.l.s4 1983009808
        %v2995 = vunpack.c.0.s8 %v2994
        %v2996 = vlaneseq
        %v2997 = vshrl.u32 %v2996, 7
        %v2998 = vsub.s32 %v2995, %v2997
        %v2999 = vrot.slane %v2985, %v2998
        %v3000 = vcombine.low %v2992, %v2999
        %v3001 = vcombine.low %v2867, %v2869
        %v3002 = vcombine.low %v2908, %v2910
        %v3004 = vunpack.c.l.s4 1983009808
        %v3005 = vunpack.c.0.s8 %v3004
        %v3006 = vlaneseq
        %v3007 = vshrl.u32 %v3006, 7
        %v3008 = vsub.s32 %v3005, %v3007
        %v3009 = vrot.slane %v3001, %v3008
        %v3011 = vunpack.c.l.s4 1983009808
        %v3012 = vunpack.c.0.s8 %v3011
        %v3013 = vlaneseq
        %v3014 = vshrl.u32 %v3013, 7
        %v3015 = vsub.s32 %v3012, %v3014
        %v3016 = vrot.slane %v3002, %v3015
        %v3017 = vcombine.low %v3009, %v3016
        %v3018 = vcombine.low %v2949, %v457
        %v3020 = vunpack.c.l.s4 1983009808
        %v3021 = vunpack.c.0.s8 %v3020
        %v3022 = vlaneseq
        %v3023 = vshrl.u32 %v3022, 7
        %v3024 = vsub.s32 %v3021, %v3023
        %v3025 = vrot.slane %v3018, %v3024
        %v3026 = vcombine.low %v3025, %v1741
        %s3031 = scalar_lea.vmem %s449, 36
        %3032 = vst [vmem:[%s3031] sm:$0xff] %v2983
        %3033 = vst [vmem:[%s3031 + $0x8] sm:$0xff] %v3000
        %3034 = vst [vmem:[%s3031 + $0x10] sm:$0xff] %v3017
        %3035 = vst [vmem:[%s3031 + $0x18] sm:$0xff] %v3026
        %3036 = vst [vmem:[%s3031 + $0x20] sm:$0xf] %v1750
        %s3037 = scalar_lea.vmem %s349, 8 [#allocation2]
        %v3038 = vld [vmem:[%s3037] sm:$0xf]
        %v3041 = vunpack.c.l.s4 1983009808
        %v3042 = vunpack.c.0.s8 %v3041
        %v3043 = vlaneseq
        %v3044 = vshrl.u32 %v3043, 7
        %v3045 = vsub.s32 %v3042, %v3044
        %v3046 = vrot.slane %v3038, %v3045
        %v3047 = vcombine.high %v3046, %v3046
        %v3050 = vpack.c.bf16 %v3046, %v3046
        %v3051 = vpack.c.bf16 %v3047, %v3047
        %s3052 = scalar_lea.vmem %s358, 256 [#allocation4]
        %v3053 = vld [vmem:[%s3052] sm:$0xf]
        %v3054 = vld [vmem:[%s3052 + $0x4] sm:$0xf]
        %v3055 = vld [vmem:[%s3052 + $0x8] sm:$0xf]
        %v3056 = vld [vmem:[%s3052 + $0xc] sm:$0xf]
        %v3057 = vld [vmem:[%s3052 + $0x10] sm:$0xf]
        %v3058 = vld [vmem:[%s3052 + $0x14] sm:$0xf]
        %v3059 = vld [vmem:[%s3052 + $0x18] sm:$0xf]
        %v3060 = vld [vmem:[%s3052 + $0x1c] sm:$0xf]
        %v3061 = vld [vmem:[%s3052 + $0x20] sm:$0xf]
        %v3062 = vld [vmem:[%s3052 + $0x24] sm:$0xf]
        %v3063 = vld [vmem:[%s3052 + $0x28] sm:$0xf]
        %v3064 = vld [vmem:[%s3052 + $0x2c] sm:$0xf]
        %v3065 = vld [vmem:[%s3052 + $0x30] sm:$0xf]
        %v3066 = vld [vmem:[%s3052 + $0x34] sm:$0xf]
        %v3067 = vld [vmem:[%s3052 + $0x38] sm:$0xf]
        %v3068 = vld [vmem:[%s3052 + $0x3c] sm:$0xf]
        %v3069 = vld [vmem:[%s3052 + $0x40] sm:$0xf]
        %v3070 = vld [vmem:[%s3052 + $0x44] sm:$0xf]
        %v3071 = vld [vmem:[%s3052 + $0x48] sm:$0xf]
        %v3072 = vld [vmem:[%s3052 + $0x4c] sm:$0xf]
        %v3073 = vld [vmem:[%s3052 + $0x50] sm:$0xf]
        %v3074 = vld [vmem:[%s3052 + $0x54] sm:$0xf]
        %v3075 = vld [vmem:[%s3052 + $0x58] sm:$0xf]
        %v3076 = vld [vmem:[%s3052 + $0x5c] sm:$0xf]
        %v3077 = vld [vmem:[%s3052 + $0x60] sm:$0xf]
        %v3078 = vld [vmem:[%s3052 + $0x64] sm:$0xf]
        %v3079 = vld [vmem:[%s3052 + $0x68] sm:$0xf]
        %v3080 = vld [vmem:[%s3052 + $0x6c] sm:$0xf]
        %v3081 = vld [vmem:[%s3052 + $0x70] sm:$0xf]
        %v3082 = vld [vmem:[%s3052 + $0x74] sm:$0xf]
        %v3083 = vld [vmem:[%s3052 + $0x78] sm:$0xf]
        %v3084 = vld [vmem:[%s3052 + $0x7c] sm:$0xf]
        %s3085 = scalar_lea.vmem %s367, 2 [#allocation6]
        %v3086 = vld [vmem:[%s3085] sm:$0x1]
        %v3088 = vlaneseq
        %v3089 = vshrl.u32 %v3088, 7
        %v3090 = vsub.s32 0, %v3089
        %v3091 = vrot.slane %v3086, %v3090
        %v3125 = vunpack.c.l.b16 %v3053
        %v3126 = vunpack.c.l.b16 %v3054
        %v3127 = vunpack.c.l.b16 %v3055
        %v3128 = vunpack.c.l.b16 %v3056
        %v3129 = vunpack.c.l.b16 %v3057
        %v3130 = vunpack.c.l.b16 %v3058
        %v3131 = vunpack.c.l.b16 %v3059
        %v3132 = vunpack.c.l.b16 %v3060
        %v3133 = vunpack.c.l.b16 %v3061
        %v3134 = vunpack.c.l.b16 %v3062
        %v3135 = vunpack.c.l.b16 %v3063
        %v3136 = vunpack.c.l.b16 %v3064
        %v3137 = vunpack.c.l.b16 %v3065
        %v3138 = vunpack.c.l.b16 %v3066
        %v3139 = vunpack.c.l.b16 %v3067
        %v3140 = vunpack.c.l.b16 %v3068
        %v3141 = vunpack.c.l.b16 %v3069
        %v3142 = vunpack.c.l.b16 %v3070
        %v3143 = vunpack.c.l.b16 %v3071
        %v3144 = vunpack.c.l.b16 %v3072
        %v3145 = vunpack.c.l.b16 %v3073
        %v3146 = vunpack.c.l.b16 %v3074
        %v3147 = vunpack.c.l.b16 %v3075
        %v3148 = vunpack.c.l.b16 %v3076
        %v3149 = vunpack.c.l.b16 %v3077
        %v3150 = vunpack.c.l.b16 %v3078
        %v3151 = vunpack.c.l.b16 %v3079
        %v3152 = vunpack.c.l.b16 %v3080
        %v3153 = vunpack.c.l.b16 %v3081
        %v3154 = vunpack.c.l.b16 %v3082
        %v3155 = vunpack.c.l.b16 %v3083
        %v3156 = vunpack.c.l.b16 %v3084
        %v3157 = vpack.c.b16 %v3126, %v3125
        %v3158 = vpack.c.b16 %v3128, %v3127
        %v3159 = vpack.c.b16 %v3130, %v3129
        %v3160 = vpack.c.b16 %v3132, %v3131
        %v3161 = vpack.c.b16 %v3134, %v3133
        %v3162 = vpack.c.b16 %v3136, %v3135
        %v3163 = vpack.c.b16 %v3138, %v3137
        %v3164 = vpack.c.b16 %v3140, %v3139
        %v3165 = vpack.c.b16 %v3142, %v3141
        %v3166 = vpack.c.b16 %v3144, %v3143
        %v3167 = vpack.c.b16 %v3146, %v3145
        %v3168 = vpack.c.b16 %v3148, %v3147
        %v3169 = vpack.c.b16 %v3150, %v3149
        %v3170 = vpack.c.b16 %v3152, %v3151
        %v3171 = vpack.c.b16 %v3154, %v3153
        %v3172 = vpack.c.b16 %v3156, %v3155
        %3189 = vmatprep.subr.bf16.mxu0 0
        %3190 = vmatpush1.bf16.msra.mxu0 %v3164
        %3191 = vmatprep.subr.bf16.mxu0 0
        %3192 = vmatpush1.bf16.msra.mxu0 %v3163
        %3193 = vmatprep.subr.bf16.mxu0 0
        %3194 = vmatpush1.bf16.msra.mxu0 %v3162
        %3195 = vmatprep.subr.bf16.mxu0 0
        %3196 = vmatpush1.bf16.msra.mxu0 %v3161
        %3197 = vmatprep.subr.bf16.mxu0 0
        %3198 = vmatpush1.bf16.msra.mxu0 %v3160
        %3199 = vmatprep.subr.bf16.mxu0 0
        %3200 = vmatpush1.bf16.msra.mxu0 %v3159
        %3201 = vmatprep.subr.bf16.mxu0 0
        %3202 = vmatpush1.bf16.msra.mxu0 %v3158
        %3203 = vmatprep.subr.bf16.mxu0 0
        %3204 = vmatpush1.bf16.msra.mxu0 %v3157
        %3205 = vmatprep.subr.bf16.mxu0 0
        %3206 = vmatpush2.bf16.msra.mxu0 %v3172
        %3207 = vmatprep.subr.bf16.mxu0 0
        %3208 = vmatpush2.bf16.msra.mxu0 %v3171
        %3209 = vmatprep.subr.bf16.mxu0 0
        %3210 = vmatpush2.bf16.msra.mxu0 %v3170
        %3211 = vmatprep.subr.bf16.mxu0 0
        %3212 = vmatpush2.bf16.msra.mxu0 %v3169
        %3213 = vmatprep.subr.bf16.mxu0 0
        %3214 = vmatpush2.bf16.msra.mxu0 %v3168
        %3215 = vmatprep.subr.bf16.mxu0 0
        %3216 = vmatpush2.bf16.msra.mxu0 %v3167
        %3217 = vmatprep.subr.bf16.mxu0 0
        %3218 = vmatpush2.bf16.msra.mxu0 %v3166
        %3219 = vmatprep.subr.bf16.mxu0 0
        %3220 = vmatpush2.bf16.msra.mxu0 %v3165
        %3221 = vmatprep.mubr.bf16.mxu0 %v3051
        %3222 = vmatmul.mubr.bf16.gmra.mxu0 %v3050
        %v3223 = vpop.f32.mrf.mxu0
        %v3224 = vadd.f32 %v3091, %v3223
        %v3225 = vpop.f32.mrf.mxu0
        %v3226 = vpop.f32.mrf.mxu0
        %v3227 = vpop.f32.mrf.mxu0
        %3228 = vdwg.mxu0
        %vm3229 = vcmp.ge.f32.partialorder %v3224, 0.0
        %v3230 = vmul.f32 %v3224, 0.01
        %v3231 = vsel %vm3229, %v3224, %v3230
        %v3232 = vpack.c.bf16 %v3231, %v3231
        %s3233 = scalar_lea.vmem %s376, 1664 [#allocation7]
        %v3234 = vld [vmem:[%s3233] sm:$0xff]
        %v3235 = vld [vmem:[%s3233 + $0x8] sm:$0xff]
        %v3236 = vld [vmem:[%s3233 + $0x10] sm:$0xff]
        %v3237 = vld [vmem:[%s3233 + $0x18] sm:$0xff]
        %v3238 = vld [vmem:[%s3233 + $0x20] sm:$0xff]
        %v3239 = vld [vmem:[%s3233 + $0x28] sm:$0xff]
        %v3240 = vld [vmem:[%s3233 + $0x30] sm:$0xf]
        %v3241 = vld [vmem:[%s3233 + $0x34] sm:$0xff]
        %v3242 = vld [vmem:[%s3233 + $0x3c] sm:$0xff]
        %v3243 = vld [vmem:[%s3233 + $0x44] sm:$0xff]
        %v3244 = vld [vmem:[%s3233 + $0x4c] sm:$0xff]
        %v3245 = vld [vmem:[%s3233 + $0x54] sm:$0xff]
        %v3246 = vld [vmem:[%s3233 + $0x5c] sm:$0xff]
        %v3247 = vld [vmem:[%s3233 + $0x64] sm:$0xf]
        %v3248 = vld [vmem:[%s3233 + $0x68] sm:$0xff]
        %v3249 = vld [vmem:[%s3233 + $0x70] sm:$0xff]
        %v3250 = vld [vmem:[%s3233 + $0x78] sm:$0xff]
        %v3251 = vld [vmem:[%s3233 + $0x80] sm:$0xff]
        %v3252 = vld [vmem:[%s3233 + $0x88] sm:$0xff]
        %v3253 = vld [vmem:[%s3233 + $0x90] sm:$0xff]
        %v3254 = vld [vmem:[%s3233 + $0x98] sm:$0xf]
        %v3255 = vld [vmem:[%s3233 + $0x9c] sm:$0xff]
        %v3256 = vld [vmem:[%s3233 + $0xa4] sm:$0xff]
        %v3257 = vld [vmem:[%s3233 + $0xac] sm:$0xff]
        %v3258 = vld [vmem:[%s3233 + $0xb4] sm:$0xff]
        %v3259 = vld [vmem:[%s3233 + $0xbc] sm:$0xff]
        %v3260 = vld [vmem:[%s3233 + $0xc4] sm:$0xff]
        %v3261 = vld [vmem:[%s3233 + $0xcc] sm:$0xf]
        %v3262 = vld [vmem:[%s3233 + $0xd0] sm:$0xff]
        %v3263 = vld [vmem:[%s3233 + $0xd8] sm:$0xff]
        %v3264 = vld [vmem:[%s3233 + $0xe0] sm:$0xff]
        %v3265 = vld [vmem:[%s3233 + $0xe8] sm:$0xff]
        %v3266 = vld [vmem:[%s3233 + $0xf0] sm:$0xff]
        %v3267 = vld [vmem:[%s3233 + $0xf8] sm:$0xff]
        %v3268 = vld [vmem:[%s3233 + $0x100] sm:$0xf]
        %v3269 = vld [vmem:[%s3233 + $0x104] sm:$0xff]
        %v3270 = vld [vmem:[%s3233 + $0x10c] sm:$0xff]
        %v3271 = vld [vmem:[%s3233 + $0x114] sm:$0xff]
        %v3272 = vld [vmem:[%s3233 + $0x11c] sm:$0xff]
        %v3273 = vld [vmem:[%s3233 + $0x124] sm:$0xff]
        %v3274 = vld [vmem:[%s3233 + $0x12c] sm:$0xff]
        %v3275 = vld [vmem:[%s3233 + $0x134] sm:$0xf]
        %v3276 = vld [vmem:[%s3233 + $0x138] sm:$0xff]
        %v3277 = vld [vmem:[%s3233 + $0x140] sm:$0xff]
        %v3278 = vld [vmem:[%s3233 + $0x148] sm:$0xff]
        %v3279 = vld [vmem:[%s3233 + $0x150] sm:$0xff]
        %v3280 = vld [vmem:[%s3233 + $0x158] sm:$0xff]
        %v3281 = vld [vmem:[%s3233 + $0x160] sm:$0xff]
        %v3282 = vld [vmem:[%s3233 + $0x168] sm:$0xf]
        %v3283 = vld [vmem:[%s3233 + $0x16c] sm:$0xff]
        %v3284 = vld [vmem:[%s3233 + $0x174] sm:$0xff]
        %v3285 = vld [vmem:[%s3233 + $0x17c] sm:$0xff]
        %v3286 = vld [vmem:[%s3233 + $0x184] sm:$0xff]
        %v3287 = vld [vmem:[%s3233 + $0x18c] sm:$0xff]
        %v3288 = vld [vmem:[%s3233 + $0x194] sm:$0xff]
        %v3289 = vld [vmem:[%s3233 + $0x19c] sm:$0xf]
        %v3290 = vld [vmem:[%s3233 + $0x1a0] sm:$0xff]
        %v3291 = vld [vmem:[%s3233 + $0x1a8] sm:$0xff]
        %v3292 = vld [vmem:[%s3233 + $0x1b0] sm:$0xff]
        %v3293 = vld [vmem:[%s3233 + $0x1b8] sm:$0xff]
        %v3294 = vld [vmem:[%s3233 + $0x1c0] sm:$0xff]
        %v3295 = vld [vmem:[%s3233 + $0x1c8] sm:$0xff]
        %v3296 = vld [vmem:[%s3233 + $0x1d0] sm:$0xf]
        %v3297 = vld [vmem:[%s3233 + $0x1d4] sm:$0xff]
        %v3298 = vld [vmem:[%s3233 + $0x1dc] sm:$0xff]
        %v3299 = vld [vmem:[%s3233 + $0x1e4] sm:$0xff]
        %v3300 = vld [vmem:[%s3233 + $0x1ec] sm:$0xff]
        %v3301 = vld [vmem:[%s3233 + $0x1f4] sm:$0xff]
        %v3302 = vld [vmem:[%s3233 + $0x1fc] sm:$0xff]
        %v3303 = vld [vmem:[%s3233 + $0x204] sm:$0xf]
        %v3304 = vld [vmem:[%s3233 + $0x208] sm:$0xff]
        %v3305 = vld [vmem:[%s3233 + $0x210] sm:$0xff]
        %v3306 = vld [vmem:[%s3233 + $0x218] sm:$0xff]
        %v3307 = vld [vmem:[%s3233 + $0x220] sm:$0xff]
        %v3308 = vld [vmem:[%s3233 + $0x228] sm:$0xff]
        %v3309 = vld [vmem:[%s3233 + $0x230] sm:$0xff]
        %v3310 = vld [vmem:[%s3233 + $0x238] sm:$0xf]
        %v3311 = vld [vmem:[%s3233 + $0x23c] sm:$0xff]
        %v3312 = vld [vmem:[%s3233 + $0x244] sm:$0xff]
        %v3313 = vld [vmem:[%s3233 + $0x24c] sm:$0xff]
        %v3314 = vld [vmem:[%s3233 + $0x254] sm:$0xff]
        %v3315 = vld [vmem:[%s3233 + $0x25c] sm:$0xff]
        %v3316 = vld [vmem:[%s3233 + $0x264] sm:$0xff]
        %v3317 = vld [vmem:[%s3233 + $0x26c] sm:$0xf]
        %v3318 = vld [vmem:[%s3233 + $0x270] sm:$0xff]
        %v3319 = vld [vmem:[%s3233 + $0x278] sm:$0xff]
        %v3320 = vld [vmem:[%s3233 + $0x280] sm:$0xff]
        %v3321 = vld [vmem:[%s3233 + $0x288] sm:$0xff]
        %v3322 = vld [vmem:[%s3233 + $0x290] sm:$0xff]
        %v3323 = vld [vmem:[%s3233 + $0x298] sm:$0xff]
        %v3324 = vld [vmem:[%s3233 + $0x2a0] sm:$0xf]
        %v3325 = vld [vmem:[%s3233 + $0x2a4] sm:$0xff]
        %v3326 = vld [vmem:[%s3233 + $0x2ac] sm:$0xff]
        %v3327 = vld [vmem:[%s3233 + $0x2b4] sm:$0xff]
        %v3328 = vld [vmem:[%s3233 + $0x2bc] sm:$0xff]
        %v3329 = vld [vmem:[%s3233 + $0x2c4] sm:$0xff]
        %v3330 = vld [vmem:[%s3233 + $0x2cc] sm:$0xff]
        %v3331 = vld [vmem:[%s3233 + $0x2d4] sm:$0xf]
        %v3332 = vld [vmem:[%s3233 + $0x2d8] sm:$0xff]
        %v3333 = vld [vmem:[%s3233 + $0x2e0] sm:$0xff]
        %v3334 = vld [vmem:[%s3233 + $0x2e8] sm:$0xff]
        %v3335 = vld [vmem:[%s3233 + $0x2f0] sm:$0xff]
        %v3336 = vld [vmem:[%s3233 + $0x2f8] sm:$0xff]
        %v3337 = vld [vmem:[%s3233 + $0x300] sm:$0xff]
        %v3338 = vld [vmem:[%s3233 + $0x308] sm:$0xf]
        %v3339 = vld [vmem:[%s3233 + $0x30c] sm:$0xff]
        %v3340 = vld [vmem:[%s3233 + $0x314] sm:$0xff]
        %v3341 = vld [vmem:[%s3233 + $0x31c] sm:$0xff]
        %v3342 = vld [vmem:[%s3233 + $0x324] sm:$0xff]
        %v3343 = vld [vmem:[%s3233 + $0x32c] sm:$0xff]
        %v3344 = vld [vmem:[%s3233 + $0x334] sm:$0xff]
        %v3345 = vld [vmem:[%s3233 + $0x33c] sm:$0xf]
        %s3346 = scalar_lea.vmem %s385, 26 [#allocation9]
        %v3347 = vld [vmem:[%s3346] sm:$0xff]
        %v3348 = vld [vmem:[%s3346 + $0x8] sm:$0x1f]
        %v3351 = vlaneseq
        %v3352 = vshrl.u32 %v3351, 7
        %v3353 = vsub.s32 0, %v3352
        %v3354 = vrot.slane %v3347, %v3353
        %v3355 = vlaneseq
        %v3356 = vshrl.u32 %v3355, 7
        %v3357 = vsub.s32 1, %v3356
        %v3358 = vrot.slane %v3347, %v3357
        %v3359 = vlaneseq
        %v3360 = vshrl.u32 %v3359, 7
        %v3361 = vsub.s32 2, %v3360
        %v3362 = vrot.slane %v3347, %v3361
        %v3363 = vlaneseq
        %v3364 = vshrl.u32 %v3363, 7
        %v3365 = vsub.s32 3, %v3364
        %v3366 = vrot.slane %v3347, %v3365
        %v3367 = vlaneseq
        %v3368 = vshrl.u32 %v3367, 7
        %v3369 = vsub.s32 4, %v3368
        %v3370 = vrot.slane %v3347, %v3369
        %v3371 = vlaneseq
        %v3372 = vshrl.u32 %v3371, 7
        %v3373 = vsub.s32 5, %v3372
        %v3374 = vrot.slane %v3347, %v3373
        %v3375 = vlaneseq
        %v3376 = vshrl.u32 %v3375, 7
        %v3377 = vsub.s32 6, %v3376
        %v3378 = vrot.slane %v3347, %v3377
        %v3379 = vlaneseq
        %v3380 = vshrl.u32 %v3379, 7
        %v3381 = vsub.s32 7, %v3380
        %v3382 = vrot.slane %v3347, %v3381
        %v3383 = vlaneseq
        %v3384 = vshrl.u32 %v3383, 7
        %v3385 = vsub.s32 0, %v3384
        %v3386 = vrot.slane %v3348, %v3385
        %v3387 = vlaneseq
        %v3388 = vshrl.u32 %v3387, 7
        %v3389 = vsub.s32 1, %v3388
        %v3390 = vrot.slane %v3348, %v3389
        %v3391 = vlaneseq
        %v3392 = vshrl.u32 %v3391, 7
        %v3393 = vsub.s32 2, %v3392
        %v3394 = vrot.slane %v3348, %v3393
        %v3395 = vlaneseq
        %v3396 = vshrl.u32 %v3395, 7
        %v3397 = vsub.s32 3, %v3396
        %v3398 = vrot.slane %v3348, %v3397
        %v3399 = vlaneseq
        %v3400 = vshrl.u32 %v3399, 7
        %v3401 = vsub.s32 4, %v3400
        %v3402 = vrot.slane %v3348, %v3401
        %v3528 = vunpack.c.l.b16 %v3234
        %v3529 = vunpack.c.h.b16 %v3234
        %v3530 = vunpack.c.l.b16 %v3235
        %v3531 = vunpack.c.h.b16 %v3235
        %v3532 = vunpack.c.l.b16 %v3236
        %v3533 = vunpack.c.h.b16 %v3236
        %v3534 = vunpack.c.l.b16 %v3237
        %v3535 = vunpack.c.h.b16 %v3237
        %v3536 = vunpack.c.l.b16 %v3238
        %v3537 = vunpack.c.h.b16 %v3238
        %v3538 = vunpack.c.l.b16 %v3239
        %v3539 = vunpack.c.h.b16 %v3239
        %v3540 = vunpack.c.l.b16 %v3240
        %v3541 = vunpack.c.l.b16 %v3241
        %v3542 = vunpack.c.h.b16 %v3241
        %v3543 = vunpack.c.l.b16 %v3242
        %v3544 = vunpack.c.h.b16 %v3242
        %v3545 = vunpack.c.l.b16 %v3243
        %v3546 = vunpack.c.h.b16 %v3243
        %v3547 = vunpack.c.l.b16 %v3244
        %v3548 = vunpack.c.h.b16 %v3244
        %v3549 = vunpack.c.l.b16 %v3245
        %v3550 = vunpack.c.h.b16 %v3245
        %v3551 = vunpack.c.l.b16 %v3246
        %v3552 = vunpack.c.h.b16 %v3246
        %v3553 = vunpack.c.l.b16 %v3247
        %v3554 = vunpack.c.l.b16 %v3248
        %v3555 = vunpack.c.h.b16 %v3248
        %v3556 = vunpack.c.l.b16 %v3249
        %v3557 = vunpack.c.h.b16 %v3249
        %v3558 = vunpack.c.l.b16 %v3250
        %v3559 = vunpack.c.h.b16 %v3250
        %v3560 = vunpack.c.l.b16 %v3251
        %v3561 = vunpack.c.h.b16 %v3251
        %v3562 = vunpack.c.l.b16 %v3252
        %v3563 = vunpack.c.h.b16 %v3252
        %v3564 = vunpack.c.l.b16 %v3253
        %v3565 = vunpack.c.h.b16 %v3253
        %v3566 = vunpack.c.l.b16 %v3254
        %v3567 = vunpack.c.l.b16 %v3255
        %v3568 = vunpack.c.h.b16 %v3255
        %v3569 = vunpack.c.l.b16 %v3256
        %v3570 = vunpack.c.h.b16 %v3256
        %v3571 = vunpack.c.l.b16 %v3257
        %v3572 = vunpack.c.h.b16 %v3257
        %v3573 = vunpack.c.l.b16 %v3258
        %v3574 = vunpack.c.h.b16 %v3258
        %v3575 = vunpack.c.l.b16 %v3259
        %v3576 = vunpack.c.h.b16 %v3259
        %v3577 = vunpack.c.l.b16 %v3260
        %v3578 = vunpack.c.h.b16 %v3260
        %v3579 = vunpack.c.l.b16 %v3261
        %v3580 = vunpack.c.l.b16 %v3262
        %v3581 = vunpack.c.h.b16 %v3262
        %v3582 = vunpack.c.l.b16 %v3263
        %v3583 = vunpack.c.h.b16 %v3263
        %v3584 = vunpack.c.l.b16 %v3264
        %v3585 = vunpack.c.h.b16 %v3264
        %v3586 = vunpack.c.l.b16 %v3265
        %v3587 = vunpack.c.h.b16 %v3265
        %v3588 = vunpack.c.l.b16 %v3266
        %v3589 = vunpack.c.h.b16 %v3266
        %v3590 = vunpack.c.l.b16 %v3267
        %v3591 = vunpack.c.h.b16 %v3267
        %v3592 = vunpack.c.l.b16 %v3268
        %v3593 = vunpack.c.l.b16 %v3269
        %v3594 = vunpack.c.h.b16 %v3269
        %v3595 = vunpack.c.l.b16 %v3270
        %v3596 = vunpack.c.h.b16 %v3270
        %v3597 = vunpack.c.l.b16 %v3271
        %v3598 = vunpack.c.h.b16 %v3271
        %v3599 = vunpack.c.l.b16 %v3272
        %v3600 = vunpack.c.h.b16 %v3272
        %v3601 = vunpack.c.l.b16 %v3273
        %v3602 = vunpack.c.h.b16 %v3273
        %v3603 = vunpack.c.l.b16 %v3274
        %v3604 = vunpack.c.h.b16 %v3274
        %v3605 = vunpack.c.l.b16 %v3275
        %v3606 = vunpack.c.l.b16 %v3276
        %v3607 = vunpack.c.h.b16 %v3276
        %v3608 = vunpack.c.l.b16 %v3277
        %v3609 = vunpack.c.h.b16 %v3277
        %v3610 = vunpack.c.l.b16 %v3278
        %v3611 = vunpack.c.h.b16 %v3278
        %v3612 = vunpack.c.l.b16 %v3279
        %v3613 = vunpack.c.h.b16 %v3279
        %v3614 = vunpack.c.l.b16 %v3280
        %v3615 = vunpack.c.h.b16 %v3280
        %v3616 = vunpack.c.l.b16 %v3281
        %v3617 = vunpack.c.h.b16 %v3281
        %v3618 = vunpack.c.l.b16 %v3282
        %v3619 = vunpack.c.l.b16 %v3283
        %v3620 = vunpack.c.h.b16 %v3283
        %v3621 = vunpack.c.l.b16 %v3284
        %v3622 = vunpack.c.h.b16 %v3284
        %v3623 = vunpack.c.l.b16 %v3285
        %v3624 = vunpack.c.h.b16 %v3285
        %v3625 = vunpack.c.l.b16 %v3286
        %v3626 = vunpack.c.h.b16 %v3286
        %v3627 = vunpack.c.l.b16 %v3287
        %v3628 = vunpack.c.h.b16 %v3287
        %v3629 = vunpack.c.l.b16 %v3288
        %v3630 = vunpack.c.h.b16 %v3288
        %v3631 = vunpack.c.l.b16 %v3289
        %v3632 = vunpack.c.l.b16 %v3290
        %v3633 = vunpack.c.h.b16 %v3290
        %v3634 = vunpack.c.l.b16 %v3291
        %v3635 = vunpack.c.h.b16 %v3291
        %v3636 = vunpack.c.l.b16 %v3292
        %v3637 = vunpack.c.h.b16 %v3292
        %v3638 = vunpack.c.l.b16 %v3293
        %v3639 = vunpack.c.h.b16 %v3293
        %v3640 = vunpack.c.l.b16 %v3294
        %v3641 = vunpack.c.h.b16 %v3294
        %v3642 = vunpack.c.l.b16 %v3295
        %v3643 = vunpack.c.h.b16 %v3295
        %v3644 = vunpack.c.l.b16 %v3296
        %v3645 = vunpack.c.l.b16 %v3297
        %v3646 = vunpack.c.h.b16 %v3297
        %v3647 = vunpack.c.l.b16 %v3298
        %v3648 = vunpack.c.h.b16 %v3298
        %v3649 = vunpack.c.l.b16 %v3299
        %v3650 = vunpack.c.h.b16 %v3299
        %v3651 = vunpack.c.l.b16 %v3300
        %v3652 = vunpack.c.h.b16 %v3300
        %v3653 = vunpack.c.l.b16 %v3301
        %v3654 = vunpack.c.h.b16 %v3301
        %v3655 = vunpack.c.l.b16 %v3302
        %v3656 = vunpack.c.h.b16 %v3302
        %v3657 = vunpack.c.l.b16 %v3303
        %v3658 = vunpack.c.l.b16 %v3304
        %v3659 = vunpack.c.h.b16 %v3304
        %v3660 = vunpack.c.l.b16 %v3305
        %v3661 = vunpack.c.h.b16 %v3305
        %v3662 = vunpack.c.l.b16 %v3306
        %v3663 = vunpack.c.h.b16 %v3306
        %v3664 = vunpack.c.l.b16 %v3307
        %v3665 = vunpack.c.h.b16 %v3307
        %v3666 = vunpack.c.l.b16 %v3308
        %v3667 = vunpack.c.h.b16 %v3308
        %v3668 = vunpack.c.l.b16 %v3309
        %v3669 = vunpack.c.h.b16 %v3309
        %v3670 = vunpack.c.l.b16 %v3310
        %v3671 = vunpack.c.l.b16 %v3311
        %v3672 = vunpack.c.h.b16 %v3311
        %v3673 = vunpack.c.l.b16 %v3312
        %v3674 = vunpack.c.h.b16 %v3312
        %v3675 = vunpack.c.l.b16 %v3313
        %v3676 = vunpack.c.h.b16 %v3313
        %v3677 = vunpack.c.l.b16 %v3314
        %v3678 = vunpack.c.h.b16 %v3314
        %v3679 = vunpack.c.l.b16 %v3315
        %v3680 = vunpack.c.h.b16 %v3315
        %v3681 = vunpack.c.l.b16 %v3316
        %v3682 = vunpack.c.h.b16 %v3316
        %v3683 = vunpack.c.l.b16 %v3317
        %v3684 = vunpack.c.l.b16 %v3318
        %v3685 = vunpack.c.h.b16 %v3318
        %v3686 = vunpack.c.l.b16 %v3319
        %v3687 = vunpack.c.h.b16 %v3319
        %v3688 = vunpack.c.l.b16 %v3320
        %v3689 = vunpack.c.h.b16 %v3320
        %v3690 = vunpack.c.l.b16 %v3321
        %v3691 = vunpack.c.h.b16 %v3321
        %v3692 = vunpack.c.l.b16 %v3322
        %v3693 = vunpack.c.h.b16 %v3322
        %v3694 = vunpack.c.l.b16 %v3323
        %v3695 = vunpack.c.h.b16 %v3323
        %v3696 = vunpack.c.l.b16 %v3324
        %v3697 = vunpack.c.l.b16 %v3325
        %v3698 = vunpack.c.h.b16 %v3325
        %v3699 = vunpack.c.l.b16 %v3326
        %v3700 = vunpack.c.h.b16 %v3326
        %v3701 = vunpack.c.l.b16 %v3327
        %v3702 = vunpack.c.h.b16 %v3327
        %v3703 = vunpack.c.l.b16 %v3328
        %v3704 = vunpack.c.h.b16 %v3328
        %v3705 = vunpack.c.l.b16 %v3329
        %v3706 = vunpack.c.h.b16 %v3329
        %v3707 = vunpack.c.l.b16 %v3330
        %v3708 = vunpack.c.h.b16 %v3330
        %v3709 = vunpack.c.l.b16 %v3331
        %v3710 = vunpack.c.l.b16 %v3332
        %v3711 = vunpack.c.h.b16 %v3332
        %v3712 = vunpack.c.l.b16 %v3333
        %v3713 = vunpack.c.h.b16 %v3333
        %v3714 = vunpack.c.l.b16 %v3334
        %v3715 = vunpack.c.h.b16 %v3334
        %v3716 = vunpack.c.l.b16 %v3335
        %v3717 = vunpack.c.h.b16 %v3335
        %v3718 = vunpack.c.l.b16 %v3336
        %v3719 = vunpack.c.h.b16 %v3336
        %v3720 = vunpack.c.l.b16 %v3337
        %v3721 = vunpack.c.h.b16 %v3337
        %v3722 = vunpack.c.l.b16 %v3338
        %v3723 = vunpack.c.l.b16 %v3339
        %v3724 = vunpack.c.h.b16 %v3339
        %v3725 = vunpack.c.l.b16 %v3340
        %v3726 = vunpack.c.h.b16 %v3340
        %v3727 = vunpack.c.l.b16 %v3341
        %v3728 = vunpack.c.h.b16 %v3341
        %v3729 = vunpack.c.l.b16 %v3342
        %v3730 = vunpack.c.h.b16 %v3342
        %v3731 = vunpack.c.l.b16 %v3343
        %v3732 = vunpack.c.h.b16 %v3343
        %v3733 = vunpack.c.l.b16 %v3344
        %v3734 = vunpack.c.h.b16 %v3344
        %v3735 = vunpack.c.l.b16 %v3345
        %v3736 = vpack.c.b16 %v3541, %v3528
        %v3737 = vpack.c.b16 %v3542, %v3529
        %v3738 = vpack.c.b16 %v3543, %v3530
        %v3739 = vpack.c.b16 %v3544, %v3531
        %v3740 = vpack.c.b16 %v3545, %v3532
        %v3741 = vpack.c.b16 %v3546, %v3533
        %v3742 = vpack.c.b16 %v3547, %v3534
        %v3743 = vpack.c.b16 %v3548, %v3535
        %v3744 = vpack.c.b16 %v3549, %v3536
        %v3745 = vpack.c.b16 %v3550, %v3537
        %v3746 = vpack.c.b16 %v3551, %v3538
        %v3747 = vpack.c.b16 %v3552, %v3539
        %v3748 = vpack.c.b16 %v3553, %v3540
        %v3749 = vpack.c.b16 %v3567, %v3554
        %v3750 = vpack.c.b16 %v3568, %v3555
        %v3751 = vpack.c.b16 %v3569, %v3556
        %v3752 = vpack.c.b16 %v3570, %v3557
        %v3753 = vpack.c.b16 %v3571, %v3558
        %v3754 = vpack.c.b16 %v3572, %v3559
        %v3755 = vpack.c.b16 %v3573, %v3560
        %v3756 = vpack.c.b16 %v3574, %v3561
        %v3757 = vpack.c.b16 %v3575, %v3562
        %v3758 = vpack.c.b16 %v3576, %v3563
        %v3759 = vpack.c.b16 %v3577, %v3564
        %v3760 = vpack.c.b16 %v3578, %v3565
        %v3761 = vpack.c.b16 %v3579, %v3566
        %v3762 = vpack.c.b16 %v3593, %v3580
        %v3763 = vpack.c.b16 %v3594, %v3581
        %v3764 = vpack.c.b16 %v3595, %v3582
        %v3765 = vpack.c.b16 %v3596, %v3583
        %v3766 = vpack.c.b16 %v3597, %v3584
        %v3767 = vpack.c.b16 %v3598, %v3585
        %v3768 = vpack.c.b16 %v3599, %v3586
        %v3769 = vpack.c.b16 %v3600, %v3587
        %v3770 = vpack.c.b16 %v3601, %v3588
        %v3771 = vpack.c.b16 %v3602, %v3589
        %v3772 = vpack.c.b16 %v3603, %v3590
        %v3773 = vpack.c.b16 %v3604, %v3591
        %v3774 = vpack.c.b16 %v3605, %v3592
        %v3775 = vpack.c.b16 %v3619, %v3606
        %v3776 = vpack.c.b16 %v3620, %v3607
        %v3777 = vpack.c.b16 %v3621, %v3608
        %v3778 = vpack.c.b16 %v3622, %v3609
        %v3779 = vpack.c.b16 %v3623, %v3610
        %v3780 = vpack.c.b16 %v3624, %v3611
        %v3781 = vpack.c.b16 %v3625, %v3612
        %v3782 = vpack.c.b16 %v3626, %v3613
        %v3783 = vpack.c.b16 %v3627, %v3614
        %v3784 = vpack.c.b16 %v3628, %v3615
        %v3785 = vpack.c.b16 %v3629, %v3616
        %v3786 = vpack.c.b16 %v3630, %v3617
        %v3787 = vpack.c.b16 %v3631, %v3618
        %v3788 = vpack.c.b16 %v3645, %v3632
        %v3789 = vpack.c.b16 %v3646, %v3633
        %v3790 = vpack.c.b16 %v3647, %v3634
        %v3791 = vpack.c.b16 %v3648, %v3635
        %v3792 = vpack.c.b16 %v3649, %v3636
        %v3793 = vpack.c.b16 %v3650, %v3637
        %v3794 = vpack.c.b16 %v3651, %v3638
        %v3795 = vpack.c.b16 %v3652, %v3639
        %v3796 = vpack.c.b16 %v3653, %v3640
        %v3797 = vpack.c.b16 %v3654, %v3641
        %v3798 = vpack.c.b16 %v3655, %v3642
        %v3799 = vpack.c.b16 %v3656, %v3643
        %v3800 = vpack.c.b16 %v3657, %v3644
        %v3801 = vpack.c.b16 %v3671, %v3658
        %v3802 = vpack.c.b16 %v3672, %v3659
        %v3803 = vpack.c.b16 %v3673, %v3660
        %v3804 = vpack.c.b16 %v3674, %v3661
        %v3805 = vpack.c.b16 %v3675, %v3662
        %v3806 = vpack.c.b16 %v3676, %v3663
        %v3807 = vpack.c.b16 %v3677, %v3664
        %v3808 = vpack.c.b16 %v3678, %v3665
        %v3809 = vpack.c.b16 %v3679, %v3666
        %v3810 = vpack.c.b16 %v3680, %v3667
        %v3811 = vpack.c.b16 %v3681, %v3668
        %v3812 = vpack.c.b16 %v3682, %v3669
        %v3813 = vpack.c.b16 %v3683, %v3670
        %v3814 = vpack.c.b16 %v3697, %v3684
        %v3815 = vpack.c.b16 %v3698, %v3685
        %v3816 = vpack.c.b16 %v3699, %v3686
        %v3817 = vpack.c.b16 %v3700, %v3687
        %v3818 = vpack.c.b16 %v3701, %v3688
        %v3819 = vpack.c.b16 %v3702, %v3689
        %v3820 = vpack.c.b16 %v3703, %v3690
        %v3821 = vpack.c.b16 %v3704, %v3691
        %v3822 = vpack.c.b16 %v3705, %v3692
        %v3823 = vpack.c.b16 %v3706, %v3693
        %v3824 = vpack.c.b16 %v3707, %v3694
        %v3825 = vpack.c.b16 %v3708, %v3695
        %v3826 = vpack.c.b16 %v3709, %v3696
        %v3827 = vpack.c.b16 %v3723, %v3710
        %v3828 = vpack.c.b16 %v3724, %v3711
        %v3829 = vpack.c.b16 %v3725, %v3712
        %v3830 = vpack.c.b16 %v3726, %v3713
        %v3831 = vpack.c.b16 %v3727, %v3714
        %v3832 = vpack.c.b16 %v3728, %v3715
        %v3833 = vpack.c.b16 %v3729, %v3716
        %v3834 = vpack.c.b16 %v3730, %v3717
        %v3835 = vpack.c.b16 %v3731, %v3718
        %v3836 = vpack.c.b16 %v3732, %v3719
        %v3837 = vpack.c.b16 %v3733, %v3720
        %v3838 = vpack.c.b16 %v3734, %v3721
        %v3839 = vpack.c.b16 %v3735, %v3722
        %3944 = vmatprep.subr.bf16.mxu0 %v3828
        %3945 = vmatpush1.bf16.msra.mxu0 %v3827
        %3946 = vmatprep.subr.bf16.mxu0 %v3815
        %3947 = vmatpush1.bf16.msra.mxu0 %v3814
        %3948 = vmatprep.subr.bf16.mxu0 %v3802
        %3949 = vmatpush1.bf16.msra.mxu0 %v3801
        %3950 = vmatprep.subr.bf16.mxu0 %v3789
        %3951 = vmatpush1.bf16.msra.mxu0 %v3788
        %3952 = vmatprep.subr.bf16.mxu0 %v3776
        %3953 = vmatpush1.bf16.msra.mxu0 %v3775
        %3954 = vmatprep.subr.bf16.mxu0 %v3763
        %3955 = vmatpush1.bf16.msra.mxu0 %v3762
        %3956 = vmatprep.subr.bf16.mxu0 %v3750
        %3957 = vmatpush1.bf16.msra.mxu0 %v3749
        %3958 = vmatprep.subr.bf16.mxu0 %v3737
        %3959 = vmatpush1.bf16.msra.mxu0 %v3736
        %3960 = vmatprep.subr.bf16.mxu0 0
        %3961 = vmatpush2.bf16.msra.mxu0 0
        %3962 = vmatprep.subr.bf16.mxu0 0
        %3963 = vmatpush2.bf16.msra.mxu0 0
        %3964 = vmatprep.subr.bf16.mxu0 0
        %3965 = vmatpush2.bf16.msra.mxu0 0
        %3966 = vmatprep.subr.bf16.mxu0 0
        %3967 = vmatpush2.bf16.msra.mxu0 0
        %3968 = vmatprep.subr.bf16.mxu0 0
        %3969 = vmatpush2.bf16.msra.mxu0 0
        %3970 = vmatprep.subr.bf16.mxu0 0
        %3971 = vmatpush2.bf16.msra.mxu0 0
        %3972 = vmatprep.subr.bf16.mxu0 0
        %3973 = vmatpush2.bf16.msra.mxu0 0
        %3974 = vmatprep.subr.bf16.mxu0 0
        %3975 = vmatpush2.bf16.msra.mxu0 0
        %3976 = vmatprep.mubr.bf16.mxu0 0
        %3977 = vmatmul.mubr.bf16.gmra.mxu0 %v3232
        %v3978 = vpop.f32.mrf.mxu0
        %v3979 = vadd.f32 %v3354, %v3978
        %v3980 = vpop.f32.mrf.mxu0
        %v3981 = vadd.f32 %v3358, %v3980
        %v3982 = vpop.f32.mrf.mxu0
        %v3983 = vpop.f32.mrf.mxu0
        %3984 = vdwg.mxu0
        %3985 = vmatprep.subr.bf16.mxu0 %v3830
        %3986 = vmatpush1.bf16.msra.mxu0 %v3829
        %3987 = vmatprep.subr.bf16.mxu0 %v3817
        %3988 = vmatpush1.bf16.msra.mxu0 %v3816
        %3989 = vmatprep.subr.bf16.mxu0 %v3804
        %3990 = vmatpush1.bf16.msra.mxu0 %v3803
        %3991 = vmatprep.subr.bf16.mxu0 %v3791
        %3992 = vmatpush1.bf16.msra.mxu0 %v3790
        %3993 = vmatprep.subr.bf16.mxu0 %v3778
        %3994 = vmatpush1.bf16.msra.mxu0 %v3777
        %3995 = vmatprep.subr.bf16.mxu0 %v3765
        %3996 = vmatpush1.bf16.msra.mxu0 %v3764
        %3997 = vmatprep.subr.bf16.mxu0 %v3752
        %3998 = vmatpush1.bf16.msra.mxu0 %v3751
        %3999 = vmatprep.subr.bf16.mxu0 %v3739
        %4000 = vmatpush1.bf16.msra.mxu0 %v3738
        %4001 = vmatprep.subr.bf16.mxu0 0
        %4002 = vmatpush2.bf16.msra.mxu0 0
        %4003 = vmatprep.subr.bf16.mxu0 0
        %4004 = vmatpush2.bf16.msra.mxu0 0
        %4005 = vmatprep.subr.bf16.mxu0 0
        %4006 = vmatpush2.bf16.msra.mxu0 0
        %4007 = vmatprep.subr.bf16.mxu0 0
        %4008 = vmatpush2.bf16.msra.mxu0 0
        %4009 = vmatprep.subr.bf16.mxu0 0
        %4010 = vmatpush2.bf16.msra.mxu0 0
        %4011 = vmatprep.subr.bf16.mxu0 0
        %4012 = vmatpush2.bf16.msra.mxu0 0
        %4013 = vmatprep.subr.bf16.mxu0 0
        %4014 = vmatpush2.bf16.msra.mxu0 0
        %4015 = vmatprep.subr.bf16.mxu0 0
        %4016 = vmatpush2.bf16.msra.mxu0 0
        %4017 = vmatprep.mubr.bf16.mxu0 0
        %4018 = vmatmul.mubr.bf16.gmra.mxu0 %v3232
        %v4019 = vpop.f32.mrf.mxu0
        %v4020 = vadd.f32 %v3362, %v4019
        %v4021 = vpop.f32.mrf.mxu0
        %v4022 = vadd.f32 %v3366, %v4021
        %v4023 = vpop.f32.mrf.mxu0
        %v4024 = vpop.f32.mrf.mxu0
        %4025 = vdwg.mxu0
        %4026 = vmatprep.subr.bf16.mxu0 %v3832
        %4027 = vmatpush1.bf16.msra.mxu0 %v3831
        %4028 = vmatprep.subr.bf16.mxu0 %v3819
        %4029 = vmatpush1.bf16.msra.mxu0 %v3818
        %4030 = vmatprep.subr.bf16.mxu0 %v3806
        %4031 = vmatpush1.bf16.msra.mxu0 %v3805
        %4032 = vmatprep.subr.bf16.mxu0 %v3793
        %4033 = vmatpush1.bf16.msra.mxu0 %v3792
        %4034 = vmatprep.subr.bf16.mxu0 %v3780
        %4035 = vmatpush1.bf16.msra.mxu0 %v3779
        %4036 = vmatprep.subr.bf16.mxu0 %v3767
        %4037 = vmatpush1.bf16.msra.mxu0 %v3766
        %4038 = vmatprep.subr.bf16.mxu0 %v3754
        %4039 = vmatpush1.bf16.msra.mxu0 %v3753
        %4040 = vmatprep.subr.bf16.mxu0 %v3741
        %4041 = vmatpush1.bf16.msra.mxu0 %v3740
        %4042 = vmatprep.subr.bf16.mxu0 0
        %4043 = vmatpush2.bf16.msra.mxu0 0
        %4044 = vmatprep.subr.bf16.mxu0 0
        %4045 = vmatpush2.bf16.msra.mxu0 0
        %4046 = vmatprep.subr.bf16.mxu0 0
        %4047 = vmatpush2.bf16.msra.mxu0 0
        %4048 = vmatprep.subr.bf16.mxu0 0
        %4049 = vmatpush2.bf16.msra.mxu0 0
        %4050 = vmatprep.subr.bf16.mxu0 0
        %4051 = vmatpush2.bf16.msra.mxu0 0
        %4052 = vmatprep.subr.bf16.mxu0 0
        %4053 = vmatpush2.bf16.msra.mxu0 0
        %4054 = vmatprep.subr.bf16.mxu0 0
        %4055 = vmatpush2.bf16.msra.mxu0 0
        %4056 = vmatprep.subr.bf16.mxu0 0
        %4057 = vmatpush2.bf16.msra.mxu0 0
        %4058 = vmatprep.mubr.bf16.mxu0 0
        %4059 = vmatmul.mubr.bf16.gmra.mxu0 %v3232
        %v4060 = vpop.f32.mrf.mxu0
        %v4061 = vadd.f32 %v3370, %v4060
        %v4062 = vpop.f32.mrf.mxu0
        %v4063 = vadd.f32 %v3374, %v4062
        %v4064 = vpop.f32.mrf.mxu0
        %v4065 = vpop.f32.mrf.mxu0
        %4066 = vdwg.mxu0
        %4067 = vmatprep.subr.bf16.mxu0 %v3834
        %4068 = vmatpush1.bf16.msra.mxu0 %v3833
        %4069 = vmatprep.subr.bf16.mxu0 %v3821
        %4070 = vmatpush1.bf16.msra.mxu0 %v3820
        %4071 = vmatprep.subr.bf16.mxu0 %v3808
        %4072 = vmatpush1.bf16.msra.mxu0 %v3807
        %4073 = vmatprep.subr.bf16.mxu0 %v3795
        %4074 = vmatpush1.bf16.msra.mxu0 %v3794
        %4075 = vmatprep.subr.bf16.mxu0 %v3782
        %4076 = vmatpush1.bf16.msra.mxu0 %v3781
        %4077 = vmatprep.subr.bf16.mxu0 %v3769
        %4078 = vmatpush1.bf16.msra.mxu0 %v3768
        %4079 = vmatprep.subr.bf16.mxu0 %v3756
        %4080 = vmatpush1.bf16.msra.mxu0 %v3755
        %4081 = vmatprep.subr.bf16.mxu0 %v3743
        %4082 = vmatpush1.bf16.msra.mxu0 %v3742
        %4083 = vmatprep.subr.bf16.mxu0 0
        %4084 = vmatpush2.bf16.msra.mxu0 0
        %4085 = vmatprep.subr.bf16.mxu0 0
        %4086 = vmatpush2.bf16.msra.mxu0 0
        %4087 = vmatprep.subr.bf16.mxu0 0
        %4088 = vmatpush2.bf16.msra.mxu0 0
        %4089 = vmatprep.subr.bf16.mxu0 0
        %4090 = vmatpush2.bf16.msra.mxu0 0
        %4091 = vmatprep.subr.bf16.mxu0 0
        %4092 = vmatpush2.bf16.msra.mxu0 0
        %4093 = vmatprep.subr.bf16.mxu0 0
        %4094 = vmatpush2.bf16.msra.mxu0 0
        %4095 = vmatprep.subr.bf16.mxu0 0
        %4096 = vmatpush2.bf16.msra.mxu0 0
        %4097 = vmatprep.subr.bf16.mxu0 0
        %4098 = vmatpush2.bf16.msra.mxu0 0
        %4099 = vmatprep.mubr.bf16.mxu0 0
        %4100 = vmatmul.mubr.bf16.gmra.mxu0 %v3232
        %v4101 = vpop.f32.mrf.mxu0
        %v4102 = vadd.f32 %v3378, %v4101
        %v4103 = vpop.f32.mrf.mxu0
        %v4104 = vadd.f32 %v3382, %v4103
        %v4105 = vpop.f32.mrf.mxu0
        %v4106 = vpop.f32.mrf.mxu0
        %4107 = vdwg.mxu0
        %4108 = vmatprep.subr.bf16.mxu0 %v3836
        %4109 = vmatpush1.bf16.msra.mxu0 %v3835
        %4110 = vmatprep.subr.bf16.mxu0 %v3823
        %4111 = vmatpush1.bf16.msra.mxu0 %v3822
        %4112 = vmatprep.subr.bf16.mxu0 %v3810
        %4113 = vmatpush1.bf16.msra.mxu0 %v3809
        %4114 = vmatprep.subr.bf16.mxu0 %v3797
        %4115 = vmatpush1.bf16.msra.mxu0 %v3796
        %4116 = vmatprep.subr.bf16.mxu0 %v3784
        %4117 = vmatpush1.bf16.msra.mxu0 %v3783
        %4118 = vmatprep.subr.bf16.mxu0 %v3771
        %4119 = vmatpush1.bf16.msra.mxu0 %v3770
        %4120 = vmatprep.subr.bf16.mxu0 %v3758
        %4121 = vmatpush1.bf16.msra.mxu0 %v3757
        %4122 = vmatprep.subr.bf16.mxu0 %v3745
        %4123 = vmatpush1.bf16.msra.mxu0 %v3744
        %4124 = vmatprep.subr.bf16.mxu0 0
        %4125 = vmatpush2.bf16.msra.mxu0 0
        %4126 = vmatprep.subr.bf16.mxu0 0
        %4127 = vmatpush2.bf16.msra.mxu0 0
        %4128 = vmatprep.subr.bf16.mxu0 0
        %4129 = vmatpush2.bf16.msra.mxu0 0
        %4130 = vmatprep.subr.bf16.mxu0 0
        %4131 = vmatpush2.bf16.msra.mxu0 0
        %4132 = vmatprep.subr.bf16.mxu0 0
        %4133 = vmatpush2.bf16.msra.mxu0 0
        %4134 = vmatprep.subr.bf16.mxu0 0
        %4135 = vmatpush2.bf16.msra.mxu0 0
        %4136 = vmatprep.subr.bf16.mxu0 0
        %4137 = vmatpush2.bf16.msra.mxu0 0
        %4138 = vmatprep.subr.bf16.mxu0 0
        %4139 = vmatpush2.bf16.msra.mxu0 0
        %4140 = vmatprep.mubr.bf16.mxu0 0
        %4141 = vmatmul.mubr.bf16.gmra.mxu0 %v3232
        %v4142 = vpop.f32.mrf.mxu0
        %v4143 = vadd.f32 %v3386, %v4142
        %v4144 = vpop.f32.mrf.mxu0
        %v4145 = vadd.f32 %v3390, %v4144
        %v4146 = vpop.f32.mrf.mxu0
        %v4147 = vpop.f32.mrf.mxu0
        %4148 = vdwg.mxu0
        %4149 = vmatprep.subr.bf16.mxu0 %v3838
        %4150 = vmatpush1.bf16.msra.mxu0 %v3837
        %4151 = vmatprep.subr.bf16.mxu0 %v3825
        %4152 = vmatpush1.bf16.msra.mxu0 %v3824
        %4153 = vmatprep.subr.bf16.mxu0 %v3812
        %4154 = vmatpush1.bf16.msra.mxu0 %v3811
        %4155 = vmatprep.subr.bf16.mxu0 %v3799
        %4156 = vmatpush1.bf16.msra.mxu0 %v3798
        %4157 = vmatprep.subr.bf16.mxu0 %v3786
        %4158 = vmatpush1.bf16.msra.mxu0 %v3785
        %4159 = vmatprep.subr.bf16.mxu0 %v3773
        %4160 = vmatpush1.bf16.msra.mxu0 %v3772
        %4161 = vmatprep.subr.bf16.mxu0 %v3760
        %4162 = vmatpush1.bf16.msra.mxu0 %v3759
        %4163 = vmatprep.subr.bf16.mxu0 %v3747
        %4164 = vmatpush1.bf16.msra.mxu0 %v3746
        %4165 = vmatprep.subr.bf16.mxu0 0
        %4166 = vmatpush2.bf16.msra.mxu0 0
        %4167 = vmatprep.subr.bf16.mxu0 0
        %4168 = vmatpush2.bf16.msra.mxu0 0
        %4169 = vmatprep.subr.bf16.mxu0 0
        %4170 = vmatpush2.bf16.msra.mxu0 0
        %4171 = vmatprep.subr.bf16.mxu0 0
        %4172 = vmatpush2.bf16.msra.mxu0 0
        %4173 = vmatprep.subr.bf16.mxu0 0
        %4174 = vmatpush2.bf16.msra.mxu0 0
        %4175 = vmatprep.subr.bf16.mxu0 0
        %4176 = vmatpush2.bf16.msra.mxu0 0
        %4177 = vmatprep.subr.bf16.mxu0 0
        %4178 = vmatpush2.bf16.msra.mxu0 0
        %4179 = vmatprep.subr.bf16.mxu0 0
        %4180 = vmatpush2.bf16.msra.mxu0 0
        %4181 = vmatprep.mubr.bf16.mxu0 0
        %4182 = vmatmul.mubr.bf16.gmra.mxu0 %v3232
        %v4183 = vpop.f32.mrf.mxu0
        %v4184 = vadd.f32 %v3394, %v4183
        %v4185 = vpop.f32.mrf.mxu0
        %v4186 = vadd.f32 %v3398, %v4185
        %v4187 = vpop.f32.mrf.mxu0
        %v4188 = vpop.f32.mrf.mxu0
        %4189 = vdwg.mxu0
        %4190 = vmatprep.subr.bf16.mxu0 0
        %4191 = vmatpush1.bf16.msra.mxu0 %v3839
        %4192 = vmatprep.subr.bf16.mxu0 0
        %4193 = vmatpush1.bf16.msra.mxu0 %v3826
        %4194 = vmatprep.subr.bf16.mxu0 0
        %4195 = vmatpush1.bf16.msra.mxu0 %v3813
        %4196 = vmatprep.subr.bf16.mxu0 0
        %4197 = vmatpush1.bf16.msra.mxu0 %v3800
        %4198 = vmatprep.subr.bf16.mxu0 0
        %4199 = vmatpush1.bf16.msra.mxu0 %v3787
        %4200 = vmatprep.subr.bf16.mxu0 0
        %4201 = vmatpush1.bf16.msra.mxu0 %v3774
        %4202 = vmatprep.subr.bf16.mxu0 0
        %4203 = vmatpush1.bf16.msra.mxu0 %v3761
        %4204 = vmatprep.subr.bf16.mxu0 0
        %4205 = vmatpush1.bf16.msra.mxu0 %v3748
        %4206 = vmatprep.subr.bf16.mxu0 0
        %4207 = vmatpush2.bf16.msra.mxu0 0
        %4208 = vmatprep.subr.bf16.mxu0 0
        %4209 = vmatpush2.bf16.msra.mxu0 0
        %4210 = vmatprep.subr.bf16.mxu0 0
        %4211 = vmatpush2.bf16.msra.mxu0 0
        %4212 = vmatprep.subr.bf16.mxu0 0
        %4213 = vmatpush2.bf16.msra.mxu0 0
        %4214 = vmatprep.subr.bf16.mxu0 0
        %4215 = vmatpush2.bf16.msra.mxu0 0
        %4216 = vmatprep.subr.bf16.mxu0 0
        %4217 = vmatpush2.bf16.msra.mxu0 0
        %4218 = vmatprep.subr.bf16.mxu0 0
        %4219 = vmatpush2.bf16.msra.mxu0 0
        %4220 = vmatprep.subr.bf16.mxu0 0
        %4221 = vmatpush2.bf16.msra.mxu0 0
        %4222 = vmatprep.mubr.bf16.mxu0 0
        %4223 = vmatmul.mubr.bf16.gmra.mxu0 %v3232
        %v4224 = vpop.f32.mrf.mxu0
        %v4225 = vadd.f32 %v3402, %v4224
        %v4226 = vpop.f32.mrf.mxu0
        %v4227 = vpop.f32.mrf.mxu0
        %v4228 = vpop.f32.mrf.mxu0
        %4229 = vdwg.mxu0
        %v4243 = vcombine.low %v3979, %v3981
        %v4244 = vcombine.low %v4020, %v4022
        %v4246 = vunpack.c.l.s4 1983009808
        %v4247 = vunpack.c.0.s8 %v4246
        %v4248 = vlaneseq
        %v4249 = vshrl.u32 %v4248, 7
        %v4250 = vsub.s32 %v4247, %v4249
        %v4251 = vrot.slane %v4243, %v4250
        %v4253 = vunpack.c.l.s4 1983009808
        %v4254 = vunpack.c.0.s8 %v4253
        %v4255 = vlaneseq
        %v4256 = vshrl.u32 %v4255, 7
        %v4257 = vsub.s32 %v4254, %v4256
        %v4258 = vrot.slane %v4244, %v4257
        %v4259 = vcombine.low %v4251, %v4258
        %v4260 = vcombine.low %v4061, %v4063
        %v4261 = vcombine.low %v4102, %v4104
        %v4263 = vunpack.c.l.s4 1983009808
        %v4264 = vunpack.c.0.s8 %v4263
        %v4265 = vlaneseq
        %v4266 = vshrl.u32 %v4265, 7
        %v4267 = vsub.s32 %v4264, %v4266
        %v4268 = vrot.slane %v4260, %v4267
        %v4270 = vunpack.c.l.s4 1983009808
        %v4271 = vunpack.c.0.s8 %v4270
        %v4272 = vlaneseq
        %v4273 = vshrl.u32 %v4272, 7
        %v4274 = vsub.s32 %v4271, %v4273
        %v4275 = vrot.slane %v4261, %v4274
        %v4276 = vcombine.low %v4268, %v4275
        %v4277 = vcombine.low %v4143, %v4145
        %v4278 = vcombine.low %v4184, %v4186
        %v4280 = vunpack.c.l.s4 1983009808
        %v4281 = vunpack.c.0.s8 %v4280
        %v4282 = vlaneseq
        %v4283 = vshrl.u32 %v4282, 7
        %v4284 = vsub.s32 %v4281, %v4283
        %v4285 = vrot.slane %v4277, %v4284
        %v4287 = vunpack.c.l.s4 1983009808
        %v4288 = vunpack.c.0.s8 %v4287
        %v4289 = vlaneseq
        %v4290 = vshrl.u32 %v4289, 7
        %v4291 = vsub.s32 %v4288, %v4290
        %v4292 = vrot.slane %v4278, %v4291
        %v4293 = vcombine.low %v4285, %v4292
        %v4294 = vcombine.low %v4225, %v457
        %v4296 = vunpack.c.l.s4 1983009808
        %v4297 = vunpack.c.0.s8 %v4296
        %v4298 = vlaneseq
        %v4299 = vshrl.u32 %v4298, 7
        %v4300 = vsub.s32 %v4297, %v4299
        %v4301 = vrot.slane %v4294, %v4300
        %v4302 = vcombine.low %v4301, %v1741
        %s4307 = scalar_lea.vmem %s449, 72
        %4308 = vst [vmem:[%s4307] sm:$0xff] %v4259
        %4309 = vst [vmem:[%s4307 + $0x8] sm:$0xff] %v4276
        %4310 = vst [vmem:[%s4307 + $0x10] sm:$0xff] %v4293
        %4311 = vst [vmem:[%s4307 + $0x18] sm:$0xff] %v4302
        %4312 = vst [vmem:[%s4307 + $0x20] sm:$0xf] %v1750
        %s4313 = scalar_lea.vmem %s349, 12 [#allocation2]
        %v4314 = vld [vmem:[%s4313] sm:$0xf]
        %v4317 = vunpack.c.l.s4 1983009808
        %v4318 = vunpack.c.0.s8 %v4317
        %v4319 = vlaneseq
        %v4320 = vshrl.u32 %v4319, 7
        %v4321 = vsub.s32 %v4318, %v4320
        %v4322 = vrot.slane %v4314, %v4321
        %v4323 = vcombine.high %v4322, %v4322
        %v4326 = vpack.c.bf16 %v4322, %v4322
        %v4327 = vpack.c.bf16 %v4323, %v4323
        %s4328 = scalar_lea.vmem %s358, 384 [#allocation4]
        %v4329 = vld [vmem:[%s4328] sm:$0xf]
        %v4330 = vld [vmem:[%s4328 + $0x4] sm:$0xf]
        %v4331 = vld [vmem:[%s4328 + $0x8] sm:$0xf]
        %v4332 = vld [vmem:[%s4328 + $0xc] sm:$0xf]
        %v4333 = vld [vmem:[%s4328 + $0x10] sm:$0xf]
        %v4334 = vld [vmem:[%s4328 + $0x14] sm:$0xf]
        %v4335 = vld [vmem:[%s4328 + $0x18] sm:$0xf]
        %v4336 = vld [vmem:[%s4328 + $0x1c] sm:$0xf]
        %v4337 = vld [vmem:[%s4328 + $0x20] sm:$0xf]
        %v4338 = vld [vmem:[%s4328 + $0x24] sm:$0xf]
        %v4339 = vld [vmem:[%s4328 + $0x28] sm:$0xf]
        %v4340 = vld [vmem:[%s4328 + $0x2c] sm:$0xf]
        %v4341 = vld [vmem:[%s4328 + $0x30] sm:$0xf]
        %v4342 = vld [vmem:[%s4328 + $0x34] sm:$0xf]
        %v4343 = vld [vmem:[%s4328 + $0x38] sm:$0xf]
        %v4344 = vld [vmem:[%s4328 + $0x3c] sm:$0xf]
        %v4345 = vld [vmem:[%s4328 + $0x40] sm:$0xf]
        %v4346 = vld [vmem:[%s4328 + $0x44] sm:$0xf]
        %v4347 = vld [vmem:[%s4328 + $0x48] sm:$0xf]
        %v4348 = vld [vmem:[%s4328 + $0x4c] sm:$0xf]
        %v4349 = vld [vmem:[%s4328 + $0x50] sm:$0xf]
        %v4350 = vld [vmem:[%s4328 + $0x54] sm:$0xf]
        %v4351 = vld [vmem:[%s4328 + $0x58] sm:$0xf]
        %v4352 = vld [vmem:[%s4328 + $0x5c] sm:$0xf]
        %v4353 = vld [vmem:[%s4328 + $0x60] sm:$0xf]
        %v4354 = vld [vmem:[%s4328 + $0x64] sm:$0xf]
        %v4355 = vld [vmem:[%s4328 + $0x68] sm:$0xf]
        %v4356 = vld [vmem:[%s4328 + $0x6c] sm:$0xf]
        %v4357 = vld [vmem:[%s4328 + $0x70] sm:$0xf]
        %v4358 = vld [vmem:[%s4328 + $0x74] sm:$0xf]
        %v4359 = vld [vmem:[%s4328 + $0x78] sm:$0xf]
        %v4360 = vld [vmem:[%s4328 + $0x7c] sm:$0xf]
        %s4361 = scalar_lea.vmem %s367, 3 [#allocation6]
        %v4362 = vld [vmem:[%s4361] sm:$0x1]
        %v4364 = vlaneseq
        %v4365 = vshrl.u32 %v4364, 7
        %v4366 = vsub.s32 0, %v4365
        %v4367 = vrot.slane %v4362, %v4366
        %v4401 = vunpack.c.l.b16 %v4329
        %v4402 = vunpack.c.l.b16 %v4330
        %v4403 = vunpack.c.l.b16 %v4331
        %v4404 = vunpack.c.l.b16 %v4332
        %v4405 = vunpack.c.l.b16 %v4333
        %v4406 = vunpack.c.l.b16 %v4334
        %v4407 = vunpack.c.l.b16 %v4335
        %v4408 = vunpack.c.l.b16 %v4336
        %v4409 = vunpack.c.l.b16 %v4337
        %v4410 = vunpack.c.l.b16 %v4338
        %v4411 = vunpack.c.l.b16 %v4339
        %v4412 = vunpack.c.l.b16 %v4340
        %v4413 = vunpack.c.l.b16 %v4341
        %v4414 = vunpack.c.l.b16 %v4342
        %v4415 = vunpack.c.l.b16 %v4343
        %v4416 = vunpack.c.l.b16 %v4344
        %v4417 = vunpack.c.l.b16 %v4345
        %v4418 = vunpack.c.l.b16 %v4346
        %v4419 = vunpack.c.l.b16 %v4347
        %v4420 = vunpack.c.l.b16 %v4348
        %v4421 = vunpack.c.l.b16 %v4349
        %v4422 = vunpack.c.l.b16 %v4350
        %v4423 = vunpack.c.l.b16 %v4351
        %v4424 = vunpack.c.l.b16 %v4352
        %v4425 = vunpack.c.l.b16 %v4353
        %v4426 = vunpack.c.l.b16 %v4354
        %v4427 = vunpack.c.l.b16 %v4355
        %v4428 = vunpack.c.l.b16 %v4356
        %v4429 = vunpack.c.l.b16 %v4357
        %v4430 = vunpack.c.l.b16 %v4358
        %v4431 = vunpack.c.l.b16 %v4359
        %v4432 = vunpack.c.l.b16 %v4360
        %v4433 = vpack.c.b16 %v4402, %v4401
        %v4434 = vpack.c.b16 %v4404, %v4403
        %v4435 = vpack.c.b16 %v4406, %v4405
        %v4436 = vpack.c.b16 %v4408, %v4407
        %v4437 = vpack.c.b16 %v4410, %v4409
        %v4438 = vpack.c.b16 %v4412, %v4411
        %v4439 = vpack.c.b16 %v4414, %v4413
        %v4440 = vpack.c.b16 %v4416, %v4415
        %v4441 = vpack.c.b16 %v4418, %v4417
        %v4442 = vpack.c.b16 %v4420, %v4419
        %v4443 = vpack.c.b16 %v4422, %v4421
        %v4444 = vpack.c.b16 %v4424, %v4423
        %v4445 = vpack.c.b16 %v4426, %v4425
        %v4446 = vpack.c.b16 %v4428, %v4427
        %v4447 = vpack.c.b16 %v4430, %v4429
        %v4448 = vpack.c.b16 %v4432, %v4431
        %4465 = vmatprep.subr.bf16.mxu0 0
        %4466 = vmatpush1.bf16.msra.mxu0 %v4440
        %4467 = vmatprep.subr.bf16.mxu0 0
        %4468 = vmatpush1.bf16.msra.mxu0 %v4439
        %4469 = vmatprep.subr.bf16.mxu0 0
        %4470 = vmatpush1.bf16.msra.mxu0 %v4438
        %4471 = vmatprep.subr.bf16.mxu0 0
        %4472 = vmatpush1.bf16.msra.mxu0 %v4437
        %4473 = vmatprep.subr.bf16.mxu0 0
        %4474 = vmatpush1.bf16.msra.mxu0 %v4436
        %4475 = vmatprep.subr.bf16.mxu0 0
        %4476 = vmatpush1.bf16.msra.mxu0 %v4435
        %4477 = vmatprep.subr.bf16.mxu0 0
        %4478 = vmatpush1.bf16.msra.mxu0 %v4434
        %4479 = vmatprep.subr.bf16.mxu0 0
        %4480 = vmatpush1.bf16.msra.mxu0 %v4433
        %4481 = vmatprep.subr.bf16.mxu0 0
        %4482 = vmatpush2.bf16.msra.mxu0 %v4448
        %4483 = vmatprep.subr.bf16.mxu0 0
        %4484 = vmatpush2.bf16.msra.mxu0 %v4447
        %4485 = vmatprep.subr.bf16.mxu0 0
        %4486 = vmatpush2.bf16.msra.mxu0 %v4446
        %4487 = vmatprep.subr.bf16.mxu0 0
        %4488 = vmatpush2.bf16.msra.mxu0 %v4445
        %4489 = vmatprep.subr.bf16.mxu0 0
        %4490 = vmatpush2.bf16.msra.mxu0 %v4444
        %4491 = vmatprep.subr.bf16.mxu0 0
        %4492 = vmatpush2.bf16.msra.mxu0 %v4443
        %4493 = vmatprep.subr.bf16.mxu0 0
        %4494 = vmatpush2.bf16.msra.mxu0 %v4442
        %4495 = vmatprep.subr.bf16.mxu0 0
        %4496 = vmatpush2.bf16.msra.mxu0 %v4441
        %4497 = vmatprep.mubr.bf16.mxu0 %v4327
        %4498 = vmatmul.mubr.bf16.gmra.mxu0 %v4326
        %v4499 = vpop.f32.mrf.mxu0
        %v4500 = vadd.f32 %v4367, %v4499
        %v4501 = vpop.f32.mrf.mxu0
        %v4502 = vpop.f32.mrf.mxu0
        %v4503 = vpop.f32.mrf.mxu0
        %4504 = vdwg.mxu0
        %vm4505 = vcmp.ge.f32.partialorder %v4500, 0.0
        %v4506 = vmul.f32 %v4500, 0.01
        %v4507 = vsel %vm4505, %v4500, %v4506
        %v4508 = vpack.c.bf16 %v4507, %v4507
        %s4509 = scalar_lea.vmem %s376, 2496 [#allocation7]
        %v4510 = vld [vmem:[%s4509] sm:$0xff]
        %v4511 = vld [vmem:[%s4509 + $0x8] sm:$0xff]
        %v4512 = vld [vmem:[%s4509 + $0x10] sm:$0xff]
        %v4513 = vld [vmem:[%s4509 + $0x18] sm:$0xff]
        %v4514 = vld [vmem:[%s4509 + $0x20] sm:$0xff]
        %v4515 = vld [vmem:[%s4509 + $0x28] sm:$0xff]
        %v4516 = vld [vmem:[%s4509 + $0x30] sm:$0xf]
        %v4517 = vld [vmem:[%s4509 + $0x34] sm:$0xff]
        %v4518 = vld [vmem:[%s4509 + $0x3c] sm:$0xff]
        %v4519 = vld [vmem:[%s4509 + $0x44] sm:$0xff]
        %v4520 = vld [vmem:[%s4509 + $0x4c] sm:$0xff]
        %v4521 = vld [vmem:[%s4509 + $0x54] sm:$0xff]
        %v4522 = vld [vmem:[%s4509 + $0x5c] sm:$0xff]
        %v4523 = vld [vmem:[%s4509 + $0x64] sm:$0xf]
        %v4524 = vld [vmem:[%s4509 + $0x68] sm:$0xff]
        %v4525 = vld [vmem:[%s4509 + $0x70] sm:$0xff]
        %v4526 = vld [vmem:[%s4509 + $0x78] sm:$0xff]
        %v4527 = vld [vmem:[%s4509 + $0x80] sm:$0xff]
        %v4528 = vld [vmem:[%s4509 + $0x88] sm:$0xff]
        %v4529 = vld [vmem:[%s4509 + $0x90] sm:$0xff]
        %v4530 = vld [vmem:[%s4509 + $0x98] sm:$0xf]
        %v4531 = vld [vmem:[%s4509 + $0x9c] sm:$0xff]
        %v4532 = vld [vmem:[%s4509 + $0xa4] sm:$0xff]
        %v4533 = vld [vmem:[%s4509 + $0xac] sm:$0xff]
        %v4534 = vld [vmem:[%s4509 + $0xb4] sm:$0xff]
        %v4535 = vld [vmem:[%s4509 + $0xbc] sm:$0xff]
        %v4536 = vld [vmem:[%s4509 + $0xc4] sm:$0xff]
        %v4537 = vld [vmem:[%s4509 + $0xcc] sm:$0xf]
        %v4538 = vld [vmem:[%s4509 + $0xd0] sm:$0xff]
        %v4539 = vld [vmem:[%s4509 + $0xd8] sm:$0xff]
        %v4540 = vld [vmem:[%s4509 + $0xe0] sm:$0xff]
        %v4541 = vld [vmem:[%s4509 + $0xe8] sm:$0xff]
        %v4542 = vld [vmem:[%s4509 + $0xf0] sm:$0xff]
        %v4543 = vld [vmem:[%s4509 + $0xf8] sm:$0xff]
        %v4544 = vld [vmem:[%s4509 + $0x100] sm:$0xf]
        %v4545 = vld [vmem:[%s4509 + $0x104] sm:$0xff]
        %v4546 = vld [vmem:[%s4509 + $0x10c] sm:$0xff]
        %v4547 = vld [vmem:[%s4509 + $0x114] sm:$0xff]
        %v4548 = vld [vmem:[%s4509 + $0x11c] sm:$0xff]
        %v4549 = vld [vmem:[%s4509 + $0x124] sm:$0xff]
        %v4550 = vld [vmem:[%s4509 + $0x12c] sm:$0xff]
        %v4551 = vld [vmem:[%s4509 + $0x134] sm:$0xf]
        %v4552 = vld [vmem:[%s4509 + $0x138] sm:$0xff]
        %v4553 = vld [vmem:[%s4509 + $0x140] sm:$0xff]
        %v4554 = vld [vmem:[%s4509 + $0x148] sm:$0xff]
        %v4555 = vld [vmem:[%s4509 + $0x150] sm:$0xff]
        %v4556 = vld [vmem:[%s4509 + $0x158] sm:$0xff]
        %v4557 = vld [vmem:[%s4509 + $0x160] sm:$0xff]
        %v4558 = vld [vmem:[%s4509 + $0x168] sm:$0xf]
        %v4559 = vld [vmem:[%s4509 + $0x16c] sm:$0xff]
        %v4560 = vld [vmem:[%s4509 + $0x174] sm:$0xff]
        %v4561 = vld [vmem:[%s4509 + $0x17c] sm:$0xff]
        %v4562 = vld [vmem:[%s4509 + $0x184] sm:$0xff]
        %v4563 = vld [vmem:[%s4509 + $0x18c] sm:$0xff]
        %v4564 = vld [vmem:[%s4509 + $0x194] sm:$0xff]
        %v4565 = vld [vmem:[%s4509 + $0x19c] sm:$0xf]
        %v4566 = vld [vmem:[%s4509 + $0x1a0] sm:$0xff]
        %v4567 = vld [vmem:[%s4509 + $0x1a8] sm:$0xff]
        %v4568 = vld [vmem:[%s4509 + $0x1b0] sm:$0xff]
        %v4569 = vld [vmem:[%s4509 + $0x1b8] sm:$0xff]
        %v4570 = vld [vmem:[%s4509 + $0x1c0] sm:$0xff]
        %v4571 = vld [vmem:[%s4509 + $0x1c8] sm:$0xff]
        %v4572 = vld [vmem:[%s4509 + $0x1d0] sm:$0xf]
        %v4573 = vld [vmem:[%s4509 + $0x1d4] sm:$0xff]
        %v4574 = vld [vmem:[%s4509 + $0x1dc] sm:$0xff]
        %v4575 = vld [vmem:[%s4509 + $0x1e4] sm:$0xff]
        %v4576 = vld [vmem:[%s4509 + $0x1ec] sm:$0xff]
        %v4577 = vld [vmem:[%s4509 + $0x1f4] sm:$0xff]
        %v4578 = vld [vmem:[%s4509 + $0x1fc] sm:$0xff]
        %v4579 = vld [vmem:[%s4509 + $0x204] sm:$0xf]
        %v4580 = vld [vmem:[%s4509 + $0x208] sm:$0xff]
        %v4581 = vld [vmem:[%s4509 + $0x210] sm:$0xff]
        %v4582 = vld [vmem:[%s4509 + $0x218] sm:$0xff]
        %v4583 = vld [vmem:[%s4509 + $0x220] sm:$0xff]
        %v4584 = vld [vmem:[%s4509 + $0x228] sm:$0xff]
        %v4585 = vld [vmem:[%s4509 + $0x230] sm:$0xff]
        %v4586 = vld [vmem:[%s4509 + $0x238] sm:$0xf]
        %v4587 = vld [vmem:[%s4509 + $0x23c] sm:$0xff]
        %v4588 = vld [vmem:[%s4509 + $0x244] sm:$0xff]
        %v4589 = vld [vmem:[%s4509 + $0x24c] sm:$0xff]
        %v4590 = vld [vmem:[%s4509 + $0x254] sm:$0xff]
        %v4591 = vld [vmem:[%s4509 + $0x25c] sm:$0xff]
        %v4592 = vld [vmem:[%s4509 + $0x264] sm:$0xff]
        %v4593 = vld [vmem:[%s4509 + $0x26c] sm:$0xf]
        %v4594 = vld [vmem:[%s4509 + $0x270] sm:$0xff]
        %v4595 = vld [vmem:[%s4509 + $0x278] sm:$0xff]
        %v4596 = vld [vmem:[%s4509 + $0x280] sm:$0xff]
        %v4597 = vld [vmem:[%s4509 + $0x288] sm:$0xff]
        %v4598 = vld [vmem:[%s4509 + $0x290] sm:$0xff]
        %v4599 = vld [vmem:[%s4509 + $0x298] sm:$0xff]
        %v4600 = vld [vmem:[%s4509 + $0x2a0] sm:$0xf]
        %v4601 = vld [vmem:[%s4509 + $0x2a4] sm:$0xff]
        %v4602 = vld [vmem:[%s4509 + $0x2ac] sm:$0xff]
        %v4603 = vld [vmem:[%s4509 + $0x2b4] sm:$0xff]
        %v4604 = vld [vmem:[%s4509 + $0x2bc] sm:$0xff]
        %v4605 = vld [vmem:[%s4509 + $0x2c4] sm:$0xff]
        %v4606 = vld [vmem:[%s4509 + $0x2cc] sm:$0xff]
        %v4607 = vld [vmem:[%s4509 + $0x2d4] sm:$0xf]
        %v4608 = vld [vmem:[%s4509 + $0x2d8] sm:$0xff]
        %v4609 = vld [vmem:[%s4509 + $0x2e0] sm:$0xff]
        %v4610 = vld [vmem:[%s4509 + $0x2e8] sm:$0xff]
        %v4611 = vld [vmem:[%s4509 + $0x2f0] sm:$0xff]
        %v4612 = vld [vmem:[%s4509 + $0x2f8] sm:$0xff]
        %v4613 = vld [vmem:[%s4509 + $0x300] sm:$0xff]
        %v4614 = vld [vmem:[%s4509 + $0x308] sm:$0xf]
        %v4615 = vld [vmem:[%s4509 + $0x30c] sm:$0xff]
        %v4616 = vld [vmem:[%s4509 + $0x314] sm:$0xff]
        %v4617 = vld [vmem:[%s4509 + $0x31c] sm:$0xff]
        %v4618 = vld [vmem:[%s4509 + $0x324] sm:$0xff]
        %v4619 = vld [vmem:[%s4509 + $0x32c] sm:$0xff]
        %v4620 = vld [vmem:[%s4509 + $0x334] sm:$0xff]
        %v4621 = vld [vmem:[%s4509 + $0x33c] sm:$0xf]
        %s4622 = scalar_lea.vmem %s385, 39 [#allocation9]
        %v4623 = vld [vmem:[%s4622] sm:$0xff]
        %v4624 = vld [vmem:[%s4622 + $0x8] sm:$0x1f]
        %v4627 = vlaneseq
        %v4628 = vshrl.u32 %v4627, 7
        %v4629 = vsub.s32 0, %v4628
        %v4630 = vrot.slane %v4623, %v4629
        %v4631 = vlaneseq
        %v4632 = vshrl.u32 %v4631, 7
        %v4633 = vsub.s32 1, %v4632
        %v4634 = vrot.slane %v4623, %v4633
        %v4635 = vlaneseq
        %v4636 = vshrl.u32 %v4635, 7
        %v4637 = vsub.s32 2, %v4636
        %v4638 = vrot.slane %v4623, %v4637
        %v4639 = vlaneseq
        %v4640 = vshrl.u32 %v4639, 7
        %v4641 = vsub.s32 3, %v4640
        %v4642 = vrot.slane %v4623, %v4641
        %v4643 = vlaneseq
        %v4644 = vshrl.u32 %v4643, 7
        %v4645 = vsub.s32 4, %v4644
        %v4646 = vrot.slane %v4623, %v4645
        %v4647 = vlaneseq
        %v4648 = vshrl.u32 %v4647, 7
        %v4649 = vsub.s32 5, %v4648
        %v4650 = vrot.slane %v4623, %v4649
        %v4651 = vlaneseq
        %v4652 = vshrl.u32 %v4651, 7
        %v4653 = vsub.s32 6, %v4652
        %v4654 = vrot.slane %v4623, %v4653
        %v4655 = vlaneseq
        %v4656 = vshrl.u32 %v4655, 7
        %v4657 = vsub.s32 7, %v4656
        %v4658 = vrot.slane %v4623, %v4657
        %v4659 = vlaneseq
        %v4660 = vshrl.u32 %v4659, 7
        %v4661 = vsub.s32 0, %v4660
        %v4662 = vrot.slane %v4624, %v4661
        %v4663 = vlaneseq
        %v4664 = vshrl.u32 %v4663, 7
        %v4665 = vsub.s32 1, %v4664
        %v4666 = vrot.slane %v4624, %v4665
        %v4667 = vlaneseq
        %v4668 = vshrl.u32 %v4667, 7
        %v4669 = vsub.s32 2, %v4668
        %v4670 = vrot.slane %v4624, %v4669
        %v4671 = vlaneseq
        %v4672 = vshrl.u32 %v4671, 7
        %v4673 = vsub.s32 3, %v4672
        %v4674 = vrot.slane %v4624, %v4673
        %v4675 = vlaneseq
        %v4676 = vshrl.u32 %v4675, 7
        %v4677 = vsub.s32 4, %v4676
        %v4678 = vrot.slane %v4624, %v4677
        %v4804 = vunpack.c.l.b16 %v4510
        %v4805 = vunpack.c.h.b16 %v4510
        %v4806 = vunpack.c.l.b16 %v4511
        %v4807 = vunpack.c.h.b16 %v4511
        %v4808 = vunpack.c.l.b16 %v4512
        %v4809 = vunpack.c.h.b16 %v4512
        %v4810 = vunpack.c.l.b16 %v4513
        %v4811 = vunpack.c.h.b16 %v4513
        %v4812 = vunpack.c.l.b16 %v4514
        %v4813 = vunpack.c.h.b16 %v4514
        %v4814 = vunpack.c.l.b16 %v4515
        %v4815 = vunpack.c.h.b16 %v4515
        %v4816 = vunpack.c.l.b16 %v4516
        %v4817 = vunpack.c.l.b16 %v4517
        %v4818 = vunpack.c.h.b16 %v4517
        %v4819 = vunpack.c.l.b16 %v4518
        %v4820 = vunpack.c.h.b16 %v4518
        %v4821 = vunpack.c.l.b16 %v4519
        %v4822 = vunpack.c.h.b16 %v4519
        %v4823 = vunpack.c.l.b16 %v4520
        %v4824 = vunpack.c.h.b16 %v4520
        %v4825 = vunpack.c.l.b16 %v4521
        %v4826 = vunpack.c.h.b16 %v4521
        %v4827 = vunpack.c.l.b16 %v4522
        %v4828 = vunpack.c.h.b16 %v4522
        %v4829 = vunpack.c.l.b16 %v4523
        %v4830 = vunpack.c.l.b16 %v4524
        %v4831 = vunpack.c.h.b16 %v4524
        %v4832 = vunpack.c.l.b16 %v4525
        %v4833 = vunpack.c.h.b16 %v4525
        %v4834 = vunpack.c.l.b16 %v4526
        %v4835 = vunpack.c.h.b16 %v4526
        %v4836 = vunpack.c.l.b16 %v4527
        %v4837 = vunpack.c.h.b16 %v4527
        %v4838 = vunpack.c.l.b16 %v4528
        %v4839 = vunpack.c.h.b16 %v4528
        %v4840 = vunpack.c.l.b16 %v4529
        %v4841 = vunpack.c.h.b16 %v4529
        %v4842 = vunpack.c.l.b16 %v4530
        %v4843 = vunpack.c.l.b16 %v4531
        %v4844 = vunpack.c.h.b16 %v4531
        %v4845 = vunpack.c.l.b16 %v4532
        %v4846 = vunpack.c.h.b16 %v4532
        %v4847 = vunpack.c.l.b16 %v4533
        %v4848 = vunpack.c.h.b16 %v4533
        %v4849 = vunpack.c.l.b16 %v4534
        %v4850 = vunpack.c.h.b16 %v4534
        %v4851 = vunpack.c.l.b16 %v4535
        %v4852 = vunpack.c.h.b16 %v4535
        %v4853 = vunpack.c.l.b16 %v4536
        %v4854 = vunpack.c.h.b16 %v4536
        %v4855 = vunpack.c.l.b16 %v4537
        %v4856 = vunpack.c.l.b16 %v4538
        %v4857 = vunpack.c.h.b16 %v4538
        %v4858 = vunpack.c.l.b16 %v4539
        %v4859 = vunpack.c.h.b16 %v4539
        %v4860 = vunpack.c.l.b16 %v4540
        %v4861 = vunpack.c.h.b16 %v4540
        %v4862 = vunpack.c.l.b16 %v4541
        %v4863 = vunpack.c.h.b16 %v4541
        %v4864 = vunpack.c.l.b16 %v4542
        %v4865 = vunpack.c.h.b16 %v4542
        %v4866 = vunpack.c.l.b16 %v4543
        %v4867 = vunpack.c.h.b16 %v4543
        %v4868 = vunpack.c.l.b16 %v4544
        %v4869 = vunpack.c.l.b16 %v4545
        %v4870 = vunpack.c.h.b16 %v4545
        %v4871 = vunpack.c.l.b16 %v4546
        %v4872 = vunpack.c.h.b16 %v4546
        %v4873 = vunpack.c.l.b16 %v4547
        %v4874 = vunpack.c.h.b16 %v4547
        %v4875 = vunpack.c.l.b16 %v4548
        %v4876 = vunpack.c.h.b16 %v4548
        %v4877 = vunpack.c.l.b16 %v4549
        %v4878 = vunpack.c.h.b16 %v4549
        %v4879 = vunpack.c.l.b16 %v4550
        %v4880 = vunpack.c.h.b16 %v4550
        %v4881 = vunpack.c.l.b16 %v4551
        %v4882 = vunpack.c.l.b16 %v4552
        %v4883 = vunpack.c.h.b16 %v4552
        %v4884 = vunpack.c.l.b16 %v4553
        %v4885 = vunpack.c.h.b16 %v4553
        %v4886 = vunpack.c.l.b16 %v4554
        %v4887 = vunpack.c.h.b16 %v4554
        %v4888 = vunpack.c.l.b16 %v4555
        %v4889 = vunpack.c.h.b16 %v4555
        %v4890 = vunpack.c.l.b16 %v4556
        %v4891 = vunpack.c.h.b16 %v4556
        %v4892 = vunpack.c.l.b16 %v4557
        %v4893 = vunpack.c.h.b16 %v4557
        %v4894 = vunpack.c.l.b16 %v4558
        %v4895 = vunpack.c.l.b16 %v4559
        %v4896 = vunpack.c.h.b16 %v4559
        %v4897 = vunpack.c.l.b16 %v4560
        %v4898 = vunpack.c.h.b16 %v4560
        %v4899 = vunpack.c.l.b16 %v4561
        %v4900 = vunpack.c.h.b16 %v4561
        %v4901 = vunpack.c.l.b16 %v4562
        %v4902 = vunpack.c.h.b16 %v4562
        %v4903 = vunpack.c.l.b16 %v4563
        %v4904 = vunpack.c.h.b16 %v4563
        %v4905 = vunpack.c.l.b16 %v4564
        %v4906 = vunpack.c.h.b16 %v4564
        %v4907 = vunpack.c.l.b16 %v4565
        %v4908 = vunpack.c.l.b16 %v4566
        %v4909 = vunpack.c.h.b16 %v4566
        %v4910 = vunpack.c.l.b16 %v4567
        %v4911 = vunpack.c.h.b16 %v4567
        %v4912 = vunpack.c.l.b16 %v4568
        %v4913 = vunpack.c.h.b16 %v4568
        %v4914 = vunpack.c.l.b16 %v4569
        %v4915 = vunpack.c.h.b16 %v4569
        %v4916 = vunpack.c.l.b16 %v4570
        %v4917 = vunpack.c.h.b16 %v4570
        %v4918 = vunpack.c.l.b16 %v4571
        %v4919 = vunpack.c.h.b16 %v4571
        %v4920 = vunpack.c.l.b16 %v4572
        %v4921 = vunpack.c.l.b16 %v4573
        %v4922 = vunpack.c.h.b16 %v4573
        %v4923 = vunpack.c.l.b16 %v4574
        %v4924 = vunpack.c.h.b16 %v4574
        %v4925 = vunpack.c.l.b16 %v4575
        %v4926 = vunpack.c.h.b16 %v4575
        %v4927 = vunpack.c.l.b16 %v4576
        %v4928 = vunpack.c.h.b16 %v4576
        %v4929 = vunpack.c.l.b16 %v4577
        %v4930 = vunpack.c.h.b16 %v4577
        %v4931 = vunpack.c.l.b16 %v4578
        %v4932 = vunpack.c.h.b16 %v4578
        %v4933 = vunpack.c.l.b16 %v4579
        %v4934 = vunpack.c.l.b16 %v4580
        %v4935 = vunpack.c.h.b16 %v4580
        %v4936 = vunpack.c.l.b16 %v4581
        %v4937 = vunpack.c.h.b16 %v4581
        %v4938 = vunpack.c.l.b16 %v4582
        %v4939 = vunpack.c.h.b16 %v4582
        %v4940 = vunpack.c.l.b16 %v4583
        %v4941 = vunpack.c.h.b16 %v4583
        %v4942 = vunpack.c.l.b16 %v4584
        %v4943 = vunpack.c.h.b16 %v4584
        %v4944 = vunpack.c.l.b16 %v4585
        %v4945 = vunpack.c.h.b16 %v4585
        %v4946 = vunpack.c.l.b16 %v4586
        %v4947 = vunpack.c.l.b16 %v4587
        %v4948 = vunpack.c.h.b16 %v4587
        %v4949 = vunpack.c.l.b16 %v4588
        %v4950 = vunpack.c.h.b16 %v4588
        %v4951 = vunpack.c.l.b16 %v4589
        %v4952 = vunpack.c.h.b16 %v4589
        %v4953 = vunpack.c.l.b16 %v4590
        %v4954 = vunpack.c.h.b16 %v4590
        %v4955 = vunpack.c.l.b16 %v4591
        %v4956 = vunpack.c.h.b16 %v4591
        %v4957 = vunpack.c.l.b16 %v4592
        %v4958 = vunpack.c.h.b16 %v4592
        %v4959 = vunpack.c.l.b16 %v4593
        %v4960 = vunpack.c.l.b16 %v4594
        %v4961 = vunpack.c.h.b16 %v4594
        %v4962 = vunpack.c.l.b16 %v4595
        %v4963 = vunpack.c.h.b16 %v4595
        %v4964 = vunpack.c.l.b16 %v4596
        %v4965 = vunpack.c.h.b16 %v4596
        %v4966 = vunpack.c.l.b16 %v4597
        %v4967 = vunpack.c.h.b16 %v4597
        %v4968 = vunpack.c.l.b16 %v4598
        %v4969 = vunpack.c.h.b16 %v4598
        %v4970 = vunpack.c.l.b16 %v4599
        %v4971 = vunpack.c.h.b16 %v4599
        %v4972 = vunpack.c.l.b16 %v4600
        %v4973 = vunpack.c.l.b16 %v4601
        %v4974 = vunpack.c.h.b16 %v4601
        %v4975 = vunpack.c.l.b16 %v4602
        %v4976 = vunpack.c.h.b16 %v4602
        %v4977 = vunpack.c.l.b16 %v4603
        %v4978 = vunpack.c.h.b16 %v4603
        %v4979 = vunpack.c.l.b16 %v4604
        %v4980 = vunpack.c.h.b16 %v4604
        %v4981 = vunpack.c.l.b16 %v4605
        %v4982 = vunpack.c.h.b16 %v4605
        %v4983 = vunpack.c.l.b16 %v4606
        %v4984 = vunpack.c.h.b16 %v4606
        %v4985 = vunpack.c.l.b16 %v4607
        %v4986 = vunpack.c.l.b16 %v4608
        %v4987 = vunpack.c.h.b16 %v4608
        %v4988 = vunpack.c.l.b16 %v4609
        %v4989 = vunpack.c.h.b16 %v4609
        %v4990 = vunpack.c.l.b16 %v4610
        %v4991 = vunpack.c.h.b16 %v4610
        %v4992 = vunpack.c.l.b16 %v4611
        %v4993 = vunpack.c.h.b16 %v4611
        %v4994 = vunpack.c.l.b16 %v4612
        %v4995 = vunpack.c.h.b16 %v4612
        %v4996 = vunpack.c.l.b16 %v4613
        %v4997 = vunpack.c.h.b16 %v4613
        %v4998 = vunpack.c.l.b16 %v4614
        %v4999 = vunpack.c.l.b16 %v4615
        %v5000 = vunpack.c.h.b16 %v4615
        %v5001 = vunpack.c.l.b16 %v4616
        %v5002 = vunpack.c.h.b16 %v4616
        %v5003 = vunpack.c.l.b16 %v4617
        %v5004 = vunpack.c.h.b16 %v4617
        %v5005 = vunpack.c.l.b16 %v4618
        %v5006 = vunpack.c.h.b16 %v4618
        %v5007 = vunpack.c.l.b16 %v4619
        %v5008 = vunpack.c.h.b16 %v4619
        %v5009 = vunpack.c.l.b16 %v4620
        %v5010 = vunpack.c.h.b16 %v4620
        %v5011 = vunpack.c.l.b16 %v4621
        %v5012 = vpack.c.b16 %v4817, %v4804
        %v5013 = vpack.c.b16 %v4818, %v4805
        %v5014 = vpack.c.b16 %v4819, %v4806
        %v5015 = vpack.c.b16 %v4820, %v4807
        %v5016 = vpack.c.b16 %v4821, %v4808
        %v5017 = vpack.c.b16 %v4822, %v4809
        %v5018 = vpack.c.b16 %v4823, %v4810
        %v5019 = vpack.c.b16 %v4824, %v4811
        %v5020 = vpack.c.b16 %v4825, %v4812
        %v5021 = vpack.c.b16 %v4826, %v4813
        %v5022 = vpack.c.b16 %v4827, %v4814
        %v5023 = vpack.c.b16 %v4828, %v4815
        %v5024 = vpack.c.b16 %v4829, %v4816
        %v5025 = vpack.c.b16 %v4843, %v4830
        %v5026 = vpack.c.b16 %v4844, %v4831
        %v5027 = vpack.c.b16 %v4845, %v4832
        %v5028 = vpack.c.b16 %v4846, %v4833
        %v5029 = vpack.c.b16 %v4847, %v4834
        %v5030 = vpack.c.b16 %v4848, %v4835
        %v5031 = vpack.c.b16 %v4849, %v4836
        %v5032 = vpack.c.b16 %v4850, %v4837
        %v5033 = vpack.c.b16 %v4851, %v4838
        %v5034 = vpack.c.b16 %v4852, %v4839
        %v5035 = vpack.c.b16 %v4853, %v4840
        %v5036 = vpack.c.b16 %v4854, %v4841
        %v5037 = vpack.c.b16 %v4855, %v4842
        %v5038 = vpack.c.b16 %v4869, %v4856
        %v5039 = vpack.c.b16 %v4870, %v4857
        %v5040 = vpack.c.b16 %v4871, %v4858
        %v5041 = vpack.c.b16 %v4872, %v4859
        %v5042 = vpack.c.b16 %v4873, %v4860
        %v5043 = vpack.c.b16 %v4874, %v4861
        %v5044 = vpack.c.b16 %v4875, %v4862
        %v5045 = vpack.c.b16 %v4876, %v4863
        %v5046 = vpack.c.b16 %v4877, %v4864
        %v5047 = vpack.c.b16 %v4878, %v4865
        %v5048 = vpack.c.b16 %v4879, %v4866
        %v5049 = vpack.c.b16 %v4880, %v4867
        %v5050 = vpack.c.b16 %v4881, %v4868
        %v5051 = vpack.c.b16 %v4895, %v4882
        %v5052 = vpack.c.b16 %v4896, %v4883
        %v5053 = vpack.c.b16 %v4897, %v4884
        %v5054 = vpack.c.b16 %v4898, %v4885
        %v5055 = vpack.c.b16 %v4899, %v4886
        %v5056 = vpack.c.b16 %v4900, %v4887
        %v5057 = vpack.c.b16 %v4901, %v4888
        %v5058 = vpack.c.b16 %v4902, %v4889
        %v5059 = vpack.c.b16 %v4903, %v4890
        %v5060 = vpack.c.b16 %v4904, %v4891
        %v5061 = vpack.c.b16 %v4905, %v4892
        %v5062 = vpack.c.b16 %v4906, %v4893
        %v5063 = vpack.c.b16 %v4907, %v4894
        %v5064 = vpack.c.b16 %v4921, %v4908
        %v5065 = vpack.c.b16 %v4922, %v4909
        %v5066 = vpack.c.b16 %v4923, %v4910
        %v5067 = vpack.c.b16 %v4924, %v4911
        %v5068 = vpack.c.b16 %v4925, %v4912
        %v5069 = vpack.c.b16 %v4926, %v4913
        %v5070 = vpack.c.b16 %v4927, %v4914
        %v5071 = vpack.c.b16 %v4928, %v4915
        %v5072 = vpack.c.b16 %v4929, %v4916
        %v5073 = vpack.c.b16 %v4930, %v4917
        %v5074 = vpack.c.b16 %v4931, %v4918
        %v5075 = vpack.c.b16 %v4932, %v4919
        %v5076 = vpack.c.b16 %v4933, %v4920
        %v5077 = vpack.c.b16 %v4947, %v4934
        %v5078 = vpack.c.b16 %v4948, %v4935
        %v5079 = vpack.c.b16 %v4949, %v4936
        %v5080 = vpack.c.b16 %v4950, %v4937
        %v5081 = vpack.c.b16 %v4951, %v4938
        %v5082 = vpack.c.b16 %v4952, %v4939
        %v5083 = vpack.c.b16 %v4953, %v4940
        %v5084 = vpack.c.b16 %v4954, %v4941
        %v5085 = vpack.c.b16 %v4955, %v4942
        %v5086 = vpack.c.b16 %v4956, %v4943
        %v5087 = vpack.c.b16 %v4957, %v4944
        %v5088 = vpack.c.b16 %v4958, %v4945
        %v5089 = vpack.c.b16 %v4959, %v4946
        %v5090 = vpack.c.b16 %v4973, %v4960
        %v5091 = vpack.c.b16 %v4974, %v4961
        %v5092 = vpack.c.b16 %v4975, %v4962
        %v5093 = vpack.c.b16 %v4976, %v4963
        %v5094 = vpack.c.b16 %v4977, %v4964
        %v5095 = vpack.c.b16 %v4978, %v4965
        %v5096 = vpack.c.b16 %v4979, %v4966
        %v5097 = vpack.c.b16 %v4980, %v4967
        %v5098 = vpack.c.b16 %v4981, %v4968
        %v5099 = vpack.c.b16 %v4982, %v4969
        %v5100 = vpack.c.b16 %v4983, %v4970
        %v5101 = vpack.c.b16 %v4984, %v4971
        %v5102 = vpack.c.b16 %v4985, %v4972
        %v5103 = vpack.c.b16 %v4999, %v4986
        %v5104 = vpack.c.b16 %v5000, %v4987
        %v5105 = vpack.c.b16 %v5001, %v4988
        %v5106 = vpack.c.b16 %v5002, %v4989
        %v5107 = vpack.c.b16 %v5003, %v4990
        %v5108 = vpack.c.b16 %v5004, %v4991
        %v5109 = vpack.c.b16 %v5005, %v4992
        %v5110 = vpack.c.b16 %v5006, %v4993
        %v5111 = vpack.c.b16 %v5007, %v4994
        %v5112 = vpack.c.b16 %v5008, %v4995
        %v5113 = vpack.c.b16 %v5009, %v4996
        %v5114 = vpack.c.b16 %v5010, %v4997
        %v5115 = vpack.c.b16 %v5011, %v4998
        %5220 = vmatprep.subr.bf16.mxu0 %v5104
        %5221 = vmatpush1.bf16.msra.mxu0 %v5103
        %5222 = vmatprep.subr.bf16.mxu0 %v5091
        %5223 = vmatpush1.bf16.msra.mxu0 %v5090
        %5224 = vmatprep.subr.bf16.mxu0 %v5078
        %5225 = vmatpush1.bf16.msra.mxu0 %v5077
        %5226 = vmatprep.subr.bf16.mxu0 %v5065
        %5227 = vmatpush1.bf16.msra.mxu0 %v5064
        %5228 = vmatprep.subr.bf16.mxu0 %v5052
        %5229 = vmatpush1.bf16.msra.mxu0 %v5051
        %5230 = vmatprep.subr.bf16.mxu0 %v5039
        %5231 = vmatpush1.bf16.msra.mxu0 %v5038
        %5232 = vmatprep.subr.bf16.mxu0 %v5026
        %5233 = vmatpush1.bf16.msra.mxu0 %v5025
        %5234 = vmatprep.subr.bf16.mxu0 %v5013
        %5235 = vmatpush1.bf16.msra.mxu0 %v5012
        %5236 = vmatprep.subr.bf16.mxu0 0
        %5237 = vmatpush2.bf16.msra.mxu0 0
        %5238 = vmatprep.subr.bf16.mxu0 0
        %5239 = vmatpush2.bf16.msra.mxu0 0
        %5240 = vmatprep.subr.bf16.mxu0 0
        %5241 = vmatpush2.bf16.msra.mxu0 0
        %5242 = vmatprep.subr.bf16.mxu0 0
        %5243 = vmatpush2.bf16.msra.mxu0 0
        %5244 = vmatprep.subr.bf16.mxu0 0
        %5245 = vmatpush2.bf16.msra.mxu0 0
        %5246 = vmatprep.subr.bf16.mxu0 0
        %5247 = vmatpush2.bf16.msra.mxu0 0
        %5248 = vmatprep.subr.bf16.mxu0 0
        %5249 = vmatpush2.bf16.msra.mxu0 0
        %5250 = vmatprep.subr.bf16.mxu0 0
        %5251 = vmatpush2.bf16.msra.mxu0 0
        %5252 = vmatprep.mubr.bf16.mxu0 0
        %5253 = vmatmul.mubr.bf16.gmra.mxu0 %v4508
        %v5254 = vpop.f32.mrf.mxu0
        %v5255 = vadd.f32 %v4630, %v5254
        %v5256 = vpop.f32.mrf.mxu0
        %v5257 = vadd.f32 %v4634, %v5256
        %v5258 = vpop.f32.mrf.mxu0
        %v5259 = vpop.f32.mrf.mxu0
        %5260 = vdwg.mxu0
        %5261 = vmatprep.subr.bf16.mxu0 %v5106
        %5262 = vmatpush1.bf16.msra.mxu0 %v5105
        %5263 = vmatprep.subr.bf16.mxu0 %v5093
        %5264 = vmatpush1.bf16.msra.mxu0 %v5092
        %5265 = vmatprep.subr.bf16.mxu0 %v5080
        %5266 = vmatpush1.bf16.msra.mxu0 %v5079
        %5267 = vmatprep.subr.bf16.mxu0 %v5067
        %5268 = vmatpush1.bf16.msra.mxu0 %v5066
        %5269 = vmatprep.subr.bf16.mxu0 %v5054
        %5270 = vmatpush1.bf16.msra.mxu0 %v5053
        %5271 = vmatprep.subr.bf16.mxu0 %v5041
        %5272 = vmatpush1.bf16.msra.mxu0 %v5040
        %5273 = vmatprep.subr.bf16.mxu0 %v5028
        %5274 = vmatpush1.bf16.msra.mxu0 %v5027
        %5275 = vmatprep.subr.bf16.mxu0 %v5015
        %5276 = vmatpush1.bf16.msra.mxu0 %v5014
        %5277 = vmatprep.subr.bf16.mxu0 0
        %5278 = vmatpush2.bf16.msra.mxu0 0
        %5279 = vmatprep.subr.bf16.mxu0 0
        %5280 = vmatpush2.bf16.msra.mxu0 0
        %5281 = vmatprep.subr.bf16.mxu0 0
        %5282 = vmatpush2.bf16.msra.mxu0 0
        %5283 = vmatprep.subr.bf16.mxu0 0
        %5284 = vmatpush2.bf16.msra.mxu0 0
        %5285 = vmatprep.subr.bf16.mxu0 0
        %5286 = vmatpush2.bf16.msra.mxu0 0
        %5287 = vmatprep.subr.bf16.mxu0 0
        %5288 = vmatpush2.bf16.msra.mxu0 0
        %5289 = vmatprep.subr.bf16.mxu0 0
        %5290 = vmatpush2.bf16.msra.mxu0 0
        %5291 = vmatprep.subr.bf16.mxu0 0
        %5292 = vmatpush2.bf16.msra.mxu0 0
        %5293 = vmatprep.mubr.bf16.mxu0 0
        %5294 = vmatmul.mubr.bf16.gmra.mxu0 %v4508
        %v5295 = vpop.f32.mrf.mxu0
        %v5296 = vadd.f32 %v4638, %v5295
        %v5297 = vpop.f32.mrf.mxu0
        %v5298 = vadd.f32 %v4642, %v5297
        %v5299 = vpop.f32.mrf.mxu0
        %v5300 = vpop.f32.mrf.mxu0
        %5301 = vdwg.mxu0
        %5302 = vmatprep.subr.bf16.mxu0 %v5108
        %5303 = vmatpush1.bf16.msra.mxu0 %v5107
        %5304 = vmatprep.subr.bf16.mxu0 %v5095
        %5305 = vmatpush1.bf16.msra.mxu0 %v5094
        %5306 = vmatprep.subr.bf16.mxu0 %v5082
        %5307 = vmatpush1.bf16.msra.mxu0 %v5081
        %5308 = vmatprep.subr.bf16.mxu0 %v5069
        %5309 = vmatpush1.bf16.msra.mxu0 %v5068
        %5310 = vmatprep.subr.bf16.mxu0 %v5056
        %5311 = vmatpush1.bf16.msra.mxu0 %v5055
        %5312 = vmatprep.subr.bf16.mxu0 %v5043
        %5313 = vmatpush1.bf16.msra.mxu0 %v5042
        %5314 = vmatprep.subr.bf16.mxu0 %v5030
        %5315 = vmatpush1.bf16.msra.mxu0 %v5029
        %5316 = vmatprep.subr.bf16.mxu0 %v5017
        %5317 = vmatpush1.bf16.msra.mxu0 %v5016
        %5318 = vmatprep.subr.bf16.mxu0 0
        %5319 = vmatpush2.bf16.msra.mxu0 0
        %5320 = vmatprep.subr.bf16.mxu0 0
        %5321 = vmatpush2.bf16.msra.mxu0 0
        %5322 = vmatprep.subr.bf16.mxu0 0
        %5323 = vmatpush2.bf16.msra.mxu0 0
        %5324 = vmatprep.subr.bf16.mxu0 0
        %5325 = vmatpush2.bf16.msra.mxu0 0
        %5326 = vmatprep.subr.bf16.mxu0 0
        %5327 = vmatpush2.bf16.msra.mxu0 0
        %5328 = vmatprep.subr.bf16.mxu0 0
        %5329 = vmatpush2.bf16.msra.mxu0 0
        %5330 = vmatprep.subr.bf16.mxu0 0
        %5331 = vmatpush2.bf16.msra.mxu0 0
        %5332 = vmatprep.subr.bf16.mxu0 0
        %5333 = vmatpush2.bf16.msra.mxu0 0
        %5334 = vmatprep.mubr.bf16.mxu0 0
        %5335 = vmatmul.mubr.bf16.gmra.mxu0 %v4508
        %v5336 = vpop.f32.mrf.mxu0
        %v5337 = vadd.f32 %v4646, %v5336
        %v5338 = vpop.f32.mrf.mxu0
        %v5339 = vadd.f32 %v4650, %v5338
        %v5340 = vpop.f32.mrf.mxu0
        %v5341 = vpop.f32.mrf.mxu0
        %5342 = vdwg.mxu0
        %5343 = vmatprep.subr.bf16.mxu0 %v5110
        %5344 = vmatpush1.bf16.msra.mxu0 %v5109
        %5345 = vmatprep.subr.bf16.mxu0 %v5097
        %5346 = vmatpush1.bf16.msra.mxu0 %v5096
        %5347 = vmatprep.subr.bf16.mxu0 %v5084
        %5348 = vmatpush1.bf16.msra.mxu0 %v5083
        %5349 = vmatprep.subr.bf16.mxu0 %v5071
        %5350 = vmatpush1.bf16.msra.mxu0 %v5070
        %5351 = vmatprep.subr.bf16.mxu0 %v5058
        %5352 = vmatpush1.bf16.msra.mxu0 %v5057
        %5353 = vmatprep.subr.bf16.mxu0 %v5045
        %5354 = vmatpush1.bf16.msra.mxu0 %v5044
        %5355 = vmatprep.subr.bf16.mxu0 %v5032
        %5356 = vmatpush1.bf16.msra.mxu0 %v5031
        %5357 = vmatprep.subr.bf16.mxu0 %v5019
        %5358 = vmatpush1.bf16.msra.mxu0 %v5018
        %5359 = vmatprep.subr.bf16.mxu0 0
        %5360 = vmatpush2.bf16.msra.mxu0 0
        %5361 = vmatprep.subr.bf16.mxu0 0
        %5362 = vmatpush2.bf16.msra.mxu0 0
        %5363 = vmatprep.subr.bf16.mxu0 0
        %5364 = vmatpush2.bf16.msra.mxu0 0
        %5365 = vmatprep.subr.bf16.mxu0 0
        %5366 = vmatpush2.bf16.msra.mxu0 0
        %5367 = vmatprep.subr.bf16.mxu0 0
        %5368 = vmatpush2.bf16.msra.mxu0 0
        %5369 = vmatprep.subr.bf16.mxu0 0
        %5370 = vmatpush2.bf16.msra.mxu0 0
        %5371 = vmatprep.subr.bf16.mxu0 0
        %5372 = vmatpush2.bf16.msra.mxu0 0
        %5373 = vmatprep.subr.bf16.mxu0 0
        %5374 = vmatpush2.bf16.msra.mxu0 0
        %5375 = vmatprep.mubr.bf16.mxu0 0
        %5376 = vmatmul.mubr.bf16.gmra.mxu0 %v4508
        %v5377 = vpop.f32.mrf.mxu0
        %v5378 = vadd.f32 %v4654, %v5377
        %v5379 = vpop.f32.mrf.mxu0
        %v5380 = vadd.f32 %v4658, %v5379
        %v5381 = vpop.f32.mrf.mxu0
        %v5382 = vpop.f32.mrf.mxu0
        %5383 = vdwg.mxu0
        %5384 = vmatprep.subr.bf16.mxu0 %v5112
        %5385 = vmatpush1.bf16.msra.mxu0 %v5111
        %5386 = vmatprep.subr.bf16.mxu0 %v5099
        %5387 = vmatpush1.bf16.msra.mxu0 %v5098
        %5388 = vmatprep.subr.bf16.mxu0 %v5086
        %5389 = vmatpush1.bf16.msra.mxu0 %v5085
        %5390 = vmatprep.subr.bf16.mxu0 %v5073
        %5391 = vmatpush1.bf16.msra.mxu0 %v5072
        %5392 = vmatprep.subr.bf16.mxu0 %v5060
        %5393 = vmatpush1.bf16.msra.mxu0 %v5059
        %5394 = vmatprep.subr.bf16.mxu0 %v5047
        %5395 = vmatpush1.bf16.msra.mxu0 %v5046
        %5396 = vmatprep.subr.bf16.mxu0 %v5034
        %5397 = vmatpush1.bf16.msra.mxu0 %v5033
        %5398 = vmatprep.subr.bf16.mxu0 %v5021
        %5399 = vmatpush1.bf16.msra.mxu0 %v5020
        %5400 = vmatprep.subr.bf16.mxu0 0
        %5401 = vmatpush2.bf16.msra.mxu0 0
        %5402 = vmatprep.subr.bf16.mxu0 0
        %5403 = vmatpush2.bf16.msra.mxu0 0
        %5404 = vmatprep.subr.bf16.mxu0 0
        %5405 = vmatpush2.bf16.msra.mxu0 0
        %5406 = vmatprep.subr.bf16.mxu0 0
        %5407 = vmatpush2.bf16.msra.mxu0 0
        %5408 = vmatprep.subr.bf16.mxu0 0
        %5409 = vmatpush2.bf16.msra.mxu0 0
        %5410 = vmatprep.subr.bf16.mxu0 0
        %5411 = vmatpush2.bf16.msra.mxu0 0
        %5412 = vmatprep.subr.bf16.mxu0 0
        %5413 = vmatpush2.bf16.msra.mxu0 0
        %5414 = vmatprep.subr.bf16.mxu0 0
        %5415 = vmatpush2.bf16.msra.mxu0 0
        %5416 = vmatprep.mubr.bf16.mxu0 0
        %5417 = vmatmul.mubr.bf16.gmra.mxu0 %v4508
        %v5418 = vpop.f32.mrf.mxu0
        %v5419 = vadd.f32 %v4662, %v5418
        %v5420 = vpop.f32.mrf.mxu0
        %v5421 = vadd.f32 %v4666, %v5420
        %v5422 = vpop.f32.mrf.mxu0
        %v5423 = vpop.f32.mrf.mxu0
        %5424 = vdwg.mxu0
        %5425 = vmatprep.subr.bf16.mxu0 %v5114
        %5426 = vmatpush1.bf16.msra.mxu0 %v5113
        %5427 = vmatprep.subr.bf16.mxu0 %v5101
        %5428 = vmatpush1.bf16.msra.mxu0 %v5100
        %5429 = vmatprep.subr.bf16.mxu0 %v5088
        %5430 = vmatpush1.bf16.msra.mxu0 %v5087
        %5431 = vmatprep.subr.bf16.mxu0 %v5075
        %5432 = vmatpush1.bf16.msra.mxu0 %v5074
        %5433 = vmatprep.subr.bf16.mxu0 %v5062
        %5434 = vmatpush1.bf16.msra.mxu0 %v5061
        %5435 = vmatprep.subr.bf16.mxu0 %v5049
        %5436 = vmatpush1.bf16.msra.mxu0 %v5048
        %5437 = vmatprep.subr.bf16.mxu0 %v5036
        %5438 = vmatpush1.bf16.msra.mxu0 %v5035
        %5439 = vmatprep.subr.bf16.mxu0 %v5023
        %5440 = vmatpush1.bf16.msra.mxu0 %v5022
        %5441 = vmatprep.subr.bf16.mxu0 0
        %5442 = vmatpush2.bf16.msra.mxu0 0
        %5443 = vmatprep.subr.bf16.mxu0 0
        %5444 = vmatpush2.bf16.msra.mxu0 0
        %5445 = vmatprep.subr.bf16.mxu0 0
        %5446 = vmatpush2.bf16.msra.mxu0 0
        %5447 = vmatprep.subr.bf16.mxu0 0
        %5448 = vmatpush2.bf16.msra.mxu0 0
        %5449 = vmatprep.subr.bf16.mxu0 0
        %5450 = vmatpush2.bf16.msra.mxu0 0
        %5451 = vmatprep.subr.bf16.mxu0 0
        %5452 = vmatpush2.bf16.msra.mxu0 0
        %5453 = vmatprep.subr.bf16.mxu0 0
        %5454 = vmatpush2.bf16.msra.mxu0 0
        %5455 = vmatprep.subr.bf16.mxu0 0
        %5456 = vmatpush2.bf16.msra.mxu0 0
        %5457 = vmatprep.mubr.bf16.mxu0 0
        %5458 = vmatmul.mubr.bf16.gmra.mxu0 %v4508
        %v5459 = vpop.f32.mrf.mxu0
        %v5460 = vadd.f32 %v4670, %v5459
        %v5461 = vpop.f32.mrf.mxu0
        %v5462 = vadd.f32 %v4674, %v5461
        %v5463 = vpop.f32.mrf.mxu0
        %v5464 = vpop.f32.mrf.mxu0
        %5465 = vdwg.mxu0
        %5466 = vmatprep.subr.bf16.mxu0 0
        %5467 = vmatpush1.bf16.msra.mxu0 %v5115
        %5468 = vmatprep.subr.bf16.mxu0 0
        %5469 = vmatpush1.bf16.msra.mxu0 %v5102
        %5470 = vmatprep.subr.bf16.mxu0 0
        %5471 = vmatpush1.bf16.msra.mxu0 %v5089
        %5472 = vmatprep.subr.bf16.mxu0 0
        %5473 = vmatpush1.bf16.msra.mxu0 %v5076
        %5474 = vmatprep.subr.bf16.mxu0 0
        %5475 = vmatpush1.bf16.msra.mxu0 %v5063
        %5476 = vmatprep.subr.bf16.mxu0 0
        %5477 = vmatpush1.bf16.msra.mxu0 %v5050
        %5478 = vmatprep.subr.bf16.mxu0 0
        %5479 = vmatpush1.bf16.msra.mxu0 %v5037
        %5480 = vmatprep.subr.bf16.mxu0 0
        %5481 = vmatpush1.bf16.msra.mxu0 %v5024
        %5482 = vmatprep.subr.bf16.mxu0 0
        %5483 = vmatpush2.bf16.msra.mxu0 0
        %5484 = vmatprep.subr.bf16.mxu0 0
        %5485 = vmatpush2.bf16.msra.mxu0 0
        %5486 = vmatprep.subr.bf16.mxu0 0
        %5487 = vmatpush2.bf16.msra.mxu0 0
        %5488 = vmatprep.subr.bf16.mxu0 0
        %5489 = vmatpush2.bf16.msra.mxu0 0
        %5490 = vmatprep.subr.bf16.mxu0 0
        %5491 = vmatpush2.bf16.msra.mxu0 0
        %5492 = vmatprep.subr.bf16.mxu0 0
        %5493 = vmatpush2.bf16.msra.mxu0 0
        %5494 = vmatprep.subr.bf16.mxu0 0
        %5495 = vmatpush2.bf16.msra.mxu0 0
        %5496 = vmatprep.subr.bf16.mxu0 0
        %5497 = vmatpush2.bf16.msra.mxu0 0
        %5498 = vmatprep.mubr.bf16.mxu0 0
        %5499 = vmatmul.mubr.bf16.gmra.mxu0 %v4508
        %v5500 = vpop.f32.mrf.mxu0
        %v5501 = vadd.f32 %v4678, %v5500
        %v5502 = vpop.f32.mrf.mxu0
        %v5503 = vpop.f32.mrf.mxu0
        %v5504 = vpop.f32.mrf.mxu0
        %5505 = vdwg.mxu0
        %v5519 = vcombine.low %v5255, %v5257
        %v5520 = vcombine.low %v5296, %v5298
        %v5522 = vunpack.c.l.s4 1983009808
        %v5523 = vunpack.c.0.s8 %v5522
        %v5524 = vlaneseq
        %v5525 = vshrl.u32 %v5524, 7
        %v5526 = vsub.s32 %v5523, %v5525
        %v5527 = vrot.slane %v5519, %v5526
        %v5529 = vunpack.c.l.s4 1983009808
        %v5530 = vunpack.c.0.s8 %v5529
        %v5531 = vlaneseq
        %v5532 = vshrl.u32 %v5531, 7
        %v5533 = vsub.s32 %v5530, %v5532
        %v5534 = vrot.slane %v5520, %v5533
        %v5535 = vcombine.low %v5527, %v5534
        %v5536 = vcombine.low %v5337, %v5339
        %v5537 = vcombine.low %v5378, %v5380
        %v5539 = vunpack.c.l.s4 1983009808
        %v5540 = vunpack.c.0.s8 %v5539
        %v5541 = vlaneseq
        %v5542 = vshrl.u32 %v5541, 7
        %v5543 = vsub.s32 %v5540, %v5542
        %v5544 = vrot.slane %v5536, %v5543
        %v5546 = vunpack.c.l.s4 1983009808
        %v5547 = vunpack.c.0.s8 %v5546
        %v5548 = vlaneseq
        %v5549 = vshrl.u32 %v5548, 7
        %v5550 = vsub.s32 %v5547, %v5549
        %v5551 = vrot.slane %v5537, %v5550
        %v5552 = vcombine.low %v5544, %v5551
        %v5553 = vcombine.low %v5419, %v5421
        %v5554 = vcombine.low %v5460, %v5462
        %v5556 = vunpack.c.l.s4 1983009808
        %v5557 = vunpack.c.0.s8 %v5556
        %v5558 = vlaneseq
        %v5559 = vshrl.u32 %v5558, 7
        %v5560 = vsub.s32 %v5557, %v5559
        %v5561 = vrot.slane %v5553, %v5560
        %v5563 = vunpack.c.l.s4 1983009808
        %v5564 = vunpack.c.0.s8 %v5563
        %v5565 = vlaneseq
        %v5566 = vshrl.u32 %v5565, 7
        %v5567 = vsub.s32 %v5564, %v5566
        %v5568 = vrot.slane %v5554, %v5567
        %v5569 = vcombine.low %v5561, %v5568
        %v5570 = vcombine.low %v5501, %v457
        %v5572 = vunpack.c.l.s4 1983009808
        %v5573 = vunpack.c.0.s8 %v5572
        %v5574 = vlaneseq
        %v5575 = vshrl.u32 %v5574, 7
        %v5576 = vsub.s32 %v5573, %v5575
        %v5577 = vrot.slane %v5570, %v5576
        %v5578 = vcombine.low %v5577, %v1741
        %s5583 = scalar_lea.vmem %s449, 108
        %5584 = vst [vmem:[%s5583] sm:$0xff] %v5535
        %5585 = vst [vmem:[%s5583 + $0x8] sm:$0xff] %v5552
        %5586 = vst [vmem:[%s5583 + $0x10] sm:$0xff] %v5569
        %5587 = vst [vmem:[%s5583 + $0x18] sm:$0xff] %v5578
        %5588 = vst [vmem:[%s5583 + $0x20] sm:$0xf] %v1750
        %s5589 = scalar_lea.vmem %s349, 16 [#allocation2]
        %v5590 = vld [vmem:[%s5589] sm:$0xf]
        %v5593 = vunpack.c.l.s4 1983009808
        %v5594 = vunpack.c.0.s8 %v5593
        %v5595 = vlaneseq
        %v5596 = vshrl.u32 %v5595, 7
        %v5597 = vsub.s32 %v5594, %v5596
        %v5598 = vrot.slane %v5590, %v5597
        %v5599 = vcombine.high %v5598, %v5598
        %v5602 = vpack.c.bf16 %v5598, %v5598
        %v5603 = vpack.c.bf16 %v5599, %v5599
        %s5604 = scalar_lea.vmem %s358, 512 [#allocation4]
        %v5605 = vld [vmem:[%s5604] sm:$0xf]
        %v5606 = vld [vmem:[%s5604 + $0x4] sm:$0xf]
        %v5607 = vld [vmem:[%s5604 + $0x8] sm:$0xf]
        %v5608 = vld [vmem:[%s5604 + $0xc] sm:$0xf]
        %v5609 = vld [vmem:[%s5604 + $0x10] sm:$0xf]
        %v5610 = vld [vmem:[%s5604 + $0x14] sm:$0xf]
        %v5611 = vld [vmem:[%s5604 + $0x18] sm:$0xf]
        %v5612 = vld [vmem:[%s5604 + $0x1c] sm:$0xf]
        %v5613 = vld [vmem:[%s5604 + $0x20] sm:$0xf]
        %v5614 = vld [vmem:[%s5604 + $0x24] sm:$0xf]
        %v5615 = vld [vmem:[%s5604 + $0x28] sm:$0xf]
        %v5616 = vld [vmem:[%s5604 + $0x2c] sm:$0xf]
        %v5617 = vld [vmem:[%s5604 + $0x30] sm:$0xf]
        %v5618 = vld [vmem:[%s5604 + $0x34] sm:$0xf]
        %v5619 = vld [vmem:[%s5604 + $0x38] sm:$0xf]
        %v5620 = vld [vmem:[%s5604 + $0x3c] sm:$0xf]
        %v5621 = vld [vmem:[%s5604 + $0x40] sm:$0xf]
        %v5622 = vld [vmem:[%s5604 + $0x44] sm:$0xf]
        %v5623 = vld [vmem:[%s5604 + $0x48] sm:$0xf]
        %v5624 = vld [vmem:[%s5604 + $0x4c] sm:$0xf]
        %v5625 = vld [vmem:[%s5604 + $0x50] sm:$0xf]
        %v5626 = vld [vmem:[%s5604 + $0x54] sm:$0xf]
        %v5627 = vld [vmem:[%s5604 + $0x58] sm:$0xf]
        %v5628 = vld [vmem:[%s5604 + $0x5c] sm:$0xf]
        %v5629 = vld [vmem:[%s5604 + $0x60] sm:$0xf]
        %v5630 = vld [vmem:[%s5604 + $0x64] sm:$0xf]
        %v5631 = vld [vmem:[%s5604 + $0x68] sm:$0xf]
        %v5632 = vld [vmem:[%s5604 + $0x6c] sm:$0xf]
        %v5633 = vld [vmem:[%s5604 + $0x70] sm:$0xf]
        %v5634 = vld [vmem:[%s5604 + $0x74] sm:$0xf]
        %v5635 = vld [vmem:[%s5604 + $0x78] sm:$0xf]
        %v5636 = vld [vmem:[%s5604 + $0x7c] sm:$0xf]
        %s5637 = scalar_lea.vmem %s367, 4 [#allocation6]
        %v5638 = vld [vmem:[%s5637] sm:$0x1]
        %v5640 = vlaneseq
        %v5641 = vshrl.u32 %v5640, 7
        %v5642 = vsub.s32 0, %v5641
        %v5643 = vrot.slane %v5638, %v5642
        %v5677 = vunpack.c.l.b16 %v5605
        %v5678 = vunpack.c.l.b16 %v5606
        %v5679 = vunpack.c.l.b16 %v5607
        %v5680 = vunpack.c.l.b16 %v5608
        %v5681 = vunpack.c.l.b16 %v5609
        %v5682 = vunpack.c.l.b16 %v5610
        %v5683 = vunpack.c.l.b16 %v5611
        %v5684 = vunpack.c.l.b16 %v5612
        %v5685 = vunpack.c.l.b16 %v5613
        %v5686 = vunpack.c.l.b16 %v5614
        %v5687 = vunpack.c.l.b16 %v5615
        %v5688 = vunpack.c.l.b16 %v5616
        %v5689 = vunpack.c.l.b16 %v5617
        %v5690 = vunpack.c.l.b16 %v5618
        %v5691 = vunpack.c.l.b16 %v5619
        %v5692 = vunpack.c.l.b16 %v5620
        %v5693 = vunpack.c.l.b16 %v5621
        %v5694 = vunpack.c.l.b16 %v5622
        %v5695 = vunpack.c.l.b16 %v5623
        %v5696 = vunpack.c.l.b16 %v5624
        %v5697 = vunpack.c.l.b16 %v5625
        %v5698 = vunpack.c.l.b16 %v5626
        %v5699 = vunpack.c.l.b16 %v5627
        %v5700 = vunpack.c.l.b16 %v5628
        %v5701 = vunpack.c.l.b16 %v5629
        %v5702 = vunpack.c.l.b16 %v5630
        %v5703 = vunpack.c.l.b16 %v5631
        %v5704 = vunpack.c.l.b16 %v5632
        %v5705 = vunpack.c.l.b16 %v5633
        %v5706 = vunpack.c.l.b16 %v5634
        %v5707 = vunpack.c.l.b16 %v5635
        %v5708 = vunpack.c.l.b16 %v5636
        %v5709 = vpack.c.b16 %v5678, %v5677
        %v5710 = vpack.c.b16 %v5680, %v5679
        %v5711 = vpack.c.b16 %v5682, %v5681
        %v5712 = vpack.c.b16 %v5684, %v5683
        %v5713 = vpack.c.b16 %v5686, %v5685
        %v5714 = vpack.c.b16 %v5688, %v5687
        %v5715 = vpack.c.b16 %v5690, %v5689
        %v5716 = vpack.c.b16 %v5692, %v5691
        %v5717 = vpack.c.b16 %v5694, %v5693
        %v5718 = vpack.c.b16 %v5696, %v5695
        %v5719 = vpack.c.b16 %v5698, %v5697
        %v5720 = vpack.c.b16 %v5700, %v5699
        %v5721 = vpack.c.b16 %v5702, %v5701
        %v5722 = vpack.c.b16 %v5704, %v5703
        %v5723 = vpack.c.b16 %v5706, %v5705
        %v5724 = vpack.c.b16 %v5708, %v5707
        %5741 = vmatprep.subr.bf16.mxu0 0
        %5742 = vmatpush1.bf16.msra.mxu0 %v5716
        %5743 = vmatprep.subr.bf16.mxu0 0
        %5744 = vmatpush1.bf16.msra.mxu0 %v5715
        %5745 = vmatprep.subr.bf16.mxu0 0
        %5746 = vmatpush1.bf16.msra.mxu0 %v5714
        %5747 = vmatprep.subr.bf16.mxu0 0
        %5748 = vmatpush1.bf16.msra.mxu0 %v5713
        %5749 = vmatprep.subr.bf16.mxu0 0
        %5750 = vmatpush1.bf16.msra.mxu0 %v5712
        %5751 = vmatprep.subr.bf16.mxu0 0
        %5752 = vmatpush1.bf16.msra.mxu0 %v5711
        %5753 = vmatprep.subr.bf16.mxu0 0
        %5754 = vmatpush1.bf16.msra.mxu0 %v5710
        %5755 = vmatprep.subr.bf16.mxu0 0
        %5756 = vmatpush1.bf16.msra.mxu0 %v5709
        %5757 = vmatprep.subr.bf16.mxu0 0
        %5758 = vmatpush2.bf16.msra.mxu0 %v5724
        %5759 = vmatprep.subr.bf16.mxu0 0
        %5760 = vmatpush2.bf16.msra.mxu0 %v5723
        %5761 = vmatprep.subr.bf16.mxu0 0
        %5762 = vmatpush2.bf16.msra.mxu0 %v5722
        %5763 = vmatprep.subr.bf16.mxu0 0
        %5764 = vmatpush2.bf16.msra.mxu0 %v5721
        %5765 = vmatprep.subr.bf16.mxu0 0
        %5766 = vmatpush2.bf16.msra.mxu0 %v5720
        %5767 = vmatprep.subr.bf16.mxu0 0
        %5768 = vmatpush2.bf16.msra.mxu0 %v5719
        %5769 = vmatprep.subr.bf16.mxu0 0
        %5770 = vmatpush2.bf16.msra.mxu0 %v5718
        %5771 = vmatprep.subr.bf16.mxu0 0
        %5772 = vmatpush2.bf16.msra.mxu0 %v5717
        %5773 = vmatprep.mubr.bf16.mxu0 %v5603
        %5774 = vmatmul.mubr.bf16.gmra.mxu0 %v5602
        %v5775 = vpop.f32.mrf.mxu0
        %v5776 = vadd.f32 %v5643, %v5775
        %v5777 = vpop.f32.mrf.mxu0
        %v5778 = vpop.f32.mrf.mxu0
        %v5779 = vpop.f32.mrf.mxu0
        %5780 = vdwg.mxu0
        %vm5781 = vcmp.ge.f32.partialorder %v5776, 0.0
        %v5782 = vmul.f32 %v5776, 0.01
        %v5783 = vsel %vm5781, %v5776, %v5782
        %v5784 = vpack.c.bf16 %v5783, %v5783
        %s5785 = scalar_lea.vmem %s376, 3328 [#allocation7]
        %v5786 = vld [vmem:[%s5785] sm:$0xff]
        %v5787 = vld [vmem:[%s5785 + $0x8] sm:$0xff]
        %v5788 = vld [vmem:[%s5785 + $0x10] sm:$0xff]
        %v5789 = vld [vmem:[%s5785 + $0x18] sm:$0xff]
        %v5790 = vld [vmem:[%s5785 + $0x20] sm:$0xff]
        %v5791 = vld [vmem:[%s5785 + $0x28] sm:$0xff]
        %v5792 = vld [vmem:[%s5785 + $0x30] sm:$0xf]
        %v5793 = vld [vmem:[%s5785 + $0x34] sm:$0xff]
        %v5794 = vld [vmem:[%s5785 + $0x3c] sm:$0xff]
        %v5795 = vld [vmem:[%s5785 + $0x44] sm:$0xff]
        %v5796 = vld [vmem:[%s5785 + $0x4c] sm:$0xff]
        %v5797 = vld [vmem:[%s5785 + $0x54] sm:$0xff]
        %v5798 = vld [vmem:[%s5785 + $0x5c] sm:$0xff]
        %v5799 = vld [vmem:[%s5785 + $0x64] sm:$0xf]
        %v5800 = vld [vmem:[%s5785 + $0x68] sm:$0xff]
        %v5801 = vld [vmem:[%s5785 + $0x70] sm:$0xff]
        %v5802 = vld [vmem:[%s5785 + $0x78] sm:$0xff]
        %v5803 = vld [vmem:[%s5785 + $0x80] sm:$0xff]
        %v5804 = vld [vmem:[%s5785 + $0x88] sm:$0xff]
        %v5805 = vld [vmem:[%s5785 + $0x90] sm:$0xff]
        %v5806 = vld [vmem:[%s5785 + $0x98] sm:$0xf]
        %v5807 = vld [vmem:[%s5785 + $0x9c] sm:$0xff]
        %v5808 = vld [vmem:[%s5785 + $0xa4] sm:$0xff]
        %v5809 = vld [vmem:[%s5785 + $0xac] sm:$0xff]
        %v5810 = vld [vmem:[%s5785 + $0xb4] sm:$0xff]
        %v5811 = vld [vmem:[%s5785 + $0xbc] sm:$0xff]
        %v5812 = vld [vmem:[%s5785 + $0xc4] sm:$0xff]
        %v5813 = vld [vmem:[%s5785 + $0xcc] sm:$0xf]
        %v5814 = vld [vmem:[%s5785 + $0xd0] sm:$0xff]
        %v5815 = vld [vmem:[%s5785 + $0xd8] sm:$0xff]
        %v5816 = vld [vmem:[%s5785 + $0xe0] sm:$0xff]
        %v5817 = vld [vmem:[%s5785 + $0xe8] sm:$0xff]
        %v5818 = vld [vmem:[%s5785 + $0xf0] sm:$0xff]
        %v5819 = vld [vmem:[%s5785 + $0xf8] sm:$0xff]
        %v5820 = vld [vmem:[%s5785 + $0x100] sm:$0xf]
        %v5821 = vld [vmem:[%s5785 + $0x104] sm:$0xff]
        %v5822 = vld [vmem:[%s5785 + $0x10c] sm:$0xff]
        %v5823 = vld [vmem:[%s5785 + $0x114] sm:$0xff]
        %v5824 = vld [vmem:[%s5785 + $0x11c] sm:$0xff]
        %v5825 = vld [vmem:[%s5785 + $0x124] sm:$0xff]
        %v5826 = vld [vmem:[%s5785 + $0x12c] sm:$0xff]
        %v5827 = vld [vmem:[%s5785 + $0x134] sm:$0xf]
        %v5828 = vld [vmem:[%s5785 + $0x138] sm:$0xff]
        %v5829 = vld [vmem:[%s5785 + $0x140] sm:$0xff]
        %v5830 = vld [vmem:[%s5785 + $0x148] sm:$0xff]
        %v5831 = vld [vmem:[%s5785 + $0x150] sm:$0xff]
        %v5832 = vld [vmem:[%s5785 + $0x158] sm:$0xff]
        %v5833 = vld [vmem:[%s5785 + $0x160] sm:$0xff]
        %v5834 = vld [vmem:[%s5785 + $0x168] sm:$0xf]
        %v5835 = vld [vmem:[%s5785 + $0x16c] sm:$0xff]
        %v5836 = vld [vmem:[%s5785 + $0x174] sm:$0xff]
        %v5837 = vld [vmem:[%s5785 + $0x17c] sm:$0xff]
        %v5838 = vld [vmem:[%s5785 + $0x184] sm:$0xff]
        %v5839 = vld [vmem:[%s5785 + $0x18c] sm:$0xff]
        %v5840 = vld [vmem:[%s5785 + $0x194] sm:$0xff]
        %v5841 = vld [vmem:[%s5785 + $0x19c] sm:$0xf]
        %v5842 = vld [vmem:[%s5785 + $0x1a0] sm:$0xff]
        %v5843 = vld [vmem:[%s5785 + $0x1a8] sm:$0xff]
        %v5844 = vld [vmem:[%s5785 + $0x1b0] sm:$0xff]
        %v5845 = vld [vmem:[%s5785 + $0x1b8] sm:$0xff]
        %v5846 = vld [vmem:[%s5785 + $0x1c0] sm:$0xff]
        %v5847 = vld [vmem:[%s5785 + $0x1c8] sm:$0xff]
        %v5848 = vld [vmem:[%s5785 + $0x1d0] sm:$0xf]
        %v5849 = vld [vmem:[%s5785 + $0x1d4] sm:$0xff]
        %v5850 = vld [vmem:[%s5785 + $0x1dc] sm:$0xff]
        %v5851 = vld [vmem:[%s5785 + $0x1e4] sm:$0xff]
        %v5852 = vld [vmem:[%s5785 + $0x1ec] sm:$0xff]
        %v5853 = vld [vmem:[%s5785 + $0x1f4] sm:$0xff]
        %v5854 = vld [vmem:[%s5785 + $0x1fc] sm:$0xff]
        %v5855 = vld [vmem:[%s5785 + $0x204] sm:$0xf]
        %v5856 = vld [vmem:[%s5785 + $0x208] sm:$0xff]
        %v5857 = vld [vmem:[%s5785 + $0x210] sm:$0xff]
        %v5858 = vld [vmem:[%s5785 + $0x218] sm:$0xff]
        %v5859 = vld [vmem:[%s5785 + $0x220] sm:$0xff]
        %v5860 = vld [vmem:[%s5785 + $0x228] sm:$0xff]
        %v5861 = vld [vmem:[%s5785 + $0x230] sm:$0xff]
        %v5862 = vld [vmem:[%s5785 + $0x238] sm:$0xf]
        %v5863 = vld [vmem:[%s5785 + $0x23c] sm:$0xff]
        %v5864 = vld [vmem:[%s5785 + $0x244] sm:$0xff]
        %v5865 = vld [vmem:[%s5785 + $0x24c] sm:$0xff]
        %v5866 = vld [vmem:[%s5785 + $0x254] sm:$0xff]
        %v5867 = vld [vmem:[%s5785 + $0x25c] sm:$0xff]
        %v5868 = vld [vmem:[%s5785 + $0x264] sm:$0xff]
        %v5869 = vld [vmem:[%s5785 + $0x26c] sm:$0xf]
        %v5870 = vld [vmem:[%s5785 + $0x270] sm:$0xff]
        %v5871 = vld [vmem:[%s5785 + $0x278] sm:$0xff]
        %v5872 = vld [vmem:[%s5785 + $0x280] sm:$0xff]
        %v5873 = vld [vmem:[%s5785 + $0x288] sm:$0xff]
        %v5874 = vld [vmem:[%s5785 + $0x290] sm:$0xff]
        %v5875 = vld [vmem:[%s5785 + $0x298] sm:$0xff]
        %v5876 = vld [vmem:[%s5785 + $0x2a0] sm:$0xf]
        %v5877 = vld [vmem:[%s5785 + $0x2a4] sm:$0xff]
        %v5878 = vld [vmem:[%s5785 + $0x2ac] sm:$0xff]
        %v5879 = vld [vmem:[%s5785 + $0x2b4] sm:$0xff]
        %v5880 = vld [vmem:[%s5785 + $0x2bc] sm:$0xff]
        %v5881 = vld [vmem:[%s5785 + $0x2c4] sm:$0xff]
        %v5882 = vld [vmem:[%s5785 + $0x2cc] sm:$0xff]
        %v5883 = vld [vmem:[%s5785 + $0x2d4] sm:$0xf]
        %v5884 = vld [vmem:[%s5785 + $0x2d8] sm:$0xff]
        %v5885 = vld [vmem:[%s5785 + $0x2e0] sm:$0xff]
        %v5886 = vld [vmem:[%s5785 + $0x2e8] sm:$0xff]
        %v5887 = vld [vmem:[%s5785 + $0x2f0] sm:$0xff]
        %v5888 = vld [vmem:[%s5785 + $0x2f8] sm:$0xff]
        %v5889 = vld [vmem:[%s5785 + $0x300] sm:$0xff]
        %v5890 = vld [vmem:[%s5785 + $0x308] sm:$0xf]
        %v5891 = vld [vmem:[%s5785 + $0x30c] sm:$0xff]
        %v5892 = vld [vmem:[%s5785 + $0x314] sm:$0xff]
        %v5893 = vld [vmem:[%s5785 + $0x31c] sm:$0xff]
        %v5894 = vld [vmem:[%s5785 + $0x324] sm:$0xff]
        %v5895 = vld [vmem:[%s5785 + $0x32c] sm:$0xff]
        %v5896 = vld [vmem:[%s5785 + $0x334] sm:$0xff]
        %v5897 = vld [vmem:[%s5785 + $0x33c] sm:$0xf]
        %s5898 = scalar_lea.vmem %s385, 52 [#allocation9]
        %v5899 = vld [vmem:[%s5898] sm:$0xff]
        %v5900 = vld [vmem:[%s5898 + $0x8] sm:$0x1f]
        %v5903 = vlaneseq
        %v5904 = vshrl.u32 %v5903, 7
        %v5905 = vsub.s32 0, %v5904
        %v5906 = vrot.slane %v5899, %v5905
        %v5907 = vlaneseq
        %v5908 = vshrl.u32 %v5907, 7
        %v5909 = vsub.s32 1, %v5908
        %v5910 = vrot.slane %v5899, %v5909
        %v5911 = vlaneseq
        %v5912 = vshrl.u32 %v5911, 7
        %v5913 = vsub.s32 2, %v5912
        %v5914 = vrot.slane %v5899, %v5913
        %v5915 = vlaneseq
        %v5916 = vshrl.u32 %v5915, 7
        %v5917 = vsub.s32 3, %v5916
        %v5918 = vrot.slane %v5899, %v5917
        %v5919 = vlaneseq
        %v5920 = vshrl.u32 %v5919, 7
        %v5921 = vsub.s32 4, %v5920
        %v5922 = vrot.slane %v5899, %v5921
        %v5923 = vlaneseq
        %v5924 = vshrl.u32 %v5923, 7
        %v5925 = vsub.s32 5, %v5924
        %v5926 = vrot.slane %v5899, %v5925
        %v5927 = vlaneseq
        %v5928 = vshrl.u32 %v5927, 7
        %v5929 = vsub.s32 6, %v5928
        %v5930 = vrot.slane %v5899, %v5929
        %v5931 = vlaneseq
        %v5932 = vshrl.u32 %v5931, 7
        %v5933 = vsub.s32 7, %v5932
        %v5934 = vrot.slane %v5899, %v5933
        %v5935 = vlaneseq
        %v5936 = vshrl.u32 %v5935, 7
        %v5937 = vsub.s32 0, %v5936
        %v5938 = vrot.slane %v5900, %v5937
        %v5939 = vlaneseq
        %v5940 = vshrl.u32 %v5939, 7
        %v5941 = vsub.s32 1, %v5940
        %v5942 = vrot.slane %v5900, %v5941
        %v5943 = vlaneseq
        %v5944 = vshrl.u32 %v5943, 7
        %v5945 = vsub.s32 2, %v5944
        %v5946 = vrot.slane %v5900, %v5945
        %v5947 = vlaneseq
        %v5948 = vshrl.u32 %v5947, 7
        %v5949 = vsub.s32 3, %v5948
        %v5950 = vrot.slane %v5900, %v5949
        %v5951 = vlaneseq
        %v5952 = vshrl.u32 %v5951, 7
        %v5953 = vsub.s32 4, %v5952
        %v5954 = vrot.slane %v5900, %v5953
        %v6080 = vunpack.c.l.b16 %v5786
        %v6081 = vunpack.c.h.b16 %v5786
        %v6082 = vunpack.c.l.b16 %v5787
        %v6083 = vunpack.c.h.b16 %v5787
        %v6084 = vunpack.c.l.b16 %v5788
        %v6085 = vunpack.c.h.b16 %v5788
        %v6086 = vunpack.c.l.b16 %v5789
        %v6087 = vunpack.c.h.b16 %v5789
        %v6088 = vunpack.c.l.b16 %v5790
        %v6089 = vunpack.c.h.b16 %v5790
        %v6090 = vunpack.c.l.b16 %v5791
        %v6091 = vunpack.c.h.b16 %v5791
        %v6092 = vunpack.c.l.b16 %v5792
        %v6093 = vunpack.c.l.b16 %v5793
        %v6094 = vunpack.c.h.b16 %v5793
        %v6095 = vunpack.c.l.b16 %v5794
        %v6096 = vunpack.c.h.b16 %v5794
        %v6097 = vunpack.c.l.b16 %v5795
        %v6098 = vunpack.c.h.b16 %v5795
        %v6099 = vunpack.c.l.b16 %v5796
        %v6100 = vunpack.c.h.b16 %v5796
        %v6101 = vunpack.c.l.b16 %v5797
        %v6102 = vunpack.c.h.b16 %v5797
        %v6103 = vunpack.c.l.b16 %v5798
        %v6104 = vunpack.c.h.b16 %v5798
        %v6105 = vunpack.c.l.b16 %v5799
        %v6106 = vunpack.c.l.b16 %v5800
        %v6107 = vunpack.c.h.b16 %v5800
        %v6108 = vunpack.c.l.b16 %v5801
        %v6109 = vunpack.c.h.b16 %v5801
        %v6110 = vunpack.c.l.b16 %v5802
        %v6111 = vunpack.c.h.b16 %v5802
        %v6112 = vunpack.c.l.b16 %v5803
        %v6113 = vunpack.c.h.b16 %v5803
        %v6114 = vunpack.c.l.b16 %v5804
        %v6115 = vunpack.c.h.b16 %v5804
        %v6116 = vunpack.c.l.b16 %v5805
        %v6117 = vunpack.c.h.b16 %v5805
        %v6118 = vunpack.c.l.b16 %v5806
        %v6119 = vunpack.c.l.b16 %v5807
        %v6120 = vunpack.c.h.b16 %v5807
        %v6121 = vunpack.c.l.b16 %v5808
        %v6122 = vunpack.c.h.b16 %v5808
        %v6123 = vunpack.c.l.b16 %v5809
        %v6124 = vunpack.c.h.b16 %v5809
        %v6125 = vunpack.c.l.b16 %v5810
        %v6126 = vunpack.c.h.b16 %v5810
        %v6127 = vunpack.c.l.b16 %v5811
        %v6128 = vunpack.c.h.b16 %v5811
        %v6129 = vunpack.c.l.b16 %v5812
        %v6130 = vunpack.c.h.b16 %v5812
        %v6131 = vunpack.c.l.b16 %v5813
        %v6132 = vunpack.c.l.b16 %v5814
        %v6133 = vunpack.c.h.b16 %v5814
        %v6134 = vunpack.c.l.b16 %v5815
        %v6135 = vunpack.c.h.b16 %v5815
        %v6136 = vunpack.c.l.b16 %v5816
        %v6137 = vunpack.c.h.b16 %v5816
        %v6138 = vunpack.c.l.b16 %v5817
        %v6139 = vunpack.c.h.b16 %v5817
        %v6140 = vunpack.c.l.b16 %v5818
        %v6141 = vunpack.c.h.b16 %v5818
        %v6142 = vunpack.c.l.b16 %v5819
        %v6143 = vunpack.c.h.b16 %v5819
        %v6144 = vunpack.c.l.b16 %v5820
        %v6145 = vunpack.c.l.b16 %v5821
        %v6146 = vunpack.c.h.b16 %v5821
        %v6147 = vunpack.c.l.b16 %v5822
        %v6148 = vunpack.c.h.b16 %v5822
        %v6149 = vunpack.c.l.b16 %v5823
        %v6150 = vunpack.c.h.b16 %v5823
        %v6151 = vunpack.c.l.b16 %v5824
        %v6152 = vunpack.c.h.b16 %v5824
        %v6153 = vunpack.c.l.b16 %v5825
        %v6154 = vunpack.c.h.b16 %v5825
        %v6155 = vunpack.c.l.b16 %v5826
        %v6156 = vunpack.c.h.b16 %v5826
        %v6157 = vunpack.c.l.b16 %v5827
        %v6158 = vunpack.c.l.b16 %v5828
        %v6159 = vunpack.c.h.b16 %v5828
        %v6160 = vunpack.c.l.b16 %v5829
        %v6161 = vunpack.c.h.b16 %v5829
        %v6162 = vunpack.c.l.b16 %v5830
        %v6163 = vunpack.c.h.b16 %v5830
        %v6164 = vunpack.c.l.b16 %v5831
        %v6165 = vunpack.c.h.b16 %v5831
        %v6166 = vunpack.c.l.b16 %v5832
        %v6167 = vunpack.c.h.b16 %v5832
        %v6168 = vunpack.c.l.b16 %v5833
        %v6169 = vunpack.c.h.b16 %v5833
        %v6170 = vunpack.c.l.b16 %v5834
        %v6171 = vunpack.c.l.b16 %v5835
        %v6172 = vunpack.c.h.b16 %v5835
        %v6173 = vunpack.c.l.b16 %v5836
        %v6174 = vunpack.c.h.b16 %v5836
        %v6175 = vunpack.c.l.b16 %v5837
        %v6176 = vunpack.c.h.b16 %v5837
        %v6177 = vunpack.c.l.b16 %v5838
        %v6178 = vunpack.c.h.b16 %v5838
        %v6179 = vunpack.c.l.b16 %v5839
        %v6180 = vunpack.c.h.b16 %v5839
        %v6181 = vunpack.c.l.b16 %v5840
        %v6182 = vunpack.c.h.b16 %v5840
        %v6183 = vunpack.c.l.b16 %v5841
        %v6184 = vunpack.c.l.b16 %v5842
        %v6185 = vunpack.c.h.b16 %v5842
        %v6186 = vunpack.c.l.b16 %v5843
        %v6187 = vunpack.c.h.b16 %v5843
        %v6188 = vunpack.c.l.b16 %v5844
        %v6189 = vunpack.c.h.b16 %v5844
        %v6190 = vunpack.c.l.b16 %v5845
        %v6191 = vunpack.c.h.b16 %v5845
        %v6192 = vunpack.c.l.b16 %v5846
        %v6193 = vunpack.c.h.b16 %v5846
        %v6194 = vunpack.c.l.b16 %v5847
        %v6195 = vunpack.c.h.b16 %v5847
        %v6196 = vunpack.c.l.b16 %v5848
        %v6197 = vunpack.c.l.b16 %v5849
        %v6198 = vunpack.c.h.b16 %v5849
        %v6199 = vunpack.c.l.b16 %v5850
        %v6200 = vunpack.c.h.b16 %v5850
        %v6201 = vunpack.c.l.b16 %v5851
        %v6202 = vunpack.c.h.b16 %v5851
        %v6203 = vunpack.c.l.b16 %v5852
        %v6204 = vunpack.c.h.b16 %v5852
        %v6205 = vunpack.c.l.b16 %v5853
        %v6206 = vunpack.c.h.b16 %v5853
        %v6207 = vunpack.c.l.b16 %v5854
        %v6208 = vunpack.c.h.b16 %v5854
        %v6209 = vunpack.c.l.b16 %v5855
        %v6210 = vunpack.c.l.b16 %v5856
        %v6211 = vunpack.c.h.b16 %v5856
        %v6212 = vunpack.c.l.b16 %v5857
        %v6213 = vunpack.c.h.b16 %v5857
        %v6214 = vunpack.c.l.b16 %v5858
        %v6215 = vunpack.c.h.b16 %v5858
        %v6216 = vunpack.c.l.b16 %v5859
        %v6217 = vunpack.c.h.b16 %v5859
        %v6218 = vunpack.c.l.b16 %v5860
        %v6219 = vunpack.c.h.b16 %v5860
        %v6220 = vunpack.c.l.b16 %v5861
        %v6221 = vunpack.c.h.b16 %v5861
        %v6222 = vunpack.c.l.b16 %v5862
        %v6223 = vunpack.c.l.b16 %v5863
        %v6224 = vunpack.c.h.b16 %v5863
        %v6225 = vunpack.c.l.b16 %v5864
        %v6226 = vunpack.c.h.b16 %v5864
        %v6227 = vunpack.c.l.b16 %v5865
        %v6228 = vunpack.c.h.b16 %v5865
        %v6229 = vunpack.c.l.b16 %v5866
        %v6230 = vunpack.c.h.b16 %v5866
        %v6231 = vunpack.c.l.b16 %v5867
        %v6232 = vunpack.c.h.b16 %v5867
        %v6233 = vunpack.c.l.b16 %v5868
        %v6234 = vunpack.c.h.b16 %v5868
        %v6235 = vunpack.c.l.b16 %v5869
        %v6236 = vunpack.c.l.b16 %v5870
        %v6237 = vunpack.c.h.b16 %v5870
        %v6238 = vunpack.c.l.b16 %v5871
        %v6239 = vunpack.c.h.b16 %v5871
        %v6240 = vunpack.c.l.b16 %v5872
        %v6241 = vunpack.c.h.b16 %v5872
        %v6242 = vunpack.c.l.b16 %v5873
        %v6243 = vunpack.c.h.b16 %v5873
        %v6244 = vunpack.c.l.b16 %v5874
        %v6245 = vunpack.c.h.b16 %v5874
        %v6246 = vunpack.c.l.b16 %v5875
        %v6247 = vunpack.c.h.b16 %v5875
        %v6248 = vunpack.c.l.b16 %v5876
        %v6249 = vunpack.c.l.b16 %v5877
        %v6250 = vunpack.c.h.b16 %v5877
        %v6251 = vunpack.c.l.b16 %v5878
        %v6252 = vunpack.c.h.b16 %v5878
        %v6253 = vunpack.c.l.b16 %v5879
        %v6254 = vunpack.c.h.b16 %v5879
        %v6255 = vunpack.c.l.b16 %v5880
        %v6256 = vunpack.c.h.b16 %v5880
        %v6257 = vunpack.c.l.b16 %v5881
        %v6258 = vunpack.c.h.b16 %v5881
        %v6259 = vunpack.c.l.b16 %v5882
        %v6260 = vunpack.c.h.b16 %v5882
        %v6261 = vunpack.c.l.b16 %v5883
        %v6262 = vunpack.c.l.b16 %v5884
        %v6263 = vunpack.c.h.b16 %v5884
        %v6264 = vunpack.c.l.b16 %v5885
        %v6265 = vunpack.c.h.b16 %v5885
        %v6266 = vunpack.c.l.b16 %v5886
        %v6267 = vunpack.c.h.b16 %v5886
        %v6268 = vunpack.c.l.b16 %v5887
        %v6269 = vunpack.c.h.b16 %v5887
        %v6270 = vunpack.c.l.b16 %v5888
        %v6271 = vunpack.c.h.b16 %v5888
        %v6272 = vunpack.c.l.b16 %v5889
        %v6273 = vunpack.c.h.b16 %v5889
        %v6274 = vunpack.c.l.b16 %v5890
        %v6275 = vunpack.c.l.b16 %v5891
        %v6276 = vunpack.c.h.b16 %v5891
        %v6277 = vunpack.c.l.b16 %v5892
        %v6278 = vunpack.c.h.b16 %v5892
        %v6279 = vunpack.c.l.b16 %v5893
        %v6280 = vunpack.c.h.b16 %v5893
        %v6281 = vunpack.c.l.b16 %v5894
        %v6282 = vunpack.c.h.b16 %v5894
        %v6283 = vunpack.c.l.b16 %v5895
        %v6284 = vunpack.c.h.b16 %v5895
        %v6285 = vunpack.c.l.b16 %v5896
        %v6286 = vunpack.c.h.b16 %v5896
        %v6287 = vunpack.c.l.b16 %v5897
        %v6288 = vpack.c.b16 %v6093, %v6080
        %v6289 = vpack.c.b16 %v6094, %v6081
        %v6290 = vpack.c.b16 %v6095, %v6082
        %v6291 = vpack.c.b16 %v6096, %v6083
        %v6292 = vpack.c.b16 %v6097, %v6084
        %v6293 = vpack.c.b16 %v6098, %v6085
        %v6294 = vpack.c.b16 %v6099, %v6086
        %v6295 = vpack.c.b16 %v6100, %v6087
        %v6296 = vpack.c.b16 %v6101, %v6088
        %v6297 = vpack.c.b16 %v6102, %v6089
        %v6298 = vpack.c.b16 %v6103, %v6090
        %v6299 = vpack.c.b16 %v6104, %v6091
        %v6300 = vpack.c.b16 %v6105, %v6092
        %v6301 = vpack.c.b16 %v6119, %v6106
        %v6302 = vpack.c.b16 %v6120, %v6107
        %v6303 = vpack.c.b16 %v6121, %v6108
        %v6304 = vpack.c.b16 %v6122, %v6109
        %v6305 = vpack.c.b16 %v6123, %v6110
        %v6306 = vpack.c.b16 %v6124, %v6111
        %v6307 = vpack.c.b16 %v6125, %v6112
        %v6308 = vpack.c.b16 %v6126, %v6113
        %v6309 = vpack.c.b16 %v6127, %v6114
        %v6310 = vpack.c.b16 %v6128, %v6115
        %v6311 = vpack.c.b16 %v6129, %v6116
        %v6312 = vpack.c.b16 %v6130, %v6117
        %v6313 = vpack.c.b16 %v6131, %v6118
        %v6314 = vpack.c.b16 %v6145, %v6132
        %v6315 = vpack.c.b16 %v6146, %v6133
        %v6316 = vpack.c.b16 %v6147, %v6134
        %v6317 = vpack.c.b16 %v6148, %v6135
        %v6318 = vpack.c.b16 %v6149, %v6136
        %v6319 = vpack.c.b16 %v6150, %v6137
        %v6320 = vpack.c.b16 %v6151, %v6138
        %v6321 = vpack.c.b16 %v6152, %v6139
        %v6322 = vpack.c.b16 %v6153, %v6140
        %v6323 = vpack.c.b16 %v6154, %v6141
        %v6324 = vpack.c.b16 %v6155, %v6142
        %v6325 = vpack.c.b16 %v6156, %v6143
        %v6326 = vpack.c.b16 %v6157, %v6144
        %v6327 = vpack.c.b16 %v6171, %v6158
        %v6328 = vpack.c.b16 %v6172, %v6159
        %v6329 = vpack.c.b16 %v6173, %v6160
        %v6330 = vpack.c.b16 %v6174, %v6161
        %v6331 = vpack.c.b16 %v6175, %v6162
        %v6332 = vpack.c.b16 %v6176, %v6163
        %v6333 = vpack.c.b16 %v6177, %v6164
        %v6334 = vpack.c.b16 %v6178, %v6165
        %v6335 = vpack.c.b16 %v6179, %v6166
        %v6336 = vpack.c.b16 %v6180, %v6167
        %v6337 = vpack.c.b16 %v6181, %v6168
        %v6338 = vpack.c.b16 %v6182, %v6169
        %v6339 = vpack.c.b16 %v6183, %v6170
        %v6340 = vpack.c.b16 %v6197, %v6184
        %v6341 = vpack.c.b16 %v6198, %v6185
        %v6342 = vpack.c.b16 %v6199, %v6186
        %v6343 = vpack.c.b16 %v6200, %v6187
        %v6344 = vpack.c.b16 %v6201, %v6188
        %v6345 = vpack.c.b16 %v6202, %v6189
        %v6346 = vpack.c.b16 %v6203, %v6190
        %v6347 = vpack.c.b16 %v6204, %v6191
        %v6348 = vpack.c.b16 %v6205, %v6192
        %v6349 = vpack.c.b16 %v6206, %v6193
        %v6350 = vpack.c.b16 %v6207, %v6194
        %v6351 = vpack.c.b16 %v6208, %v6195
        %v6352 = vpack.c.b16 %v6209, %v6196
        %v6353 = vpack.c.b16 %v6223, %v6210
        %v6354 = vpack.c.b16 %v6224, %v6211
        %v6355 = vpack.c.b16 %v6225, %v6212
        %v6356 = vpack.c.b16 %v6226, %v6213
        %v6357 = vpack.c.b16 %v6227, %v6214
        %v6358 = vpack.c.b16 %v6228, %v6215
        %v6359 = vpack.c.b16 %v6229, %v6216
        %v6360 = vpack.c.b16 %v6230, %v6217
        %v6361 = vpack.c.b16 %v6231, %v6218
        %v6362 = vpack.c.b16 %v6232, %v6219
        %v6363 = vpack.c.b16 %v6233, %v6220
        %v6364 = vpack.c.b16 %v6234, %v6221
        %v6365 = vpack.c.b16 %v6235, %v6222
        %v6366 = vpack.c.b16 %v6249, %v6236
        %v6367 = vpack.c.b16 %v6250, %v6237
        %v6368 = vpack.c.b16 %v6251, %v6238
        %v6369 = vpack.c.b16 %v6252, %v6239
        %v6370 = vpack.c.b16 %v6253, %v6240
        %v6371 = vpack.c.b16 %v6254, %v6241
        %v6372 = vpack.c.b16 %v6255, %v6242
        %v6373 = vpack.c.b16 %v6256, %v6243
        %v6374 = vpack.c.b16 %v6257, %v6244
        %v6375 = vpack.c.b16 %v6258, %v6245
        %v6376 = vpack.c.b16 %v6259, %v6246
        %v6377 = vpack.c.b16 %v6260, %v6247
        %v6378 = vpack.c.b16 %v6261, %v6248
        %v6379 = vpack.c.b16 %v6275, %v6262
        %v6380 = vpack.c.b16 %v6276, %v6263
        %v6381 = vpack.c.b16 %v6277, %v6264
        %v6382 = vpack.c.b16 %v6278, %v6265
        %v6383 = vpack.c.b16 %v6279, %v6266
        %v6384 = vpack.c.b16 %v6280, %v6267
        %v6385 = vpack.c.b16 %v6281, %v6268
        %v6386 = vpack.c.b16 %v6282, %v6269
        %v6387 = vpack.c.b16 %v6283, %v6270
        %v6388 = vpack.c.b16 %v6284, %v6271
        %v6389 = vpack.c.b16 %v6285, %v6272
        %v6390 = vpack.c.b16 %v6286, %v6273
        %v6391 = vpack.c.b16 %v6287, %v6274
        %6496 = vmatprep.subr.bf16.mxu0 %v6380
        %6497 = vmatpush1.bf16.msra.mxu0 %v6379
        %6498 = vmatprep.subr.bf16.mxu0 %v6367
        %6499 = vmatpush1.bf16.msra.mxu0 %v6366
        %6500 = vmatprep.subr.bf16.mxu0 %v6354
        %6501 = vmatpush1.bf16.msra.mxu0 %v6353
        %6502 = vmatprep.subr.bf16.mxu0 %v6341
        %6503 = vmatpush1.bf16.msra.mxu0 %v6340
        %6504 = vmatprep.subr.bf16.mxu0 %v6328
        %6505 = vmatpush1.bf16.msra.mxu0 %v6327
        %6506 = vmatprep.subr.bf16.mxu0 %v6315
        %6507 = vmatpush1.bf16.msra.mxu0 %v6314
        %6508 = vmatprep.subr.bf16.mxu0 %v6302
        %6509 = vmatpush1.bf16.msra.mxu0 %v6301
        %6510 = vmatprep.subr.bf16.mxu0 %v6289
        %6511 = vmatpush1.bf16.msra.mxu0 %v6288
        %6512 = vmatprep.subr.bf16.mxu0 0
        %6513 = vmatpush2.bf16.msra.mxu0 0
        %6514 = vmatprep.subr.bf16.mxu0 0
        %6515 = vmatpush2.bf16.msra.mxu0 0
        %6516 = vmatprep.subr.bf16.mxu0 0
        %6517 = vmatpush2.bf16.msra.mxu0 0
        %6518 = vmatprep.subr.bf16.mxu0 0
        %6519 = vmatpush2.bf16.msra.mxu0 0
        %6520 = vmatprep.subr.bf16.mxu0 0
        %6521 = vmatpush2.bf16.msra.mxu0 0
        %6522 = vmatprep.subr.bf16.mxu0 0
        %6523 = vmatpush2.bf16.msra.mxu0 0
        %6524 = vmatprep.subr.bf16.mxu0 0
        %6525 = vmatpush2.bf16.msra.mxu0 0
        %6526 = vmatprep.subr.bf16.mxu0 0
        %6527 = vmatpush2.bf16.msra.mxu0 0
        %6528 = vmatprep.mubr.bf16.mxu0 0
        %6529 = vmatmul.mubr.bf16.gmra.mxu0 %v5784
        %v6530 = vpop.f32.mrf.mxu0
        %v6531 = vadd.f32 %v5906, %v6530
        %v6532 = vpop.f32.mrf.mxu0
        %v6533 = vadd.f32 %v5910, %v6532
        %v6534 = vpop.f32.mrf.mxu0
        %v6535 = vpop.f32.mrf.mxu0
        %6536 = vdwg.mxu0
        %6537 = vmatprep.subr.bf16.mxu0 %v6382
        %6538 = vmatpush1.bf16.msra.mxu0 %v6381
        %6539 = vmatprep.subr.bf16.mxu0 %v6369
        %6540 = vmatpush1.bf16.msra.mxu0 %v6368
        %6541 = vmatprep.subr.bf16.mxu0 %v6356
        %6542 = vmatpush1.bf16.msra.mxu0 %v6355
        %6543 = vmatprep.subr.bf16.mxu0 %v6343
        %6544 = vmatpush1.bf16.msra.mxu0 %v6342
        %6545 = vmatprep.subr.bf16.mxu0 %v6330
        %6546 = vmatpush1.bf16.msra.mxu0 %v6329
        %6547 = vmatprep.subr.bf16.mxu0 %v6317
        %6548 = vmatpush1.bf16.msra.mxu0 %v6316
        %6549 = vmatprep.subr.bf16.mxu0 %v6304
        %6550 = vmatpush1.bf16.msra.mxu0 %v6303
        %6551 = vmatprep.subr.bf16.mxu0 %v6291
        %6552 = vmatpush1.bf16.msra.mxu0 %v6290
        %6553 = vmatprep.subr.bf16.mxu0 0
        %6554 = vmatpush2.bf16.msra.mxu0 0
        %6555 = vmatprep.subr.bf16.mxu0 0
        %6556 = vmatpush2.bf16.msra.mxu0 0
        %6557 = vmatprep.subr.bf16.mxu0 0
        %6558 = vmatpush2.bf16.msra.mxu0 0
        %6559 = vmatprep.subr.bf16.mxu0 0
        %6560 = vmatpush2.bf16.msra.mxu0 0
        %6561 = vmatprep.subr.bf16.mxu0 0
        %6562 = vmatpush2.bf16.msra.mxu0 0
        %6563 = vmatprep.subr.bf16.mxu0 0
        %6564 = vmatpush2.bf16.msra.mxu0 0
        %6565 = vmatprep.subr.bf16.mxu0 0
        %6566 = vmatpush2.bf16.msra.mxu0 0
        %6567 = vmatprep.subr.bf16.mxu0 0
        %6568 = vmatpush2.bf16.msra.mxu0 0
        %6569 = vmatprep.mubr.bf16.mxu0 0
        %6570 = vmatmul.mubr.bf16.gmra.mxu0 %v5784
        %v6571 = vpop.f32.mrf.mxu0
        %v6572 = vadd.f32 %v5914, %v6571
        %v6573 = vpop.f32.mrf.mxu0
        %v6574 = vadd.f32 %v5918, %v6573
        %v6575 = vpop.f32.mrf.mxu0
        %v6576 = vpop.f32.mrf.mxu0
        %6577 = vdwg.mxu0
        %6578 = vmatprep.subr.bf16.mxu0 %v6384
        %6579 = vmatpush1.bf16.msra.mxu0 %v6383
        %6580 = vmatprep.subr.bf16.mxu0 %v6371
        %6581 = vmatpush1.bf16.msra.mxu0 %v6370
        %6582 = vmatprep.subr.bf16.mxu0 %v6358
        %6583 = vmatpush1.bf16.msra.mxu0 %v6357
        %6584 = vmatprep.subr.bf16.mxu0 %v6345
        %6585 = vmatpush1.bf16.msra.mxu0 %v6344
        %6586 = vmatprep.subr.bf16.mxu0 %v6332
        %6587 = vmatpush1.bf16.msra.mxu0 %v6331
        %6588 = vmatprep.subr.bf16.mxu0 %v6319
        %6589 = vmatpush1.bf16.msra.mxu0 %v6318
        %6590 = vmatprep.subr.bf16.mxu0 %v6306
        %6591 = vmatpush1.bf16.msra.mxu0 %v6305
        %6592 = vmatprep.subr.bf16.mxu0 %v6293
        %6593 = vmatpush1.bf16.msra.mxu0 %v6292
        %6594 = vmatprep.subr.bf16.mxu0 0
        %6595 = vmatpush2.bf16.msra.mxu0 0
        %6596 = vmatprep.subr.bf16.mxu0 0
        %6597 = vmatpush2.bf16.msra.mxu0 0
        %6598 = vmatprep.subr.bf16.mxu0 0
        %6599 = vmatpush2.bf16.msra.mxu0 0
        %6600 = vmatprep.subr.bf16.mxu0 0
        %6601 = vmatpush2.bf16.msra.mxu0 0
        %6602 = vmatprep.subr.bf16.mxu0 0
        %6603 = vmatpush2.bf16.msra.mxu0 0
        %6604 = vmatprep.subr.bf16.mxu0 0
        %6605 = vmatpush2.bf16.msra.mxu0 0
        %6606 = vmatprep.subr.bf16.mxu0 0
        %6607 = vmatpush2.bf16.msra.mxu0 0
        %6608 = vmatprep.subr.bf16.mxu0 0
        %6609 = vmatpush2.bf16.msra.mxu0 0
        %6610 = vmatprep.mubr.bf16.mxu0 0
        %6611 = vmatmul.mubr.bf16.gmra.mxu0 %v5784
        %v6612 = vpop.f32.mrf.mxu0
        %v6613 = vadd.f32 %v5922, %v6612
        %v6614 = vpop.f32.mrf.mxu0
        %v6615 = vadd.f32 %v5926, %v6614
        %v6616 = vpop.f32.mrf.mxu0
        %v6617 = vpop.f32.mrf.mxu0
        %6618 = vdwg.mxu0
        %6619 = vmatprep.subr.bf16.mxu0 %v6386
        %6620 = vmatpush1.bf16.msra.mxu0 %v6385
        %6621 = vmatprep.subr.bf16.mxu0 %v6373
        %6622 = vmatpush1.bf16.msra.mxu0 %v6372
        %6623 = vmatprep.subr.bf16.mxu0 %v6360
        %6624 = vmatpush1.bf16.msra.mxu0 %v6359
        %6625 = vmatprep.subr.bf16.mxu0 %v6347
        %6626 = vmatpush1.bf16.msra.mxu0 %v6346
        %6627 = vmatprep.subr.bf16.mxu0 %v6334
        %6628 = vmatpush1.bf16.msra.mxu0 %v6333
        %6629 = vmatprep.subr.bf16.mxu0 %v6321
        %6630 = vmatpush1.bf16.msra.mxu0 %v6320
        %6631 = vmatprep.subr.bf16.mxu0 %v6308
        %6632 = vmatpush1.bf16.msra.mxu0 %v6307
        %6633 = vmatprep.subr.bf16.mxu0 %v6295
        %6634 = vmatpush1.bf16.msra.mxu0 %v6294
        %6635 = vmatprep.subr.bf16.mxu0 0
        %6636 = vmatpush2.bf16.msra.mxu0 0
        %6637 = vmatprep.subr.bf16.mxu0 0
        %6638 = vmatpush2.bf16.msra.mxu0 0
        %6639 = vmatprep.subr.bf16.mxu0 0
        %6640 = vmatpush2.bf16.msra.mxu0 0
        %6641 = vmatprep.subr.bf16.mxu0 0
        %6642 = vmatpush2.bf16.msra.mxu0 0
        %6643 = vmatprep.subr.bf16.mxu0 0
        %6644 = vmatpush2.bf16.msra.mxu0 0
        %6645 = vmatprep.subr.bf16.mxu0 0
        %6646 = vmatpush2.bf16.msra.mxu0 0
        %6647 = vmatprep.subr.bf16.mxu0 0
        %6648 = vmatpush2.bf16.msra.mxu0 0
        %6649 = vmatprep.subr.bf16.mxu0 0
        %6650 = vmatpush2.bf16.msra.mxu0 0
        %6651 = vmatprep.mubr.bf16.mxu0 0
        %6652 = vmatmul.mubr.bf16.gmra.mxu0 %v5784
        %v6653 = vpop.f32.mrf.mxu0
        %v6654 = vadd.f32 %v5930, %v6653
        %v6655 = vpop.f32.mrf.mxu0
        %v6656 = vadd.f32 %v5934, %v6655
        %v6657 = vpop.f32.mrf.mxu0
        %v6658 = vpop.f32.mrf.mxu0
        %6659 = vdwg.mxu0
        %6660 = vmatprep.subr.bf16.mxu0 %v6388
        %6661 = vmatpush1.bf16.msra.mxu0 %v6387
        %6662 = vmatprep.subr.bf16.mxu0 %v6375
        %6663 = vmatpush1.bf16.msra.mxu0 %v6374
        %6664 = vmatprep.subr.bf16.mxu0 %v6362
        %6665 = vmatpush1.bf16.msra.mxu0 %v6361
        %6666 = vmatprep.subr.bf16.mxu0 %v6349
        %6667 = vmatpush1.bf16.msra.mxu0 %v6348
        %6668 = vmatprep.subr.bf16.mxu0 %v6336
        %6669 = vmatpush1.bf16.msra.mxu0 %v6335
        %6670 = vmatprep.subr.bf16.mxu0 %v6323
        %6671 = vmatpush1.bf16.msra.mxu0 %v6322
        %6672 = vmatprep.subr.bf16.mxu0 %v6310
        %6673 = vmatpush1.bf16.msra.mxu0 %v6309
        %6674 = vmatprep.subr.bf16.mxu0 %v6297
        %6675 = vmatpush1.bf16.msra.mxu0 %v6296
        %6676 = vmatprep.subr.bf16.mxu0 0
        %6677 = vmatpush2.bf16.msra.mxu0 0
        %6678 = vmatprep.subr.bf16.mxu0 0
        %6679 = vmatpush2.bf16.msra.mxu0 0
        %6680 = vmatprep.subr.bf16.mxu0 0
        %6681 = vmatpush2.bf16.msra.mxu0 0
        %6682 = vmatprep.subr.bf16.mxu0 0
        %6683 = vmatpush2.bf16.msra.mxu0 0
        %6684 = vmatprep.subr.bf16.mxu0 0
        %6685 = vmatpush2.bf16.msra.mxu0 0
        %6686 = vmatprep.subr.bf16.mxu0 0
        %6687 = vmatpush2.bf16.msra.mxu0 0
        %6688 = vmatprep.subr.bf16.mxu0 0
        %6689 = vmatpush2.bf16.msra.mxu0 0
        %6690 = vmatprep.subr.bf16.mxu0 0
        %6691 = vmatpush2.bf16.msra.mxu0 0
        %6692 = vmatprep.mubr.bf16.mxu0 0
        %6693 = vmatmul.mubr.bf16.gmra.mxu0 %v5784
        %v6694 = vpop.f32.mrf.mxu0
        %v6695 = vadd.f32 %v5938, %v6694
        %v6696 = vpop.f32.mrf.mxu0
        %v6697 = vadd.f32 %v5942, %v6696
        %v6698 = vpop.f32.mrf.mxu0
        %v6699 = vpop.f32.mrf.mxu0
        %6700 = vdwg.mxu0
        %6701 = vmatprep.subr.bf16.mxu0 %v6390
        %6702 = vmatpush1.bf16.msra.mxu0 %v6389
        %6703 = vmatprep.subr.bf16.mxu0 %v6377
        %6704 = vmatpush1.bf16.msra.mxu0 %v6376
        %6705 = vmatprep.subr.bf16.mxu0 %v6364
        %6706 = vmatpush1.bf16.msra.mxu0 %v6363
        %6707 = vmatprep.subr.bf16.mxu0 %v6351
        %6708 = vmatpush1.bf16.msra.mxu0 %v6350
        %6709 = vmatprep.subr.bf16.mxu0 %v6338
        %6710 = vmatpush1.bf16.msra.mxu0 %v6337
        %6711 = vmatprep.subr.bf16.mxu0 %v6325
        %6712 = vmatpush1.bf16.msra.mxu0 %v6324
        %6713 = vmatprep.subr.bf16.mxu0 %v6312
        %6714 = vmatpush1.bf16.msra.mxu0 %v6311
        %6715 = vmatprep.subr.bf16.mxu0 %v6299
        %6716 = vmatpush1.bf16.msra.mxu0 %v6298
        %6717 = vmatprep.subr.bf16.mxu0 0
        %6718 = vmatpush2.bf16.msra.mxu0 0
        %6719 = vmatprep.subr.bf16.mxu0 0
        %6720 = vmatpush2.bf16.msra.mxu0 0
        %6721 = vmatprep.subr.bf16.mxu0 0
        %6722 = vmatpush2.bf16.msra.mxu0 0
        %6723 = vmatprep.subr.bf16.mxu0 0
        %6724 = vmatpush2.bf16.msra.mxu0 0
        %6725 = vmatprep.subr.bf16.mxu0 0
        %6726 = vmatpush2.bf16.msra.mxu0 0
        %6727 = vmatprep.subr.bf16.mxu0 0
        %6728 = vmatpush2.bf16.msra.mxu0 0
        %6729 = vmatprep.subr.bf16.mxu0 0
        %6730 = vmatpush2.bf16.msra.mxu0 0
        %6731 = vmatprep.subr.bf16.mxu0 0
        %6732 = vmatpush2.bf16.msra.mxu0 0
        %6733 = vmatprep.mubr.bf16.mxu0 0
        %6734 = vmatmul.mubr.bf16.gmra.mxu0 %v5784
        %v6735 = vpop.f32.mrf.mxu0
        %v6736 = vadd.f32 %v5946, %v6735
        %v6737 = vpop.f32.mrf.mxu0
        %v6738 = vadd.f32 %v5950, %v6737
        %v6739 = vpop.f32.mrf.mxu0
        %v6740 = vpop.f32.mrf.mxu0
        %6741 = vdwg.mxu0
        %6742 = vmatprep.subr.bf16.mxu0 0
        %6743 = vmatpush1.bf16.msra.mxu0 %v6391
        %6744 = vmatprep.subr.bf16.mxu0 0
        %6745 = vmatpush1.bf16.msra.mxu0 %v6378
        %6746 = vmatprep.subr.bf16.mxu0 0
        %6747 = vmatpush1.bf16.msra.mxu0 %v6365
        %6748 = vmatprep.subr.bf16.mxu0 0
        %6749 = vmatpush1.bf16.msra.mxu0 %v6352
        %6750 = vmatprep.subr.bf16.mxu0 0
        %6751 = vmatpush1.bf16.msra.mxu0 %v6339
        %6752 = vmatprep.subr.bf16.mxu0 0
        %6753 = vmatpush1.bf16.msra.mxu0 %v6326
        %6754 = vmatprep.subr.bf16.mxu0 0
        %6755 = vmatpush1.bf16.msra.mxu0 %v6313
        %6756 = vmatprep.subr.bf16.mxu0 0
        %6757 = vmatpush1.bf16.msra.mxu0 %v6300
        %6758 = vmatprep.subr.bf16.mxu0 0
        %6759 = vmatpush2.bf16.msra.mxu0 0
        %6760 = vmatprep.subr.bf16.mxu0 0
        %6761 = vmatpush2.bf16.msra.mxu0 0
        %6762 = vmatprep.subr.bf16.mxu0 0
        %6763 = vmatpush2.bf16.msra.mxu0 0
        %6764 = vmatprep.subr.bf16.mxu0 0
        %6765 = vmatpush2.bf16.msra.mxu0 0
        %6766 = vmatprep.subr.bf16.mxu0 0
        %6767 = vmatpush2.bf16.msra.mxu0 0
        %6768 = vmatprep.subr.bf16.mxu0 0
        %6769 = vmatpush2.bf16.msra.mxu0 0
        %6770 = vmatprep.subr.bf16.mxu0 0
        %6771 = vmatpush2.bf16.msra.mxu0 0
        %6772 = vmatprep.subr.bf16.mxu0 0
        %6773 = vmatpush2.bf16.msra.mxu0 0
        %6774 = vmatprep.mubr.bf16.mxu0 0
        %6775 = vmatmul.mubr.bf16.gmra.mxu0 %v5784
        %v6776 = vpop.f32.mrf.mxu0
        %v6777 = vadd.f32 %v5954, %v6776
        %v6778 = vpop.f32.mrf.mxu0
        %v6779 = vpop.f32.mrf.mxu0
        %v6780 = vpop.f32.mrf.mxu0
        %6781 = vdwg.mxu0
        %v6795 = vcombine.low %v6531, %v6533
        %v6796 = vcombine.low %v6572, %v6574
        %v6798 = vunpack.c.l.s4 1983009808
        %v6799 = vunpack.c.0.s8 %v6798
        %v6800 = vlaneseq
        %v6801 = vshrl.u32 %v6800, 7
        %v6802 = vsub.s32 %v6799, %v6801
        %v6803 = vrot.slane %v6795, %v6802
        %v6805 = vunpack.c.l.s4 1983009808
        %v6806 = vunpack.c.0.s8 %v6805
        %v6807 = vlaneseq
        %v6808 = vshrl.u32 %v6807, 7
        %v6809 = vsub.s32 %v6806, %v6808
        %v6810 = vrot.slane %v6796, %v6809
        %v6811 = vcombine.low %v6803, %v6810
        %v6812 = vcombine.low %v6613, %v6615
        %v6813 = vcombine.low %v6654, %v6656
        %v6815 = vunpack.c.l.s4 1983009808
        %v6816 = vunpack.c.0.s8 %v6815
        %v6817 = vlaneseq
        %v6818 = vshrl.u32 %v6817, 7
        %v6819 = vsub.s32 %v6816, %v6818
        %v6820 = vrot.slane %v6812, %v6819
        %v6822 = vunpack.c.l.s4 1983009808
        %v6823 = vunpack.c.0.s8 %v6822
        %v6824 = vlaneseq
        %v6825 = vshrl.u32 %v6824, 7
        %v6826 = vsub.s32 %v6823, %v6825
        %v6827 = vrot.slane %v6813, %v6826
        %v6828 = vcombine.low %v6820, %v6827
        %v6829 = vcombine.low %v6695, %v6697
        %v6830 = vcombine.low %v6736, %v6738
        %v6832 = vunpack.c.l.s4 1983009808
        %v6833 = vunpack.c.0.s8 %v6832
        %v6834 = vlaneseq
        %v6835 = vshrl.u32 %v6834, 7
        %v6836 = vsub.s32 %v6833, %v6835
        %v6837 = vrot.slane %v6829, %v6836
        %v6839 = vunpack.c.l.s4 1983009808
        %v6840 = vunpack.c.0.s8 %v6839
        %v6841 = vlaneseq
        %v6842 = vshrl.u32 %v6841, 7
        %v6843 = vsub.s32 %v6840, %v6842
        %v6844 = vrot.slane %v6830, %v6843
        %v6845 = vcombine.low %v6837, %v6844
        %v6846 = vcombine.low %v6777, %v457
        %v6848 = vunpack.c.l.s4 1983009808
        %v6849 = vunpack.c.0.s8 %v6848
        %v6850 = vlaneseq
        %v6851 = vshrl.u32 %v6850, 7
        %v6852 = vsub.s32 %v6849, %v6851
        %v6853 = vrot.slane %v6846, %v6852
        %v6854 = vcombine.low %v6853, %v1741
        %s6859 = scalar_lea.vmem %s449, 144
        %6860 = vst [vmem:[%s6859] sm:$0xff] %v6811
        %6861 = vst [vmem:[%s6859 + $0x8] sm:$0xff] %v6828
        %6862 = vst [vmem:[%s6859 + $0x10] sm:$0xff] %v6845
        %6863 = vst [vmem:[%s6859 + $0x18] sm:$0xff] %v6854
        %6864 = vst [vmem:[%s6859 + $0x20] sm:$0xf] %v1750
        %s6865 = scalar_lea.vmem %s349, 20 [#allocation2]
        %v6866 = vld [vmem:[%s6865] sm:$0xf]
        %v6869 = vunpack.c.l.s4 1983009808
        %v6870 = vunpack.c.0.s8 %v6869
        %v6871 = vlaneseq
        %v6872 = vshrl.u32 %v6871, 7
        %v6873 = vsub.s32 %v6870, %v6872
        %v6874 = vrot.slane %v6866, %v6873
        %v6875 = vcombine.high %v6874, %v6874
        %v6878 = vpack.c.bf16 %v6874, %v6874
        %v6879 = vpack.c.bf16 %v6875, %v6875
        %s6880 = scalar_lea.vmem %s358, 640 [#allocation4]
        %v6881 = vld [vmem:[%s6880] sm:$0xf]
        %v6882 = vld [vmem:[%s6880 + $0x4] sm:$0xf]
        %v6883 = vld [vmem:[%s6880 + $0x8] sm:$0xf]
        %v6884 = vld [vmem:[%s6880 + $0xc] sm:$0xf]
        %v6885 = vld [vmem:[%s6880 + $0x10] sm:$0xf]
        %v6886 = vld [vmem:[%s6880 + $0x14] sm:$0xf]
        %v6887 = vld [vmem:[%s6880 + $0x18] sm:$0xf]
        %v6888 = vld [vmem:[%s6880 + $0x1c] sm:$0xf]
        %v6889 = vld [vmem:[%s6880 + $0x20] sm:$0xf]
        %v6890 = vld [vmem:[%s6880 + $0x24] sm:$0xf]
        %v6891 = vld [vmem:[%s6880 + $0x28] sm:$0xf]
        %v6892 = vld [vmem:[%s6880 + $0x2c] sm:$0xf]
        %v6893 = vld [vmem:[%s6880 + $0x30] sm:$0xf]
        %v6894 = vld [vmem:[%s6880 + $0x34] sm:$0xf]
        %v6895 = vld [vmem:[%s6880 + $0x38] sm:$0xf]
        %v6896 = vld [vmem:[%s6880 + $0x3c] sm:$0xf]
        %v6897 = vld [vmem:[%s6880 + $0x40] sm:$0xf]
        %v6898 = vld [vmem:[%s6880 + $0x44] sm:$0xf]
        %v6899 = vld [vmem:[%s6880 + $0x48] sm:$0xf]
        %v6900 = vld [vmem:[%s6880 + $0x4c] sm:$0xf]
        %v6901 = vld [vmem:[%s6880 + $0x50] sm:$0xf]
        %v6902 = vld [vmem:[%s6880 + $0x54] sm:$0xf]
        %v6903 = vld [vmem:[%s6880 + $0x58] sm:$0xf]
        %v6904 = vld [vmem:[%s6880 + $0x5c] sm:$0xf]
        %v6905 = vld [vmem:[%s6880 + $0x60] sm:$0xf]
        %v6906 = vld [vmem:[%s6880 + $0x64] sm:$0xf]
        %v6907 = vld [vmem:[%s6880 + $0x68] sm:$0xf]
        %v6908 = vld [vmem:[%s6880 + $0x6c] sm:$0xf]
        %v6909 = vld [vmem:[%s6880 + $0x70] sm:$0xf]
        %v6910 = vld [vmem:[%s6880 + $0x74] sm:$0xf]
        %v6911 = vld [vmem:[%s6880 + $0x78] sm:$0xf]
        %v6912 = vld [vmem:[%s6880 + $0x7c] sm:$0xf]
        %s6913 = scalar_lea.vmem %s367, 5 [#allocation6]
        %v6914 = vld [vmem:[%s6913] sm:$0x1]
        %v6916 = vlaneseq
        %v6917 = vshrl.u32 %v6916, 7
        %v6918 = vsub.s32 0, %v6917
        %v6919 = vrot.slane %v6914, %v6918
        %v6953 = vunpack.c.l.b16 %v6881
        %v6954 = vunpack.c.l.b16 %v6882
        %v6955 = vunpack.c.l.b16 %v6883
        %v6956 = vunpack.c.l.b16 %v6884
        %v6957 = vunpack.c.l.b16 %v6885
        %v6958 = vunpack.c.l.b16 %v6886
        %v6959 = vunpack.c.l.b16 %v6887
        %v6960 = vunpack.c.l.b16 %v6888
        %v6961 = vunpack.c.l.b16 %v6889
        %v6962 = vunpack.c.l.b16 %v6890
        %v6963 = vunpack.c.l.b16 %v6891
        %v6964 = vunpack.c.l.b16 %v6892
        %v6965 = vunpack.c.l.b16 %v6893
        %v6966 = vunpack.c.l.b16 %v6894
        %v6967 = vunpack.c.l.b16 %v6895
        %v6968 = vunpack.c.l.b16 %v6896
        %v6969 = vunpack.c.l.b16 %v6897
        %v6970 = vunpack.c.l.b16 %v6898
        %v6971 = vunpack.c.l.b16 %v6899
        %v6972 = vunpack.c.l.b16 %v6900
        %v6973 = vunpack.c.l.b16 %v6901
        %v6974 = vunpack.c.l.b16 %v6902
        %v6975 = vunpack.c.l.b16 %v6903
        %v6976 = vunpack.c.l.b16 %v6904
        %v6977 = vunpack.c.l.b16 %v6905
        %v6978 = vunpack.c.l.b16 %v6906
        %v6979 = vunpack.c.l.b16 %v6907
        %v6980 = vunpack.c.l.b16 %v6908
        %v6981 = vunpack.c.l.b16 %v6909
        %v6982 = vunpack.c.l.b16 %v6910
        %v6983 = vunpack.c.l.b16 %v6911
        %v6984 = vunpack.c.l.b16 %v6912
        %v6985 = vpack.c.b16 %v6954, %v6953
        %v6986 = vpack.c.b16 %v6956, %v6955
        %v6987 = vpack.c.b16 %v6958, %v6957
        %v6988 = vpack.c.b16 %v6960, %v6959
        %v6989 = vpack.c.b16 %v6962, %v6961
        %v6990 = vpack.c.b16 %v6964, %v6963
        %v6991 = vpack.c.b16 %v6966, %v6965
        %v6992 = vpack.c.b16 %v6968, %v6967
        %v6993 = vpack.c.b16 %v6970, %v6969
        %v6994 = vpack.c.b16 %v6972, %v6971
        %v6995 = vpack.c.b16 %v6974, %v6973
        %v6996 = vpack.c.b16 %v6976, %v6975
        %v6997 = vpack.c.b16 %v6978, %v6977
        %v6998 = vpack.c.b16 %v6980, %v6979
        %v6999 = vpack.c.b16 %v6982, %v6981
        %v7000 = vpack.c.b16 %v6984, %v6983
        %7017 = vmatprep.subr.bf16.mxu0 0
        %7018 = vmatpush1.bf16.msra.mxu0 %v6992
        %7019 = vmatprep.subr.bf16.mxu0 0
        %7020 = vmatpush1.bf16.msra.mxu0 %v6991
        %7021 = vmatprep.subr.bf16.mxu0 0
        %7022 = vmatpush1.bf16.msra.mxu0 %v6990
        %7023 = vmatprep.subr.bf16.mxu0 0
        %7024 = vmatpush1.bf16.msra.mxu0 %v6989
        %7025 = vmatprep.subr.bf16.mxu0 0
        %7026 = vmatpush1.bf16.msra.mxu0 %v6988
        %7027 = vmatprep.subr.bf16.mxu0 0
        %7028 = vmatpush1.bf16.msra.mxu0 %v6987
        %7029 = vmatprep.subr.bf16.mxu0 0
        %7030 = vmatpush1.bf16.msra.mxu0 %v6986
        %7031 = vmatprep.subr.bf16.mxu0 0
        %7032 = vmatpush1.bf16.msra.mxu0 %v6985
        %7033 = vmatprep.subr.bf16.mxu0 0
        %7034 = vmatpush2.bf16.msra.mxu0 %v7000
        %7035 = vmatprep.subr.bf16.mxu0 0
        %7036 = vmatpush2.bf16.msra.mxu0 %v6999
        %7037 = vmatprep.subr.bf16.mxu0 0
        %7038 = vmatpush2.bf16.msra.mxu0 %v6998
        %7039 = vmatprep.subr.bf16.mxu0 0
        %7040 = vmatpush2.bf16.msra.mxu0 %v6997
        %7041 = vmatprep.subr.bf16.mxu0 0
        %7042 = vmatpush2.bf16.msra.mxu0 %v6996
        %7043 = vmatprep.subr.bf16.mxu0 0
        %7044 = vmatpush2.bf16.msra.mxu0 %v6995
        %7045 = vmatprep.subr.bf16.mxu0 0
        %7046 = vmatpush2.bf16.msra.mxu0 %v6994
        %7047 = vmatprep.subr.bf16.mxu0 0
        %7048 = vmatpush2.bf16.msra.mxu0 %v6993
        %7049 = vmatprep.mubr.bf16.mxu0 %v6879
        %7050 = vmatmul.mubr.bf16.gmra.mxu0 %v6878
        %v7051 = vpop.f32.mrf.mxu0
        %v7052 = vadd.f32 %v6919, %v7051
        %v7053 = vpop.f32.mrf.mxu0
        %v7054 = vpop.f32.mrf.mxu0
        %v7055 = vpop.f32.mrf.mxu0
        %7056 = vdwg.mxu0
        %vm7057 = vcmp.ge.f32.partialorder %v7052, 0.0
        %v7058 = vmul.f32 %v7052, 0.01
        %v7059 = vsel %vm7057, %v7052, %v7058
        %v7060 = vpack.c.bf16 %v7059, %v7059
        %s7061 = scalar_lea.vmem %s376, 4160 [#allocation7]
        %v7062 = vld [vmem:[%s7061] sm:$0xff]
        %v7063 = vld [vmem:[%s7061 + $0x8] sm:$0xff]
        %v7064 = vld [vmem:[%s7061 + $0x10] sm:$0xff]
        %v7065 = vld [vmem:[%s7061 + $0x18] sm:$0xff]
        %v7066 = vld [vmem:[%s7061 + $0x20] sm:$0xff]
        %v7067 = vld [vmem:[%s7061 + $0x28] sm:$0xff]
        %v7068 = vld [vmem:[%s7061 + $0x30] sm:$0xf]
        %v7069 = vld [vmem:[%s7061 + $0x34] sm:$0xff]
        %v7070 = vld [vmem:[%s7061 + $0x3c] sm:$0xff]
        %v7071 = vld [vmem:[%s7061 + $0x44] sm:$0xff]
        %v7072 = vld [vmem:[%s7061 + $0x4c] sm:$0xff]
        %v7073 = vld [vmem:[%s7061 + $0x54] sm:$0xff]
        %v7074 = vld [vmem:[%s7061 + $0x5c] sm:$0xff]
        %v7075 = vld [vmem:[%s7061 + $0x64] sm:$0xf]
        %v7076 = vld [vmem:[%s7061 + $0x68] sm:$0xff]
        %v7077 = vld [vmem:[%s7061 + $0x70] sm:$0xff]
        %v7078 = vld [vmem:[%s7061 + $0x78] sm:$0xff]
        %v7079 = vld [vmem:[%s7061 + $0x80] sm:$0xff]
        %v7080 = vld [vmem:[%s7061 + $0x88] sm:$0xff]
        %v7081 = vld [vmem:[%s7061 + $0x90] sm:$0xff]
        %v7082 = vld [vmem:[%s7061 + $0x98] sm:$0xf]
        %v7083 = vld [vmem:[%s7061 + $0x9c] sm:$0xff]
        %v7084 = vld [vmem:[%s7061 + $0xa4] sm:$0xff]
        %v7085 = vld [vmem:[%s7061 + $0xac] sm:$0xff]
        %v7086 = vld [vmem:[%s7061 + $0xb4] sm:$0xff]
        %v7087 = vld [vmem:[%s7061 + $0xbc] sm:$0xff]
        %v7088 = vld [vmem:[%s7061 + $0xc4] sm:$0xff]
        %v7089 = vld [vmem:[%s7061 + $0xcc] sm:$0xf]
        %v7090 = vld [vmem:[%s7061 + $0xd0] sm:$0xff]
        %v7091 = vld [vmem:[%s7061 + $0xd8] sm:$0xff]
        %v7092 = vld [vmem:[%s7061 + $0xe0] sm:$0xff]
        %v7093 = vld [vmem:[%s7061 + $0xe8] sm:$0xff]
        %v7094 = vld [vmem:[%s7061 + $0xf0] sm:$0xff]
        %v7095 = vld [vmem:[%s7061 + $0xf8] sm:$0xff]
        %v7096 = vld [vmem:[%s7061 + $0x100] sm:$0xf]
        %v7097 = vld [vmem:[%s7061 + $0x104] sm:$0xff]
        %v7098 = vld [vmem:[%s7061 + $0x10c] sm:$0xff]
        %v7099 = vld [vmem:[%s7061 + $0x114] sm:$0xff]
        %v7100 = vld [vmem:[%s7061 + $0x11c] sm:$0xff]
        %v7101 = vld [vmem:[%s7061 + $0x124] sm:$0xff]
        %v7102 = vld [vmem:[%s7061 + $0x12c] sm:$0xff]
        %v7103 = vld [vmem:[%s7061 + $0x134] sm:$0xf]
        %v7104 = vld [vmem:[%s7061 + $0x138] sm:$0xff]
        %v7105 = vld [vmem:[%s7061 + $0x140] sm:$0xff]
        %v7106 = vld [vmem:[%s7061 + $0x148] sm:$0xff]
        %v7107 = vld [vmem:[%s7061 + $0x150] sm:$0xff]
        %v7108 = vld [vmem:[%s7061 + $0x158] sm:$0xff]
        %v7109 = vld [vmem:[%s7061 + $0x160] sm:$0xff]
        %v7110 = vld [vmem:[%s7061 + $0x168] sm:$0xf]
        %v7111 = vld [vmem:[%s7061 + $0x16c] sm:$0xff]
        %v7112 = vld [vmem:[%s7061 + $0x174] sm:$0xff]
        %v7113 = vld [vmem:[%s7061 + $0x17c] sm:$0xff]
        %v7114 = vld [vmem:[%s7061 + $0x184] sm:$0xff]
        %v7115 = vld [vmem:[%s7061 + $0x18c] sm:$0xff]
        %v7116 = vld [vmem:[%s7061 + $0x194] sm:$0xff]
        %v7117 = vld [vmem:[%s7061 + $0x19c] sm:$0xf]
        %v7118 = vld [vmem:[%s7061 + $0x1a0] sm:$0xff]
        %v7119 = vld [vmem:[%s7061 + $0x1a8] sm:$0xff]
        %v7120 = vld [vmem:[%s7061 + $0x1b0] sm:$0xff]
        %v7121 = vld [vmem:[%s7061 + $0x1b8] sm:$0xff]
        %v7122 = vld [vmem:[%s7061 + $0x1c0] sm:$0xff]
        %v7123 = vld [vmem:[%s7061 + $0x1c8] sm:$0xff]
        %v7124 = vld [vmem:[%s7061 + $0x1d0] sm:$0xf]
        %v7125 = vld [vmem:[%s7061 + $0x1d4] sm:$0xff]
        %v7126 = vld [vmem:[%s7061 + $0x1dc] sm:$0xff]
        %v7127 = vld [vmem:[%s7061 + $0x1e4] sm:$0xff]
        %v7128 = vld [vmem:[%s7061 + $0x1ec] sm:$0xff]
        %v7129 = vld [vmem:[%s7061 + $0x1f4] sm:$0xff]
        %v7130 = vld [vmem:[%s7061 + $0x1fc] sm:$0xff]
        %v7131 = vld [vmem:[%s7061 + $0x204] sm:$0xf]
        %v7132 = vld [vmem:[%s7061 + $0x208] sm:$0xff]
        %v7133 = vld [vmem:[%s7061 + $0x210] sm:$0xff]
        %v7134 = vld [vmem:[%s7061 + $0x218] sm:$0xff]
        %v7135 = vld [vmem:[%s7061 + $0x220] sm:$0xff]
        %v7136 = vld [vmem:[%s7061 + $0x228] sm:$0xff]
        %v7137 = vld [vmem:[%s7061 + $0x230] sm:$0xff]
        %v7138 = vld [vmem:[%s7061 + $0x238] sm:$0xf]
        %v7139 = vld [vmem:[%s7061 + $0x23c] sm:$0xff]
        %v7140 = vld [vmem:[%s7061 + $0x244] sm:$0xff]
        %v7141 = vld [vmem:[%s7061 + $0x24c] sm:$0xff]
        %v7142 = vld [vmem:[%s7061 + $0x254] sm:$0xff]
        %v7143 = vld [vmem:[%s7061 + $0x25c] sm:$0xff]
        %v7144 = vld [vmem:[%s7061 + $0x264] sm:$0xff]
        %v7145 = vld [vmem:[%s7061 + $0x26c] sm:$0xf]
        %v7146 = vld [vmem:[%s7061 + $0x270] sm:$0xff]
        %v7147 = vld [vmem:[%s7061 + $0x278] sm:$0xff]
        %v7148 = vld [vmem:[%s7061 + $0x280] sm:$0xff]
        %v7149 = vld [vmem:[%s7061 + $0x288] sm:$0xff]
        %v7150 = vld [vmem:[%s7061 + $0x290] sm:$0xff]
        %v7151 = vld [vmem:[%s7061 + $0x298] sm:$0xff]
        %v7152 = vld [vmem:[%s7061 + $0x2a0] sm:$0xf]
        %v7153 = vld [vmem:[%s7061 + $0x2a4] sm:$0xff]
        %v7154 = vld [vmem:[%s7061 + $0x2ac] sm:$0xff]
        %v7155 = vld [vmem:[%s7061 + $0x2b4] sm:$0xff]
        %v7156 = vld [vmem:[%s7061 + $0x2bc] sm:$0xff]
        %v7157 = vld [vmem:[%s7061 + $0x2c4] sm:$0xff]
        %v7158 = vld [vmem:[%s7061 + $0x2cc] sm:$0xff]
        %v7159 = vld [vmem:[%s7061 + $0x2d4] sm:$0xf]
        %v7160 = vld [vmem:[%s7061 + $0x2d8] sm:$0xff]
        %v7161 = vld [vmem:[%s7061 + $0x2e0] sm:$0xff]
        %v7162 = vld [vmem:[%s7061 + $0x2e8] sm:$0xff]
        %v7163 = vld [vmem:[%s7061 + $0x2f0] sm:$0xff]
        %v7164 = vld [vmem:[%s7061 + $0x2f8] sm:$0xff]
        %v7165 = vld [vmem:[%s7061 + $0x300] sm:$0xff]
        %v7166 = vld [vmem:[%s7061 + $0x308] sm:$0xf]
        %v7167 = vld [vmem:[%s7061 + $0x30c] sm:$0xff]
        %v7168 = vld [vmem:[%s7061 + $0x314] sm:$0xff]
        %v7169 = vld [vmem:[%s7061 + $0x31c] sm:$0xff]
        %v7170 = vld [vmem:[%s7061 + $0x324] sm:$0xff]
        %v7171 = vld [vmem:[%s7061 + $0x32c] sm:$0xff]
        %v7172 = vld [vmem:[%s7061 + $0x334] sm:$0xff]
        %v7173 = vld [vmem:[%s7061 + $0x33c] sm:$0xf]
        %s7174 = scalar_lea.vmem %s385, 65 [#allocation9]
        %v7175 = vld [vmem:[%s7174] sm:$0xff]
        %v7176 = vld [vmem:[%s7174 + $0x8] sm:$0x1f]
        %v7179 = vlaneseq
        %v7180 = vshrl.u32 %v7179, 7
        %v7181 = vsub.s32 0, %v7180
        %v7182 = vrot.slane %v7175, %v7181
        %v7183 = vlaneseq
        %v7184 = vshrl.u32 %v7183, 7
        %v7185 = vsub.s32 1, %v7184
        %v7186 = vrot.slane %v7175, %v7185
        %v7187 = vlaneseq
        %v7188 = vshrl.u32 %v7187, 7
        %v7189 = vsub.s32 2, %v7188
        %v7190 = vrot.slane %v7175, %v7189
        %v7191 = vlaneseq
        %v7192 = vshrl.u32 %v7191, 7
        %v7193 = vsub.s32 3, %v7192
        %v7194 = vrot.slane %v7175, %v7193
        %v7195 = vlaneseq
        %v7196 = vshrl.u32 %v7195, 7
        %v7197 = vsub.s32 4, %v7196
        %v7198 = vrot.slane %v7175, %v7197
        %v7199 = vlaneseq
        %v7200 = vshrl.u32 %v7199, 7
        %v7201 = vsub.s32 5, %v7200
        %v7202 = vrot.slane %v7175, %v7201
        %v7203 = vlaneseq
        %v7204 = vshrl.u32 %v7203, 7
        %v7205 = vsub.s32 6, %v7204
        %v7206 = vrot.slane %v7175, %v7205
        %v7207 = vlaneseq
        %v7208 = vshrl.u32 %v7207, 7
        %v7209 = vsub.s32 7, %v7208
        %v7210 = vrot.slane %v7175, %v7209
        %v7211 = vlaneseq
        %v7212 = vshrl.u32 %v7211, 7
        %v7213 = vsub.s32 0, %v7212
        %v7214 = vrot.slane %v7176, %v7213
        %v7215 = vlaneseq
        %v7216 = vshrl.u32 %v7215, 7
        %v7217 = vsub.s32 1, %v7216
        %v7218 = vrot.slane %v7176, %v7217
        %v7219 = vlaneseq
        %v7220 = vshrl.u32 %v7219, 7
        %v7221 = vsub.s32 2, %v7220
        %v7222 = vrot.slane %v7176, %v7221
        %v7223 = vlaneseq
        %v7224 = vshrl.u32 %v7223, 7
        %v7225 = vsub.s32 3, %v7224
        %v7226 = vrot.slane %v7176, %v7225
        %v7227 = vlaneseq
        %v7228 = vshrl.u32 %v7227, 7
        %v7229 = vsub.s32 4, %v7228
        %v7230 = vrot.slane %v7176, %v7229
        %v7356 = vunpack.c.l.b16 %v7062
        %v7357 = vunpack.c.h.b16 %v7062
        %v7358 = vunpack.c.l.b16 %v7063
        %v7359 = vunpack.c.h.b16 %v7063
        %v7360 = vunpack.c.l.b16 %v7064
        %v7361 = vunpack.c.h.b16 %v7064
        %v7362 = vunpack.c.l.b16 %v7065
        %v7363 = vunpack.c.h.b16 %v7065
        %v7364 = vunpack.c.l.b16 %v7066
        %v7365 = vunpack.c.h.b16 %v7066
        %v7366 = vunpack.c.l.b16 %v7067
        %v7367 = vunpack.c.h.b16 %v7067
        %v7368 = vunpack.c.l.b16 %v7068
        %v7369 = vunpack.c.l.b16 %v7069
        %v7370 = vunpack.c.h.b16 %v7069
        %v7371 = vunpack.c.l.b16 %v7070
        %v7372 = vunpack.c.h.b16 %v7070
        %v7373 = vunpack.c.l.b16 %v7071
        %v7374 = vunpack.c.h.b16 %v7071
        %v7375 = vunpack.c.l.b16 %v7072
        %v7376 = vunpack.c.h.b16 %v7072
        %v7377 = vunpack.c.l.b16 %v7073
        %v7378 = vunpack.c.h.b16 %v7073
        %v7379 = vunpack.c.l.b16 %v7074
        %v7380 = vunpack.c.h.b16 %v7074
        %v7381 = vunpack.c.l.b16 %v7075
        %v7382 = vunpack.c.l.b16 %v7076
        %v7383 = vunpack.c.h.b16 %v7076
        %v7384 = vunpack.c.l.b16 %v7077
        %v7385 = vunpack.c.h.b16 %v7077
        %v7386 = vunpack.c.l.b16 %v7078
        %v7387 = vunpack.c.h.b16 %v7078
        %v7388 = vunpack.c.l.b16 %v7079
        %v7389 = vunpack.c.h.b16 %v7079
        %v7390 = vunpack.c.l.b16 %v7080
        %v7391 = vunpack.c.h.b16 %v7080
        %v7392 = vunpack.c.l.b16 %v7081
        %v7393 = vunpack.c.h.b16 %v7081
        %v7394 = vunpack.c.l.b16 %v7082
        %v7395 = vunpack.c.l.b16 %v7083
        %v7396 = vunpack.c.h.b16 %v7083
        %v7397 = vunpack.c.l.b16 %v7084
        %v7398 = vunpack.c.h.b16 %v7084
        %v7399 = vunpack.c.l.b16 %v7085
        %v7400 = vunpack.c.h.b16 %v7085
        %v7401 = vunpack.c.l.b16 %v7086
        %v7402 = vunpack.c.h.b16 %v7086
        %v7403 = vunpack.c.l.b16 %v7087
        %v7404 = vunpack.c.h.b16 %v7087
        %v7405 = vunpack.c.l.b16 %v7088
        %v7406 = vunpack.c.h.b16 %v7088
        %v7407 = vunpack.c.l.b16 %v7089
        %v7408 = vunpack.c.l.b16 %v7090
        %v7409 = vunpack.c.h.b16 %v7090
        %v7410 = vunpack.c.l.b16 %v7091
        %v7411 = vunpack.c.h.b16 %v7091
        %v7412 = vunpack.c.l.b16 %v7092
        %v7413 = vunpack.c.h.b16 %v7092
        %v7414 = vunpack.c.l.b16 %v7093
        %v7415 = vunpack.c.h.b16 %v7093
        %v7416 = vunpack.c.l.b16 %v7094
        %v7417 = vunpack.c.h.b16 %v7094
        %v7418 = vunpack.c.l.b16 %v7095
        %v7419 = vunpack.c.h.b16 %v7095
        %v7420 = vunpack.c.l.b16 %v7096
        %v7421 = vunpack.c.l.b16 %v7097
        %v7422 = vunpack.c.h.b16 %v7097
        %v7423 = vunpack.c.l.b16 %v7098
        %v7424 = vunpack.c.h.b16 %v7098
        %v7425 = vunpack.c.l.b16 %v7099
        %v7426 = vunpack.c.h.b16 %v7099
        %v7427 = vunpack.c.l.b16 %v7100
        %v7428 = vunpack.c.h.b16 %v7100
        %v7429 = vunpack.c.l.b16 %v7101
        %v7430 = vunpack.c.h.b16 %v7101
        %v7431 = vunpack.c.l.b16 %v7102
        %v7432 = vunpack.c.h.b16 %v7102
        %v7433 = vunpack.c.l.b16 %v7103
        %v7434 = vunpack.c.l.b16 %v7104
        %v7435 = vunpack.c.h.b16 %v7104
        %v7436 = vunpack.c.l.b16 %v7105
        %v7437 = vunpack.c.h.b16 %v7105
        %v7438 = vunpack.c.l.b16 %v7106
        %v7439 = vunpack.c.h.b16 %v7106
        %v7440 = vunpack.c.l.b16 %v7107
        %v7441 = vunpack.c.h.b16 %v7107
        %v7442 = vunpack.c.l.b16 %v7108
        %v7443 = vunpack.c.h.b16 %v7108
        %v7444 = vunpack.c.l.b16 %v7109
        %v7445 = vunpack.c.h.b16 %v7109
        %v7446 = vunpack.c.l.b16 %v7110
        %v7447 = vunpack.c.l.b16 %v7111
        %v7448 = vunpack.c.h.b16 %v7111
        %v7449 = vunpack.c.l.b16 %v7112
        %v7450 = vunpack.c.h.b16 %v7112
        %v7451 = vunpack.c.l.b16 %v7113
        %v7452 = vunpack.c.h.b16 %v7113
        %v7453 = vunpack.c.l.b16 %v7114
        %v7454 = vunpack.c.h.b16 %v7114
        %v7455 = vunpack.c.l.b16 %v7115
        %v7456 = vunpack.c.h.b16 %v7115
        %v7457 = vunpack.c.l.b16 %v7116
        %v7458 = vunpack.c.h.b16 %v7116
        %v7459 = vunpack.c.l.b16 %v7117
        %v7460 = vunpack.c.l.b16 %v7118
        %v7461 = vunpack.c.h.b16 %v7118
        %v7462 = vunpack.c.l.b16 %v7119
        %v7463 = vunpack.c.h.b16 %v7119
        %v7464 = vunpack.c.l.b16 %v7120
        %v7465 = vunpack.c.h.b16 %v7120
        %v7466 = vunpack.c.l.b16 %v7121
        %v7467 = vunpack.c.h.b16 %v7121
        %v7468 = vunpack.c.l.b16 %v7122
        %v7469 = vunpack.c.h.b16 %v7122
        %v7470 = vunpack.c.l.b16 %v7123
        %v7471 = vunpack.c.h.b16 %v7123
        %v7472 = vunpack.c.l.b16 %v7124
        %v7473 = vunpack.c.l.b16 %v7125
        %v7474 = vunpack.c.h.b16 %v7125
        %v7475 = vunpack.c.l.b16 %v7126
        %v7476 = vunpack.c.h.b16 %v7126
        %v7477 = vunpack.c.l.b16 %v7127
        %v7478 = vunpack.c.h.b16 %v7127
        %v7479 = vunpack.c.l.b16 %v7128
        %v7480 = vunpack.c.h.b16 %v7128
        %v7481 = vunpack.c.l.b16 %v7129
        %v7482 = vunpack.c.h.b16 %v7129
        %v7483 = vunpack.c.l.b16 %v7130
        %v7484 = vunpack.c.h.b16 %v7130
        %v7485 = vunpack.c.l.b16 %v7131
        %v7486 = vunpack.c.l.b16 %v7132
        %v7487 = vunpack.c.h.b16 %v7132
        %v7488 = vunpack.c.l.b16 %v7133
        %v7489 = vunpack.c.h.b16 %v7133
        %v7490 = vunpack.c.l.b16 %v7134
        %v7491 = vunpack.c.h.b16 %v7134
        %v7492 = vunpack.c.l.b16 %v7135
        %v7493 = vunpack.c.h.b16 %v7135
        %v7494 = vunpack.c.l.b16 %v7136
        %v7495 = vunpack.c.h.b16 %v7136
        %v7496 = vunpack.c.l.b16 %v7137
        %v7497 = vunpack.c.h.b16 %v7137
        %v7498 = vunpack.c.l.b16 %v7138
        %v7499 = vunpack.c.l.b16 %v7139
        %v7500 = vunpack.c.h.b16 %v7139
        %v7501 = vunpack.c.l.b16 %v7140
        %v7502 = vunpack.c.h.b16 %v7140
        %v7503 = vunpack.c.l.b16 %v7141
        %v7504 = vunpack.c.h.b16 %v7141
        %v7505 = vunpack.c.l.b16 %v7142
        %v7506 = vunpack.c.h.b16 %v7142
        %v7507 = vunpack.c.l.b16 %v7143
        %v7508 = vunpack.c.h.b16 %v7143
        %v7509 = vunpack.c.l.b16 %v7144
        %v7510 = vunpack.c.h.b16 %v7144
        %v7511 = vunpack.c.l.b16 %v7145
        %v7512 = vunpack.c.l.b16 %v7146
        %v7513 = vunpack.c.h.b16 %v7146
        %v7514 = vunpack.c.l.b16 %v7147
        %v7515 = vunpack.c.h.b16 %v7147
        %v7516 = vunpack.c.l.b16 %v7148
        %v7517 = vunpack.c.h.b16 %v7148
        %v7518 = vunpack.c.l.b16 %v7149
        %v7519 = vunpack.c.h.b16 %v7149
        %v7520 = vunpack.c.l.b16 %v7150
        %v7521 = vunpack.c.h.b16 %v7150
        %v7522 = vunpack.c.l.b16 %v7151
        %v7523 = vunpack.c.h.b16 %v7151
        %v7524 = vunpack.c.l.b16 %v7152
        %v7525 = vunpack.c.l.b16 %v7153
        %v7526 = vunpack.c.h.b16 %v7153
        %v7527 = vunpack.c.l.b16 %v7154
        %v7528 = vunpack.c.h.b16 %v7154
        %v7529 = vunpack.c.l.b16 %v7155
        %v7530 = vunpack.c.h.b16 %v7155
        %v7531 = vunpack.c.l.b16 %v7156
        %v7532 = vunpack.c.h.b16 %v7156
        %v7533 = vunpack.c.l.b16 %v7157
        %v7534 = vunpack.c.h.b16 %v7157
        %v7535 = vunpack.c.l.b16 %v7158
        %v7536 = vunpack.c.h.b16 %v7158
        %v7537 = vunpack.c.l.b16 %v7159
        %v7538 = vunpack.c.l.b16 %v7160
        %v7539 = vunpack.c.h.b16 %v7160
        %v7540 = vunpack.c.l.b16 %v7161
        %v7541 = vunpack.c.h.b16 %v7161
        %v7542 = vunpack.c.l.b16 %v7162
        %v7543 = vunpack.c.h.b16 %v7162
        %v7544 = vunpack.c.l.b16 %v7163
        %v7545 = vunpack.c.h.b16 %v7163
        %v7546 = vunpack.c.l.b16 %v7164
        %v7547 = vunpack.c.h.b16 %v7164
        %v7548 = vunpack.c.l.b16 %v7165
        %v7549 = vunpack.c.h.b16 %v7165
        %v7550 = vunpack.c.l.b16 %v7166
        %v7551 = vunpack.c.l.b16 %v7167
        %v7552 = vunpack.c.h.b16 %v7167
        %v7553 = vunpack.c.l.b16 %v7168
        %v7554 = vunpack.c.h.b16 %v7168
        %v7555 = vunpack.c.l.b16 %v7169
        %v7556 = vunpack.c.h.b16 %v7169
        %v7557 = vunpack.c.l.b16 %v7170
        %v7558 = vunpack.c.h.b16 %v7170
        %v7559 = vunpack.c.l.b16 %v7171
        %v7560 = vunpack.c.h.b16 %v7171
        %v7561 = vunpack.c.l.b16 %v7172
        %v7562 = vunpack.c.h.b16 %v7172
        %v7563 = vunpack.c.l.b16 %v7173
        %v7564 = vpack.c.b16 %v7369, %v7356
        %v7565 = vpack.c.b16 %v7370, %v7357
        %v7566 = vpack.c.b16 %v7371, %v7358
        %v7567 = vpack.c.b16 %v7372, %v7359
        %v7568 = vpack.c.b16 %v7373, %v7360
        %v7569 = vpack.c.b16 %v7374, %v7361
        %v7570 = vpack.c.b16 %v7375, %v7362
        %v7571 = vpack.c.b16 %v7376, %v7363
        %v7572 = vpack.c.b16 %v7377, %v7364
        %v7573 = vpack.c.b16 %v7378, %v7365
        %v7574 = vpack.c.b16 %v7379, %v7366
        %v7575 = vpack.c.b16 %v7380, %v7367
        %v7576 = vpack.c.b16 %v7381, %v7368
        %v7577 = vpack.c.b16 %v7395, %v7382
        %v7578 = vpack.c.b16 %v7396, %v7383
        %v7579 = vpack.c.b16 %v7397, %v7384
        %v7580 = vpack.c.b16 %v7398, %v7385
        %v7581 = vpack.c.b16 %v7399, %v7386
        %v7582 = vpack.c.b16 %v7400, %v7387
        %v7583 = vpack.c.b16 %v7401, %v7388
        %v7584 = vpack.c.b16 %v7402, %v7389
        %v7585 = vpack.c.b16 %v7403, %v7390
        %v7586 = vpack.c.b16 %v7404, %v7391
        %v7587 = vpack.c.b16 %v7405, %v7392
        %v7588 = vpack.c.b16 %v7406, %v7393
        %v7589 = vpack.c.b16 %v7407, %v7394
        %v7590 = vpack.c.b16 %v7421, %v7408
        %v7591 = vpack.c.b16 %v7422, %v7409
        %v7592 = vpack.c.b16 %v7423, %v7410
        %v7593 = vpack.c.b16 %v7424, %v7411
        %v7594 = vpack.c.b16 %v7425, %v7412
        %v7595 = vpack.c.b16 %v7426, %v7413
        %v7596 = vpack.c.b16 %v7427, %v7414
        %v7597 = vpack.c.b16 %v7428, %v7415
        %v7598 = vpack.c.b16 %v7429, %v7416
        %v7599 = vpack.c.b16 %v7430, %v7417
        %v7600 = vpack.c.b16 %v7431, %v7418
        %v7601 = vpack.c.b16 %v7432, %v7419
        %v7602 = vpack.c.b16 %v7433, %v7420
        %v7603 = vpack.c.b16 %v7447, %v7434
        %v7604 = vpack.c.b16 %v7448, %v7435
        %v7605 = vpack.c.b16 %v7449, %v7436
        %v7606 = vpack.c.b16 %v7450, %v7437
        %v7607 = vpack.c.b16 %v7451, %v7438
        %v7608 = vpack.c.b16 %v7452, %v7439
        %v7609 = vpack.c.b16 %v7453, %v7440
        %v7610 = vpack.c.b16 %v7454, %v7441
        %v7611 = vpack.c.b16 %v7455, %v7442
        %v7612 = vpack.c.b16 %v7456, %v7443
        %v7613 = vpack.c.b16 %v7457, %v7444
        %v7614 = vpack.c.b16 %v7458, %v7445
        %v7615 = vpack.c.b16 %v7459, %v7446
        %v7616 = vpack.c.b16 %v7473, %v7460
        %v7617 = vpack.c.b16 %v7474, %v7461
        %v7618 = vpack.c.b16 %v7475, %v7462
        %v7619 = vpack.c.b16 %v7476, %v7463
        %v7620 = vpack.c.b16 %v7477, %v7464
        %v7621 = vpack.c.b16 %v7478, %v7465
        %v7622 = vpack.c.b16 %v7479, %v7466
        %v7623 = vpack.c.b16 %v7480, %v7467
        %v7624 = vpack.c.b16 %v7481, %v7468
        %v7625 = vpack.c.b16 %v7482, %v7469
        %v7626 = vpack.c.b16 %v7483, %v7470
        %v7627 = vpack.c.b16 %v7484, %v7471
        %v7628 = vpack.c.b16 %v7485, %v7472
        %v7629 = vpack.c.b16 %v7499, %v7486
        %v7630 = vpack.c.b16 %v7500, %v7487
        %v7631 = vpack.c.b16 %v7501, %v7488
        %v7632 = vpack.c.b16 %v7502, %v7489
        %v7633 = vpack.c.b16 %v7503, %v7490
        %v7634 = vpack.c.b16 %v7504, %v7491
        %v7635 = vpack.c.b16 %v7505, %v7492
        %v7636 = vpack.c.b16 %v7506, %v7493
        %v7637 = vpack.c.b16 %v7507, %v7494
        %v7638 = vpack.c.b16 %v7508, %v7495
        %v7639 = vpack.c.b16 %v7509, %v7496
        %v7640 = vpack.c.b16 %v7510, %v7497
        %v7641 = vpack.c.b16 %v7511, %v7498
        %v7642 = vpack.c.b16 %v7525, %v7512
        %v7643 = vpack.c.b16 %v7526, %v7513
        %v7644 = vpack.c.b16 %v7527, %v7514
        %v7645 = vpack.c.b16 %v7528, %v7515
        %v7646 = vpack.c.b16 %v7529, %v7516
        %v7647 = vpack.c.b16 %v7530, %v7517
        %v7648 = vpack.c.b16 %v7531, %v7518
        %v7649 = vpack.c.b16 %v7532, %v7519
        %v7650 = vpack.c.b16 %v7533, %v7520
        %v7651 = vpack.c.b16 %v7534, %v7521
        %v7652 = vpack.c.b16 %v7535, %v7522
        %v7653 = vpack.c.b16 %v7536, %v7523
        %v7654 = vpack.c.b16 %v7537, %v7524
        %v7655 = vpack.c.b16 %v7551, %v7538
        %v7656 = vpack.c.b16 %v7552, %v7539
        %v7657 = vpack.c.b16 %v7553, %v7540
        %v7658 = vpack.c.b16 %v7554, %v7541
        %v7659 = vpack.c.b16 %v7555, %v7542
        %v7660 = vpack.c.b16 %v7556, %v7543
        %v7661 = vpack.c.b16 %v7557, %v7544
        %v7662 = vpack.c.b16 %v7558, %v7545
        %v7663 = vpack.c.b16 %v7559, %v7546
        %v7664 = vpack.c.b16 %v7560, %v7547
        %v7665 = vpack.c.b16 %v7561, %v7548
        %v7666 = vpack.c.b16 %v7562, %v7549
        %v7667 = vpack.c.b16 %v7563, %v7550
        %7772 = vmatprep.subr.bf16.mxu0 %v7656
        %7773 = vmatpush1.bf16.msra.mxu0 %v7655
        %7774 = vmatprep.subr.bf16.mxu0 %v7643
        %7775 = vmatpush1.bf16.msra.mxu0 %v7642
        %7776 = vmatprep.subr.bf16.mxu0 %v7630
        %7777 = vmatpush1.bf16.msra.mxu0 %v7629
        %7778 = vmatprep.subr.bf16.mxu0 %v7617
        %7779 = vmatpush1.bf16.msra.mxu0 %v7616
        %7780 = vmatprep.subr.bf16.mxu0 %v7604
        %7781 = vmatpush1.bf16.msra.mxu0 %v7603
        %7782 = vmatprep.subr.bf16.mxu0 %v7591
        %7783 = vmatpush1.bf16.msra.mxu0 %v7590
        %7784 = vmatprep.subr.bf16.mxu0 %v7578
        %7785 = vmatpush1.bf16.msra.mxu0 %v7577
        %7786 = vmatprep.subr.bf16.mxu0 %v7565
        %7787 = vmatpush1.bf16.msra.mxu0 %v7564
        %7788 = vmatprep.subr.bf16.mxu0 0
        %7789 = vmatpush2.bf16.msra.mxu0 0
        %7790 = vmatprep.subr.bf16.mxu0 0
        %7791 = vmatpush2.bf16.msra.mxu0 0
        %7792 = vmatprep.subr.bf16.mxu0 0
        %7793 = vmatpush2.bf16.msra.mxu0 0
        %7794 = vmatprep.subr.bf16.mxu0 0
        %7795 = vmatpush2.bf16.msra.mxu0 0
        %7796 = vmatprep.subr.bf16.mxu0 0
        %7797 = vmatpush2.bf16.msra.mxu0 0
        %7798 = vmatprep.subr.bf16.mxu0 0
        %7799 = vmatpush2.bf16.msra.mxu0 0
        %7800 = vmatprep.subr.bf16.mxu0 0
        %7801 = vmatpush2.bf16.msra.mxu0 0
        %7802 = vmatprep.subr.bf16.mxu0 0
        %7803 = vmatpush2.bf16.msra.mxu0 0
        %7804 = vmatprep.mubr.bf16.mxu0 0
        %7805 = vmatmul.mubr.bf16.gmra.mxu0 %v7060
        %v7806 = vpop.f32.mrf.mxu0
        %v7807 = vadd.f32 %v7182, %v7806
        %v7808 = vpop.f32.mrf.mxu0
        %v7809 = vadd.f32 %v7186, %v7808
        %v7810 = vpop.f32.mrf.mxu0
        %v7811 = vpop.f32.mrf.mxu0
        %7812 = vdwg.mxu0
        %7813 = vmatprep.subr.bf16.mxu0 %v7658
        %7814 = vmatpush1.bf16.msra.mxu0 %v7657
        %7815 = vmatprep.subr.bf16.mxu0 %v7645
        %7816 = vmatpush1.bf16.msra.mxu0 %v7644
        %7817 = vmatprep.subr.bf16.mxu0 %v7632
        %7818 = vmatpush1.bf16.msra.mxu0 %v7631
        %7819 = vmatprep.subr.bf16.mxu0 %v7619
        %7820 = vmatpush1.bf16.msra.mxu0 %v7618
        %7821 = vmatprep.subr.bf16.mxu0 %v7606
        %7822 = vmatpush1.bf16.msra.mxu0 %v7605
        %7823 = vmatprep.subr.bf16.mxu0 %v7593
        %7824 = vmatpush1.bf16.msra.mxu0 %v7592
        %7825 = vmatprep.subr.bf16.mxu0 %v7580
        %7826 = vmatpush1.bf16.msra.mxu0 %v7579
        %7827 = vmatprep.subr.bf16.mxu0 %v7567
        %7828 = vmatpush1.bf16.msra.mxu0 %v7566
        %7829 = vmatprep.subr.bf16.mxu0 0
        %7830 = vmatpush2.bf16.msra.mxu0 0
        %7831 = vmatprep.subr.bf16.mxu0 0
        %7832 = vmatpush2.bf16.msra.mxu0 0
        %7833 = vmatprep.subr.bf16.mxu0 0
        %7834 = vmatpush2.bf16.msra.mxu0 0
        %7835 = vmatprep.subr.bf16.mxu0 0
        %7836 = vmatpush2.bf16.msra.mxu0 0
        %7837 = vmatprep.subr.bf16.mxu0 0
        %7838 = vmatpush2.bf16.msra.mxu0 0
        %7839 = vmatprep.subr.bf16.mxu0 0
        %7840 = vmatpush2.bf16.msra.mxu0 0
        %7841 = vmatprep.subr.bf16.mxu0 0
        %7842 = vmatpush2.bf16.msra.mxu0 0
        %7843 = vmatprep.subr.bf16.mxu0 0
        %7844 = vmatpush2.bf16.msra.mxu0 0
        %7845 = vmatprep.mubr.bf16.mxu0 0
        %7846 = vmatmul.mubr.bf16.gmra.mxu0 %v7060
        %v7847 = vpop.f32.mrf.mxu0
        %v7848 = vadd.f32 %v7190, %v7847
        %v7849 = vpop.f32.mrf.mxu0
        %v7850 = vadd.f32 %v7194, %v7849
        %v7851 = vpop.f32.mrf.mxu0
        %v7852 = vpop.f32.mrf.mxu0
        %7853 = vdwg.mxu0
        %7854 = vmatprep.subr.bf16.mxu0 %v7660
        %7855 = vmatpush1.bf16.msra.mxu0 %v7659
        %7856 = vmatprep.subr.bf16.mxu0 %v7647
        %7857 = vmatpush1.bf16.msra.mxu0 %v7646
        %7858 = vmatprep.subr.bf16.mxu0 %v7634
        %7859 = vmatpush1.bf16.msra.mxu0 %v7633
        %7860 = vmatprep.subr.bf16.mxu0 %v7621
        %7861 = vmatpush1.bf16.msra.mxu0 %v7620
        %7862 = vmatprep.subr.bf16.mxu0 %v7608
        %7863 = vmatpush1.bf16.msra.mxu0 %v7607
        %7864 = vmatprep.subr.bf16.mxu0 %v7595
        %7865 = vmatpush1.bf16.msra.mxu0 %v7594
        %7866 = vmatprep.subr.bf16.mxu0 %v7582
        %7867 = vmatpush1.bf16.msra.mxu0 %v7581
        %7868 = vmatprep.subr.bf16.mxu0 %v7569
        %7869 = vmatpush1.bf16.msra.mxu0 %v7568
        %7870 = vmatprep.subr.bf16.mxu0 0
        %7871 = vmatpush2.bf16.msra.mxu0 0
        %7872 = vmatprep.subr.bf16.mxu0 0
        %7873 = vmatpush2.bf16.msra.mxu0 0
        %7874 = vmatprep.subr.bf16.mxu0 0
        %7875 = vmatpush2.bf16.msra.mxu0 0
        %7876 = vmatprep.subr.bf16.mxu0 0
        %7877 = vmatpush2.bf16.msra.mxu0 0
        %7878 = vmatprep.subr.bf16.mxu0 0
        %7879 = vmatpush2.bf16.msra.mxu0 0
        %7880 = vmatprep.subr.bf16.mxu0 0
        %7881 = vmatpush2.bf16.msra.mxu0 0
        %7882 = vmatprep.subr.bf16.mxu0 0
        %7883 = vmatpush2.bf16.msra.mxu0 0
        %7884 = vmatprep.subr.bf16.mxu0 0
        %7885 = vmatpush2.bf16.msra.mxu0 0
        %7886 = vmatprep.mubr.bf16.mxu0 0
        %7887 = vmatmul.mubr.bf16.gmra.mxu0 %v7060
        %v7888 = vpop.f32.mrf.mxu0
        %v7889 = vadd.f32 %v7198, %v7888
        %v7890 = vpop.f32.mrf.mxu0
        %v7891 = vadd.f32 %v7202, %v7890
        %v7892 = vpop.f32.mrf.mxu0
        %v7893 = vpop.f32.mrf.mxu0
        %7894 = vdwg.mxu0
        %7895 = vmatprep.subr.bf16.mxu0 %v7662
        %7896 = vmatpush1.bf16.msra.mxu0 %v7661
        %7897 = vmatprep.subr.bf16.mxu0 %v7649
        %7898 = vmatpush1.bf16.msra.mxu0 %v7648
        %7899 = vmatprep.subr.bf16.mxu0 %v7636
        %7900 = vmatpush1.bf16.msra.mxu0 %v7635
        %7901 = vmatprep.subr.bf16.mxu0 %v7623
        %7902 = vmatpush1.bf16.msra.mxu0 %v7622
        %7903 = vmatprep.subr.bf16.mxu0 %v7610
        %7904 = vmatpush1.bf16.msra.mxu0 %v7609
        %7905 = vmatprep.subr.bf16.mxu0 %v7597
        %7906 = vmatpush1.bf16.msra.mxu0 %v7596
        %7907 = vmatprep.subr.bf16.mxu0 %v7584
        %7908 = vmatpush1.bf16.msra.mxu0 %v7583
        %7909 = vmatprep.subr.bf16.mxu0 %v7571
        %7910 = vmatpush1.bf16.msra.mxu0 %v7570
        %7911 = vmatprep.subr.bf16.mxu0 0
        %7912 = vmatpush2.bf16.msra.mxu0 0
        %7913 = vmatprep.subr.bf16.mxu0 0
        %7914 = vmatpush2.bf16.msra.mxu0 0
        %7915 = vmatprep.subr.bf16.mxu0 0
        %7916 = vmatpush2.bf16.msra.mxu0 0
        %7917 = vmatprep.subr.bf16.mxu0 0
        %7918 = vmatpush2.bf16.msra.mxu0 0
        %7919 = vmatprep.subr.bf16.mxu0 0
        %7920 = vmatpush2.bf16.msra.mxu0 0
        %7921 = vmatprep.subr.bf16.mxu0 0
        %7922 = vmatpush2.bf16.msra.mxu0 0
        %7923 = vmatprep.subr.bf16.mxu0 0
        %7924 = vmatpush2.bf16.msra.mxu0 0
        %7925 = vmatprep.subr.bf16.mxu0 0
        %7926 = vmatpush2.bf16.msra.mxu0 0
        %7927 = vmatprep.mubr.bf16.mxu0 0
        %7928 = vmatmul.mubr.bf16.gmra.mxu0 %v7060
        %v7929 = vpop.f32.mrf.mxu0
        %v7930 = vadd.f32 %v7206, %v7929
        %v7931 = vpop.f32.mrf.mxu0
        %v7932 = vadd.f32 %v7210, %v7931
        %v7933 = vpop.f32.mrf.mxu0
        %v7934 = vpop.f32.mrf.mxu0
        %7935 = vdwg.mxu0
        %7936 = vmatprep.subr.bf16.mxu0 %v7664
        %7937 = vmatpush1.bf16.msra.mxu0 %v7663
        %7938 = vmatprep.subr.bf16.mxu0 %v7651
        %7939 = vmatpush1.bf16.msra.mxu0 %v7650
        %7940 = vmatprep.subr.bf16.mxu0 %v7638
        %7941 = vmatpush1.bf16.msra.mxu0 %v7637
        %7942 = vmatprep.subr.bf16.mxu0 %v7625
        %7943 = vmatpush1.bf16.msra.mxu0 %v7624
        %7944 = vmatprep.subr.bf16.mxu0 %v7612
        %7945 = vmatpush1.bf16.msra.mxu0 %v7611
        %7946 = vmatprep.subr.bf16.mxu0 %v7599
        %7947 = vmatpush1.bf16.msra.mxu0 %v7598
        %7948 = vmatprep.subr.bf16.mxu0 %v7586
        %7949 = vmatpush1.bf16.msra.mxu0 %v7585
        %7950 = vmatprep.subr.bf16.mxu0 %v7573
        %7951 = vmatpush1.bf16.msra.mxu0 %v7572
        %7952 = vmatprep.subr.bf16.mxu0 0
        %7953 = vmatpush2.bf16.msra.mxu0 0
        %7954 = vmatprep.subr.bf16.mxu0 0
        %7955 = vmatpush2.bf16.msra.mxu0 0
        %7956 = vmatprep.subr.bf16.mxu0 0
        %7957 = vmatpush2.bf16.msra.mxu0 0
        %7958 = vmatprep.subr.bf16.mxu0 0
        %7959 = vmatpush2.bf16.msra.mxu0 0
        %7960 = vmatprep.subr.bf16.mxu0 0
        %7961 = vmatpush2.bf16.msra.mxu0 0
        %7962 = vmatprep.subr.bf16.mxu0 0
        %7963 = vmatpush2.bf16.msra.mxu0 0
        %7964 = vmatprep.subr.bf16.mxu0 0
        %7965 = vmatpush2.bf16.msra.mxu0 0
        %7966 = vmatprep.subr.bf16.mxu0 0
        %7967 = vmatpush2.bf16.msra.mxu0 0
        %7968 = vmatprep.mubr.bf16.mxu0 0
        %7969 = vmatmul.mubr.bf16.gmra.mxu0 %v7060
        %v7970 = vpop.f32.mrf.mxu0
        %v7971 = vadd.f32 %v7214, %v7970
        %v7972 = vpop.f32.mrf.mxu0
        %v7973 = vadd.f32 %v7218, %v7972
        %v7974 = vpop.f32.mrf.mxu0
        %v7975 = vpop.f32.mrf.mxu0
        %7976 = vdwg.mxu0
        %7977 = vmatprep.subr.bf16.mxu0 %v7666
        %7978 = vmatpush1.bf16.msra.mxu0 %v7665
        %7979 = vmatprep.subr.bf16.mxu0 %v7653
        %7980 = vmatpush1.bf16.msra.mxu0 %v7652
        %7981 = vmatprep.subr.bf16.mxu0 %v7640
        %7982 = vmatpush1.bf16.msra.mxu0 %v7639
        %7983 = vmatprep.subr.bf16.mxu0 %v7627
        %7984 = vmatpush1.bf16.msra.mxu0 %v7626
        %7985 = vmatprep.subr.bf16.mxu0 %v7614
        %7986 = vmatpush1.bf16.msra.mxu0 %v7613
        %7987 = vmatprep.subr.bf16.mxu0 %v7601
        %7988 = vmatpush1.bf16.msra.mxu0 %v7600
        %7989 = vmatprep.subr.bf16.mxu0 %v7588
        %7990 = vmatpush1.bf16.msra.mxu0 %v7587
        %7991 = vmatprep.subr.bf16.mxu0 %v7575
        %7992 = vmatpush1.bf16.msra.mxu0 %v7574
        %7993 = vmatprep.subr.bf16.mxu0 0
        %7994 = vmatpush2.bf16.msra.mxu0 0
        %7995 = vmatprep.subr.bf16.mxu0 0
        %7996 = vmatpush2.bf16.msra.mxu0 0
        %7997 = vmatprep.subr.bf16.mxu0 0
        %7998 = vmatpush2.bf16.msra.mxu0 0
        %7999 = vmatprep.subr.bf16.mxu0 0
        %8000 = vmatpush2.bf16.msra.mxu0 0
        %8001 = vmatprep.subr.bf16.mxu0 0
        %8002 = vmatpush2.bf16.msra.mxu0 0
        %8003 = vmatprep.subr.bf16.mxu0 0
        %8004 = vmatpush2.bf16.msra.mxu0 0
        %8005 = vmatprep.subr.bf16.mxu0 0
        %8006 = vmatpush2.bf16.msra.mxu0 0
        %8007 = vmatprep.subr.bf16.mxu0 0
        %8008 = vmatpush2.bf16.msra.mxu0 0
        %8009 = vmatprep.mubr.bf16.mxu0 0
        %8010 = vmatmul.mubr.bf16.gmra.mxu0 %v7060
        %v8011 = vpop.f32.mrf.mxu0
        %v8012 = vadd.f32 %v7222, %v8011
        %v8013 = vpop.f32.mrf.mxu0
        %v8014 = vadd.f32 %v7226, %v8013
        %v8015 = vpop.f32.mrf.mxu0
        %v8016 = vpop.f32.mrf.mxu0
        %8017 = vdwg.mxu0
        %8018 = vmatprep.subr.bf16.mxu0 0
        %8019 = vmatpush1.bf16.msra.mxu0 %v7667
        %8020 = vmatprep.subr.bf16.mxu0 0
        %8021 = vmatpush1.bf16.msra.mxu0 %v7654
        %8022 = vmatprep.subr.bf16.mxu0 0
        %8023 = vmatpush1.bf16.msra.mxu0 %v7641
        %8024 = vmatprep.subr.bf16.mxu0 0
        %8025 = vmatpush1.bf16.msra.mxu0 %v7628
        %8026 = vmatprep.subr.bf16.mxu0 0
        %8027 = vmatpush1.bf16.msra.mxu0 %v7615
        %8028 = vmatprep.subr.bf16.mxu0 0
        %8029 = vmatpush1.bf16.msra.mxu0 %v7602
        %8030 = vmatprep.subr.bf16.mxu0 0
        %8031 = vmatpush1.bf16.msra.mxu0 %v7589
        %8032 = vmatprep.subr.bf16.mxu0 0
        %8033 = vmatpush1.bf16.msra.mxu0 %v7576
        %8034 = vmatprep.subr.bf16.mxu0 0
        %8035 = vmatpush2.bf16.msra.mxu0 0
        %8036 = vmatprep.subr.bf16.mxu0 0
        %8037 = vmatpush2.bf16.msra.mxu0 0
        %8038 = vmatprep.subr.bf16.mxu0 0
        %8039 = vmatpush2.bf16.msra.mxu0 0
        %8040 = vmatprep.subr.bf16.mxu0 0
        %8041 = vmatpush2.bf16.msra.mxu0 0
        %8042 = vmatprep.subr.bf16.mxu0 0
        %8043 = vmatpush2.bf16.msra.mxu0 0
        %8044 = vmatprep.subr.bf16.mxu0 0
        %8045 = vmatpush2.bf16.msra.mxu0 0
        %8046 = vmatprep.subr.bf16.mxu0 0
        %8047 = vmatpush2.bf16.msra.mxu0 0
        %8048 = vmatprep.subr.bf16.mxu0 0
        %8049 = vmatpush2.bf16.msra.mxu0 0
        %8050 = vmatprep.mubr.bf16.mxu0 0
        %8051 = vmatmul.mubr.bf16.gmra.mxu0 %v7060
        %v8052 = vpop.f32.mrf.mxu0
        %v8053 = vadd.f32 %v7230, %v8052
        %v8054 = vpop.f32.mrf.mxu0
        %v8055 = vpop.f32.mrf.mxu0
        %v8056 = vpop.f32.mrf.mxu0
        %8057 = vdwg.mxu0
        %v8071 = vcombine.low %v7807, %v7809
        %v8072 = vcombine.low %v7848, %v7850
        %v8074 = vunpack.c.l.s4 1983009808
        %v8075 = vunpack.c.0.s8 %v8074
        %v8076 = vlaneseq
        %v8077 = vshrl.u32 %v8076, 7
        %v8078 = vsub.s32 %v8075, %v8077
        %v8079 = vrot.slane %v8071, %v8078
        %v8081 = vunpack.c.l.s4 1983009808
        %v8082 = vunpack.c.0.s8 %v8081
        %v8083 = vlaneseq
        %v8084 = vshrl.u32 %v8083, 7
        %v8085 = vsub.s32 %v8082, %v8084
        %v8086 = vrot.slane %v8072, %v8085
        %v8087 = vcombine.low %v8079, %v8086
        %v8088 = vcombine.low %v7889, %v7891
        %v8089 = vcombine.low %v7930, %v7932
        %v8091 = vunpack.c.l.s4 1983009808
        %v8092 = vunpack.c.0.s8 %v8091
        %v8093 = vlaneseq
        %v8094 = vshrl.u32 %v8093, 7
        %v8095 = vsub.s32 %v8092, %v8094
        %v8096 = vrot.slane %v8088, %v8095
        %v8098 = vunpack.c.l.s4 1983009808
        %v8099 = vunpack.c.0.s8 %v8098
        %v8100 = vlaneseq
        %v8101 = vshrl.u32 %v8100, 7
        %v8102 = vsub.s32 %v8099, %v8101
        %v8103 = vrot.slane %v8089, %v8102
        %v8104 = vcombine.low %v8096, %v8103
        %v8105 = vcombine.low %v7971, %v7973
        %v8106 = vcombine.low %v8012, %v8014
        %v8108 = vunpack.c.l.s4 1983009808
        %v8109 = vunpack.c.0.s8 %v8108
        %v8110 = vlaneseq
        %v8111 = vshrl.u32 %v8110, 7
        %v8112 = vsub.s32 %v8109, %v8111
        %v8113 = vrot.slane %v8105, %v8112
        %v8115 = vunpack.c.l.s4 1983009808
        %v8116 = vunpack.c.0.s8 %v8115
        %v8117 = vlaneseq
        %v8118 = vshrl.u32 %v8117, 7
        %v8119 = vsub.s32 %v8116, %v8118
        %v8120 = vrot.slane %v8106, %v8119
        %v8121 = vcombine.low %v8113, %v8120
        %v8122 = vcombine.low %v8053, %v457
        %v8124 = vunpack.c.l.s4 1983009808
        %v8125 = vunpack.c.0.s8 %v8124
        %v8126 = vlaneseq
        %v8127 = vshrl.u32 %v8126, 7
        %v8128 = vsub.s32 %v8125, %v8127
        %v8129 = vrot.slane %v8122, %v8128
        %v8130 = vcombine.low %v8129, %v1741
        %s8135 = scalar_lea.vmem %s449, 180
        %8136 = vst [vmem:[%s8135] sm:$0xff] %v8087
        %8137 = vst [vmem:[%s8135 + $0x8] sm:$0xff] %v8104
        %8138 = vst [vmem:[%s8135 + $0x10] sm:$0xff] %v8121
        %8139 = vst [vmem:[%s8135 + $0x18] sm:$0xff] %v8130
        %8140 = vst [vmem:[%s8135 + $0x20] sm:$0xf] %v1750
        %s8141 = smul.u32 6, %s27
        %p8142 = scmp.lt.s32.totalorder %s8141, 11
        %s8143 = scalar_select %p8142, %s8141, 11
        %s8144 = smul.addr %s8143, 18
        %s8145 = smul.addr %s8144, 2
        %s8146 = scalar_lea.vmem %s6, %s8145
        // Predicated region
        $region69: #{cal_style_codes_pallas.1} parent=43 // pred_check
          %p8147 = pneg %p196
        $region70: #{cal_style_codes_pallas.1} parent=43 // pred_check_branch
          %8149 = sbr.rel (%p8147) target = $region72
        $region71: #{cal_style_codes_pallas.1} parent=43 // pred_region
          %s8150 = smul.u32 6, %s27
        $region72: #{cal_style_codes_pallas.1} parent=43 // pred_fallthru
          _
      $region44: #{cal_style_codes_pallas.1} parent=5 // pred_fallthru
        _
      %p8151 = scmp.le.s32.totalorder 2, %s22
      // Predicated region
      $region73: #{cal_style_codes_pallas.1} parent=5 // pred_check
        %p8152 = pneg %p8151
      $region74: #{cal_style_codes_pallas.1} parent=5 // pred_check_branch
        %8154 = sbr.rel (%p8152) target = $region76
      $region75: #{cal_style_codes_pallas.1} parent=5 // pred_region
        %s8155 = ssub.s32 %s22, 2
        // Predicated region
        $region77: #{cal_style_codes_pallas.1} parent=75 // pred_check
          %p8156 = pneg %p202
        $region78: #{cal_style_codes_pallas.1} parent=75 // pred_check_branch
          %8158 = sbr.rel (%p8156) target = $region80
        $region79: #{cal_style_codes_pallas.1} parent=75 // pred_region
          %s8159 = smul.u32 6, %s28
          %p8160 = scmp.lt.s32.totalorder %s8159, 11
          %s8161 = scalar_select %p8160, %s8159, 11
          %s8162 = smul.addr %s8161, 18
          %s8163 = smul.addr %s8162, 2
          %s8164 = scalar_lea.vmem %s6, %s8163
        $region80: #{cal_style_codes_pallas.1} parent=75 // pred_fallthru
          _
      $region76: #{cal_style_codes_pallas.1} parent=5 // pred_fallthru
        _
    $region6: #{cal_style_codes_pallas.1} parent=1 // loop_footer
      %s26 = sadd.s32 1, %s22
    $region7: #{cal_style_codes_pallas.1} parent=1 // loop_footer_branch
      %21 = sbr.rel target = $region3
    $region8: #{cal_style_codes_pallas.1} parent=1 // loop_exit
      _
    %8165 = vsyncpa [#allocation3], 1
    %s8166 = scalar_lea.sflag [#allocation3], 1
    %8167 = vsyncpa %s8166, 1
    %8168 = vsyncpa [#allocation5], 1
    %s8169 = scalar_lea.sflag [#allocation5], 1
    %8170 = vsyncpa %s8169, 1
    %8171 = vsyncpa [#allocation8], 1
    %s8172 = scalar_lea.sflag [#allocation8], 1
    %8173 = vsyncpa %s8172, 1
    %8174 = vsyncpa [#allocation11], 1

</llo_original>
